<compile_context>
chip_gen: v7x
topology: tpu7x:2x2x1
jax: 0.10.0
libtpu: 0.0.40
codegen_flags: <defaults>
</compile_context>

<pallas_src>
import jax
import jax.numpy as jnp
from jax import lax
from jax.experimental import pallas as pl
from jax.experimental.pallas import tpu as pltpu


# ----------------------------------------------------------------------------
# conv3x3 (stride 1, pad 1) + bias + ReLU + 2x2 max-pool, on VMEM values.
# ----------------------------------------------------------------------------
def _conv3x3_relu_pool2x2(x, w, b):
    """x: (H, W, Cin) f32; w: (9*Cin, Cout); b: (1, Cout).

    Returns conv(3x3,pad=1)+bias -> ReLU -> 2x2 maxpool as a flat
    (H//2 * W//2, Cout) matrix, rows in row-major (h, w) order.
    """
    H, W, Cin = x.shape
    Cout = w.shape[-1]
    H2, W2 = H // 2, W // 2

    # ---- zero padding (pad=1).  W is padded by 8 per side so the sublane
    # concat operands are 8-aligned; the image lives at rows [1,H+1), cols [8,W+8).
    zrow = jnp.zeros((1, W, Cin), x.dtype)
    xp = jnp.concatenate([zrow, x, zrow], axis=0)            # (H+2, W, Cin)
    zcol = jnp.zeros((H + 2, 8, Cin), x.dtype)
    xp = jnp.concatenate([zcol, xp, zcol], axis=1)           # (H+2, W+16, Cin)

    # ---- im2col: column block (kh*3+kw) holds the shifted channel slice.
    cols = [
        xp[kh:kh + H, 7 + kw:7 + kw + W, :].reshape(H * W, Cin)
        for kh in range(3) for kw in range(3)
    ]
    patch = jnp.concatenate(cols, axis=-1)                   # (H*W, 9*Cin)

    # ---- conv as a single MXU matmul + bias + ReLU.
    y = jnp.dot(patch, w, preferred_element_type=jnp.float32) + b
    y = jnp.maximum(y, 0.0)                                  # (H*W, Cout)

    # ---- fused 2x2 max-pool.
    # Row p of y is pixel (i=p//W, j=p%W).  The 2x2 window max at (i, j) is
    # max(y[p], y[p+1], y[p+W], y[p+W+1]); compute it for all rows with two
    # overlapping-slice maxima, then select rows p = 2a*W + 2b with a one-hot
    # matmul (rows straddling an image row boundary are never selected).
    ta = jnp.maximum(y[:-1, :], y[1:, :])                    # (H*W-1,   Cout)
    tb = jnp.maximum(ta[:-W, :], ta[W:, :])                  # (H*W-W-1, Cout)

    R, Q = H2 * W2, H * W - W - 1
    s = W2.bit_length() - 1                                  # log2(W2); W2 is a power of two
    r_idx = lax.broadcasted_iota(jnp.int32, (R, Q), 0)
    q_idx = lax.broadcasted_iota(jnp.int32, (R, Q), 1)
    want = 2 * W * (r_idx >> s) + 2 * (r_idx & (W2 - 1))
    sel = jnp.where(q_idx == want, 1.0, 0.0).astype(jnp.float32)
    return jnp.dot(sel, tb, preferred_element_type=jnp.float32)   # (H2*W2, Cout)


# ----------------------------------------------------------------------------
# Fused forward-pass kernel (one grid step = one batch element).
# ----------------------------------------------------------------------------
def _net_kernel(x_ref, w1_ref, b1_ref, w2_ref, b2_ref, w3_ref, b3_ref,
                wfc1_ref, bfc1_ref, wfc2_ref, bfc2_ref, o_ref):
    x = x_ref[0]                                             # (H, W, 1)
    H, W, _ = x.shape

    p1 = _conv3x3_relu_pool2x2(x, w1_ref[...], b1_ref[...])
    p1 = p1.reshape(H // 2, W // 2, p1.shape[-1])            # (H/2, W/2, 32)

    p2 = _conv3x3_relu_pool2x2(p1, w2_ref[...], b2_ref[...])
    p2 = p2.reshape(H // 4, W // 4, p2.shape[-1])            # (H/4, W/4, 64)

    p3 = _conv3x3_relu_pool2x2(p2, w3_ref[...], b3_ref[...])  # (H/8*W/8, 128) = (12, 128)

    # fc1 (+ReLU): build a lane-dense (1, 1536) feature row by concatenating
    # the 12 spatial rows along lanes; wfc1 was pre-permuted to this order.
    P = p3.shape[0]
    feat = jnp.concatenate([p3[p:p + 1, :] for p in range(P)], axis=-1)   # (1, 1536)
    h = jnp.dot(feat, wfc1_ref[...], preferred_element_type=jnp.float32)
    h = jnp.maximum(h + bfc1_ref[...], 0.0)                  # (1, 512)

    # fc2: single output neuron -> elementwise multiply + lane reduction.
    out = jnp.sum(h * wfc2_ref[...], axis=-1, keepdims=True) + bfc2_ref[...]  # (1, 1)
    o_ref[0] = out


# ----------------------------------------------------------------------------
# Wrapper (mirrors Net.forward).
# ----------------------------------------------------------------------------
def net_forward(x_nchw, params):
    """x_nchw: (N, 1, H, W) float32 -> (N, 1) float32."""
    N, Cin, H, W = x_nchw.shape
    assert Cin == 1
    # Static requirements of the fused kernel (hold for the 24x32 input):
    assert H % 8 == 0, "H must be a multiple of 8"
    assert W % 32 == 0 and (W & (W - 1)) == 0, "W must be a power of two >= 32"
    assert (H // 8) * (W // 8) * 128 == params["wfc1"].shape[0]

    x = jnp.transpose(x_nchw, (0, 2, 3, 1))                  # NCHW -> NHWC (free: C == 1)

    out = pl.pallas_call(
        _net_kernel,
        out_shape=jax.ShapeDtypeStruct((N, 1, 1), jnp.float32),
        grid=(N,),
        in_specs=[
            pl.BlockSpec((1, H, W, 1), lambda n: (n, 0, 0, 0)),
            pl.BlockSpec(params["w1"].shape, lambda n: (0, 0)),
            pl.BlockSpec(params["b1"].shape, lambda n: (0, 0)),
            pl.BlockSpec(params["w2"].shape, lambda n: (0, 0)),
            pl.BlockSpec(params["b2"].shape, lambda n: (0, 0)),
            pl.BlockSpec(params["w3"].shape, lambda n: (0, 0)),
            pl.BlockSpec(params["b3"].shape, lambda n: (0, 0)),
            pl.BlockSpec(params["wfc1"].shape, lambda n: (0, 0)),
            pl.BlockSpec(params["bfc1"].shape, lambda n: (0, 0)),
            pl.BlockSpec(params["wfc2"].shape, lambda n: (0, 0)),
            pl.BlockSpec(params["bfc2"].shape, lambda n: (0, 0)),
        ],
        out_specs=pl.BlockSpec((1, 1, 1), lambda n: (n, 0, 0)),
        compiler_params=pltpu.CompilerParams(
            dimension_semantics=("parallel",),
            vmem_limit_bytes=32 * 1024 * 1024),
    )(x, params["w1"], params["b1"], params["w2"], params["b2"],
      params["w3"], params["b3"], params["wfc1"], params["bfc1"],
      params["wfc2"], params["bfc2"])
    return out.reshape(N, 1)


def init_params(key, H3=3, W3=4):
    """Deterministic synthetic parameters, pre-laid-out for the fused kernel.

    Weights are drawn in PyTorch layouts (Conv2d: (Cout,Cin,3,3), Linear:
    (out,in)) and re-laid-out ONCE at init (zero runtime cost):
      * conv weights -> (9*Cin, Cout), row index = (kh*3+kw)*Cin + ci
      * fc1 weight   -> (1536, 512), row index = (h*W3 + w)*128 + c, i.e. the
        kernel's NHWC flatten order (torch flattens NCHW as c*12 + h*W3 + w)
      * fc2 weight stays (1, 512); biases become row vectors.
    """
    ks = jax.random.split(key, 10)
    s = 0.05

    def nrm(k, shape):
        return s * jax.random.normal(k, shape, dtype=jnp.float32)

    def conv_w(k, cout, cin):
        wt = nrm(k, (cout, cin, 3, 3))                       # torch layout
        return wt.transpose(2, 3, 1, 0).reshape(9 * cin, cout)

    w1 = conv_w(ks[0], 32, 1)
    b1 = nrm(ks[1], (32,)).reshape(1, 32)
    w2 = conv_w(ks[2], 64, 32)
    b2 = nrm(ks[3], (64,)).reshape(1, 64)
    w3 = conv_w(ks[4], 128, 64)
    b3 = nrm(ks[5], (128,)).reshape(1, 128)

    wfc1_t = nrm(ks[6], (512, 1536))                         # torch (out, in)
    wfc1 = (wfc1_t.reshape(512, 128, H3 * W3)
                  .transpose(2, 1, 0)
                  .reshape(H3 * W3 * 128, 512))
    bfc1 = nrm(ks[7], (512,)).reshape(1, 512)
    wfc2 = nrm(ks[8], (1, 512))                              # used as-is
    bfc2 = nrm(ks[9], (1,)).reshape(1, 1)

    return dict(w1=w1, b1=b1, w2=w2, b2=b2, w3=w3, b3=b3,
                wfc1=wfc1, bfc1=bfc1, wfc2=wfc2, bfc2=bfc2)


if __name__ == "__main__":
    key = jax.random.PRNGKey(0)
    kx, kp = jax.random.split(key)
    # Input spatial 24x32 -> after three 2x2 pools: 3x4, so 128*3*4 = 1536
    # features, matching fc1's expected input size.
    x = jax.random.normal(kx, (2, 1, 24, 32), dtype=jnp.float32)
    params = init_params(kp)

    out = jax.jit(net_forward)(x, params)
    out = jax.block_until_ready(out)
    assert out.shape == (2, 1), out.shape
    print("KERNEL_OK")
</pallas_src>

<mosaic_0001>
module attributes {stable_mosaic.version = 11 : i64} {
  func.func @_net_kernel(%arg0: i32, %arg1: memref<1x24x32x1xf32, #tpu.memory_space<vmem>>, %arg2: memref<9x32xf32, #tpu.memory_space<vmem>>, %arg3: memref<1x32xf32, #tpu.memory_space<vmem>>, %arg4: memref<288x64xf32, #tpu.memory_space<vmem>>, %arg5: memref<1x64xf32, #tpu.memory_space<vmem>>, %arg6: memref<576x128xf32, #tpu.memory_space<vmem>>, %arg7: memref<1x128xf32, #tpu.memory_space<vmem>>, %arg8: memref<1536x512xf32, #tpu.memory_space<vmem>>, %arg9: memref<1x512xf32, #tpu.memory_space<vmem>>, %arg10: memref<1x512xf32, #tpu.memory_space<vmem>>, %arg11: memref<1x1xf32, #tpu.memory_space<vmem>>, %arg12: memref<1x1x1xf32, #tpu.memory_space<vmem>>) attributes {dimension_semantics = [#tpu.dimension_semantics<parallel>], iteration_bounds = array<i64: 2>, scalar_prefetch = 0 : i64, scratch_operands = 0 : i64, tpu.core_type = #tpu.core_type<tc>, window_params = [{transform_indices = @transform_0, window_bounds = array<i64: 1, 24, 32, 1>}, {pipeline_mode = #tpu.pipeline_mode<synchronous>, transform_indices = @transform_1, window_bounds = array<i64: 9, 32>}, {pipeline_mode = #tpu.pipeline_mode<synchronous>, transform_indices = @transform_2, window_bounds = array<i64: 1, 32>}, {pipeline_mode = #tpu.pipeline_mode<synchronous>, transform_indices = @transform_3, window_bounds = array<i64: 288, 64>}, {pipeline_mode = #tpu.pipeline_mode<synchronous>, transform_indices = @transform_4, window_bounds = array<i64: 1, 64>}, {pipeline_mode = #tpu.pipeline_mode<synchronous>, transform_indices = @transform_5, window_bounds = array<i64: 576, 128>}, {pipeline_mode = #tpu.pipeline_mode<synchronous>, transform_indices = @transform_6, window_bounds = array<i64: 1, 128>}, {pipeline_mode = #tpu.pipeline_mode<synchronous>, transform_indices = @transform_7, window_bounds = array<i64: 1536, 512>}, {pipeline_mode = #tpu.pipeline_mode<synchronous>, transform_indices = @transform_8, window_bounds = array<i64: 1, 512>}, {pipeline_mode = #tpu.pipeline_mode<synchronous>, transform_indices = @transform_9, window_bounds = array<i64: 1, 512>}, {pipeline_mode = #tpu.pipeline_mode<synchronous>, transform_indices = @transform_10, window_bounds = array<i64: 1, 1>}, {transform_indices = @transform_11, window_bounds = array<i64: 1, 1, 1>}]} {
    %c0 = arith.constant 0 : index
    %c0_0 = arith.constant 0 : index
    %c0_1 = arith.constant 0 : index
    %c0_2 = arith.constant 0 : index
    %0 = vector.load %arg1[%c0, %c0_0, %c0_1, %c0_2] : memref<1x24x32x1xf32, #tpu.memory_space<vmem>>, vector<1x24x32x1xf32>
    %1 = vector.shape_cast %0 : vector<1x24x32x1xf32> to vector<24x32x1xf32>
    %c0_3 = arith.constant 0 : index
    %c0_4 = arith.constant 0 : index
    %2 = vector.load %arg2[%c0_3, %c0_4] : memref<9x32xf32, #tpu.memory_space<vmem>>, vector<9x32xf32>
    %c0_5 = arith.constant 0 : index
    %c0_6 = arith.constant 0 : index
    %3 = vector.load %arg3[%c0_5, %c0_6] : memref<1x32xf32, #tpu.memory_space<vmem>>, vector<1x32xf32>
    %cst = arith.constant 0.000000e+00 : f32
    %4 = vector.broadcast %cst : f32 to vector<1x32x1xf32>
    %5 = tpu.concatenate %4, %1, %4 in 0 : vector<1x32x1xf32>, vector<24x32x1xf32>, vector<1x32x1xf32> -> vector<26x32x1xf32>
    %cst_7 = arith.constant 0.000000e+00 : f32
    %6 = vector.broadcast %cst_7 : f32 to vector<26x8x1xf32>
    %7 = tpu.concatenate %6, %5, %6 in 1 : vector<26x8x1xf32>, vector<26x32x1xf32>, vector<26x8x1xf32> -> vector<26x48x1xf32>
    %8 = vector.extract_strided_slice %7 {offsets = [0, 7, 0], sizes = [24, 32, 1], strides = [1, 1, 1]} : vector<26x48x1xf32> to vector<24x32x1xf32>
    %9 = vector.shape_cast %8 : vector<24x32x1xf32> to vector<768x1xf32>
    %10 = vector.extract_strided_slice %7 {offsets = [0, 8, 0], sizes = [24, 32, 1], strides = [1, 1, 1]} : vector<26x48x1xf32> to vector<24x32x1xf32>
    %11 = vector.shape_cast %10 : vector<24x32x1xf32> to vector<768x1xf32>
    %12 = vector.extract_strided_slice %7 {offsets = [0, 9, 0], sizes = [24, 32, 1], strides = [1, 1, 1]} : vector<26x48x1xf32> to vector<24x32x1xf32>
    %13 = vector.shape_cast %12 : vector<24x32x1xf32> to vector<768x1xf32>
    %14 = vector.extract_strided_slice %7 {offsets = [1, 7, 0], sizes = [24, 32, 1], strides = [1, 1, 1]} : vector<26x48x1xf32> to vector<24x32x1xf32>
    %15 = vector.shape_cast %14 : vector<24x32x1xf32> to vector<768x1xf32>
    %16 = vector.extract_strided_slice %7 {offsets = [1, 8, 0], sizes = [24, 32, 1], strides = [1, 1, 1]} : vector<26x48x1xf32> to vector<24x32x1xf32>
    %17 = vector.shape_cast %16 : vector<24x32x1xf32> to vector<768x1xf32>
    %18 = vector.extract_strided_slice %7 {offsets = [1, 9, 0], sizes = [24, 32, 1], strides = [1, 1, 1]} : vector<26x48x1xf32> to vector<24x32x1xf32>
    %19 = vector.shape_cast %18 : vector<24x32x1xf32> to vector<768x1xf32>
    %20 = vector.extract_strided_slice %7 {offsets = [2, 7, 0], sizes = [24, 32, 1], strides = [1, 1, 1]} : vector<26x48x1xf32> to vector<24x32x1xf32>
    %21 = vector.shape_cast %20 : vector<24x32x1xf32> to vector<768x1xf32>
    %22 = vector.extract_strided_slice %7 {offsets = [2, 8, 0], sizes = [24, 32, 1], strides = [1, 1, 1]} : vector<26x48x1xf32> to vector<24x32x1xf32>
    %23 = vector.shape_cast %22 : vector<24x32x1xf32> to vector<768x1xf32>
    %24 = vector.extract_strided_slice %7 {offsets = [2, 9, 0], sizes = [24, 32, 1], strides = [1, 1, 1]} : vector<26x48x1xf32> to vector<24x32x1xf32>
    %25 = vector.shape_cast %24 : vector<24x32x1xf32> to vector<768x1xf32>
    %26 = tpu.concatenate %9, %11, %13, %15, %17, %19, %21, %23, %25 in 1 : vector<768x1xf32>, vector<768x1xf32>, vector<768x1xf32>, vector<768x1xf32>, vector<768x1xf32>, vector<768x1xf32>, vector<768x1xf32>, vector<768x1xf32>, vector<768x1xf32> -> vector<768x9xf32>
    %cst_8 = arith.constant dense<0.000000e+00> : vector<768x32xf32>
    %27 = tpu.matmul %26, %2, %cst_8 {dimension_numbers = #tpu.dot_dimension_numbers<[1], [0], [0], [1], [0, 0, 1, 1], [], []>} : vector<768x9xf32>, vector<9x32xf32>, vector<768x32xf32> -> vector<768x32xf32>
    %28 = vector.broadcast %3 : vector<1x32xf32> to vector<768x32xf32>
    %29 = arith.addf %27, %28 : vector<768x32xf32>
    %cst_9 = arith.constant 0.000000e+00 : f32
    %30 = vector.broadcast %cst_9 : f32 to vector<768x32xf32>
    %31 = arith.maximumf %29, %30 : vector<768x32xf32>
    %32 = vector.extract_strided_slice %31 {offsets = [0, 0], sizes = [767, 32], strides = [1, 1]} : vector<768x32xf32> to vector<767x32xf32>
    %33 = vector.extract_strided_slice %31 {offsets = [1, 0], sizes = [767, 32], strides = [1, 1]} : vector<768x32xf32> to vector<767x32xf32>
    %34 = arith.maximumf %32, %33 : vector<767x32xf32>
    %35 = vector.extract_strided_slice %34 {offsets = [0, 0], sizes = [735, 32], strides = [1, 1]} : vector<767x32xf32> to vector<735x32xf32>
    %36 = vector.extract_strided_slice %34 {offsets = [32, 0], sizes = [735, 32], strides = [1, 1]} : vector<767x32xf32> to vector<735x32xf32>
    %37 = arith.maximumf %35, %36 : vector<735x32xf32>
    %38 = tpu.iota {dimensions = array<i32: 0>} : vector<192x735xi32>
    %39 = tpu.iota {dimensions = array<i32: 1>} : vector<192x735xi32>
    %c4_i32 = arith.constant 4 : i32
    %40 = vector.broadcast %c4_i32 : i32 to vector<192x735xi32>
    %41 = arith.shrsi %38, %40 : vector<192x735xi32>
    %c64_i32 = arith.constant 64 : i32
    %42 = vector.broadcast %c64_i32 : i32 to vector<192x735xi32>
    %43 = arith.muli %42, %41 : vector<192x735xi32>
    %c15_i32 = arith.constant 15 : i32
    %44 = vector.broadcast %c15_i32 : i32 to vector<192x735xi32>
    %45 = arith.andi %38, %44 : vector<192x735xi32>
    %c2_i32 = arith.constant 2 : i32
    %46 = vector.broadcast %c2_i32 : i32 to vector<192x735xi32>
    %47 = arith.muli %46, %45 : vector<192x735xi32>
    %48 = arith.addi %43, %47 : vector<192x735xi32>
    %49 = arith.cmpi eq, %39, %48 : vector<192x735xi32>
    %cst_10 = arith.constant 1.000000e+00 : f32
    %cst_11 = arith.constant 0.000000e+00 : f32
    %50 = vector.broadcast %cst_10 : f32 to vector<192x735xf32>
    %51 = vector.broadcast %cst_11 : f32 to vector<192x735xf32>
    %52 = arith.select %49, %50, %51 : vector<192x735xi1>, vector<192x735xf32>
    %cst_12 = arith.constant dense<0.000000e+00> : vector<192x32xf32>
    %53 = tpu.matmul %52, %37, %cst_12 {dimension_numbers = #tpu.dot_dimension_numbers<[1], [0], [0], [1], [0, 0, 1, 1], [], []>} : vector<192x735xf32>, vector<735x32xf32>, vector<192x32xf32> -> vector<192x32xf32>
    %54 = vector.shape_cast %53 : vector<192x32xf32> to vector<12x16x32xf32>
    %c0_13 = arith.constant 0 : index
    %c0_14 = arith.constant 0 : index
    %55 = vector.load %arg4[%c0_13, %c0_14] : memref<288x64xf32, #tpu.memory_space<vmem>>, vector<288x64xf32>
    %c0_15 = arith.constant 0 : index
    %c0_16 = arith.constant 0 : index
    %56 = vector.load %arg5[%c0_15, %c0_16] : memref<1x64xf32, #tpu.memory_space<vmem>>, vector<1x64xf32>
    %cst_17 = arith.constant 0.000000e+00 : f32
    %57 = vector.broadcast %cst_17 : f32 to vector<1x16x32xf32>
    %58 = tpu.concatenate %57, %54, %57 in 0 : vector<1x16x32xf32>, vector<12x16x32xf32>, vector<1x16x32xf32> -> vector<14x16x32xf32>
    %cst_18 = arith.constant 0.000000e+00 : f32
    %59 = vector.broadcast %cst_18 : f32 to vector<14x8x32xf32>
    %60 = tpu.concatenate %59, %58, %59 in 1 : vector<14x8x32xf32>, vector<14x16x32xf32>, vector<14x8x32xf32> -> vector<14x32x32xf32>
    %61 = vector.extract_strided_slice %60 {offsets = [0, 7, 0], sizes = [12, 16, 32], strides = [1, 1, 1]} : vector<14x32x32xf32> to vector<12x16x32xf32>
    %62 = vector.shape_cast %61 : vector<12x16x32xf32> to vector<192x32xf32>
    %63 = vector.extract_strided_slice %60 {offsets = [0, 8, 0], sizes = [12, 16, 32], strides = [1, 1, 1]} : vector<14x32x32xf32> to vector<12x16x32xf32>
    %64 = vector.shape_cast %63 : vector<12x16x32xf32> to vector<192x32xf32>
    %65 = vector.extract_strided_slice %60 {offsets = [0, 9, 0], sizes = [12, 16, 32], strides = [1, 1, 1]} : vector<14x32x32xf32> to vector<12x16x32xf32>
    %66 = vector.shape_cast %65 : vector<12x16x32xf32> to vector<192x32xf32>
    %67 = vector.extract_strided_slice %60 {offsets = [1, 7, 0], sizes = [12, 16, 32], strides = [1, 1, 1]} : vector<14x32x32xf32> to vector<12x16x32xf32>
    %68 = vector.shape_cast %67 : vector<12x16x32xf32> to vector<192x32xf32>
    %69 = vector.extract_strided_slice %60 {offsets = [1, 8, 0], sizes = [12, 16, 32], strides = [1, 1, 1]} : vector<14x32x32xf32> to vector<12x16x32xf32>
    %70 = vector.shape_cast %69 : vector<12x16x32xf32> to vector<192x32xf32>
    %71 = vector.extract_strided_slice %60 {offsets = [1, 9, 0], sizes = [12, 16, 32], strides = [1, 1, 1]} : vector<14x32x32xf32> to vector<12x16x32xf32>
    %72 = vector.shape_cast %71 : vector<12x16x32xf32> to vector<192x32xf32>
    %73 = vector.extract_strided_slice %60 {offsets = [2, 7, 0], sizes = [12, 16, 32], strides = [1, 1, 1]} : vector<14x32x32xf32> to vector<12x16x32xf32>
    %74 = vector.shape_cast %73 : vector<12x16x32xf32> to vector<192x32xf32>
    %75 = vector.extract_strided_slice %60 {offsets = [2, 8, 0], sizes = [12, 16, 32], strides = [1, 1, 1]} : vector<14x32x32xf32> to vector<12x16x32xf32>
    %76 = vector.shape_cast %75 : vector<12x16x32xf32> to vector<192x32xf32>
    %77 = vector.extract_strided_slice %60 {offsets = [2, 9, 0], sizes = [12, 16, 32], strides = [1, 1, 1]} : vector<14x32x32xf32> to vector<12x16x32xf32>
    %78 = vector.shape_cast %77 : vector<12x16x32xf32> to vector<192x32xf32>
    %79 = tpu.concatenate %62, %64, %66, %68, %70, %72, %74, %76, %78 in 1 : vector<192x32xf32>, vector<192x32xf32>, vector<192x32xf32>, vector<192x32xf32>, vector<192x32xf32>, vector<192x32xf32>, vector<192x32xf32>, vector<192x32xf32>, vector<192x32xf32> -> vector<192x288xf32>
    %cst_19 = arith.constant dense<0.000000e+00> : vector<192x64xf32>
    %80 = tpu.matmul %79, %55, %cst_19 {dimension_numbers = #tpu.dot_dimension_numbers<[1], [0], [0], [1], [0, 0, 1, 1], [], []>} : vector<192x288xf32>, vector<288x64xf32>, vector<192x64xf32> -> vector<192x64xf32>
    %81 = vector.broadcast %56 : vector<1x64xf32> to vector<192x64xf32>
    %82 = arith.addf %80, %81 : vector<192x64xf32>
    %cst_20 = arith.constant 0.000000e+00 : f32
    %83 = vector.broadcast %cst_20 : f32 to vector<192x64xf32>
    %84 = arith.maximumf %82, %83 : vector<192x64xf32>
    %85 = vector.extract_strided_slice %84 {offsets = [0, 0], sizes = [191, 64], strides = [1, 1]} : vector<192x64xf32> to vector<191x64xf32>
    %86 = vector.extract_strided_slice %84 {offsets = [1, 0], sizes = [191, 64], strides = [1, 1]} : vector<192x64xf32> to vector<191x64xf32>
    %87 = arith.maximumf %85, %86 : vector<191x64xf32>
    %88 = vector.extract_strided_slice %87 {offsets = [0, 0], sizes = [175, 64], strides = [1, 1]} : vector<191x64xf32> to vector<175x64xf32>
    %89 = vector.extract_strided_slice %87 {offsets = [16, 0], sizes = [175, 64], strides = [1, 1]} : vector<191x64xf32> to vector<175x64xf32>
    %90 = arith.maximumf %88, %89 : vector<175x64xf32>
    %91 = tpu.iota {dimensions = array<i32: 0>} : vector<48x175xi32>
    %92 = tpu.iota {dimensions = array<i32: 1>} : vector<48x175xi32>
    %c3_i32 = arith.constant 3 : i32
    %93 = vector.broadcast %c3_i32 : i32 to vector<48x175xi32>
    %94 = arith.shrsi %91, %93 : vector<48x175xi32>
    %c32_i32 = arith.constant 32 : i32
    %95 = vector.broadcast %c32_i32 : i32 to vector<48x175xi32>
    %96 = arith.muli %95, %94 : vector<48x175xi32>
    %c7_i32 = arith.constant 7 : i32
    %97 = vector.broadcast %c7_i32 : i32 to vector<48x175xi32>
    %98 = arith.andi %91, %97 : vector<48x175xi32>
    %c2_i32_21 = arith.constant 2 : i32
    %99 = vector.broadcast %c2_i32_21 : i32 to vector<48x175xi32>
    %100 = arith.muli %99, %98 : vector<48x175xi32>
    %101 = arith.addi %96, %100 : vector<48x175xi32>
    %102 = arith.cmpi eq, %92, %101 : vector<48x175xi32>
    %cst_22 = arith.constant 1.000000e+00 : f32
    %cst_23 = arith.constant 0.000000e+00 : f32
    %103 = vector.broadcast %cst_22 : f32 to vector<48x175xf32>
    %104 = vector.broadcast %cst_23 : f32 to vector<48x175xf32>
    %105 = arith.select %102, %103, %104 : vector<48x175xi1>, vector<48x175xf32>
    %cst_24 = arith.constant dense<0.000000e+00> : vector<48x64xf32>
    %106 = tpu.matmul %105, %90, %cst_24 {dimension_numbers = #tpu.dot_dimension_numbers<[1], [0], [0], [1], [0, 0, 1, 1], [], []>} : vector<48x175xf32>, vector<175x64xf32>, vector<48x64xf32> -> vector<48x64xf32>
    %107 = vector.shape_cast %106 : vector<48x64xf32> to vector<6x8x64xf32>
    %c0_25 = arith.constant 0 : index
    %c0_26 = arith.constant 0 : index
    %108 = vector.load %arg6[%c0_25, %c0_26] : memref<576x128xf32, #tpu.memory_space<vmem>>, vector<576x128xf32>
    %c0_27 = arith.constant 0 : index
    %c0_28 = arith.constant 0 : index
    %109 = vector.load %arg7[%c0_27, %c0_28] : memref<1x128xf32, #tpu.memory_space<vmem>>, vector<1x128xf32>
    %cst_29 = arith.constant 0.000000e+00 : f32
    %110 = vector.broadcast %cst_29 : f32 to vector<1x8x64xf32>
    %111 = tpu.concatenate %110, %107, %110 in 0 : vector<1x8x64xf32>, vector<6x8x64xf32>, vector<1x8x64xf32> -> vector<8x8x64xf32>
    %cst_30 = arith.constant 0.000000e+00 : f32
    %112 = vector.broadcast %cst_30 : f32 to vector<8x8x64xf32>
    %113 = tpu.concatenate %112, %111, %112 in 1 : vector<8x8x64xf32>, vector<8x8x64xf32>, vector<8x8x64xf32> -> vector<8x24x64xf32>
    %114 = vector.extract_strided_slice %113 {offsets = [0, 7, 0], sizes = [6, 8, 64], strides = [1, 1, 1]} : vector<8x24x64xf32> to vector<6x8x64xf32>
    %115 = vector.shape_cast %114 : vector<6x8x64xf32> to vector<48x64xf32>
    %116 = vector.extract_strided_slice %113 {offsets = [0, 8, 0], sizes = [6, 8, 64], strides = [1, 1, 1]} : vector<8x24x64xf32> to vector<6x8x64xf32>
    %117 = vector.shape_cast %116 : vector<6x8x64xf32> to vector<48x64xf32>
    %118 = vector.extract_strided_slice %113 {offsets = [0, 9, 0], sizes = [6, 8, 64], strides = [1, 1, 1]} : vector<8x24x64xf32> to vector<6x8x64xf32>
    %119 = vector.shape_cast %118 : vector<6x8x64xf32> to vector<48x64xf32>
    %120 = vector.extract_strided_slice %113 {offsets = [1, 7, 0], sizes = [6, 8, 64], strides = [1, 1, 1]} : vector<8x24x64xf32> to vector<6x8x64xf32>
    %121 = vector.shape_cast %120 : vector<6x8x64xf32> to vector<48x64xf32>
    %122 = vector.extract_strided_slice %113 {offsets = [1, 8, 0], sizes = [6, 8, 64], strides = [1, 1, 1]} : vector<8x24x64xf32> to vector<6x8x64xf32>
    %123 = vector.shape_cast %122 : vector<6x8x64xf32> to vector<48x64xf32>
    %124 = vector.extract_strided_slice %113 {offsets = [1, 9, 0], sizes = [6, 8, 64], strides = [1, 1, 1]} : vector<8x24x64xf32> to vector<6x8x64xf32>
    %125 = vector.shape_cast %124 : vector<6x8x64xf32> to vector<48x64xf32>
    %126 = vector.extract_strided_slice %113 {offsets = [2, 7, 0], sizes = [6, 8, 64], strides = [1, 1, 1]} : vector<8x24x64xf32> to vector<6x8x64xf32>
    %127 = vector.shape_cast %126 : vector<6x8x64xf32> to vector<48x64xf32>
    %128 = vector.extract_strided_slice %113 {offsets = [2, 8, 0], sizes = [6, 8, 64], strides = [1, 1, 1]} : vector<8x24x64xf32> to vector<6x8x64xf32>
    %129 = vector.shape_cast %128 : vector<6x8x64xf32> to vector<48x64xf32>
    %130 = vector.extract_strided_slice %113 {offsets = [2, 9, 0], sizes = [6, 8, 64], strides = [1, 1, 1]} : vector<8x24x64xf32> to vector<6x8x64xf32>
    %131 = vector.shape_cast %130 : vector<6x8x64xf32> to vector<48x64xf32>
    %132 = tpu.concatenate %115, %117, %119, %121, %123, %125, %127, %129, %131 in 1 : vector<48x64xf32>, vector<48x64xf32>, vector<48x64xf32>, vector<48x64xf32>, vector<48x64xf32>, vector<48x64xf32>, vector<48x64xf32>, vector<48x64xf32>, vector<48x64xf32> -> vector<48x576xf32>
    %cst_31 = arith.constant dense<0.000000e+00> : vector<48x128xf32>
    %133 = tpu.matmul %132, %108, %cst_31 {dimension_numbers = #tpu.dot_dimension_numbers<[1], [0], [0], [1], [0, 0, 1, 1], [], []>} : vector<48x576xf32>, vector<576x128xf32>, vector<48x128xf32> -> vector<48x128xf32>
    %134 = vector.broadcast %109 : vector<1x128xf32> to vector<48x128xf32>
    %135 = arith.addf %133, %134 : vector<48x128xf32>
    %cst_32 = arith.constant 0.000000e+00 : f32
    %136 = vector.broadcast %cst_32 : f32 to vector<48x128xf32>
    %137 = arith.maximumf %135, %136 : vector<48x128xf32>
    %138 = vector.extract_strided_slice %137 {offsets = [0, 0], sizes = [47, 128], strides = [1, 1]} : vector<48x128xf32> to vector<47x128xf32>
    %139 = vector.extract_strided_slice %137 {offsets = [1, 0], sizes = [47, 128], strides = [1, 1]} : vector<48x128xf32> to vector<47x128xf32>
    %140 = arith.maximumf %138, %139 : vector<47x128xf32>
    %141 = vector.extract_strided_slice %140 {offsets = [0, 0], sizes = [39, 128], strides = [1, 1]} : vector<47x128xf32> to vector<39x128xf32>
    %142 = vector.extract_strided_slice %140 {offsets = [8, 0], sizes = [39, 128], strides = [1, 1]} : vector<47x128xf32> to vector<39x128xf32>
    %143 = arith.maximumf %141, %142 : vector<39x128xf32>
    %144 = tpu.iota {dimensions = array<i32: 0>} : vector<12x39xi32>
    %145 = tpu.iota {dimensions = array<i32: 1>} : vector<12x39xi32>
    %c2_i32_33 = arith.constant 2 : i32
    %146 = vector.broadcast %c2_i32_33 : i32 to vector<12x39xi32>
    %147 = arith.shrsi %144, %146 : vector<12x39xi32>
    %c16_i32 = arith.constant 16 : i32
    %148 = vector.broadcast %c16_i32 : i32 to vector<12x39xi32>
    %149 = arith.muli %148, %147 : vector<12x39xi32>
    %c3_i32_34 = arith.constant 3 : i32
    %150 = vector.broadcast %c3_i32_34 : i32 to vector<12x39xi32>
    %151 = arith.andi %144, %150 : vector<12x39xi32>
    %c2_i32_35 = arith.constant 2 : i32
    %152 = vector.broadcast %c2_i32_35 : i32 to vector<12x39xi32>
    %153 = arith.muli %152, %151 : vector<12x39xi32>
    %154 = arith.addi %149, %153 : vector<12x39xi32>
    %155 = arith.cmpi eq, %145, %154 : vector<12x39xi32>
    %cst_36 = arith.constant 1.000000e+00 : f32
    %cst_37 = arith.constant 0.000000e+00 : f32
    %156 = vector.broadcast %cst_36 : f32 to vector<12x39xf32>
    %157 = vector.broadcast %cst_37 : f32 to vector<12x39xf32>
    %158 = arith.select %155, %156, %157 : vector<12x39xi1>, vector<12x39xf32>
    %cst_38 = arith.constant dense<0.000000e+00> : vector<12x128xf32>
    %159 = tpu.matmul %158, %143, %cst_38 {dimension_numbers = #tpu.dot_dimension_numbers<[1], [0], [0], [1], [0, 0, 1, 1], [], []>} : vector<12x39xf32>, vector<39x128xf32>, vector<12x128xf32> -> vector<12x128xf32>
    %160 = vector.extract_strided_slice %159 {offsets = [0, 0], sizes = [1, 128], strides = [1, 1]} : vector<12x128xf32> to vector<1x128xf32>
    %161 = vector.extract_strided_slice %159 {offsets = [1, 0], sizes = [1, 128], strides = [1, 1]} : vector<12x128xf32> to vector<1x128xf32>
    %162 = vector.extract_strided_slice %159 {offsets = [2, 0], sizes = [1, 128], strides = [1, 1]} : vector<12x128xf32> to vector<1x128xf32>
    %163 = vector.extract_strided_slice %159 {offsets = [3, 0], sizes = [1, 128], strides = [1, 1]} : vector<12x128xf32> to vector<1x128xf32>
    %164 = vector.extract_strided_slice %159 {offsets = [4, 0], sizes = [1, 128], strides = [1, 1]} : vector<12x128xf32> to vector<1x128xf32>
    %165 = vector.extract_strided_slice %159 {offsets = [5, 0], sizes = [1, 128], strides = [1, 1]} : vector<12x128xf32> to vector<1x128xf32>
    %166 = vector.extract_strided_slice %159 {offsets = [6, 0], sizes = [1, 128], strides = [1, 1]} : vector<12x128xf32> to vector<1x128xf32>
    %167 = vector.extract_strided_slice %159 {offsets = [7, 0], sizes = [1, 128], strides = [1, 1]} : vector<12x128xf32> to vector<1x128xf32>
    %168 = vector.extract_strided_slice %159 {offsets = [8, 0], sizes = [1, 128], strides = [1, 1]} : vector<12x128xf32> to vector<1x128xf32>
    %169 = vector.extract_strided_slice %159 {offsets = [9, 0], sizes = [1, 128], strides = [1, 1]} : vector<12x128xf32> to vector<1x128xf32>
    %170 = vector.extract_strided_slice %159 {offsets = [10, 0], sizes = [1, 128], strides = [1, 1]} : vector<12x128xf32> to vector<1x128xf32>
    %171 = vector.extract_strided_slice %159 {offsets = [11, 0], sizes = [1, 128], strides = [1, 1]} : vector<12x128xf32> to vector<1x128xf32>
    %172 = tpu.concatenate %160, %161, %162, %163, %164, %165, %166, %167, %168, %169, %170, %171 in 1 : vector<1x128xf32>, vector<1x128xf32>, vector<1x128xf32>, vector<1x128xf32>, vector<1x128xf32>, vector<1x128xf32>, vector<1x128xf32>, vector<1x128xf32>, vector<1x128xf32>, vector<1x128xf32>, vector<1x128xf32>, vector<1x128xf32> -> vector<1x1536xf32>
    %c0_39 = arith.constant 0 : index
    %c0_40 = arith.constant 0 : index
    %173 = vector.load %arg8[%c0_39, %c0_40] : memref<1536x512xf32, #tpu.memory_space<vmem>>, vector<1536x512xf32>
    %cst_41 = arith.constant dense<0.000000e+00> : vector<1x512xf32>
    %174 = tpu.matmul %172, %173, %cst_41 {dimension_numbers = #tpu.dot_dimension_numbers<[1], [0], [0], [1], [0, 0, 1, 1], [], []>} : vector<1x1536xf32>, vector<1536x512xf32>, vector<1x512xf32> -> vector<1x512xf32>
    %c0_42 = arith.constant 0 : index
    %c0_43 = arith.constant 0 : index
    %175 = vector.load %arg9[%c0_42, %c0_43] : memref<1x512xf32, #tpu.memory_space<vmem>>, vector<1x512xf32>
    %176 = arith.addf %174, %175 : vector<1x512xf32>
    %cst_44 = arith.constant 0.000000e+00 : f32
    %177 = vector.broadcast %cst_44 : f32 to vector<1x512xf32>
    %178 = arith.maximumf %176, %177 : vector<1x512xf32>
    %c0_45 = arith.constant 0 : index
    %c0_46 = arith.constant 0 : index
    %179 = vector.load %arg10[%c0_45, %c0_46] : memref<1x512xf32, #tpu.memory_space<vmem>>, vector<1x512xf32>
    %180 = arith.mulf %178, %179 : vector<1x512xf32>
    %cst_47 = arith.constant dense<0.000000e+00> : vector<1xf32>
    %181 = vector.multi_reduction <add>, %180, %cst_47 [1] : vector<1x512xf32> to vector<1xf32>
    %182 = vector.shape_cast %181 : vector<1xf32> to vector<1x1xf32>
    %c0_48 = arith.constant 0 : index
    %c0_49 = arith.constant 0 : index
    %183 = vector.load %arg11[%c0_48, %c0_49] : memref<1x1xf32, #tpu.memory_space<vmem>>, vector<1x1xf32>
    %184 = arith.addf %182, %183 : vector<1x1xf32>
    %c0_50 = arith.constant 0 : index
    %c0_51 = arith.constant 0 : index
    %c0_52 = arith.constant 0 : index
    %185 = vector.load %arg12[%c0_50, %c0_51, %c0_52] : memref<1x1x1xf32, #tpu.memory_space<vmem>>, vector<1x1x1xf32>
    %186 = vector.shape_cast %185 : vector<1x1x1xf32> to vector<1x1xf32>
    %187 = vector.shape_cast %184 : vector<1x1xf32> to vector<1x1x1xf32>
    tpu.vector_store %arg12[%c0_50, %c0_51, %c0_52], %187 {strides = array<i32>} : memref<1x1x1xf32, #tpu.memory_space<vmem>>, vector<1x1x1xf32>,
    return
  }
  func.func @transform_0(%arg0: i32) -> (i32, i32, i32, i32) {
    %c0_i32 = arith.constant 0 : i32
    %c0_i32_0 = arith.constant 0 : i32
    %c0_i32_1 = arith.constant 0 : i32
    %c0_i32_2 = arith.constant 0 : i32
    return %arg0, %c0_i32, %c0_i32_0, %c0_i32_1 : i32, i32, i32, i32
  }
  func.func @transform_1(%arg0: i32) -> (i32, i32) {
    %c0_i32 = arith.constant 0 : i32
    %c0_i32_0 = arith.constant 0 : i32
    %c0_i32_1 = arith.constant 0 : i32
    return %c0_i32, %c0_i32_0 : i32, i32
  }
  func.func @transform_2(%arg0: i32) -> (i32, i32) {
    %c0_i32 = arith.constant 0 : i32
    %c0_i32_0 = arith.constant 0 : i32
    %c0_i32_1 = arith.constant 0 : i32
    return %c0_i32, %c0_i32_0 : i32, i32
  }
  func.func @transform_3(%arg0: i32) -> (i32, i32) {
    %c0_i32 = arith.constant 0 : i32
    %c0_i32_0 = arith.constant 0 : i32
    %c0_i32_1 = arith.constant 0 : i32
    return %c0_i32, %c0_i32_0 : i32, i32
  }
  func.func @transform_4(%arg0: i32) -> (i32, i32) {
    %c0_i32 = arith.constant 0 : i32
    %c0_i32_0 = arith.constant 0 : i32
    %c0_i32_1 = arith.constant 0 : i32
    return %c0_i32, %c0_i32_0 : i32, i32
  }
  func.func @transform_5(%arg0: i32) -> (i32, i32) {
    %c0_i32 = arith.constant 0 : i32
    %c0_i32_0 = arith.constant 0 : i32
    %c0_i32_1 = arith.constant 0 : i32
    return %c0_i32, %c0_i32_0 : i32, i32
  }
  func.func @transform_6(%arg0: i32) -> (i32, i32) {
    %c0_i32 = arith.constant 0 : i32
    %c0_i32_0 = arith.constant 0 : i32
    %c0_i32_1 = arith.constant 0 : i32
    return %c0_i32, %c0_i32_0 : i32, i32
  }
  func.func @transform_7(%arg0: i32) -> (i32, i32) {
    %c0_i32 = arith.constant 0 : i32
    %c0_i32_0 = arith.constant 0 : i32
    %c0_i32_1 = arith.constant 0 : i32
    return %c0_i32, %c0_i32_0 : i32, i32
  }
  func.func @transform_8(%arg0: i32) -> (i32, i32) {
    %c0_i32 = arith.constant 0 : i32
    %c0_i32_0 = arith.constant 0 : i32
    %c0_i32_1 = arith.constant 0 : i32
    return %c0_i32, %c0_i32_0 : i32, i32
  }
  func.func @transform_9(%arg0: i32) -> (i32, i32) {
    %c0_i32 = arith.constant 0 : i32
    %c0_i32_0 = arith.constant 0 : i32
    %c0_i32_1 = arith.constant 0 : i32
    return %c0_i32, %c0_i32_0 : i32, i32
  }
  func.func @transform_10(%arg0: i32) -> (i32, i32) {
    %c0_i32 = arith.constant 0 : i32
    %c0_i32_0 = arith.constant 0 : i32
    %c0_i32_1 = arith.constant 0 : i32
    return %c0_i32, %c0_i32_0 : i32, i32
  }
  func.func @transform_11(%arg0: i32) -> (i32, i32, i32) {
    %c0_i32 = arith.constant 0 : i32
    %c0_i32_0 = arith.constant 0 : i32
    %c0_i32_1 = arith.constant 0 : i32
    return %arg0, %c0_i32, %c0_i32_0 : i32, i32, i32
  }
}

</mosaic_0001>

<llo_original>
// kernel: net_forward.1
$region0: #{net_forward.1}
  #allocation0 [shape = 'u32[]', space=smem, size = 0x4, offset = 0x4, fixed_abs, tag = 'smem constant byte address 0x4 - core index']
  #allocation1 [shape = 'u32[144,128]{1,0:T(1,128)}', space=vmem, size = 0x12000, scoped, tag = 'internal scratch']
  #allocation2 [shape = 'f32[1,1]{1,0:T(1,128)S(1)}', space=vmem, size = 0x200, scoped, tag = 'scoped memory for net_forward.1']
  %s0 = inlined_call_operand.vmem [shape: f32[2,24,32,1], index: 0, kind: input, shape index: {}]
  %s1 = inlined_call_operand.hbm [shape: f32[9,32], index: 1, kind: input, shape index: {}]
  %s2 = inlined_call_operand.hbm [shape: f32[1,32], index: 2, kind: input, shape index: {}]
  %s3 = inlined_call_operand.vmem [shape: f32[288,64], index: 3, kind: input, shape index: {}]
  %s4 = inlined_call_operand.hbm [shape: f32[1,64], index: 4, kind: input, shape index: {}]
  %s5 = inlined_call_operand.hbm [shape: f32[576,128], index: 5, kind: input, shape index: {}]
  %s6 = inlined_call_operand.hbm [shape: f32[1,128], index: 6, kind: input, shape index: {}]
  %s7 = inlined_call_operand.hbm [shape: f32[1536,512], index: 7, kind: input, shape index: {}]
  %s8 = inlined_call_operand.hbm [shape: f32[1,512], index: 8, kind: input, shape index: {}]
  %s9 = inlined_call_operand.hbm [shape: f32[1,512], index: 9, kind: input, shape index: {}]
  %s10 = inlined_call_operand.<no memory space> [shape: f32[1,1], index: 10, kind: input, shape index: {}]
  %s11 = inlined_call_operand.vmem [shape: f32[2,1,1], index: 11, kind: output, shape index: {}]
  %s12 = sld [smem:[#allocation0]]
  $region109: #{net_forward.1} parent=0
    _
  %s14 = ssub.s32 1, %s12
  %s15 = scalar_select 0, %s14, %s12
  %v16 = vstv %s10
  %17 = vst [vmem:[#allocation2] sm:$0x1] %v16
  $region1: #{net_forward.1} parent=0
    #allocation3 [shape = 'u8[8192]{0}', space=vmem, size = 0x2000, scoped, tag = 'input window, operand 1, single buffered']
    #allocation4 [shape = 's32[2]{0}', space=sflag, size = 0x8, scoped, tag = 'scoped memory for net_forward.1']
    #allocation5 [shape = 'u8[512]{0}', space=vmem, size = 0x400, scoped, tag = 'input window, operand 2, single buffered']
    #allocation6 [shape = 's32[1]{0}', space=sflag, size = 0x4, scoped, tag = 'scoped memory for net_forward.1']
    #allocation7 [shape = 'u8[512]{0}', space=vmem, size = 0x400, scoped, tag = 'input window, operand 4, single buffered']
    #allocation8 [shape = 'u8[294912]{0}', space=vmem, size = 0x48000, scoped, tag = 'input window, operand 5, single buffered']
    #allocation9 [shape = 's32[1]{0}', space=sflag, size = 0x4, scoped, tag = 'scoped memory for net_forward.1']
    #allocation10 [shape = 'u8[512]{0}', space=vmem, size = 0x400, scoped, tag = 'input window, operand 6, single buffered']
    #allocation11 [shape = 'u8[3145728]{0}', space=vmem, size = 0x300000, scoped, tag = 'input window, operand 7, single buffered']
    #allocation12 [shape = 's32[1]{0}', space=sflag, size = 0x4, scoped, tag = 'scoped memory for net_forward.1']
    #allocation13 [shape = 'u8[2048]{0}', space=vmem, size = 0x800, scoped, tag = 'input window, operand 8, single buffered']
    #allocation14 [shape = 'u8[2048]{0}', space=vmem, size = 0x800, scoped, tag = 'input window, operand 9, single buffered']
    #allocation15 [shape = 's32[1]{0}', space=sflag, size = 0x4, scoped, tag = 'scoped memory for net_forward.1']
    %18 = vsyncpa [#allocation4], 0
    %19 = vsyncpa [#allocation6], 0
    %20 = vsyncpa [#allocation9], 0
    %21 = vsyncpa [#allocation12], 0
    %22 = vsyncpa [#allocation15], 0
    loop: start=0, step=1, limit=4
    $region2: #{net_forward.1} parent=1 // loop_pre_header
      _
    $region3: #{net_forward.1} parent=1 // loop_header
      %s24 = sphi 0, %s28
      %p25 = scmp.ge.s32.totalorder %s24, 4
      %s34 = sphi 0, %s36
      %s37 = sphi 0, %s34
      %s38 = sphi 0, %s37
      %s54 = sphi 0, %s38
      %s58 = sphi 0, %s58
      %s60 = sphi 0, %s58
      %s61 = sphi 0, %s60
      %s75 = sphi 0, %s61
      %s79 = sphi 0, %s79
      %s81 = sphi 0, %s79
      %s82 = sphi 0, %s81
      %s96 = sphi 0, %s82
      %s100 = sphi 0, %s100
      %s102 = sphi 0, %s100
      %s103 = sphi 0, %s102
      %s117 = sphi 0, %s103
      %s121 = sphi 0, %s121
      %s123 = sphi 0, %s121
      %s124 = sphi 0, %s123
      %s138 = sphi 0, %s124
      %s142 = sphi 0, %s142
      %s144 = sphi 0, %s142
      %s145 = sphi 0, %s144
      %s159 = sphi 0, %s145
      %s163 = sphi 0, %s163
      %s165 = sphi 0, %s163
      %s166 = sphi 0, %s165
      %s180 = sphi 0, %s166
      %s184 = sphi 0, %s184
      %s186 = sphi 0, %s184
      %s187 = sphi 0, %s186
      %s201 = sphi 0, %s187
      %s205 = sphi 0, %s205
      %s207 = sphi 0, %s205
      %s208 = sphi 0, %s207
      %s222 = sphi 0, %s208
      %s226 = sphi 0, %s226
      %s228 = sphi 0, %s226
      %s229 = sphi 0, %s228
      %s243 = sphi 0, %s229
      %s247 = sphi 0, %s247
      %s249 = sphi 0, %s247
      %s250 = sphi 0, %s249
      %s264 = sphi 0, %s250
      %s270 = sphi 0, %s272
      %s273 = sphi 0, %s270
      %s274 = sphi 0, %s273
      %s290 = sphi 0, %s274
    $region4: #{net_forward.1} parent=1 // loop_header_branch
      %27 = sbr.rel (%p25) target = $region8
    $region5: #{net_forward.1} parent=1 // loop_body
      %s29 = ssub.s32 %s24, 1
      %s30 = ssub.s32 %s24, 2
      %s31 = sadd.s32 %s24, 1
      %s32 = ssub.s32 %s24, %s31
      %p33 = scmp.eq.s32.totalorder %s32, 0
      %s35 = sadd.s32 %s34, 1
      %s36 = scalar_select %p33, %s34, %s35
      %p39 = pneg %p33
      %p40 = scmp.eq.s32.totalorder %s24, 1
      %p41 = por %p39, %p40
      %p42 = scmp.ne.s32.totalorder %s34, %s37
      %p43 = scmp.eq.s32.totalorder %s24, 0
      %p44 = por %p42, %p43
      %p45 = scmp.ne.s32.totalorder %s34, %s37
      %p46 = scmp.eq.s32.totalorder %s29, 1
      %p47 = por %p45, %p46
      %p48 = scmp.ne.s32.totalorder %s37, %s38
      %p49 = scmp.eq.s32.totalorder %s29, 0
      %p50 = por %p48, %p49
      %p51 = scmp.ne.s32.totalorder %s37, %s38
      %p52 = scmp.eq.s32.totalorder %s30, 1
      %p53 = por %p51, %p52
      %p55 = scmp.ne.s32.totalorder %s38, %s54
      %p56 = scmp.eq.s32.totalorder %s30, 0
      %p57 = por %p55, %p56
      %s59 = sadd.s32 %s58, 1
      %p62 = scmp.eq.s32.totalorder %s24, 1
      %p63 = scmp.ne.s32.totalorder %s58, %s60
      %p64 = scmp.eq.s32.totalorder %s24, 0
      %p65 = por %p63, %p64
      %p66 = scmp.ne.s32.totalorder %s58, %s60
      %p67 = scmp.eq.s32.totalorder %s29, 1
      %p68 = por %p66, %p67
      %p69 = scmp.ne.s32.totalorder %s60, %s61
      %p70 = scmp.eq.s32.totalorder %s29, 0
      %p71 = por %p69, %p70
      %p72 = scmp.ne.s32.totalorder %s60, %s61
      %p73 = scmp.eq.s32.totalorder %s30, 1
      %p74 = por %p72, %p73
      %p76 = scmp.ne.s32.totalorder %s61, %s75
      %p77 = scmp.eq.s32.totalorder %s30, 0
      %p78 = por %p76, %p77
      %s80 = sadd.s32 %s79, 1
      %p83 = scmp.eq.s32.totalorder %s24, 1
      %p84 = scmp.ne.s32.totalorder %s79, %s81
      %p85 = scmp.eq.s32.totalorder %s24, 0
      %p86 = por %p84, %p85
      %p87 = scmp.ne.s32.totalorder %s79, %s81
      %p88 = scmp.eq.s32.totalorder %s29, 1
      %p89 = por %p87, %p88
      %p90 = scmp.ne.s32.totalorder %s81, %s82
      %p91 = scmp.eq.s32.totalorder %s29, 0
      %p92 = por %p90, %p91
      %p93 = scmp.ne.s32.totalorder %s81, %s82
      %p94 = scmp.eq.s32.totalorder %s30, 1
      %p95 = por %p93, %p94
      %p97 = scmp.ne.s32.totalorder %s82, %s96
      %p98 = scmp.eq.s32.totalorder %s30, 0
      %p99 = por %p97, %p98
      %s101 = sadd.s32 %s100, 1
      %p104 = scmp.eq.s32.totalorder %s24, 1
      %p105 = scmp.ne.s32.totalorder %s100, %s102
      %p106 = scmp.eq.s32.totalorder %s24, 0
      %p107 = por %p105, %p106
      %p108 = scmp.ne.s32.totalorder %s100, %s102
      %p109 = scmp.eq.s32.totalorder %s29, 1
      %p110 = por %p108, %p109
      %p111 = scmp.ne.s32.totalorder %s102, %s103
      %p112 = scmp.eq.s32.totalorder %s29, 0
      %p113 = por %p111, %p112
      %p114 = scmp.ne.s32.totalorder %s102, %s103
      %p115 = scmp.eq.s32.totalorder %s30, 1
      %p116 = por %p114, %p115
      %p118 = scmp.ne.s32.totalorder %s103, %s117
      %p119 = scmp.eq.s32.totalorder %s30, 0
      %p120 = por %p118, %p119
      %s122 = sadd.s32 %s121, 1
      %p125 = scmp.eq.s32.totalorder %s24, 1
      %p126 = scmp.ne.s32.totalorder %s121, %s123
      %p127 = scmp.eq.s32.totalorder %s24, 0
      %p128 = por %p126, %p127
      %p129 = scmp.ne.s32.totalorder %s121, %s123
      %p130 = scmp.eq.s32.totalorder %s29, 1
      %p131 = por %p129, %p130
      %p132 = scmp.ne.s32.totalorder %s123, %s124
      %p133 = scmp.eq.s32.totalorder %s29, 0
      %p134 = por %p132, %p133
      %p135 = scmp.ne.s32.totalorder %s123, %s124
      %p136 = scmp.eq.s32.totalorder %s30, 1
      %p137 = por %p135, %p136
      %p139 = scmp.ne.s32.totalorder %s124, %s138
      %p140 = scmp.eq.s32.totalorder %s30, 0
      %p141 = por %p139, %p140
      %s143 = sadd.s32 %s142, 1
      %p146 = scmp.eq.s32.totalorder %s24, 1
      %p147 = scmp.ne.s32.totalorder %s142, %s144
      %p148 = scmp.eq.s32.totalorder %s24, 0
      %p149 = por %p147, %p148
      %p150 = scmp.ne.s32.totalorder %s142, %s144
      %p151 = scmp.eq.s32.totalorder %s29, 1
      %p152 = por %p150, %p151
      %p153 = scmp.ne.s32.totalorder %s144, %s145
      %p154 = scmp.eq.s32.totalorder %s29, 0
      %p155 = por %p153, %p154
      %p156 = scmp.ne.s32.totalorder %s144, %s145
      %p157 = scmp.eq.s32.totalorder %s30, 1
      %p158 = por %p156, %p157
      %p160 = scmp.ne.s32.totalorder %s145, %s159
      %p161 = scmp.eq.s32.totalorder %s30, 0
      %p162 = por %p160, %p161
      %s164 = sadd.s32 %s163, 1
      %p167 = scmp.eq.s32.totalorder %s24, 1
      %p168 = scmp.ne.s32.totalorder %s163, %s165
      %p169 = scmp.eq.s32.totalorder %s24, 0
      %p170 = por %p168, %p169
      %p171 = scmp.ne.s32.totalorder %s163, %s165
      %p172 = scmp.eq.s32.totalorder %s29, 1
      %p173 = por %p171, %p172
      %p174 = scmp.ne.s32.totalorder %s165, %s166
      %p175 = scmp.eq.s32.totalorder %s29, 0
      %p176 = por %p174, %p175
      %p177 = scmp.ne.s32.totalorder %s165, %s166
      %p178 = scmp.eq.s32.totalorder %s30, 1
      %p179 = por %p177, %p178
      %p181 = scmp.ne.s32.totalorder %s166, %s180
      %p182 = scmp.eq.s32.totalorder %s30, 0
      %p183 = por %p181, %p182
      %s185 = sadd.s32 %s184, 1
      %p188 = scmp.eq.s32.totalorder %s24, 1
      %p189 = scmp.ne.s32.totalorder %s184, %s186
      %p190 = scmp.eq.s32.totalorder %s24, 0
      %p191 = por %p189, %p190
      %p192 = scmp.ne.s32.totalorder %s184, %s186
      %p193 = scmp.eq.s32.totalorder %s29, 1
      %p194 = por %p192, %p193
      %p195 = scmp.ne.s32.totalorder %s186, %s187
      %p196 = scmp.eq.s32.totalorder %s29, 0
      %p197 = por %p195, %p196
      %p198 = scmp.ne.s32.totalorder %s186, %s187
      %p199 = scmp.eq.s32.totalorder %s30, 1
      %p200 = por %p198, %p199
      %p202 = scmp.ne.s32.totalorder %s187, %s201
      %p203 = scmp.eq.s32.totalorder %s30, 0
      %p204 = por %p202, %p203
      %s206 = sadd.s32 %s205, 1
      %p209 = scmp.eq.s32.totalorder %s24, 1
      %p210 = scmp.ne.s32.totalorder %s205, %s207
      %p211 = scmp.eq.s32.totalorder %s24, 0
      %p212 = por %p210, %p211
      %p213 = scmp.ne.s32.totalorder %s205, %s207
      %p214 = scmp.eq.s32.totalorder %s29, 1
      %p215 = por %p213, %p214
      %p216 = scmp.ne.s32.totalorder %s207, %s208
      %p217 = scmp.eq.s32.totalorder %s29, 0
      %p218 = por %p216, %p217
      %p219 = scmp.ne.s32.totalorder %s207, %s208
      %p220 = scmp.eq.s32.totalorder %s30, 1
      %p221 = por %p219, %p220
      %p223 = scmp.ne.s32.totalorder %s208, %s222
      %p224 = scmp.eq.s32.totalorder %s30, 0
      %p225 = por %p223, %p224
      %s227 = sadd.s32 %s226, 1
      %p230 = scmp.eq.s32.totalorder %s24, 1
      %p231 = scmp.ne.s32.totalorder %s226, %s228
      %p232 = scmp.eq.s32.totalorder %s24, 0
      %p233 = por %p231, %p232
      %p234 = scmp.ne.s32.totalorder %s226, %s228
      %p235 = scmp.eq.s32.totalorder %s29, 1
      %p236 = por %p234, %p235
      %p237 = scmp.ne.s32.totalorder %s228, %s229
      %p238 = scmp.eq.s32.totalorder %s29, 0
      %p239 = por %p237, %p238
      %p240 = scmp.ne.s32.totalorder %s228, %s229
      %p241 = scmp.eq.s32.totalorder %s30, 1
      %p242 = por %p240, %p241
      %p244 = scmp.ne.s32.totalorder %s229, %s243
      %p245 = scmp.eq.s32.totalorder %s30, 0
      %p246 = por %p244, %p245
      %s248 = sadd.s32 %s247, 1
      %p251 = scmp.eq.s32.totalorder %s24, 1
      %p252 = scmp.ne.s32.totalorder %s247, %s249
      %p253 = scmp.eq.s32.totalorder %s24, 0
      %p254 = por %p252, %p253
      %p255 = scmp.ne.s32.totalorder %s247, %s249
      %p256 = scmp.eq.s32.totalorder %s29, 1
      %p257 = por %p255, %p256
      %p258 = scmp.ne.s32.totalorder %s249, %s250
      %p259 = scmp.eq.s32.totalorder %s29, 0
      %p260 = por %p258, %p259
      %p261 = scmp.ne.s32.totalorder %s249, %s250
      %p262 = scmp.eq.s32.totalorder %s30, 1
      %p263 = por %p261, %p262
      %p265 = scmp.ne.s32.totalorder %s250, %s264
      %p266 = scmp.eq.s32.totalorder %s30, 0
      %p267 = por %p265, %p266
      %s268 = ssub.s32 %s24, %s31
      %p269 = scmp.eq.s32.totalorder %s268, 0
      %s271 = sadd.s32 %s270, 1
      %s272 = scalar_select %p269, %s270, %s271
      %p275 = pneg %p269
      %p276 = scmp.eq.s32.totalorder %s24, 1
      %p277 = por %p275, %p276
      %p278 = scmp.ne.s32.totalorder %s270, %s273
      %p279 = scmp.eq.s32.totalorder %s24, 0
      %p280 = por %p278, %p279
      %p281 = scmp.ne.s32.totalorder %s270, %s273
      %p282 = scmp.eq.s32.totalorder %s29, 1
      %p283 = por %p281, %p282
      %p284 = scmp.ne.s32.totalorder %s273, %s274
      %p285 = scmp.eq.s32.totalorder %s29, 0
      %p286 = por %p284, %p285
      %p287 = scmp.ne.s32.totalorder %s273, %s274
      %p288 = scmp.eq.s32.totalorder %s30, 1
      %p289 = por %p287, %p288
      %p291 = scmp.ne.s32.totalorder %s274, %s290
      %p292 = scmp.eq.s32.totalorder %s30, 0
      %p293 = por %p291, %p292
      %p294 = scmp.le.s32.totalorder 1, %s24
      %p295 = scmp.lt.s32.totalorder %s24, 3
      %p296 = pnand %p294, %p295
      %p297 = pneg %p296
      // Predicated region
      $region9: #{net_forward.1} parent=5 // pred_check
        _
      $region10: #{net_forward.1} parent=5 // pred_check_branch
        %299 = sbr.rel (%p296) target = $region12
      $region11: #{net_forward.1} parent=5 // pred_region
        %s300 = ssub.s32 %s24, 1
        // Predicated region
        $region13: #{net_forward.1} parent=11 // pred_check
          %p301 = pneg %p71
        $region14: #{net_forward.1} parent=11 // pred_check_branch
          %303 = sbr.rel (%p301) target = $region16
        $region15: #{net_forward.1} parent=11 // pred_region
          %s305 = ssub.s32 256, 256
          %306 = vsyncadd [#allocation4], %s305
          %s307 = sshll.u32 [#allocation3], 4
          %s308 = int_to_ptr.vmem [resolvable:$true] %s307
          %313 = dma.hbm_to_vmem [thread:$0]  %s1, 256, %s308, [#allocation4], 128, 128, 8
        $region16: #{net_forward.1} parent=11 // pred_fallthru
          _
        // Predicated region
        $region17: #{net_forward.1} parent=11 // pred_check
          %p314 = pneg %p92
        $region18: #{net_forward.1} parent=11 // pred_check_branch
          %316 = sbr.rel (%p314) target = $region20
        $region19: #{net_forward.1} parent=11 // pred_region
          %s318 = ssub.s32 16, 16
          %319 = vsyncadd [#allocation6], %s318
          %s321 = sshll.u32 [#allocation5], 4
          %s322 = int_to_ptr.vmem [resolvable:$true] %s321
          %324 = dma.hbm_to_vmem [thread:$0]  %s2, 16, %s322, [#allocation6]
        $region20: #{net_forward.1} parent=11 // pred_fallthru
          _
        // Predicated region
        $region21: #{net_forward.1} parent=11 // pred_check
          %p325 = pneg %p113
        $region22: #{net_forward.1} parent=11 // pred_check_branch
          %327 = sbr.rel (%p325) target = $region24
        $region23: #{net_forward.1} parent=11 // pred_region
          _
        $region24: #{net_forward.1} parent=11 // pred_fallthru
          _
        // Predicated region
        $region25: #{net_forward.1} parent=11 // pred_check
          %p328 = pneg %p134
        $region26: #{net_forward.1} parent=11 // pred_check_branch
          %330 = sbr.rel (%p328) target = $region28
        $region27: #{net_forward.1} parent=11 // pred_region
          %s332 = ssub.s32 16, 16
          %333 = vsyncadd [#allocation6], %s332
          %s335 = sshll.u32 [#allocation7], 4
          %s336 = int_to_ptr.vmem [resolvable:$true] %s335
          %338 = dma.hbm_to_vmem [thread:$0]  %s4, 16, %s336, [#allocation6]
        $region28: #{net_forward.1} parent=11 // pred_fallthru
          _
        // Predicated region
        $region29: #{net_forward.1} parent=11 // pred_check
          %p339 = pneg %p155
        $region30: #{net_forward.1} parent=11 // pred_check_branch
          %341 = sbr.rel (%p339) target = $region32
        $region31: #{net_forward.1} parent=11 // pred_region
          %s343 = ssub.s32 9216, 9216
          %344 = vsyncadd [#allocation9], %s343
          %s345 = sshll.u32 [#allocation8], 4
          %s346 = int_to_ptr.vmem [resolvable:$true] %s345
          %351 = dma.hbm_to_vmem [thread:$0]  %s5, 9216, %s346, [#allocation9], 128, 128, 8
        $region32: #{net_forward.1} parent=11 // pred_fallthru
          _
        // Predicated region
        $region33: #{net_forward.1} parent=11 // pred_check
          %p352 = pneg %p176
        $region34: #{net_forward.1} parent=11 // pred_check_branch
          %354 = sbr.rel (%p352) target = $region36
        $region35: #{net_forward.1} parent=11 // pred_region
          %s356 = ssub.s32 16, 16
          %357 = vsyncadd [#allocation9], %s356
          %s359 = sshll.u32 [#allocation10], 4
          %s360 = int_to_ptr.vmem [resolvable:$true] %s359
          %362 = dma.hbm_to_vmem [thread:$0]  %s6, 16, %s360, [#allocation9]
        $region36: #{net_forward.1} parent=11 // pred_fallthru
          _
        // Predicated region
        $region37: #{net_forward.1} parent=11 // pred_check
          %p363 = pneg %p197
        $region38: #{net_forward.1} parent=11 // pred_check_branch
          %365 = sbr.rel (%p363) target = $region40
        $region39: #{net_forward.1} parent=11 // pred_region
          %s367 = ssub.s32 98304, 98304
          %368 = vsyncadd [#allocation12], %s367
          %s369 = sshll.u32 [#allocation11], 4
          %s370 = int_to_ptr.vmem [resolvable:$true] %s369
          %375 = dma.hbm_to_vmem [thread:$0]  %s7, 98304, %s370, [#allocation12], 512, 512, 32
        $region40: #{net_forward.1} parent=11 // pred_fallthru
          _
        // Predicated region
        $region41: #{net_forward.1} parent=11 // pred_check
          %p376 = pneg %p218
        $region42: #{net_forward.1} parent=11 // pred_check_branch
          %378 = sbr.rel (%p376) target = $region44
        $region43: #{net_forward.1} parent=11 // pred_region
          %s380 = ssub.s32 64, 64
          %381 = vsyncadd [#allocation12], %s380
          %s383 = sshll.u32 [#allocation13], 4
          %s384 = int_to_ptr.vmem [resolvable:$true] %s383
          %386 = dma.hbm_to_vmem [thread:$0]  %s8, 64, %s384, [#allocation12]
        $region44: #{net_forward.1} parent=11 // pred_fallthru
          _
        // Predicated region
        $region45: #{net_forward.1} parent=11 // pred_check
          %p387 = pneg %p239
        $region46: #{net_forward.1} parent=11 // pred_check_branch
          %389 = sbr.rel (%p387) target = $region48
        $region47: #{net_forward.1} parent=11 // pred_region
          %s391 = ssub.s32 64, 64
          %392 = vsyncadd [#allocation15], %s391
          %s394 = sshll.u32 [#allocation14], 4
          %s395 = int_to_ptr.vmem [resolvable:$true] %s394
          %397 = dma.hbm_to_vmem [thread:$0]  %s9, 64, %s395, [#allocation15]
        $region48: #{net_forward.1} parent=11 // pred_fallthru
          _
        // Predicated region
        $region49: #{net_forward.1} parent=11 // pred_check
          %p398 = pneg %p260
        $region50: #{net_forward.1} parent=11 // pred_check_branch
          %400 = sbr.rel (%p398) target = $region52
        $region51: #{net_forward.1} parent=11 // pred_region
          _
        $region52: #{net_forward.1} parent=11 // pred_fallthru
          _
      $region12: #{net_forward.1} parent=5 // pred_fallthru
        _
      %p401 = scmp.lt.s32.totalorder %s24, 2
      // Predicated region
      $region53: #{net_forward.1} parent=5 // pred_check
        %p402 = pneg %p401
      $region54: #{net_forward.1} parent=5 // pred_check_branch
        %404 = sbr.rel (%p402) target = $region56
      $region55: #{net_forward.1} parent=5 // pred_region
        // Predicated region
        $region57: #{net_forward.1} parent=55 // pred_check
          %p405 = pneg %p44
        $region58: #{net_forward.1} parent=55 // pred_check_branch
          %407 = sbr.rel (%p405) target = $region60
        $region59: #{net_forward.1} parent=55 // pred_region
          %p408 = scmp.lt.s32.totalorder %s24, 1
          %s409 = scalar_select %p408, %s24, 1
          %s410 = smul.addr %s409, 96
          %s411 = smul.addr %s410, 8
          %s412 = scalar_lea.vmem %s0, %s411
        $region60: #{net_forward.1} parent=55 // pred_fallthru
          _
      $region56: #{net_forward.1} parent=5 // pred_fallthru
        _
      %p413 = scmp.le.s32.totalorder 1, %s24
      %p414 = scmp.lt.s32.totalorder %s24, 3
      %p415 = pnand %p413, %p414
      %p416 = pneg %p415
      // Predicated region
      $region61: #{net_forward.1} parent=5 // pred_check
        _
      $region62: #{net_forward.1} parent=5 // pred_check_branch
        %418 = sbr.rel (%p415) target = $region64
      $region63: #{net_forward.1} parent=5 // pred_region
        %s419 = ssub.s32 %s24, 1
        // Predicated region
        $region65: #{net_forward.1} parent=63 // pred_check
          %p420 = pneg %p71
        $region66: #{net_forward.1} parent=63 // pred_check_branch
          %422 = sbr.rel (%p420) target = $region68
        $region67: #{net_forward.1} parent=63 // pred_region
          %423 = dma.done [#allocation4], 256
        $region68: #{net_forward.1} parent=63 // pred_fallthru
          _
        // Predicated region
        $region69: #{net_forward.1} parent=63 // pred_check
          %p424 = pneg %p92
        $region70: #{net_forward.1} parent=63 // pred_check_branch
          %426 = sbr.rel (%p424) target = $region72
        $region71: #{net_forward.1} parent=63 // pred_region
          %427 = dma.done [#allocation6], 16
        $region72: #{net_forward.1} parent=63 // pred_fallthru
          _
        // Predicated region
        $region73: #{net_forward.1} parent=63 // pred_check
          %p428 = pneg %p134
        $region74: #{net_forward.1} parent=63 // pred_check_branch
          %430 = sbr.rel (%p428) target = $region76
        $region75: #{net_forward.1} parent=63 // pred_region
          %431 = dma.done [#allocation6], 16
        $region76: #{net_forward.1} parent=63 // pred_fallthru
          _
        // Predicated region
        $region77: #{net_forward.1} parent=63 // pred_check
          %p432 = pneg %p155
        $region78: #{net_forward.1} parent=63 // pred_check_branch
          %434 = sbr.rel (%p432) target = $region80
        $region79: #{net_forward.1} parent=63 // pred_region
          %435 = dma.done [#allocation9], 9216
        $region80: #{net_forward.1} parent=63 // pred_fallthru
          _
        // Predicated region
        $region81: #{net_forward.1} parent=63 // pred_check
          %p436 = pneg %p176
        $region82: #{net_forward.1} parent=63 // pred_check_branch
          %438 = sbr.rel (%p436) target = $region84
        $region83: #{net_forward.1} parent=63 // pred_region
          %439 = dma.done [#allocation9], 16
        $region84: #{net_forward.1} parent=63 // pred_fallthru
          _
        // Predicated region
        $region85: #{net_forward.1} parent=63 // pred_check
          %p440 = pneg %p197
        $region86: #{net_forward.1} parent=63 // pred_check_branch
          %442 = sbr.rel (%p440) target = $region88
        $region87: #{net_forward.1} parent=63 // pred_region
          %443 = dma.done [#allocation12], 98304
        $region88: #{net_forward.1} parent=63 // pred_fallthru
          _
        // Predicated region
        $region89: #{net_forward.1} parent=63 // pred_check
          %p444 = pneg %p218
        $region90: #{net_forward.1} parent=63 // pred_check_branch
          %446 = sbr.rel (%p444) target = $region92
        $region91: #{net_forward.1} parent=63 // pred_region
          %447 = dma.done [#allocation12], 64
        $region92: #{net_forward.1} parent=63 // pred_fallthru
          _
        // Predicated region
        $region93: #{net_forward.1} parent=63 // pred_check
          %p448 = pneg %p239
        $region94: #{net_forward.1} parent=63 // pred_check_branch
          %450 = sbr.rel (%p448) target = $region96
        $region95: #{net_forward.1} parent=63 // pred_region
          %451 = dma.done [#allocation15], 64
        $region96: #{net_forward.1} parent=63 // pred_fallthru
          _
        %p452 = scmp.lt.s32.totalorder %s29, 1
        %s453 = scalar_select %p452, %s29, 1
        %s454 = smul.addr %s453, 96
        %s455 = smul.addr %s454, 8
        %s456 = scalar_lea.vmem %s0, %s455
        %p457 = pneg %p50
        %p458 = pneg %p47
        %p459 = pneg %p71
        %p460 = pneg %p68
        %p461 = pneg %p92
        %p462 = pneg %p89
        %p463 = pneg %p113
        %p464 = pneg %p110
        %p465 = pneg %p134
        %p466 = pneg %p131
        %p467 = pneg %p155
        %p468 = pneg %p152
        %p469 = pneg %p176
        %p470 = pneg %p173
        %p471 = pneg %p197
        %p472 = pneg %p194
        %p473 = pneg %p218
        %p474 = pneg %p215
        %p475 = pneg %p239
        %p476 = pneg %p236
        %p477 = pneg %p260
        %p478 = pneg %p257
        %p479 = pneg %p286
        %p480 = pneg %p283
        %p481 = scmp.lt.s32.totalorder %s29, 1
        %s482 = scalar_select %p481, %s29, 1
        %s483 = scalar_lea.vmem %s11, %s482
        %p484 = scmp.lt.s32.totalorder %s29, 1
        %s485 = scalar_select %p484, %s29, 1
        %s486 = smul.addr %s485, 96
        %s487 = smul.addr %s486, 8
        %s488 = scalar_lea.vmem %s0, %s487
        %p489 = scmp.lt.s32.totalorder %s29, 1
        %s490 = scalar_select %p489, %s29, 1
        %s491 = scalar_lea.vmem %s11, %s490
        %v492 = vld [vmem:[%s488] sm:$0xff]
        %v493 = vld [vmem:[%s488 + $0x8] sm:$0xff]
        %v494 = vld [vmem:[%s488 + $0x10] sm:$0xff]
        %v495 = vld [vmem:[%s488 + $0x18] sm:$0xff]
        %v496 = vld [vmem:[%s488 + $0x20] sm:$0xff]
        %v497 = vld [vmem:[%s488 + $0x28] sm:$0xff]
        %v498 = vld [vmem:[%s488 + $0x30] sm:$0xff]
        %v499 = vld [vmem:[%s488 + $0x38] sm:$0xff]
        %v500 = vld [vmem:[%s488 + $0x40] sm:$0xff]
        %v501 = vld [vmem:[%s488 + $0x48] sm:$0xff]
        %v502 = vld [vmem:[%s488 + $0x50] sm:$0xff]
        %v503 = vld [vmem:[%s488 + $0x58] sm:$0xff]
        %v504 = vld [vmem:[%s488 + $0x60] sm:$0xff]
        %v505 = vld [vmem:[%s488 + $0x68] sm:$0xff]
        %v506 = vld [vmem:[%s488 + $0x70] sm:$0xff]
        %v507 = vld [vmem:[%s488 + $0x78] sm:$0xff]
        %v508 = vld [vmem:[%s488 + $0x80] sm:$0xff]
        %v509 = vld [vmem:[%s488 + $0x88] sm:$0xff]
        %v510 = vld [vmem:[%s488 + $0x90] sm:$0xff]
        %v511 = vld [vmem:[%s488 + $0x98] sm:$0xff]
        %v512 = vld [vmem:[%s488 + $0xa0] sm:$0xff]
        %v513 = vld [vmem:[%s488 + $0xa8] sm:$0xff]
        %v514 = vld [vmem:[%s488 + $0xb0] sm:$0xff]
        %v515 = vld [vmem:[%s488 + $0xb8] sm:$0xff]
        %v516 = vld [vmem:[%s488 + $0xc0] sm:$0xff]
        %v517 = vld [vmem:[%s488 + $0xc8] sm:$0xff]
        %v518 = vld [vmem:[%s488 + $0xd0] sm:$0xff]
        %v519 = vld [vmem:[%s488 + $0xd8] sm:$0xff]
        %v520 = vld [vmem:[%s488 + $0xe0] sm:$0xff]
        %v521 = vld [vmem:[%s488 + $0xe8] sm:$0xff]
        %v522 = vld [vmem:[%s488 + $0xf0] sm:$0xff]
        %v523 = vld [vmem:[%s488 + $0xf8] sm:$0xff]
        %v524 = vld [vmem:[%s488 + $0x100] sm:$0xff]
        %v525 = vld [vmem:[%s488 + $0x108] sm:$0xff]
        %v526 = vld [vmem:[%s488 + $0x110] sm:$0xff]
        %v527 = vld [vmem:[%s488 + $0x118] sm:$0xff]
        %v528 = vld [vmem:[%s488 + $0x120] sm:$0xff]
        %v529 = vld [vmem:[%s488 + $0x128] sm:$0xff]
        %v530 = vld [vmem:[%s488 + $0x130] sm:$0xff]
        %v531 = vld [vmem:[%s488 + $0x138] sm:$0xff]
        %v532 = vld [vmem:[%s488 + $0x140] sm:$0xff]
        %v533 = vld [vmem:[%s488 + $0x148] sm:$0xff]
        %v534 = vld [vmem:[%s488 + $0x150] sm:$0xff]
        %v535 = vld [vmem:[%s488 + $0x158] sm:$0xff]
        %v536 = vld [vmem:[%s488 + $0x160] sm:$0xff]
        %v537 = vld [vmem:[%s488 + $0x168] sm:$0xff]
        %v538 = vld [vmem:[%s488 + $0x170] sm:$0xff]
        %v539 = vld [vmem:[%s488 + $0x178] sm:$0xff]
        %v540 = vld [vmem:[%s488 + $0x180] sm:$0xff]
        %v541 = vld [vmem:[%s488 + $0x188] sm:$0xff]
        %v542 = vld [vmem:[%s488 + $0x190] sm:$0xff]
        %v543 = vld [vmem:[%s488 + $0x198] sm:$0xff]
        %v544 = vld [vmem:[%s488 + $0x1a0] sm:$0xff]
        %v545 = vld [vmem:[%s488 + $0x1a8] sm:$0xff]
        %v546 = vld [vmem:[%s488 + $0x1b0] sm:$0xff]
        %v547 = vld [vmem:[%s488 + $0x1b8] sm:$0xff]
        %v548 = vld [vmem:[%s488 + $0x1c0] sm:$0xff]
        %v549 = vld [vmem:[%s488 + $0x1c8] sm:$0xff]
        %v550 = vld [vmem:[%s488 + $0x1d0] sm:$0xff]
        %v551 = vld [vmem:[%s488 + $0x1d8] sm:$0xff]
        %v552 = vld [vmem:[%s488 + $0x1e0] sm:$0xff]
        %v553 = vld [vmem:[%s488 + $0x1e8] sm:$0xff]
        %v554 = vld [vmem:[%s488 + $0x1f0] sm:$0xff]
        %v555 = vld [vmem:[%s488 + $0x1f8] sm:$0xff]
        %v556 = vld [vmem:[%s488 + $0x200] sm:$0xff]
        %v557 = vld [vmem:[%s488 + $0x208] sm:$0xff]
        %v558 = vld [vmem:[%s488 + $0x210] sm:$0xff]
        %v559 = vld [vmem:[%s488 + $0x218] sm:$0xff]
        %v560 = vld [vmem:[%s488 + $0x220] sm:$0xff]
        %v561 = vld [vmem:[%s488 + $0x228] sm:$0xff]
        %v562 = vld [vmem:[%s488 + $0x230] sm:$0xff]
        %v563 = vld [vmem:[%s488 + $0x238] sm:$0xff]
        %v564 = vld [vmem:[%s488 + $0x240] sm:$0xff]
        %v565 = vld [vmem:[%s488 + $0x248] sm:$0xff]
        %v566 = vld [vmem:[%s488 + $0x250] sm:$0xff]
        %v567 = vld [vmem:[%s488 + $0x258] sm:$0xff]
        %v568 = vld [vmem:[%s488 + $0x260] sm:$0xff]
        %v569 = vld [vmem:[%s488 + $0x268] sm:$0xff]
        %v570 = vld [vmem:[%s488 + $0x270] sm:$0xff]
        %v571 = vld [vmem:[%s488 + $0x278] sm:$0xff]
        %v572 = vld [vmem:[%s488 + $0x280] sm:$0xff]
        %v573 = vld [vmem:[%s488 + $0x288] sm:$0xff]
        %v574 = vld [vmem:[%s488 + $0x290] sm:$0xff]
        %v575 = vld [vmem:[%s488 + $0x298] sm:$0xff]
        %v576 = vld [vmem:[%s488 + $0x2a0] sm:$0xff]
        %v577 = vld [vmem:[%s488 + $0x2a8] sm:$0xff]
        %v578 = vld [vmem:[%s488 + $0x2b0] sm:$0xff]
        %v579 = vld [vmem:[%s488 + $0x2b8] sm:$0xff]
        %v580 = vld [vmem:[%s488 + $0x2c0] sm:$0xff]
        %v581 = vld [vmem:[%s488 + $0x2c8] sm:$0xff]
        %v582 = vld [vmem:[%s488 + $0x2d0] sm:$0xff]
        %v583 = vld [vmem:[%s488 + $0x2d8] sm:$0xff]
        %v584 = vld [vmem:[%s488 + $0x2e0] sm:$0xff]
        %v585 = vld [vmem:[%s488 + $0x2e8] sm:$0xff]
        %v586 = vld [vmem:[%s488 + $0x2f0] sm:$0xff]
        %v587 = vld [vmem:[%s488 + $0x2f8] sm:$0xff]
        %v588 = vld [vmem:[#allocation3] sm:$0xff]
        %v589 = vld [vmem:[#allocation3 + $0x8] sm:$0x1]
        %v590 = vld [vmem:[#allocation5] sm:$0x1]
        %vm684 = vcmask 1040384
        %v685 = vrot.slane 0.0, 7
        %v686 = vsel %vm684, %v685, %v685
        %v687 = vrot.slane %v492, 7
        %v688 = vsel %vm684, %v685, %v687
        %v689 = vrot.slane %v493, 7
        %v690 = vsel %vm684, %v687, %v689
        %v691 = vrot.slane %v494, 7
        %v692 = vsel %vm684, %v689, %v691
        %v693 = vrot.slane %v495, 7
        %v694 = vsel %vm684, %v691, %v693
        %v695 = vrot.slane %v496, 7
        %v696 = vsel %vm684, %v685, %v695
        %v697 = vrot.slane %v497, 7
        %v698 = vsel %vm684, %v695, %v697
        %v699 = vrot.slane %v498, 7
        %v700 = vsel %vm684, %v697, %v699
        %v701 = vrot.slane %v499, 7
        %v702 = vsel %vm684, %v699, %v701
        %v703 = vrot.slane %v500, 7
        %v704 = vsel %vm684, %v685, %v703
        %v705 = vrot.slane %v501, 7
        %v706 = vsel %vm684, %v703, %v705
        %v707 = vrot.slane %v502, 7
        %v708 = vsel %vm684, %v705, %v707
        %v709 = vrot.slane %v503, 7
        %v710 = vsel %vm684, %v707, %v709
        %v711 = vrot.slane %v504, 7
        %v712 = vsel %vm684, %v685, %v711
        %v713 = vrot.slane %v505, 7
        %v714 = vsel %vm684, %v711, %v713
        %v715 = vrot.slane %v506, 7
        %v716 = vsel %vm684, %v713, %v715
        %v717 = vrot.slane %v507, 7
        %v718 = vsel %vm684, %v715, %v717
        %v719 = vrot.slane %v508, 7
        %v720 = vsel %vm684, %v685, %v719
        %v721 = vrot.slane %v509, 7
        %v722 = vsel %vm684, %v719, %v721
        %v723 = vrot.slane %v510, 7
        %v724 = vsel %vm684, %v721, %v723
        %v725 = vrot.slane %v511, 7
        %v726 = vsel %vm684, %v723, %v725
        %v727 = vrot.slane %v512, 7
        %v728 = vsel %vm684, %v685, %v727
        %v729 = vrot.slane %v513, 7
        %v730 = vsel %vm684, %v727, %v729
        %v731 = vrot.slane %v514, 7
        %v732 = vsel %vm684, %v729, %v731
        %v733 = vrot.slane %v515, 7
        %v734 = vsel %vm684, %v731, %v733
        %v735 = vrot.slane %v516, 7
        %v736 = vsel %vm684, %v685, %v735
        %v737 = vrot.slane %v517, 7
        %v738 = vsel %vm684, %v735, %v737
        %v739 = vrot.slane %v518, 7
        %v740 = vsel %vm684, %v737, %v739
        %v741 = vrot.slane %v519, 7
        %v742 = vsel %vm684, %v739, %v741
        %v743 = vrot.slane %v520, 7
        %v744 = vsel %vm684, %v685, %v743
        %v745 = vrot.slane %v521, 7
        %v746 = vsel %vm684, %v743, %v745
        %v747 = vrot.slane %v522, 7
        %v748 = vsel %vm684, %v745, %v747
        %v749 = vrot.slane %v523, 7
        %v750 = vsel %vm684, %v747, %v749
        %v751 = vrot.slane %v524, 7
        %v752 = vsel %vm684, %v685, %v751
        %v753 = vrot.slane %v525, 7
        %v754 = vsel %vm684, %v751, %v753
        %v755 = vrot.slane %v526, 7
        %v756 = vsel %vm684, %v753, %v755
        %v757 = vrot.slane %v527, 7
        %v758 = vsel %vm684, %v755, %v757
        %v759 = vrot.slane %v528, 7
        %v760 = vsel %vm684, %v685, %v759
        %v761 = vrot.slane %v529, 7
        %v762 = vsel %vm684, %v759, %v761
        %v763 = vrot.slane %v530, 7
        %v764 = vsel %vm684, %v761, %v763
        %v765 = vrot.slane %v531, 7
        %v766 = vsel %vm684, %v763, %v765
        %v767 = vrot.slane %v532, 7
        %v768 = vsel %vm684, %v685, %v767
        %v769 = vrot.slane %v533, 7
        %v770 = vsel %vm684, %v767, %v769
        %v771 = vrot.slane %v534, 7
        %v772 = vsel %vm684, %v769, %v771
        %v773 = vrot.slane %v535, 7
        %v774 = vsel %vm684, %v771, %v773
        %v775 = vrot.slane %v536, 7
        %v776 = vsel %vm684, %v685, %v775
        %v777 = vrot.slane %v537, 7
        %v778 = vsel %vm684, %v775, %v777
        %v779 = vrot.slane %v538, 7
        %v780 = vsel %vm684, %v777, %v779
        %v781 = vrot.slane %v539, 7
        %v782 = vsel %vm684, %v779, %v781
        %v783 = vrot.slane %v540, 7
        %v784 = vsel %vm684, %v685, %v783
        %v785 = vrot.slane %v541, 7
        %v786 = vsel %vm684, %v783, %v785
        %v787 = vrot.slane %v542, 7
        %v788 = vsel %vm684, %v785, %v787
        %v789 = vrot.slane %v543, 7
        %v790 = vsel %vm684, %v787, %v789
        %v791 = vrot.slane %v544, 7
        %v792 = vsel %vm684, %v685, %v791
        %v793 = vrot.slane %v545, 7
        %v794 = vsel %vm684, %v791, %v793
        %v795 = vrot.slane %v546, 7
        %v796 = vsel %vm684, %v793, %v795
        %v797 = vrot.slane %v547, 7
        %v798 = vsel %vm684, %v795, %v797
        %v799 = vrot.slane %v548, 7
        %v800 = vsel %vm684, %v685, %v799
        %v801 = vrot.slane %v549, 7
        %v802 = vsel %vm684, %v799, %v801
        %v803 = vrot.slane %v550, 7
        %v804 = vsel %vm684, %v801, %v803
        %v805 = vrot.slane %v551, 7
        %v806 = vsel %vm684, %v803, %v805
        %v807 = vrot.slane %v552, 7
        %v808 = vsel %vm684, %v685, %v807
        %v809 = vrot.slane %v553, 7
        %v810 = vsel %vm684, %v807, %v809
        %v811 = vrot.slane %v554, 7
        %v812 = vsel %vm684, %v809, %v811
        %v813 = vrot.slane %v555, 7
        %v814 = vsel %vm684, %v811, %v813
        %v815 = vrot.slane %v556, 7
        %v816 = vsel %vm684, %v685, %v815
        %v817 = vrot.slane %v557, 7
        %v818 = vsel %vm684, %v815, %v817
        %v819 = vrot.slane %v558, 7
        %v820 = vsel %vm684, %v817, %v819
        %v821 = vrot.slane %v559, 7
        %v822 = vsel %vm684, %v819, %v821
        %v823 = vrot.slane %v560, 7
        %v824 = vsel %vm684, %v685, %v823
        %v825 = vrot.slane %v561, 7
        %v826 = vsel %vm684, %v823, %v825
        %v827 = vrot.slane %v562, 7
        %v828 = vsel %vm684, %v825, %v827
        %v829 = vrot.slane %v563, 7
        %v830 = vsel %vm684, %v827, %v829
        %v831 = vrot.slane %v564, 7
        %v832 = vsel %vm684, %v685, %v831
        %v833 = vrot.slane %v565, 7
        %v834 = vsel %vm684, %v831, %v833
        %v835 = vrot.slane %v566, 7
        %v836 = vsel %vm684, %v833, %v835
        %v837 = vrot.slane %v567, 7
        %v838 = vsel %vm684, %v835, %v837
        %v839 = vrot.slane %v568, 7
        %v840 = vsel %vm684, %v685, %v839
        %v841 = vrot.slane %v569, 7
        %v842 = vsel %vm684, %v839, %v841
        %v843 = vrot.slane %v570, 7
        %v844 = vsel %vm684, %v841, %v843
        %v845 = vrot.slane %v571, 7
        %v846 = vsel %vm684, %v843, %v845
        %v847 = vrot.slane %v572, 7
        %v848 = vsel %vm684, %v685, %v847
        %v849 = vrot.slane %v573, 7
        %v850 = vsel %vm684, %v847, %v849
        %v851 = vrot.slane %v574, 7
        %v852 = vsel %vm684, %v849, %v851
        %v853 = vrot.slane %v575, 7
        %v854 = vsel %vm684, %v851, %v853
        %v855 = vrot.slane %v576, 7
        %v856 = vsel %vm684, %v685, %v855
        %v857 = vrot.slane %v577, 7
        %v858 = vsel %vm684, %v855, %v857
        %v859 = vrot.slane %v578, 7
        %v860 = vsel %vm684, %v857, %v859
        %v861 = vrot.slane %v579, 7
        %v862 = vsel %vm684, %v859, %v861
        %v863 = vrot.slane %v580, 7
        %v864 = vsel %vm684, %v685, %v863
        %v865 = vrot.slane %v581, 7
        %v866 = vsel %vm684, %v863, %v865
        %v867 = vrot.slane %v582, 7
        %v868 = vsel %vm684, %v865, %v867
        %v869 = vrot.slane %v583, 7
        %v870 = vsel %vm684, %v867, %v869
        %vm964 = vcmask 1046528
        %v965 = vrot.slane 0.0, 1
        %v966 = vsel %vm964, %v965, %v965
        %v967 = vrot.slane %v492, 1
        %v968 = vrot.slane %v493, 1
        %v969 = vsel %vm964, %v967, %v968
        %v970 = vrot.slane %v494, 1
        %v971 = vsel %vm964, %v968, %v970
        %v972 = vrot.slane %v495, 1
        %v973 = vsel %vm964, %v970, %v972
        %v974 = vsel %vm964, %v972, %v965
        %v975 = vrot.slane %v496, 1
        %v976 = vrot.slane %v497, 1
        %v977 = vsel %vm964, %v975, %v976
        %v978 = vrot.slane %v498, 1
        %v979 = vsel %vm964, %v976, %v978
        %v980 = vrot.slane %v499, 1
        %v981 = vsel %vm964, %v978, %v980
        %v982 = vsel %vm964, %v980, %v965
        %v983 = vrot.slane %v500, 1
        %v984 = vrot.slane %v501, 1
        %v985 = vsel %vm964, %v983, %v984
        %v986 = vrot.slane %v502, 1
        %v987 = vsel %vm964, %v984, %v986
        %v988 = vrot.slane %v503, 1
        %v989 = vsel %vm964, %v986, %v988
        %v990 = vsel %vm964, %v988, %v965
        %v991 = vrot.slane %v504, 1
        %v992 = vrot.slane %v505, 1
        %v993 = vsel %vm964, %v991, %v992
        %v994 = vrot.slane %v506, 1
        %v995 = vsel %vm964, %v992, %v994
        %v996 = vrot.slane %v507, 1
        %v997 = vsel %vm964, %v994, %v996
        %v998 = vsel %vm964, %v996, %v965
        %v999 = vrot.slane %v508, 1
        %v1000 = vrot.slane %v509, 1
        %v1001 = vsel %vm964, %v999, %v1000
        %v1002 = vrot.slane %v510, 1
        %v1003 = vsel %vm964, %v1000, %v1002
        %v1004 = vrot.slane %v511, 1
        %v1005 = vsel %vm964, %v1002, %v1004
        %v1006 = vsel %vm964, %v1004, %v965
        %v1007 = vrot.slane %v512, 1
        %v1008 = vrot.slane %v513, 1
        %v1009 = vsel %vm964, %v1007, %v1008
        %v1010 = vrot.slane %v514, 1
        %v1011 = vsel %vm964, %v1008, %v1010
        %v1012 = vrot.slane %v515, 1
        %v1013 = vsel %vm964, %v1010, %v1012
        %v1014 = vsel %vm964, %v1012, %v965
        %v1015 = vrot.slane %v516, 1
        %v1016 = vrot.slane %v517, 1
        %v1017 = vsel %vm964, %v1015, %v1016
        %v1018 = vrot.slane %v518, 1
        %v1019 = vsel %vm964, %v1016, %v1018
        %v1020 = vrot.slane %v519, 1
        %v1021 = vsel %vm964, %v1018, %v1020
        %v1022 = vsel %vm964, %v1020, %v965
        %v1023 = vrot.slane %v520, 1
        %v1024 = vrot.slane %v521, 1
        %v1025 = vsel %vm964, %v1023, %v1024
        %v1026 = vrot.slane %v522, 1
        %v1027 = vsel %vm964, %v1024, %v1026
        %v1028 = vrot.slane %v523, 1
        %v1029 = vsel %vm964, %v1026, %v1028
        %v1030 = vsel %vm964, %v1028, %v965
        %v1031 = vrot.slane %v524, 1
        %v1032 = vrot.slane %v525, 1
        %v1033 = vsel %vm964, %v1031, %v1032
        %v1034 = vrot.slane %v526, 1
        %v1035 = vsel %vm964, %v1032, %v1034
        %v1036 = vrot.slane %v527, 1
        %v1037 = vsel %vm964, %v1034, %v1036
        %v1038 = vsel %vm964, %v1036, %v965
        %v1039 = vrot.slane %v528, 1
        %v1040 = vrot.slane %v529, 1
        %v1041 = vsel %vm964, %v1039, %v1040
        %v1042 = vrot.slane %v530, 1
        %v1043 = vsel %vm964, %v1040, %v1042
        %v1044 = vrot.slane %v531, 1
        %v1045 = vsel %vm964, %v1042, %v1044
        %v1046 = vsel %vm964, %v1044, %v965
        %v1047 = vrot.slane %v532, 1
        %v1048 = vrot.slane %v533, 1
        %v1049 = vsel %vm964, %v1047, %v1048
        %v1050 = vrot.slane %v534, 1
        %v1051 = vsel %vm964, %v1048, %v1050
        %v1052 = vrot.slane %v535, 1
        %v1053 = vsel %vm964, %v1050, %v1052
        %v1054 = vsel %vm964, %v1052, %v965
        %v1055 = vrot.slane %v536, 1
        %v1056 = vrot.slane %v537, 1
        %v1057 = vsel %vm964, %v1055, %v1056
        %v1058 = vrot.slane %v538, 1
        %v1059 = vsel %vm964, %v1056, %v1058
        %v1060 = vrot.slane %v539, 1
        %v1061 = vsel %vm964, %v1058, %v1060
        %v1062 = vsel %vm964, %v1060, %v965
        %v1063 = vrot.slane %v540, 1
        %v1064 = vrot.slane %v541, 1
        %v1065 = vsel %vm964, %v1063, %v1064
        %v1066 = vrot.slane %v542, 1
        %v1067 = vsel %vm964, %v1064, %v1066
        %v1068 = vrot.slane %v543, 1
        %v1069 = vsel %vm964, %v1066, %v1068
        %v1070 = vsel %vm964, %v1068, %v965
        %v1071 = vrot.slane %v544, 1
        %v1072 = vrot.slane %v545, 1
        %v1073 = vsel %vm964, %v1071, %v1072
        %v1074 = vrot.slane %v546, 1
        %v1075 = vsel %vm964, %v1072, %v1074
        %v1076 = vrot.slane %v547, 1
        %v1077 = vsel %vm964, %v1074, %v1076
        %v1078 = vsel %vm964, %v1076, %v965
        %v1079 = vrot.slane %v548, 1
        %v1080 = vrot.slane %v549, 1
        %v1081 = vsel %vm964, %v1079, %v1080
        %v1082 = vrot.slane %v550, 1
        %v1083 = vsel %vm964, %v1080, %v1082
        %v1084 = vrot.slane %v551, 1
        %v1085 = vsel %vm964, %v1082, %v1084
        %v1086 = vsel %vm964, %v1084, %v965
        %v1087 = vrot.slane %v552, 1
        %v1088 = vrot.slane %v553, 1
        %v1089 = vsel %vm964, %v1087, %v1088
        %v1090 = vrot.slane %v554, 1
        %v1091 = vsel %vm964, %v1088, %v1090
        %v1092 = vrot.slane %v555, 1
        %v1093 = vsel %vm964, %v1090, %v1092
        %v1094 = vsel %vm964, %v1092, %v965
        %v1095 = vrot.slane %v556, 1
        %v1096 = vrot.slane %v557, 1
        %v1097 = vsel %vm964, %v1095, %v1096
        %v1098 = vrot.slane %v558, 1
        %v1099 = vsel %vm964, %v1096, %v1098
        %v1100 = vrot.slane %v559, 1
        %v1101 = vsel %vm964, %v1098, %v1100
        %v1102 = vsel %vm964, %v1100, %v965
        %v1103 = vrot.slane %v560, 1
        %v1104 = vrot.slane %v561, 1
        %v1105 = vsel %vm964, %v1103, %v1104
        %v1106 = vrot.slane %v562, 1
        %v1107 = vsel %vm964, %v1104, %v1106
        %v1108 = vrot.slane %v563, 1
        %v1109 = vsel %vm964, %v1106, %v1108
        %v1110 = vsel %vm964, %v1108, %v965
        %v1111 = vrot.slane %v564, 1
        %v1112 = vrot.slane %v565, 1
        %v1113 = vsel %vm964, %v1111, %v1112
        %v1114 = vrot.slane %v566, 1
        %v1115 = vsel %vm964, %v1112, %v1114
        %v1116 = vrot.slane %v567, 1
        %v1117 = vsel %vm964, %v1114, %v1116
        %v1118 = vsel %vm964, %v1116, %v965
        %v1119 = vrot.slane %v568, 1
        %v1120 = vrot.slane %v569, 1
        %v1121 = vsel %vm964, %v1119, %v1120
        %v1122 = vrot.slane %v570, 1
        %v1123 = vsel %vm964, %v1120, %v1122
        %v1124 = vrot.slane %v571, 1
        %v1125 = vsel %vm964, %v1122, %v1124
        %v1126 = vsel %vm964, %v1124, %v965
        %v1127 = vrot.slane %v572, 1
        %v1128 = vrot.slane %v573, 1
        %v1129 = vsel %vm964, %v1127, %v1128
        %v1130 = vrot.slane %v574, 1
        %v1131 = vsel %vm964, %v1128, %v1130
        %v1132 = vrot.slane %v575, 1
        %v1133 = vsel %vm964, %v1130, %v1132
        %v1134 = vsel %vm964, %v1132, %v965
        %v1135 = vrot.slane %v576, 1
        %v1136 = vrot.slane %v577, 1
        %v1137 = vsel %vm964, %v1135, %v1136
        %v1138 = vrot.slane %v578, 1
        %v1139 = vsel %vm964, %v1136, %v1138
        %v1140 = vrot.slane %v579, 1
        %v1141 = vsel %vm964, %v1138, %v1140
        %v1142 = vsel %vm964, %v1140, %v965
        %v1143 = vrot.slane %v580, 1
        %v1144 = vrot.slane %v581, 1
        %v1145 = vsel %vm964, %v1143, %v1144
        %v1146 = vrot.slane %v582, 1
        %v1147 = vsel %vm964, %v1144, %v1146
        %v1148 = vrot.slane %v583, 1
        %v1149 = vsel %vm964, %v1146, %v1148
        %v1150 = vsel %vm964, %v1148, %v965
        %v1155 = vrot.slane %v584, 7
        %v1156 = vsel %vm684, %v685, %v1155
        %v1157 = vrot.slane %v585, 7
        %v1158 = vsel %vm684, %v1155, %v1157
        %v1159 = vrot.slane %v586, 7
        %v1160 = vsel %vm684, %v1157, %v1159
        %v1161 = vrot.slane %v587, 7
        %v1162 = vsel %vm684, %v1159, %v1161
        %v1163 = vrot.slane %v584, 1
        %v1164 = vrot.slane %v585, 1
        %v1165 = vsel %vm964, %v1163, %v1164
        %v1166 = vrot.slane %v586, 1
        %v1167 = vsel %vm964, %v1164, %v1166
        %v1168 = vrot.slane %v587, 1
        %v1169 = vsel %vm964, %v1166, %v1168
        %v1170 = vsel %vm964, %v1168, %v965
        %1171 = vrot.lane.b32.xlu0 0.0, 1
        %v1172 = vpop.permute.xlu0 %1171
        %1173 = vrot.lane.b32.xlu0 %v492, 1
        %v1174 = vpop.permute.xlu0 %1173
        %1175 = vrot.lane.b32.xlu0 %v493, 1
        %v1176 = vpop.permute.xlu0 %1175
        %1177 = vrot.lane.b32.xlu0 %v494, 1
        %v1178 = vpop.permute.xlu0 %1177
        %1179 = vrot.lane.b32.xlu0 %v495, 1
        %v1180 = vpop.permute.xlu0 %1179
        %1181 = vrot.lane.b32.xlu0 %v496, 1
        %v1182 = vpop.permute.xlu0 %1181
        %1183 = vrot.lane.b32.xlu0 %v497, 1
        %v1184 = vpop.permute.xlu0 %1183
        %1185 = vrot.lane.b32.xlu0 %v498, 1
        %v1186 = vpop.permute.xlu0 %1185
        %1187 = vrot.lane.b32.xlu0 %v499, 1
        %v1188 = vpop.permute.xlu0 %1187
        %1189 = vrot.lane.b32.xlu0 %v500, 1
        %v1190 = vpop.permute.xlu0 %1189
        %1191 = vrot.lane.b32.xlu0 %v501, 1
        %v1192 = vpop.permute.xlu0 %1191
        %1193 = vrot.lane.b32.xlu0 %v502, 1
        %v1194 = vpop.permute.xlu0 %1193
        %1195 = vrot.lane.b32.xlu0 %v503, 1
        %v1196 = vpop.permute.xlu0 %1195
        %1197 = vrot.lane.b32.xlu0 %v504, 1
        %v1198 = vpop.permute.xlu0 %1197
        %1199 = vrot.lane.b32.xlu0 %v505, 1
        %v1200 = vpop.permute.xlu0 %1199
        %1201 = vrot.lane.b32.xlu0 %v506, 1
        %v1202 = vpop.permute.xlu0 %1201
        %1203 = vrot.lane.b32.xlu0 %v507, 1
        %v1204 = vpop.permute.xlu0 %1203
        %1205 = vrot.lane.b32.xlu0 %v508, 1
        %v1206 = vpop.permute.xlu0 %1205
        %1207 = vrot.lane.b32.xlu0 %v509, 1
        %v1208 = vpop.permute.xlu0 %1207
        %1209 = vrot.lane.b32.xlu0 %v510, 1
        %v1210 = vpop.permute.xlu0 %1209
        %1211 = vrot.lane.b32.xlu0 %v511, 1
        %v1212 = vpop.permute.xlu0 %1211
        %1213 = vrot.lane.b32.xlu0 %v512, 1
        %v1214 = vpop.permute.xlu0 %1213
        %1215 = vrot.lane.b32.xlu0 %v513, 1
        %v1216 = vpop.permute.xlu0 %1215
        %1217 = vrot.lane.b32.xlu0 %v514, 1
        %v1218 = vpop.permute.xlu0 %1217
        %1219 = vrot.lane.b32.xlu0 %v515, 1
        %v1220 = vpop.permute.xlu0 %1219
        %1221 = vrot.lane.b32.xlu0 %v516, 1
        %v1222 = vpop.permute.xlu0 %1221
        %1223 = vrot.lane.b32.xlu0 %v517, 1
        %v1224 = vpop.permute.xlu0 %1223
        %1225 = vrot.lane.b32.xlu0 %v518, 1
        %v1226 = vpop.permute.xlu0 %1225
        %1227 = vrot.lane.b32.xlu0 %v519, 1
        %v1228 = vpop.permute.xlu0 %1227
        %1229 = vrot.lane.b32.xlu0 %v520, 1
        %v1230 = vpop.permute.xlu0 %1229
        %1231 = vrot.lane.b32.xlu0 %v521, 1
        %v1232 = vpop.permute.xlu0 %1231
        %1233 = vrot.lane.b32.xlu0 %v522, 1
        %v1234 = vpop.permute.xlu0 %1233
        %1235 = vrot.lane.b32.xlu0 %v523, 1
        %v1236 = vpop.permute.xlu0 %1235
        %1237 = vrot.lane.b32.xlu0 %v524, 1
        %v1238 = vpop.permute.xlu0 %1237
        %1239 = vrot.lane.b32.xlu0 %v525, 1
        %v1240 = vpop.permute.xlu0 %1239
        %1241 = vrot.lane.b32.xlu0 %v526, 1
        %v1242 = vpop.permute.xlu0 %1241
        %1243 = vrot.lane.b32.xlu0 %v527, 1
        %v1244 = vpop.permute.xlu0 %1243
        %1245 = vrot.lane.b32.xlu0 %v528, 1
        %v1246 = vpop.permute.xlu0 %1245
        %1247 = vrot.lane.b32.xlu0 %v529, 1
        %v1248 = vpop.permute.xlu0 %1247
        %1249 = vrot.lane.b32.xlu0 %v530, 1
        %v1250 = vpop.permute.xlu0 %1249
        %1251 = vrot.lane.b32.xlu0 %v531, 1
        %v1252 = vpop.permute.xlu0 %1251
        %1253 = vrot.lane.b32.xlu0 %v532, 1
        %v1254 = vpop.permute.xlu0 %1253
        %1255 = vrot.lane.b32.xlu0 %v533, 1
        %v1256 = vpop.permute.xlu0 %1255
        %1257 = vrot.lane.b32.xlu0 %v534, 1
        %v1258 = vpop.permute.xlu0 %1257
        %1259 = vrot.lane.b32.xlu0 %v535, 1
        %v1260 = vpop.permute.xlu0 %1259
        %1261 = vrot.lane.b32.xlu0 %v536, 1
        %v1262 = vpop.permute.xlu0 %1261
        %1263 = vrot.lane.b32.xlu0 %v537, 1
        %v1264 = vpop.permute.xlu0 %1263
        %1265 = vrot.lane.b32.xlu0 %v538, 1
        %v1266 = vpop.permute.xlu0 %1265
        %1267 = vrot.lane.b32.xlu0 %v539, 1
        %v1268 = vpop.permute.xlu0 %1267
        %1269 = vrot.lane.b32.xlu0 %v540, 1
        %v1270 = vpop.permute.xlu0 %1269
        %1271 = vrot.lane.b32.xlu0 %v541, 1
        %v1272 = vpop.permute.xlu0 %1271
        %1273 = vrot.lane.b32.xlu0 %v542, 1
        %v1274 = vpop.permute.xlu0 %1273
        %1275 = vrot.lane.b32.xlu0 %v543, 1
        %v1276 = vpop.permute.xlu0 %1275
        %1277 = vrot.lane.b32.xlu0 %v544, 1
        %v1278 = vpop.permute.xlu0 %1277
        %1279 = vrot.lane.b32.xlu0 %v545, 1
        %v1280 = vpop.permute.xlu0 %1279
        %1281 = vrot.lane.b32.xlu0 %v546, 1
        %v1282 = vpop.permute.xlu0 %1281
        %1283 = vrot.lane.b32.xlu0 %v547, 1
        %v1284 = vpop.permute.xlu0 %1283
        %1285 = vrot.lane.b32.xlu0 %v548, 1
        %v1286 = vpop.permute.xlu0 %1285
        %1287 = vrot.lane.b32.xlu0 %v549, 1
        %v1288 = vpop.permute.xlu0 %1287
        %1289 = vrot.lane.b32.xlu0 %v550, 1
        %v1290 = vpop.permute.xlu0 %1289
        %1291 = vrot.lane.b32.xlu0 %v551, 1
        %v1292 = vpop.permute.xlu0 %1291
        %1293 = vrot.lane.b32.xlu0 %v552, 1
        %v1294 = vpop.permute.xlu0 %1293
        %1295 = vrot.lane.b32.xlu0 %v553, 1
        %v1296 = vpop.permute.xlu0 %1295
        %1297 = vrot.lane.b32.xlu0 %v554, 1
        %v1298 = vpop.permute.xlu0 %1297
        %1299 = vrot.lane.b32.xlu0 %v555, 1
        %v1300 = vpop.permute.xlu0 %1299
        %1301 = vrot.lane.b32.xlu0 %v556, 1
        %v1302 = vpop.permute.xlu0 %1301
        %1303 = vrot.lane.b32.xlu0 %v557, 1
        %v1304 = vpop.permute.xlu0 %1303
        %1305 = vrot.lane.b32.xlu0 %v558, 1
        %v1306 = vpop.permute.xlu0 %1305
        %1307 = vrot.lane.b32.xlu0 %v559, 1
        %v1308 = vpop.permute.xlu0 %1307
        %1309 = vrot.lane.b32.xlu0 %v560, 1
        %v1310 = vpop.permute.xlu0 %1309
        %1311 = vrot.lane.b32.xlu0 %v561, 1
        %v1312 = vpop.permute.xlu0 %1311
        %1313 = vrot.lane.b32.xlu0 %v562, 1
        %v1314 = vpop.permute.xlu0 %1313
        %1315 = vrot.lane.b32.xlu0 %v563, 1
        %v1316 = vpop.permute.xlu0 %1315
        %1317 = vrot.lane.b32.xlu0 %v564, 1
        %v1318 = vpop.permute.xlu0 %1317
        %1319 = vrot.lane.b32.xlu0 %v565, 1
        %v1320 = vpop.permute.xlu0 %1319
        %1321 = vrot.lane.b32.xlu0 %v566, 1
        %v1322 = vpop.permute.xlu0 %1321
        %1323 = vrot.lane.b32.xlu0 %v567, 1
        %v1324 = vpop.permute.xlu0 %1323
        %1325 = vrot.lane.b32.xlu0 %v568, 1
        %v1326 = vpop.permute.xlu0 %1325
        %1327 = vrot.lane.b32.xlu0 %v569, 1
        %v1328 = vpop.permute.xlu0 %1327
        %1329 = vrot.lane.b32.xlu0 %v570, 1
        %v1330 = vpop.permute.xlu0 %1329
        %1331 = vrot.lane.b32.xlu0 %v571, 1
        %v1332 = vpop.permute.xlu0 %1331
        %1333 = vrot.lane.b32.xlu0 %v572, 1
        %v1334 = vpop.permute.xlu0 %1333
        %1335 = vrot.lane.b32.xlu0 %v573, 1
        %v1336 = vpop.permute.xlu0 %1335
        %1337 = vrot.lane.b32.xlu0 %v574, 1
        %v1338 = vpop.permute.xlu0 %1337
        %1339 = vrot.lane.b32.xlu0 %v575, 1
        %v1340 = vpop.permute.xlu0 %1339
        %1341 = vrot.lane.b32.xlu0 %v576, 1
        %v1342 = vpop.permute.xlu0 %1341
        %1343 = vrot.lane.b32.xlu0 %v577, 1
        %v1344 = vpop.permute.xlu0 %1343
        %1345 = vrot.lane.b32.xlu0 %v578, 1
        %v1346 = vpop.permute.xlu0 %1345
        %1347 = vrot.lane.b32.xlu0 %v579, 1
        %v1348 = vpop.permute.xlu0 %1347
        %1349 = vrot.lane.b32.xlu0 %v580, 1
        %v1350 = vpop.permute.xlu0 %1349
        %1351 = vrot.lane.b32.xlu0 %v581, 1
        %v1352 = vpop.permute.xlu0 %1351
        %1353 = vrot.lane.b32.xlu0 %v582, 1
        %v1354 = vpop.permute.xlu0 %1353
        %1355 = vrot.lane.b32.xlu0 %v583, 1
        %v1356 = vpop.permute.xlu0 %1355
        %1450 = vrot.lane.b32.xlu0 %v966, 2
        %v1451 = vpop.permute.xlu0 %1450
        %1452 = vrot.lane.b32.xlu0 %v969, 2
        %v1453 = vpop.permute.xlu0 %1452
        %1454 = vrot.lane.b32.xlu0 %v971, 2
        %v1455 = vpop.permute.xlu0 %1454
        %1456 = vrot.lane.b32.xlu0 %v973, 2
        %v1457 = vpop.permute.xlu0 %1456
        %1458 = vrot.lane.b32.xlu0 %v974, 2
        %v1459 = vpop.permute.xlu0 %1458
        %1460 = vrot.lane.b32.xlu0 %v977, 2
        %v1461 = vpop.permute.xlu0 %1460
        %1462 = vrot.lane.b32.xlu0 %v979, 2
        %v1463 = vpop.permute.xlu0 %1462
        %1464 = vrot.lane.b32.xlu0 %v981, 2
        %v1465 = vpop.permute.xlu0 %1464
        %1466 = vrot.lane.b32.xlu0 %v982, 2
        %v1467 = vpop.permute.xlu0 %1466
        %1468 = vrot.lane.b32.xlu0 %v985, 2
        %v1469 = vpop.permute.xlu0 %1468
        %1470 = vrot.lane.b32.xlu0 %v987, 2
        %v1471 = vpop.permute.xlu0 %1470
        %1472 = vrot.lane.b32.xlu0 %v989, 2
        %v1473 = vpop.permute.xlu0 %1472
        %1474 = vrot.lane.b32.xlu0 %v990, 2
        %v1475 = vpop.permute.xlu0 %1474
        %1476 = vrot.lane.b32.xlu0 %v993, 2
        %v1477 = vpop.permute.xlu0 %1476
        %1478 = vrot.lane.b32.xlu0 %v995, 2
        %v1479 = vpop.permute.xlu0 %1478
        %1480 = vrot.lane.b32.xlu0 %v997, 2
        %v1481 = vpop.permute.xlu0 %1480
        %1482 = vrot.lane.b32.xlu0 %v998, 2
        %v1483 = vpop.permute.xlu0 %1482
        %1484 = vrot.lane.b32.xlu0 %v1001, 2
        %v1485 = vpop.permute.xlu0 %1484
        %1486 = vrot.lane.b32.xlu0 %v1003, 2
        %v1487 = vpop.permute.xlu0 %1486
        %1488 = vrot.lane.b32.xlu0 %v1005, 2
        %v1489 = vpop.permute.xlu0 %1488
        %1490 = vrot.lane.b32.xlu0 %v1006, 2
        %v1491 = vpop.permute.xlu0 %1490
        %1492 = vrot.lane.b32.xlu0 %v1009, 2
        %v1493 = vpop.permute.xlu0 %1492
        %1494 = vrot.lane.b32.xlu0 %v1011, 2
        %v1495 = vpop.permute.xlu0 %1494
        %1496 = vrot.lane.b32.xlu0 %v1013, 2
        %v1497 = vpop.permute.xlu0 %1496
        %1498 = vrot.lane.b32.xlu0 %v1014, 2
        %v1499 = vpop.permute.xlu0 %1498
        %1500 = vrot.lane.b32.xlu0 %v1017, 2
        %v1501 = vpop.permute.xlu0 %1500
        %1502 = vrot.lane.b32.xlu0 %v1019, 2
        %v1503 = vpop.permute.xlu0 %1502
        %1504 = vrot.lane.b32.xlu0 %v1021, 2
        %v1505 = vpop.permute.xlu0 %1504
        %1506 = vrot.lane.b32.xlu0 %v1022, 2
        %v1507 = vpop.permute.xlu0 %1506
        %1508 = vrot.lane.b32.xlu0 %v1025, 2
        %v1509 = vpop.permute.xlu0 %1508
        %1510 = vrot.lane.b32.xlu0 %v1027, 2
        %v1511 = vpop.permute.xlu0 %1510
        %1512 = vrot.lane.b32.xlu0 %v1029, 2
        %v1513 = vpop.permute.xlu0 %1512
        %1514 = vrot.lane.b32.xlu0 %v1030, 2
        %v1515 = vpop.permute.xlu0 %1514
        %1516 = vrot.lane.b32.xlu0 %v1033, 2
        %v1517 = vpop.permute.xlu0 %1516
        %1518 = vrot.lane.b32.xlu0 %v1035, 2
        %v1519 = vpop.permute.xlu0 %1518
        %1520 = vrot.lane.b32.xlu0 %v1037, 2
        %v1521 = vpop.permute.xlu0 %1520
        %1522 = vrot.lane.b32.xlu0 %v1038, 2
        %v1523 = vpop.permute.xlu0 %1522
        %1524 = vrot.lane.b32.xlu0 %v1041, 2
        %v1525 = vpop.permute.xlu0 %1524
        %1526 = vrot.lane.b32.xlu0 %v1043, 2
        %v1527 = vpop.permute.xlu0 %1526
        %1528 = vrot.lane.b32.xlu0 %v1045, 2
        %v1529 = vpop.permute.xlu0 %1528
        %1530 = vrot.lane.b32.xlu0 %v1046, 2
        %v1531 = vpop.permute.xlu0 %1530
        %1532 = vrot.lane.b32.xlu0 %v1049, 2
        %v1533 = vpop.permute.xlu0 %1532
        %1534 = vrot.lane.b32.xlu0 %v1051, 2
        %v1535 = vpop.permute.xlu0 %1534
        %1536 = vrot.lane.b32.xlu0 %v1053, 2
        %v1537 = vpop.permute.xlu0 %1536
        %1538 = vrot.lane.b32.xlu0 %v1054, 2
        %v1539 = vpop.permute.xlu0 %1538
        %1540 = vrot.lane.b32.xlu0 %v1057, 2
        %v1541 = vpop.permute.xlu0 %1540
        %1542 = vrot.lane.b32.xlu0 %v1059, 2
        %v1543 = vpop.permute.xlu0 %1542
        %1544 = vrot.lane.b32.xlu0 %v1061, 2
        %v1545 = vpop.permute.xlu0 %1544
        %1546 = vrot.lane.b32.xlu0 %v1062, 2
        %v1547 = vpop.permute.xlu0 %1546
        %1548 = vrot.lane.b32.xlu0 %v1065, 2
        %v1549 = vpop.permute.xlu0 %1548
        %1550 = vrot.lane.b32.xlu0 %v1067, 2
        %v1551 = vpop.permute.xlu0 %1550
        %1552 = vrot.lane.b32.xlu0 %v1069, 2
        %v1553 = vpop.permute.xlu0 %1552
        %1554 = vrot.lane.b32.xlu0 %v1070, 2
        %v1555 = vpop.permute.xlu0 %1554
        %1556 = vrot.lane.b32.xlu0 %v1073, 2
        %v1557 = vpop.permute.xlu0 %1556
        %1558 = vrot.lane.b32.xlu0 %v1075, 2
        %v1559 = vpop.permute.xlu0 %1558
        %1560 = vrot.lane.b32.xlu0 %v1077, 2
        %v1561 = vpop.permute.xlu0 %1560
        %1562 = vrot.lane.b32.xlu0 %v1078, 2
        %v1563 = vpop.permute.xlu0 %1562
        %1564 = vrot.lane.b32.xlu0 %v1081, 2
        %v1565 = vpop.permute.xlu0 %1564
        %1566 = vrot.lane.b32.xlu0 %v1083, 2
        %v1567 = vpop.permute.xlu0 %1566
        %1568 = vrot.lane.b32.xlu0 %v1085, 2
        %v1569 = vpop.permute.xlu0 %1568
        %1570 = vrot.lane.b32.xlu0 %v1086, 2
        %v1571 = vpop.permute.xlu0 %1570
        %1572 = vrot.lane.b32.xlu0 %v1089, 2
        %v1573 = vpop.permute.xlu0 %1572
        %1574 = vrot.lane.b32.xlu0 %v1091, 2
        %v1575 = vpop.permute.xlu0 %1574
        %1576 = vrot.lane.b32.xlu0 %v1093, 2
        %v1577 = vpop.permute.xlu0 %1576
        %1578 = vrot.lane.b32.xlu0 %v1094, 2
        %v1579 = vpop.permute.xlu0 %1578
        %1580 = vrot.lane.b32.xlu0 %v1097, 2
        %v1581 = vpop.permute.xlu0 %1580
        %1582 = vrot.lane.b32.xlu0 %v1099, 2
        %v1583 = vpop.permute.xlu0 %1582
        %1584 = vrot.lane.b32.xlu0 %v1101, 2
        %v1585 = vpop.permute.xlu0 %1584
        %1586 = vrot.lane.b32.xlu0 %v1102, 2
        %v1587 = vpop.permute.xlu0 %1586
        %1588 = vrot.lane.b32.xlu0 %v1105, 2
        %v1589 = vpop.permute.xlu0 %1588
        %1590 = vrot.lane.b32.xlu0 %v1107, 2
        %v1591 = vpop.permute.xlu0 %1590
        %1592 = vrot.lane.b32.xlu0 %v1109, 2
        %v1593 = vpop.permute.xlu0 %1592
        %1594 = vrot.lane.b32.xlu0 %v1110, 2
        %v1595 = vpop.permute.xlu0 %1594
        %1596 = vrot.lane.b32.xlu0 %v1113, 2
        %v1597 = vpop.permute.xlu0 %1596
        %1598 = vrot.lane.b32.xlu0 %v1115, 2
        %v1599 = vpop.permute.xlu0 %1598
        %1600 = vrot.lane.b32.xlu0 %v1117, 2
        %v1601 = vpop.permute.xlu0 %1600
        %1602 = vrot.lane.b32.xlu0 %v1118, 2
        %v1603 = vpop.permute.xlu0 %1602
        %1604 = vrot.lane.b32.xlu0 %v1121, 2
        %v1605 = vpop.permute.xlu0 %1604
        %1606 = vrot.lane.b32.xlu0 %v1123, 2
        %v1607 = vpop.permute.xlu0 %1606
        %1608 = vrot.lane.b32.xlu0 %v1125, 2
        %v1609 = vpop.permute.xlu0 %1608
        %1610 = vrot.lane.b32.xlu0 %v1126, 2
        %v1611 = vpop.permute.xlu0 %1610
        %1612 = vrot.lane.b32.xlu0 %v1129, 2
        %v1613 = vpop.permute.xlu0 %1612
        %1614 = vrot.lane.b32.xlu0 %v1131, 2
        %v1615 = vpop.permute.xlu0 %1614
        %1616 = vrot.lane.b32.xlu0 %v1133, 2
        %v1617 = vpop.permute.xlu0 %1616
        %1618 = vrot.lane.b32.xlu0 %v1134, 2
        %v1619 = vpop.permute.xlu0 %1618
        %1620 = vrot.lane.b32.xlu0 %v1137, 2
        %v1621 = vpop.permute.xlu0 %1620
        %1622 = vrot.lane.b32.xlu0 %v1139, 2
        %v1623 = vpop.permute.xlu0 %1622
        %1624 = vrot.lane.b32.xlu0 %v1141, 2
        %v1625 = vpop.permute.xlu0 %1624
        %1626 = vrot.lane.b32.xlu0 %v1142, 2
        %v1627 = vpop.permute.xlu0 %1626
        %1628 = vrot.lane.b32.xlu0 %v1145, 2
        %v1629 = vpop.permute.xlu0 %1628
        %1630 = vrot.lane.b32.xlu0 %v1147, 2
        %v1631 = vpop.permute.xlu0 %1630
        %1632 = vrot.lane.b32.xlu0 %v1149, 2
        %v1633 = vpop.permute.xlu0 %1632
        %1634 = vrot.lane.b32.xlu0 %v1150, 2
        %v1635 = vpop.permute.xlu0 %1634
        %1729 = vrot.lane.b32.xlu0 %v688, 3
        %v1730 = vpop.permute.xlu0 %1729
        %1731 = vrot.lane.b32.xlu0 %v690, 3
        %v1732 = vpop.permute.xlu0 %1731
        %1733 = vrot.lane.b32.xlu0 %v692, 3
        %v1734 = vpop.permute.xlu0 %1733
        %1735 = vrot.lane.b32.xlu0 %v694, 3
        %v1736 = vpop.permute.xlu0 %1735
        %1737 = vrot.lane.b32.xlu0 %v696, 3
        %v1738 = vpop.permute.xlu0 %1737
        %1739 = vrot.lane.b32.xlu0 %v698, 3
        %v1740 = vpop.permute.xlu0 %1739
        %1741 = vrot.lane.b32.xlu0 %v700, 3
        %v1742 = vpop.permute.xlu0 %1741
        %1743 = vrot.lane.b32.xlu0 %v702, 3
        %v1744 = vpop.permute.xlu0 %1743
        %1745 = vrot.lane.b32.xlu0 %v704, 3
        %v1746 = vpop.permute.xlu0 %1745
        %1747 = vrot.lane.b32.xlu0 %v706, 3
        %v1748 = vpop.permute.xlu0 %1747
        %1749 = vrot.lane.b32.xlu0 %v708, 3
        %v1750 = vpop.permute.xlu0 %1749
        %1751 = vrot.lane.b32.xlu0 %v710, 3
        %v1752 = vpop.permute.xlu0 %1751
        %1753 = vrot.lane.b32.xlu0 %v712, 3
        %v1754 = vpop.permute.xlu0 %1753
        %1755 = vrot.lane.b32.xlu0 %v714, 3
        %v1756 = vpop.permute.xlu0 %1755
        %1757 = vrot.lane.b32.xlu0 %v716, 3
        %v1758 = vpop.permute.xlu0 %1757
        %1759 = vrot.lane.b32.xlu0 %v718, 3
        %v1760 = vpop.permute.xlu0 %1759
        %1761 = vrot.lane.b32.xlu0 %v720, 3
        %v1762 = vpop.permute.xlu0 %1761
        %1763 = vrot.lane.b32.xlu0 %v722, 3
        %v1764 = vpop.permute.xlu0 %1763
        %1765 = vrot.lane.b32.xlu0 %v724, 3
        %v1766 = vpop.permute.xlu0 %1765
        %1767 = vrot.lane.b32.xlu0 %v726, 3
        %v1768 = vpop.permute.xlu0 %1767
        %1769 = vrot.lane.b32.xlu0 %v728, 3
        %v1770 = vpop.permute.xlu0 %1769
        %1771 = vrot.lane.b32.xlu0 %v730, 3
        %v1772 = vpop.permute.xlu0 %1771
        %1773 = vrot.lane.b32.xlu0 %v732, 3
        %v1774 = vpop.permute.xlu0 %1773
        %1775 = vrot.lane.b32.xlu0 %v734, 3
        %v1776 = vpop.permute.xlu0 %1775
        %1777 = vrot.lane.b32.xlu0 %v736, 3
        %v1778 = vpop.permute.xlu0 %1777
        %1779 = vrot.lane.b32.xlu0 %v738, 3
        %v1780 = vpop.permute.xlu0 %1779
        %1781 = vrot.lane.b32.xlu0 %v740, 3
        %v1782 = vpop.permute.xlu0 %1781
        %1783 = vrot.lane.b32.xlu0 %v742, 3
        %v1784 = vpop.permute.xlu0 %1783
        %1785 = vrot.lane.b32.xlu0 %v744, 3
        %v1786 = vpop.permute.xlu0 %1785
        %1787 = vrot.lane.b32.xlu0 %v746, 3
        %v1788 = vpop.permute.xlu0 %1787
        %1789 = vrot.lane.b32.xlu0 %v748, 3
        %v1790 = vpop.permute.xlu0 %1789
        %1791 = vrot.lane.b32.xlu0 %v750, 3
        %v1792 = vpop.permute.xlu0 %1791
        %1793 = vrot.lane.b32.xlu0 %v752, 3
        %v1794 = vpop.permute.xlu0 %1793
        %1795 = vrot.lane.b32.xlu0 %v754, 3
        %v1796 = vpop.permute.xlu0 %1795
        %1797 = vrot.lane.b32.xlu0 %v756, 3
        %v1798 = vpop.permute.xlu0 %1797
        %1799 = vrot.lane.b32.xlu0 %v758, 3
        %v1800 = vpop.permute.xlu0 %1799
        %1801 = vrot.lane.b32.xlu0 %v760, 3
        %v1802 = vpop.permute.xlu0 %1801
        %1803 = vrot.lane.b32.xlu0 %v762, 3
        %v1804 = vpop.permute.xlu0 %1803
        %1805 = vrot.lane.b32.xlu0 %v764, 3
        %v1806 = vpop.permute.xlu0 %1805
        %1807 = vrot.lane.b32.xlu0 %v766, 3
        %v1808 = vpop.permute.xlu0 %1807
        %1809 = vrot.lane.b32.xlu0 %v768, 3
        %v1810 = vpop.permute.xlu0 %1809
        %1811 = vrot.lane.b32.xlu0 %v770, 3
        %v1812 = vpop.permute.xlu0 %1811
        %1813 = vrot.lane.b32.xlu0 %v772, 3
        %v1814 = vpop.permute.xlu0 %1813
        %1815 = vrot.lane.b32.xlu0 %v774, 3
        %v1816 = vpop.permute.xlu0 %1815
        %1817 = vrot.lane.b32.xlu0 %v776, 3
        %v1818 = vpop.permute.xlu0 %1817
        %1819 = vrot.lane.b32.xlu0 %v778, 3
        %v1820 = vpop.permute.xlu0 %1819
        %1821 = vrot.lane.b32.xlu0 %v780, 3
        %v1822 = vpop.permute.xlu0 %1821
        %1823 = vrot.lane.b32.xlu0 %v782, 3
        %v1824 = vpop.permute.xlu0 %1823
        %1825 = vrot.lane.b32.xlu0 %v784, 3
        %v1826 = vpop.permute.xlu0 %1825
        %1827 = vrot.lane.b32.xlu0 %v786, 3
        %v1828 = vpop.permute.xlu0 %1827
        %1829 = vrot.lane.b32.xlu0 %v788, 3
        %v1830 = vpop.permute.xlu0 %1829
        %1831 = vrot.lane.b32.xlu0 %v790, 3
        %v1832 = vpop.permute.xlu0 %1831
        %1833 = vrot.lane.b32.xlu0 %v792, 3
        %v1834 = vpop.permute.xlu0 %1833
        %1835 = vrot.lane.b32.xlu0 %v794, 3
        %v1836 = vpop.permute.xlu0 %1835
        %1837 = vrot.lane.b32.xlu0 %v796, 3
        %v1838 = vpop.permute.xlu0 %1837
        %1839 = vrot.lane.b32.xlu0 %v798, 3
        %v1840 = vpop.permute.xlu0 %1839
        %1841 = vrot.lane.b32.xlu0 %v800, 3
        %v1842 = vpop.permute.xlu0 %1841
        %1843 = vrot.lane.b32.xlu0 %v802, 3
        %v1844 = vpop.permute.xlu0 %1843
        %1845 = vrot.lane.b32.xlu0 %v804, 3
        %v1846 = vpop.permute.xlu0 %1845
        %1847 = vrot.lane.b32.xlu0 %v806, 3
        %v1848 = vpop.permute.xlu0 %1847
        %1849 = vrot.lane.b32.xlu0 %v808, 3
        %v1850 = vpop.permute.xlu0 %1849
        %1851 = vrot.lane.b32.xlu0 %v810, 3
        %v1852 = vpop.permute.xlu0 %1851
        %1853 = vrot.lane.b32.xlu0 %v812, 3
        %v1854 = vpop.permute.xlu0 %1853
        %1855 = vrot.lane.b32.xlu0 %v814, 3
        %v1856 = vpop.permute.xlu0 %1855
        %1857 = vrot.lane.b32.xlu0 %v816, 3
        %v1858 = vpop.permute.xlu0 %1857
        %1859 = vrot.lane.b32.xlu0 %v818, 3
        %v1860 = vpop.permute.xlu0 %1859
        %1861 = vrot.lane.b32.xlu0 %v820, 3
        %v1862 = vpop.permute.xlu0 %1861
        %1863 = vrot.lane.b32.xlu0 %v822, 3
        %v1864 = vpop.permute.xlu0 %1863
        %1865 = vrot.lane.b32.xlu0 %v824, 3
        %v1866 = vpop.permute.xlu0 %1865
        %1867 = vrot.lane.b32.xlu0 %v826, 3
        %v1868 = vpop.permute.xlu0 %1867
        %1869 = vrot.lane.b32.xlu0 %v828, 3
        %v1870 = vpop.permute.xlu0 %1869
        %1871 = vrot.lane.b32.xlu0 %v830, 3
        %v1872 = vpop.permute.xlu0 %1871
        %1873 = vrot.lane.b32.xlu0 %v832, 3
        %v1874 = vpop.permute.xlu0 %1873
        %1875 = vrot.lane.b32.xlu0 %v834, 3
        %v1876 = vpop.permute.xlu0 %1875
        %1877 = vrot.lane.b32.xlu0 %v836, 3
        %v1878 = vpop.permute.xlu0 %1877
        %1879 = vrot.lane.b32.xlu0 %v838, 3
        %v1880 = vpop.permute.xlu0 %1879
        %1881 = vrot.lane.b32.xlu0 %v840, 3
        %v1882 = vpop.permute.xlu0 %1881
        %1883 = vrot.lane.b32.xlu0 %v842, 3
        %v1884 = vpop.permute.xlu0 %1883
        %1885 = vrot.lane.b32.xlu0 %v844, 3
        %v1886 = vpop.permute.xlu0 %1885
        %1887 = vrot.lane.b32.xlu0 %v846, 3
        %v1888 = vpop.permute.xlu0 %1887
        %1889 = vrot.lane.b32.xlu0 %v848, 3
        %v1890 = vpop.permute.xlu0 %1889
        %1891 = vrot.lane.b32.xlu0 %v850, 3
        %v1892 = vpop.permute.xlu0 %1891
        %1893 = vrot.lane.b32.xlu0 %v852, 3
        %v1894 = vpop.permute.xlu0 %1893
        %1895 = vrot.lane.b32.xlu0 %v854, 3
        %v1896 = vpop.permute.xlu0 %1895
        %1897 = vrot.lane.b32.xlu0 %v856, 3
        %v1898 = vpop.permute.xlu0 %1897
        %1899 = vrot.lane.b32.xlu0 %v858, 3
        %v1900 = vpop.permute.xlu0 %1899
        %1901 = vrot.lane.b32.xlu0 %v860, 3
        %v1902 = vpop.permute.xlu0 %1901
        %1903 = vrot.lane.b32.xlu0 %v862, 3
        %v1904 = vpop.permute.xlu0 %1903
        %1905 = vrot.lane.b32.xlu0 %v864, 3
        %v1906 = vpop.permute.xlu0 %1905
        %1907 = vrot.lane.b32.xlu0 %v866, 3
        %v1908 = vpop.permute.xlu0 %1907
        %1909 = vrot.lane.b32.xlu0 %v868, 3
        %v1910 = vpop.permute.xlu0 %1909
        %1911 = vrot.lane.b32.xlu0 %v870, 3
        %v1912 = vpop.permute.xlu0 %1911
        %1913 = vrot.lane.b32.xlu0 %v1156, 3
        %v1914 = vpop.permute.xlu0 %1913
        %1915 = vrot.lane.b32.xlu0 %v1158, 3
        %v1916 = vpop.permute.xlu0 %1915
        %1917 = vrot.lane.b32.xlu0 %v1160, 3
        %v1918 = vpop.permute.xlu0 %1917
        %1919 = vrot.lane.b32.xlu0 %v1162, 3
        %v1920 = vpop.permute.xlu0 %1919
        %2017 = vrot.lane.b32.xlu0 %v492, 4
        %v2018 = vpop.permute.xlu0 %2017
        %2019 = vrot.lane.b32.xlu0 %v493, 4
        %v2020 = vpop.permute.xlu0 %2019
        %2021 = vrot.lane.b32.xlu0 %v494, 4
        %v2022 = vpop.permute.xlu0 %2021
        %2023 = vrot.lane.b32.xlu0 %v495, 4
        %v2024 = vpop.permute.xlu0 %2023
        %2025 = vrot.lane.b32.xlu0 %v496, 4
        %v2026 = vpop.permute.xlu0 %2025
        %2027 = vrot.lane.b32.xlu0 %v497, 4
        %v2028 = vpop.permute.xlu0 %2027
        %2029 = vrot.lane.b32.xlu0 %v498, 4
        %v2030 = vpop.permute.xlu0 %2029
        %2031 = vrot.lane.b32.xlu0 %v499, 4
        %v2032 = vpop.permute.xlu0 %2031
        %2033 = vrot.lane.b32.xlu0 %v500, 4
        %v2034 = vpop.permute.xlu0 %2033
        %2035 = vrot.lane.b32.xlu0 %v501, 4
        %v2036 = vpop.permute.xlu0 %2035
        %2037 = vrot.lane.b32.xlu0 %v502, 4
        %v2038 = vpop.permute.xlu0 %2037
        %2039 = vrot.lane.b32.xlu0 %v503, 4
        %v2040 = vpop.permute.xlu0 %2039
        %2041 = vrot.lane.b32.xlu0 %v504, 4
        %v2042 = vpop.permute.xlu0 %2041
        %2043 = vrot.lane.b32.xlu0 %v505, 4
        %v2044 = vpop.permute.xlu0 %2043
        %2045 = vrot.lane.b32.xlu0 %v506, 4
        %v2046 = vpop.permute.xlu0 %2045
        %2047 = vrot.lane.b32.xlu0 %v507, 4
        %v2048 = vpop.permute.xlu0 %2047
        %2049 = vrot.lane.b32.xlu0 %v508, 4
        %v2050 = vpop.permute.xlu0 %2049
        %2051 = vrot.lane.b32.xlu0 %v509, 4
        %v2052 = vpop.permute.xlu0 %2051
        %2053 = vrot.lane.b32.xlu0 %v510, 4
        %v2054 = vpop.permute.xlu0 %2053
        %2055 = vrot.lane.b32.xlu0 %v511, 4
        %v2056 = vpop.permute.xlu0 %2055
        %2057 = vrot.lane.b32.xlu0 %v512, 4
        %v2058 = vpop.permute.xlu0 %2057
        %2059 = vrot.lane.b32.xlu0 %v513, 4
        %v2060 = vpop.permute.xlu0 %2059
        %2061 = vrot.lane.b32.xlu0 %v514, 4
        %v2062 = vpop.permute.xlu0 %2061
        %2063 = vrot.lane.b32.xlu0 %v515, 4
        %v2064 = vpop.permute.xlu0 %2063
        %2065 = vrot.lane.b32.xlu0 %v516, 4
        %v2066 = vpop.permute.xlu0 %2065
        %2067 = vrot.lane.b32.xlu0 %v517, 4
        %v2068 = vpop.permute.xlu0 %2067
        %2069 = vrot.lane.b32.xlu0 %v518, 4
        %v2070 = vpop.permute.xlu0 %2069
        %2071 = vrot.lane.b32.xlu0 %v519, 4
        %v2072 = vpop.permute.xlu0 %2071
        %2073 = vrot.lane.b32.xlu0 %v520, 4
        %v2074 = vpop.permute.xlu0 %2073
        %2075 = vrot.lane.b32.xlu0 %v521, 4
        %v2076 = vpop.permute.xlu0 %2075
        %2077 = vrot.lane.b32.xlu0 %v522, 4
        %v2078 = vpop.permute.xlu0 %2077
        %2079 = vrot.lane.b32.xlu0 %v523, 4
        %v2080 = vpop.permute.xlu0 %2079
        %2081 = vrot.lane.b32.xlu0 %v524, 4
        %v2082 = vpop.permute.xlu0 %2081
        %2083 = vrot.lane.b32.xlu0 %v525, 4
        %v2084 = vpop.permute.xlu0 %2083
        %2085 = vrot.lane.b32.xlu0 %v526, 4
        %v2086 = vpop.permute.xlu0 %2085
        %2087 = vrot.lane.b32.xlu0 %v527, 4
        %v2088 = vpop.permute.xlu0 %2087
        %2089 = vrot.lane.b32.xlu0 %v528, 4
        %v2090 = vpop.permute.xlu0 %2089
        %2091 = vrot.lane.b32.xlu0 %v529, 4
        %v2092 = vpop.permute.xlu0 %2091
        %2093 = vrot.lane.b32.xlu0 %v530, 4
        %v2094 = vpop.permute.xlu0 %2093
        %2095 = vrot.lane.b32.xlu0 %v531, 4
        %v2096 = vpop.permute.xlu0 %2095
        %2097 = vrot.lane.b32.xlu0 %v532, 4
        %v2098 = vpop.permute.xlu0 %2097
        %2099 = vrot.lane.b32.xlu0 %v533, 4
        %v2100 = vpop.permute.xlu0 %2099
        %2101 = vrot.lane.b32.xlu0 %v534, 4
        %v2102 = vpop.permute.xlu0 %2101
        %2103 = vrot.lane.b32.xlu0 %v535, 4
        %v2104 = vpop.permute.xlu0 %2103
        %2105 = vrot.lane.b32.xlu0 %v536, 4
        %v2106 = vpop.permute.xlu0 %2105
        %2107 = vrot.lane.b32.xlu0 %v537, 4
        %v2108 = vpop.permute.xlu0 %2107
        %2109 = vrot.lane.b32.xlu0 %v538, 4
        %v2110 = vpop.permute.xlu0 %2109
        %2111 = vrot.lane.b32.xlu0 %v539, 4
        %v2112 = vpop.permute.xlu0 %2111
        %2113 = vrot.lane.b32.xlu0 %v540, 4
        %v2114 = vpop.permute.xlu0 %2113
        %2115 = vrot.lane.b32.xlu0 %v541, 4
        %v2116 = vpop.permute.xlu0 %2115
        %2117 = vrot.lane.b32.xlu0 %v542, 4
        %v2118 = vpop.permute.xlu0 %2117
        %2119 = vrot.lane.b32.xlu0 %v543, 4
        %v2120 = vpop.permute.xlu0 %2119
        %2121 = vrot.lane.b32.xlu0 %v544, 4
        %v2122 = vpop.permute.xlu0 %2121
        %2123 = vrot.lane.b32.xlu0 %v545, 4
        %v2124 = vpop.permute.xlu0 %2123
        %2125 = vrot.lane.b32.xlu0 %v546, 4
        %v2126 = vpop.permute.xlu0 %2125
        %2127 = vrot.lane.b32.xlu0 %v547, 4
        %v2128 = vpop.permute.xlu0 %2127
        %2129 = vrot.lane.b32.xlu0 %v548, 4
        %v2130 = vpop.permute.xlu0 %2129
        %2131 = vrot.lane.b32.xlu0 %v549, 4
        %v2132 = vpop.permute.xlu0 %2131
        %2133 = vrot.lane.b32.xlu0 %v550, 4
        %v2134 = vpop.permute.xlu0 %2133
        %2135 = vrot.lane.b32.xlu0 %v551, 4
        %v2136 = vpop.permute.xlu0 %2135
        %2137 = vrot.lane.b32.xlu0 %v552, 4
        %v2138 = vpop.permute.xlu0 %2137
        %2139 = vrot.lane.b32.xlu0 %v553, 4
        %v2140 = vpop.permute.xlu0 %2139
        %2141 = vrot.lane.b32.xlu0 %v554, 4
        %v2142 = vpop.permute.xlu0 %2141
        %2143 = vrot.lane.b32.xlu0 %v555, 4
        %v2144 = vpop.permute.xlu0 %2143
        %2145 = vrot.lane.b32.xlu0 %v556, 4
        %v2146 = vpop.permute.xlu0 %2145
        %2147 = vrot.lane.b32.xlu0 %v557, 4
        %v2148 = vpop.permute.xlu0 %2147
        %2149 = vrot.lane.b32.xlu0 %v558, 4
        %v2150 = vpop.permute.xlu0 %2149
        %2151 = vrot.lane.b32.xlu0 %v559, 4
        %v2152 = vpop.permute.xlu0 %2151
        %2153 = vrot.lane.b32.xlu0 %v560, 4
        %v2154 = vpop.permute.xlu0 %2153
        %2155 = vrot.lane.b32.xlu0 %v561, 4
        %v2156 = vpop.permute.xlu0 %2155
        %2157 = vrot.lane.b32.xlu0 %v562, 4
        %v2158 = vpop.permute.xlu0 %2157
        %2159 = vrot.lane.b32.xlu0 %v563, 4
        %v2160 = vpop.permute.xlu0 %2159
        %2161 = vrot.lane.b32.xlu0 %v564, 4
        %v2162 = vpop.permute.xlu0 %2161
        %2163 = vrot.lane.b32.xlu0 %v565, 4
        %v2164 = vpop.permute.xlu0 %2163
        %2165 = vrot.lane.b32.xlu0 %v566, 4
        %v2166 = vpop.permute.xlu0 %2165
        %2167 = vrot.lane.b32.xlu0 %v567, 4
        %v2168 = vpop.permute.xlu0 %2167
        %2169 = vrot.lane.b32.xlu0 %v568, 4
        %v2170 = vpop.permute.xlu0 %2169
        %2171 = vrot.lane.b32.xlu0 %v569, 4
        %v2172 = vpop.permute.xlu0 %2171
        %2173 = vrot.lane.b32.xlu0 %v570, 4
        %v2174 = vpop.permute.xlu0 %2173
        %2175 = vrot.lane.b32.xlu0 %v571, 4
        %v2176 = vpop.permute.xlu0 %2175
        %2177 = vrot.lane.b32.xlu0 %v572, 4
        %v2178 = vpop.permute.xlu0 %2177
        %2179 = vrot.lane.b32.xlu0 %v573, 4
        %v2180 = vpop.permute.xlu0 %2179
        %2181 = vrot.lane.b32.xlu0 %v574, 4
        %v2182 = vpop.permute.xlu0 %2181
        %2183 = vrot.lane.b32.xlu0 %v575, 4
        %v2184 = vpop.permute.xlu0 %2183
        %2185 = vrot.lane.b32.xlu0 %v576, 4
        %v2186 = vpop.permute.xlu0 %2185
        %2187 = vrot.lane.b32.xlu0 %v577, 4
        %v2188 = vpop.permute.xlu0 %2187
        %2189 = vrot.lane.b32.xlu0 %v578, 4
        %v2190 = vpop.permute.xlu0 %2189
        %2191 = vrot.lane.b32.xlu0 %v579, 4
        %v2192 = vpop.permute.xlu0 %2191
        %2193 = vrot.lane.b32.xlu0 %v580, 4
        %v2194 = vpop.permute.xlu0 %2193
        %2195 = vrot.lane.b32.xlu0 %v581, 4
        %v2196 = vpop.permute.xlu0 %2195
        %2197 = vrot.lane.b32.xlu0 %v582, 4
        %v2198 = vpop.permute.xlu0 %2197
        %2199 = vrot.lane.b32.xlu0 %v583, 4
        %v2200 = vpop.permute.xlu0 %2199
        %2201 = vrot.lane.b32.xlu0 %v584, 4
        %v2202 = vpop.permute.xlu0 %2201
        %2203 = vrot.lane.b32.xlu0 %v585, 4
        %v2204 = vpop.permute.xlu0 %2203
        %2205 = vrot.lane.b32.xlu0 %v586, 4
        %v2206 = vpop.permute.xlu0 %2205
        %2207 = vrot.lane.b32.xlu0 %v587, 4
        %v2208 = vpop.permute.xlu0 %2207
        %2305 = vrot.lane.b32.xlu0 %v969, 5
        %v2306 = vpop.permute.xlu0 %2305
        %2307 = vrot.lane.b32.xlu0 %v971, 5
        %v2308 = vpop.permute.xlu0 %2307
        %2309 = vrot.lane.b32.xlu0 %v973, 5
        %v2310 = vpop.permute.xlu0 %2309
        %2311 = vrot.lane.b32.xlu0 %v974, 5
        %v2312 = vpop.permute.xlu0 %2311
        %2313 = vrot.lane.b32.xlu0 %v977, 5
        %v2314 = vpop.permute.xlu0 %2313
        %2315 = vrot.lane.b32.xlu0 %v979, 5
        %v2316 = vpop.permute.xlu0 %2315
        %2317 = vrot.lane.b32.xlu0 %v981, 5
        %v2318 = vpop.permute.xlu0 %2317
        %2319 = vrot.lane.b32.xlu0 %v982, 5
        %v2320 = vpop.permute.xlu0 %2319
        %2321 = vrot.lane.b32.xlu0 %v985, 5
        %v2322 = vpop.permute.xlu0 %2321
        %2323 = vrot.lane.b32.xlu0 %v987, 5
        %v2324 = vpop.permute.xlu0 %2323
        %2325 = vrot.lane.b32.xlu0 %v989, 5
        %v2326 = vpop.permute.xlu0 %2325
        %2327 = vrot.lane.b32.xlu0 %v990, 5
        %v2328 = vpop.permute.xlu0 %2327
        %2329 = vrot.lane.b32.xlu0 %v993, 5
        %v2330 = vpop.permute.xlu0 %2329
        %2331 = vrot.lane.b32.xlu0 %v995, 5
        %v2332 = vpop.permute.xlu0 %2331
        %2333 = vrot.lane.b32.xlu0 %v997, 5
        %v2334 = vpop.permute.xlu0 %2333
        %2335 = vrot.lane.b32.xlu0 %v998, 5
        %v2336 = vpop.permute.xlu0 %2335
        %2337 = vrot.lane.b32.xlu0 %v1001, 5
        %v2338 = vpop.permute.xlu0 %2337
        %2339 = vrot.lane.b32.xlu0 %v1003, 5
        %v2340 = vpop.permute.xlu0 %2339
        %2341 = vrot.lane.b32.xlu0 %v1005, 5
        %v2342 = vpop.permute.xlu0 %2341
        %2343 = vrot.lane.b32.xlu0 %v1006, 5
        %v2344 = vpop.permute.xlu0 %2343
        %2345 = vrot.lane.b32.xlu0 %v1009, 5
        %v2346 = vpop.permute.xlu0 %2345
        %2347 = vrot.lane.b32.xlu0 %v1011, 5
        %v2348 = vpop.permute.xlu0 %2347
        %2349 = vrot.lane.b32.xlu0 %v1013, 5
        %v2350 = vpop.permute.xlu0 %2349
        %2351 = vrot.lane.b32.xlu0 %v1014, 5
        %v2352 = vpop.permute.xlu0 %2351
        %2353 = vrot.lane.b32.xlu0 %v1017, 5
        %v2354 = vpop.permute.xlu0 %2353
        %2355 = vrot.lane.b32.xlu0 %v1019, 5
        %v2356 = vpop.permute.xlu0 %2355
        %2357 = vrot.lane.b32.xlu0 %v1021, 5
        %v2358 = vpop.permute.xlu0 %2357
        %2359 = vrot.lane.b32.xlu0 %v1022, 5
        %v2360 = vpop.permute.xlu0 %2359
        %2361 = vrot.lane.b32.xlu0 %v1025, 5
        %v2362 = vpop.permute.xlu0 %2361
        %2363 = vrot.lane.b32.xlu0 %v1027, 5
        %v2364 = vpop.permute.xlu0 %2363
        %2365 = vrot.lane.b32.xlu0 %v1029, 5
        %v2366 = vpop.permute.xlu0 %2365
        %2367 = vrot.lane.b32.xlu0 %v1030, 5
        %v2368 = vpop.permute.xlu0 %2367
        %2369 = vrot.lane.b32.xlu0 %v1033, 5
        %v2370 = vpop.permute.xlu0 %2369
        %2371 = vrot.lane.b32.xlu0 %v1035, 5
        %v2372 = vpop.permute.xlu0 %2371
        %2373 = vrot.lane.b32.xlu0 %v1037, 5
        %v2374 = vpop.permute.xlu0 %2373
        %2375 = vrot.lane.b32.xlu0 %v1038, 5
        %v2376 = vpop.permute.xlu0 %2375
        %2377 = vrot.lane.b32.xlu0 %v1041, 5
        %v2378 = vpop.permute.xlu0 %2377
        %2379 = vrot.lane.b32.xlu0 %v1043, 5
        %v2380 = vpop.permute.xlu0 %2379
        %2381 = vrot.lane.b32.xlu0 %v1045, 5
        %v2382 = vpop.permute.xlu0 %2381
        %2383 = vrot.lane.b32.xlu0 %v1046, 5
        %v2384 = vpop.permute.xlu0 %2383
        %2385 = vrot.lane.b32.xlu0 %v1049, 5
        %v2386 = vpop.permute.xlu0 %2385
        %2387 = vrot.lane.b32.xlu0 %v1051, 5
        %v2388 = vpop.permute.xlu0 %2387
        %2389 = vrot.lane.b32.xlu0 %v1053, 5
        %v2390 = vpop.permute.xlu0 %2389
        %2391 = vrot.lane.b32.xlu0 %v1054, 5
        %v2392 = vpop.permute.xlu0 %2391
        %2393 = vrot.lane.b32.xlu0 %v1057, 5
        %v2394 = vpop.permute.xlu0 %2393
        %2395 = vrot.lane.b32.xlu0 %v1059, 5
        %v2396 = vpop.permute.xlu0 %2395
        %2397 = vrot.lane.b32.xlu0 %v1061, 5
        %v2398 = vpop.permute.xlu0 %2397
        %2399 = vrot.lane.b32.xlu0 %v1062, 5
        %v2400 = vpop.permute.xlu0 %2399
        %2401 = vrot.lane.b32.xlu0 %v1065, 5
        %v2402 = vpop.permute.xlu0 %2401
        %2403 = vrot.lane.b32.xlu0 %v1067, 5
        %v2404 = vpop.permute.xlu0 %2403
        %2405 = vrot.lane.b32.xlu0 %v1069, 5
        %v2406 = vpop.permute.xlu0 %2405
        %2407 = vrot.lane.b32.xlu0 %v1070, 5
        %v2408 = vpop.permute.xlu0 %2407
        %2409 = vrot.lane.b32.xlu0 %v1073, 5
        %v2410 = vpop.permute.xlu0 %2409
        %2411 = vrot.lane.b32.xlu0 %v1075, 5
        %v2412 = vpop.permute.xlu0 %2411
        %2413 = vrot.lane.b32.xlu0 %v1077, 5
        %v2414 = vpop.permute.xlu0 %2413
        %2415 = vrot.lane.b32.xlu0 %v1078, 5
        %v2416 = vpop.permute.xlu0 %2415
        %2417 = vrot.lane.b32.xlu0 %v1081, 5
        %v2418 = vpop.permute.xlu0 %2417
        %2419 = vrot.lane.b32.xlu0 %v1083, 5
        %v2420 = vpop.permute.xlu0 %2419
        %2421 = vrot.lane.b32.xlu0 %v1085, 5
        %v2422 = vpop.permute.xlu0 %2421
        %2423 = vrot.lane.b32.xlu0 %v1086, 5
        %v2424 = vpop.permute.xlu0 %2423
        %2425 = vrot.lane.b32.xlu0 %v1089, 5
        %v2426 = vpop.permute.xlu0 %2425
        %2427 = vrot.lane.b32.xlu0 %v1091, 5
        %v2428 = vpop.permute.xlu0 %2427
        %2429 = vrot.lane.b32.xlu0 %v1093, 5
        %v2430 = vpop.permute.xlu0 %2429
        %2431 = vrot.lane.b32.xlu0 %v1094, 5
        %v2432 = vpop.permute.xlu0 %2431
        %2433 = vrot.lane.b32.xlu0 %v1097, 5
        %v2434 = vpop.permute.xlu0 %2433
        %2435 = vrot.lane.b32.xlu0 %v1099, 5
        %v2436 = vpop.permute.xlu0 %2435
        %2437 = vrot.lane.b32.xlu0 %v1101, 5
        %v2438 = vpop.permute.xlu0 %2437
        %2439 = vrot.lane.b32.xlu0 %v1102, 5
        %v2440 = vpop.permute.xlu0 %2439
        %2441 = vrot.lane.b32.xlu0 %v1105, 5
        %v2442 = vpop.permute.xlu0 %2441
        %2443 = vrot.lane.b32.xlu0 %v1107, 5
        %v2444 = vpop.permute.xlu0 %2443
        %2445 = vrot.lane.b32.xlu0 %v1109, 5
        %v2446 = vpop.permute.xlu0 %2445
        %2447 = vrot.lane.b32.xlu0 %v1110, 5
        %v2448 = vpop.permute.xlu0 %2447
        %2449 = vrot.lane.b32.xlu0 %v1113, 5
        %v2450 = vpop.permute.xlu0 %2449
        %2451 = vrot.lane.b32.xlu0 %v1115, 5
        %v2452 = vpop.permute.xlu0 %2451
        %2453 = vrot.lane.b32.xlu0 %v1117, 5
        %v2454 = vpop.permute.xlu0 %2453
        %2455 = vrot.lane.b32.xlu0 %v1118, 5
        %v2456 = vpop.permute.xlu0 %2455
        %2457 = vrot.lane.b32.xlu0 %v1121, 5
        %v2458 = vpop.permute.xlu0 %2457
        %2459 = vrot.lane.b32.xlu0 %v1123, 5
        %v2460 = vpop.permute.xlu0 %2459
        %2461 = vrot.lane.b32.xlu0 %v1125, 5
        %v2462 = vpop.permute.xlu0 %2461
        %2463 = vrot.lane.b32.xlu0 %v1126, 5
        %v2464 = vpop.permute.xlu0 %2463
        %2465 = vrot.lane.b32.xlu0 %v1129, 5
        %v2466 = vpop.permute.xlu0 %2465
        %2467 = vrot.lane.b32.xlu0 %v1131, 5
        %v2468 = vpop.permute.xlu0 %2467
        %2469 = vrot.lane.b32.xlu0 %v1133, 5
        %v2470 = vpop.permute.xlu0 %2469
        %2471 = vrot.lane.b32.xlu0 %v1134, 5
        %v2472 = vpop.permute.xlu0 %2471
        %2473 = vrot.lane.b32.xlu0 %v1137, 5
        %v2474 = vpop.permute.xlu0 %2473
        %2475 = vrot.lane.b32.xlu0 %v1139, 5
        %v2476 = vpop.permute.xlu0 %2475
        %2477 = vrot.lane.b32.xlu0 %v1141, 5
        %v2478 = vpop.permute.xlu0 %2477
        %2479 = vrot.lane.b32.xlu0 %v1142, 5
        %v2480 = vpop.permute.xlu0 %2479
        %2481 = vrot.lane.b32.xlu0 %v1145, 5
        %v2482 = vpop.permute.xlu0 %2481
        %2483 = vrot.lane.b32.xlu0 %v1147, 5
        %v2484 = vpop.permute.xlu0 %2483
        %2485 = vrot.lane.b32.xlu0 %v1149, 5
        %v2486 = vpop.permute.xlu0 %2485
        %2487 = vrot.lane.b32.xlu0 %v1150, 5
        %v2488 = vpop.permute.xlu0 %2487
        %2489 = vrot.lane.b32.xlu0 %v1165, 5
        %v2490 = vpop.permute.xlu0 %2489
        %2491 = vrot.lane.b32.xlu0 %v1167, 5
        %v2492 = vpop.permute.xlu0 %2491
        %2493 = vrot.lane.b32.xlu0 %v1169, 5
        %v2494 = vpop.permute.xlu0 %2493
        %2495 = vrot.lane.b32.xlu0 %v1170, 5
        %v2496 = vpop.permute.xlu0 %2495
        %2593 = vrot.lane.b32.xlu0 %v696, 6
        %v2594 = vpop.permute.xlu0 %2593
        %2595 = vrot.lane.b32.xlu0 %v698, 6
        %v2596 = vpop.permute.xlu0 %2595
        %2597 = vrot.lane.b32.xlu0 %v700, 6
        %v2598 = vpop.permute.xlu0 %2597
        %2599 = vrot.lane.b32.xlu0 %v702, 6
        %v2600 = vpop.permute.xlu0 %2599
        %2601 = vrot.lane.b32.xlu0 %v704, 6
        %v2602 = vpop.permute.xlu0 %2601
        %2603 = vrot.lane.b32.xlu0 %v706, 6
        %v2604 = vpop.permute.xlu0 %2603
        %2605 = vrot.lane.b32.xlu0 %v708, 6
        %v2606 = vpop.permute.xlu0 %2605
        %2607 = vrot.lane.b32.xlu0 %v710, 6
        %v2608 = vpop.permute.xlu0 %2607
        %2609 = vrot.lane.b32.xlu0 %v712, 6
        %v2610 = vpop.permute.xlu0 %2609
        %2611 = vrot.lane.b32.xlu0 %v714, 6
        %v2612 = vpop.permute.xlu0 %2611
        %2613 = vrot.lane.b32.xlu0 %v716, 6
        %v2614 = vpop.permute.xlu0 %2613
        %2615 = vrot.lane.b32.xlu0 %v718, 6
        %v2616 = vpop.permute.xlu0 %2615
        %2617 = vrot.lane.b32.xlu0 %v720, 6
        %v2618 = vpop.permute.xlu0 %2617
        %2619 = vrot.lane.b32.xlu0 %v722, 6
        %v2620 = vpop.permute.xlu0 %2619
        %2621 = vrot.lane.b32.xlu0 %v724, 6
        %v2622 = vpop.permute.xlu0 %2621
        %2623 = vrot.lane.b32.xlu0 %v726, 6
        %v2624 = vpop.permute.xlu0 %2623
        %2625 = vrot.lane.b32.xlu0 %v728, 6
        %v2626 = vpop.permute.xlu0 %2625
        %2627 = vrot.lane.b32.xlu0 %v730, 6
        %v2628 = vpop.permute.xlu0 %2627
        %2629 = vrot.lane.b32.xlu0 %v732, 6
        %v2630 = vpop.permute.xlu0 %2629
        %2631 = vrot.lane.b32.xlu0 %v734, 6
        %v2632 = vpop.permute.xlu0 %2631
        %2633 = vrot.lane.b32.xlu0 %v736, 6
        %v2634 = vpop.permute.xlu0 %2633
        %2635 = vrot.lane.b32.xlu0 %v738, 6
        %v2636 = vpop.permute.xlu0 %2635
        %2637 = vrot.lane.b32.xlu0 %v740, 6
        %v2638 = vpop.permute.xlu0 %2637
        %2639 = vrot.lane.b32.xlu0 %v742, 6
        %v2640 = vpop.permute.xlu0 %2639
        %2641 = vrot.lane.b32.xlu0 %v744, 6
        %v2642 = vpop.permute.xlu0 %2641
        %2643 = vrot.lane.b32.xlu0 %v746, 6
        %v2644 = vpop.permute.xlu0 %2643
        %2645 = vrot.lane.b32.xlu0 %v748, 6
        %v2646 = vpop.permute.xlu0 %2645
        %2647 = vrot.lane.b32.xlu0 %v750, 6
        %v2648 = vpop.permute.xlu0 %2647
        %2649 = vrot.lane.b32.xlu0 %v752, 6
        %v2650 = vpop.permute.xlu0 %2649
        %2651 = vrot.lane.b32.xlu0 %v754, 6
        %v2652 = vpop.permute.xlu0 %2651
        %2653 = vrot.lane.b32.xlu0 %v756, 6
        %v2654 = vpop.permute.xlu0 %2653
        %2655 = vrot.lane.b32.xlu0 %v758, 6
        %v2656 = vpop.permute.xlu0 %2655
        %2657 = vrot.lane.b32.xlu0 %v760, 6
        %v2658 = vpop.permute.xlu0 %2657
        %2659 = vrot.lane.b32.xlu0 %v762, 6
        %v2660 = vpop.permute.xlu0 %2659
        %2661 = vrot.lane.b32.xlu0 %v764, 6
        %v2662 = vpop.permute.xlu0 %2661
        %2663 = vrot.lane.b32.xlu0 %v766, 6
        %v2664 = vpop.permute.xlu0 %2663
        %2665 = vrot.lane.b32.xlu0 %v768, 6
        %v2666 = vpop.permute.xlu0 %2665
        %2667 = vrot.lane.b32.xlu0 %v770, 6
        %v2668 = vpop.permute.xlu0 %2667
        %2669 = vrot.lane.b32.xlu0 %v772, 6
        %v2670 = vpop.permute.xlu0 %2669
        %2671 = vrot.lane.b32.xlu0 %v774, 6
        %v2672 = vpop.permute.xlu0 %2671
        %2673 = vrot.lane.b32.xlu0 %v776, 6
        %v2674 = vpop.permute.xlu0 %2673
        %2675 = vrot.lane.b32.xlu0 %v778, 6
        %v2676 = vpop.permute.xlu0 %2675
        %2677 = vrot.lane.b32.xlu0 %v780, 6
        %v2678 = vpop.permute.xlu0 %2677
        %2679 = vrot.lane.b32.xlu0 %v782, 6
        %v2680 = vpop.permute.xlu0 %2679
        %2681 = vrot.lane.b32.xlu0 %v784, 6
        %v2682 = vpop.permute.xlu0 %2681
        %2683 = vrot.lane.b32.xlu0 %v786, 6
        %v2684 = vpop.permute.xlu0 %2683
        %2685 = vrot.lane.b32.xlu0 %v788, 6
        %v2686 = vpop.permute.xlu0 %2685
        %2687 = vrot.lane.b32.xlu0 %v790, 6
        %v2688 = vpop.permute.xlu0 %2687
        %2689 = vrot.lane.b32.xlu0 %v792, 6
        %v2690 = vpop.permute.xlu0 %2689
        %2691 = vrot.lane.b32.xlu0 %v794, 6
        %v2692 = vpop.permute.xlu0 %2691
        %2693 = vrot.lane.b32.xlu0 %v796, 6
        %v2694 = vpop.permute.xlu0 %2693
        %2695 = vrot.lane.b32.xlu0 %v798, 6
        %v2696 = vpop.permute.xlu0 %2695
        %2697 = vrot.lane.b32.xlu0 %v800, 6
        %v2698 = vpop.permute.xlu0 %2697
        %2699 = vrot.lane.b32.xlu0 %v802, 6
        %v2700 = vpop.permute.xlu0 %2699
        %2701 = vrot.lane.b32.xlu0 %v804, 6
        %v2702 = vpop.permute.xlu0 %2701
        %2703 = vrot.lane.b32.xlu0 %v806, 6
        %v2704 = vpop.permute.xlu0 %2703
        %2705 = vrot.lane.b32.xlu0 %v808, 6
        %v2706 = vpop.permute.xlu0 %2705
        %2707 = vrot.lane.b32.xlu0 %v810, 6
        %v2708 = vpop.permute.xlu0 %2707
        %2709 = vrot.lane.b32.xlu0 %v812, 6
        %v2710 = vpop.permute.xlu0 %2709
        %2711 = vrot.lane.b32.xlu0 %v814, 6
        %v2712 = vpop.permute.xlu0 %2711
        %2713 = vrot.lane.b32.xlu0 %v816, 6
        %v2714 = vpop.permute.xlu0 %2713
        %2715 = vrot.lane.b32.xlu0 %v818, 6
        %v2716 = vpop.permute.xlu0 %2715
        %2717 = vrot.lane.b32.xlu0 %v820, 6
        %v2718 = vpop.permute.xlu0 %2717
        %2719 = vrot.lane.b32.xlu0 %v822, 6
        %v2720 = vpop.permute.xlu0 %2719
        %2721 = vrot.lane.b32.xlu0 %v824, 6
        %v2722 = vpop.permute.xlu0 %2721
        %2723 = vrot.lane.b32.xlu0 %v826, 6
        %v2724 = vpop.permute.xlu0 %2723
        %2725 = vrot.lane.b32.xlu0 %v828, 6
        %v2726 = vpop.permute.xlu0 %2725
        %2727 = vrot.lane.b32.xlu0 %v830, 6
        %v2728 = vpop.permute.xlu0 %2727
        %2729 = vrot.lane.b32.xlu0 %v832, 6
        %v2730 = vpop.permute.xlu0 %2729
        %2731 = vrot.lane.b32.xlu0 %v834, 6
        %v2732 = vpop.permute.xlu0 %2731
        %2733 = vrot.lane.b32.xlu0 %v836, 6
        %v2734 = vpop.permute.xlu0 %2733
        %2735 = vrot.lane.b32.xlu0 %v838, 6
        %v2736 = vpop.permute.xlu0 %2735
        %2737 = vrot.lane.b32.xlu0 %v840, 6
        %v2738 = vpop.permute.xlu0 %2737
        %2739 = vrot.lane.b32.xlu0 %v842, 6
        %v2740 = vpop.permute.xlu0 %2739
        %2741 = vrot.lane.b32.xlu0 %v844, 6
        %v2742 = vpop.permute.xlu0 %2741
        %2743 = vrot.lane.b32.xlu0 %v846, 6
        %v2744 = vpop.permute.xlu0 %2743
        %2745 = vrot.lane.b32.xlu0 %v848, 6
        %v2746 = vpop.permute.xlu0 %2745
        %2747 = vrot.lane.b32.xlu0 %v850, 6
        %v2748 = vpop.permute.xlu0 %2747
        %2749 = vrot.lane.b32.xlu0 %v852, 6
        %v2750 = vpop.permute.xlu0 %2749
        %2751 = vrot.lane.b32.xlu0 %v854, 6
        %v2752 = vpop.permute.xlu0 %2751
        %2753 = vrot.lane.b32.xlu0 %v856, 6
        %v2754 = vpop.permute.xlu0 %2753
        %2755 = vrot.lane.b32.xlu0 %v858, 6
        %v2756 = vpop.permute.xlu0 %2755
        %2757 = vrot.lane.b32.xlu0 %v860, 6
        %v2758 = vpop.permute.xlu0 %2757
        %2759 = vrot.lane.b32.xlu0 %v862, 6
        %v2760 = vpop.permute.xlu0 %2759
        %2761 = vrot.lane.b32.xlu0 %v864, 6
        %v2762 = vpop.permute.xlu0 %2761
        %2763 = vrot.lane.b32.xlu0 %v866, 6
        %v2764 = vpop.permute.xlu0 %2763
        %2765 = vrot.lane.b32.xlu0 %v868, 6
        %v2766 = vpop.permute.xlu0 %2765
        %2767 = vrot.lane.b32.xlu0 %v870, 6
        %v2768 = vpop.permute.xlu0 %2767
        %2769 = vrot.lane.b32.xlu0 %v1156, 6
        %v2770 = vpop.permute.xlu0 %2769
        %2771 = vrot.lane.b32.xlu0 %v1158, 6
        %v2772 = vpop.permute.xlu0 %2771
        %2773 = vrot.lane.b32.xlu0 %v1160, 6
        %v2774 = vpop.permute.xlu0 %2773
        %2775 = vrot.lane.b32.xlu0 %v1162, 6
        %v2776 = vpop.permute.xlu0 %2775
        %2777 = vrot.lane.b32.xlu0 %v686, 6
        %v2778 = vpop.permute.xlu0 %2777
        %2872 = vrot.lane.b32.xlu0 %v496, 7
        %v2873 = vpop.permute.xlu0 %2872
        %2874 = vrot.lane.b32.xlu0 %v497, 7
        %v2875 = vpop.permute.xlu0 %2874
        %2876 = vrot.lane.b32.xlu0 %v498, 7
        %v2877 = vpop.permute.xlu0 %2876
        %2878 = vrot.lane.b32.xlu0 %v499, 7
        %v2879 = vpop.permute.xlu0 %2878
        %2880 = vrot.lane.b32.xlu0 %v500, 7
        %v2881 = vpop.permute.xlu0 %2880
        %2882 = vrot.lane.b32.xlu0 %v501, 7
        %v2883 = vpop.permute.xlu0 %2882
        %2884 = vrot.lane.b32.xlu0 %v502, 7
        %v2885 = vpop.permute.xlu0 %2884
        %2886 = vrot.lane.b32.xlu0 %v503, 7
        %v2887 = vpop.permute.xlu0 %2886
        %2888 = vrot.lane.b32.xlu0 %v504, 7
        %v2889 = vpop.permute.xlu0 %2888
        %2890 = vrot.lane.b32.xlu0 %v505, 7
        %v2891 = vpop.permute.xlu0 %2890
        %2892 = vrot.lane.b32.xlu0 %v506, 7
        %v2893 = vpop.permute.xlu0 %2892
        %2894 = vrot.lane.b32.xlu0 %v507, 7
        %v2895 = vpop.permute.xlu0 %2894
        %2896 = vrot.lane.b32.xlu0 %v508, 7
        %v2897 = vpop.permute.xlu0 %2896
        %2898 = vrot.lane.b32.xlu0 %v509, 7
        %v2899 = vpop.permute.xlu0 %2898
        %2900 = vrot.lane.b32.xlu0 %v510, 7
        %v2901 = vpop.permute.xlu0 %2900
        %2902 = vrot.lane.b32.xlu0 %v511, 7
        %v2903 = vpop.permute.xlu0 %2902
        %2904 = vrot.lane.b32.xlu0 %v512, 7
        %v2905 = vpop.permute.xlu0 %2904
        %2906 = vrot.lane.b32.xlu0 %v513, 7
        %v2907 = vpop.permute.xlu0 %2906
        %2908 = vrot.lane.b32.xlu0 %v514, 7
        %v2909 = vpop.permute.xlu0 %2908
        %2910 = vrot.lane.b32.xlu0 %v515, 7
        %v2911 = vpop.permute.xlu0 %2910
        %2912 = vrot.lane.b32.xlu0 %v516, 7
        %v2913 = vpop.permute.xlu0 %2912
        %2914 = vrot.lane.b32.xlu0 %v517, 7
        %v2915 = vpop.permute.xlu0 %2914
        %2916 = vrot.lane.b32.xlu0 %v518, 7
        %v2917 = vpop.permute.xlu0 %2916
        %2918 = vrot.lane.b32.xlu0 %v519, 7
        %v2919 = vpop.permute.xlu0 %2918
        %2920 = vrot.lane.b32.xlu0 %v520, 7
        %v2921 = vpop.permute.xlu0 %2920
        %2922 = vrot.lane.b32.xlu0 %v521, 7
        %v2923 = vpop.permute.xlu0 %2922
        %2924 = vrot.lane.b32.xlu0 %v522, 7
        %v2925 = vpop.permute.xlu0 %2924
        %2926 = vrot.lane.b32.xlu0 %v523, 7
        %v2927 = vpop.permute.xlu0 %2926
        %2928 = vrot.lane.b32.xlu0 %v524, 7
        %v2929 = vpop.permute.xlu0 %2928
        %2930 = vrot.lane.b32.xlu0 %v525, 7
        %v2931 = vpop.permute.xlu0 %2930
        %2932 = vrot.lane.b32.xlu0 %v526, 7
        %v2933 = vpop.permute.xlu0 %2932
        %2934 = vrot.lane.b32.xlu0 %v527, 7
        %v2935 = vpop.permute.xlu0 %2934
        %2936 = vrot.lane.b32.xlu0 %v528, 7
        %v2937 = vpop.permute.xlu0 %2936
        %2938 = vrot.lane.b32.xlu0 %v529, 7
        %v2939 = vpop.permute.xlu0 %2938
        %2940 = vrot.lane.b32.xlu0 %v530, 7
        %v2941 = vpop.permute.xlu0 %2940
        %2942 = vrot.lane.b32.xlu0 %v531, 7
        %v2943 = vpop.permute.xlu0 %2942
        %2944 = vrot.lane.b32.xlu0 %v532, 7
        %v2945 = vpop.permute.xlu0 %2944
        %2946 = vrot.lane.b32.xlu0 %v533, 7
        %v2947 = vpop.permute.xlu0 %2946
        %2948 = vrot.lane.b32.xlu0 %v534, 7
        %v2949 = vpop.permute.xlu0 %2948
        %2950 = vrot.lane.b32.xlu0 %v535, 7
        %v2951 = vpop.permute.xlu0 %2950
        %2952 = vrot.lane.b32.xlu0 %v536, 7
        %v2953 = vpop.permute.xlu0 %2952
        %2954 = vrot.lane.b32.xlu0 %v537, 7
        %v2955 = vpop.permute.xlu0 %2954
        %2956 = vrot.lane.b32.xlu0 %v538, 7
        %v2957 = vpop.permute.xlu0 %2956
        %2958 = vrot.lane.b32.xlu0 %v539, 7
        %v2959 = vpop.permute.xlu0 %2958
        %2960 = vrot.lane.b32.xlu0 %v540, 7
        %v2961 = vpop.permute.xlu0 %2960
        %2962 = vrot.lane.b32.xlu0 %v541, 7
        %v2963 = vpop.permute.xlu0 %2962
        %2964 = vrot.lane.b32.xlu0 %v542, 7
        %v2965 = vpop.permute.xlu0 %2964
        %2966 = vrot.lane.b32.xlu0 %v543, 7
        %v2967 = vpop.permute.xlu0 %2966
        %2968 = vrot.lane.b32.xlu0 %v544, 7
        %v2969 = vpop.permute.xlu0 %2968
        %2970 = vrot.lane.b32.xlu0 %v545, 7
        %v2971 = vpop.permute.xlu0 %2970
        %2972 = vrot.lane.b32.xlu0 %v546, 7
        %v2973 = vpop.permute.xlu0 %2972
        %2974 = vrot.lane.b32.xlu0 %v547, 7
        %v2975 = vpop.permute.xlu0 %2974
        %2976 = vrot.lane.b32.xlu0 %v548, 7
        %v2977 = vpop.permute.xlu0 %2976
        %2978 = vrot.lane.b32.xlu0 %v549, 7
        %v2979 = vpop.permute.xlu0 %2978
        %2980 = vrot.lane.b32.xlu0 %v550, 7
        %v2981 = vpop.permute.xlu0 %2980
        %2982 = vrot.lane.b32.xlu0 %v551, 7
        %v2983 = vpop.permute.xlu0 %2982
        %2984 = vrot.lane.b32.xlu0 %v552, 7
        %v2985 = vpop.permute.xlu0 %2984
        %2986 = vrot.lane.b32.xlu0 %v553, 7
        %v2987 = vpop.permute.xlu0 %2986
        %2988 = vrot.lane.b32.xlu0 %v554, 7
        %v2989 = vpop.permute.xlu0 %2988
        %2990 = vrot.lane.b32.xlu0 %v555, 7
        %v2991 = vpop.permute.xlu0 %2990
        %2992 = vrot.lane.b32.xlu0 %v556, 7
        %v2993 = vpop.permute.xlu0 %2992
        %2994 = vrot.lane.b32.xlu0 %v557, 7
        %v2995 = vpop.permute.xlu0 %2994
        %2996 = vrot.lane.b32.xlu0 %v558, 7
        %v2997 = vpop.permute.xlu0 %2996
        %2998 = vrot.lane.b32.xlu0 %v559, 7
        %v2999 = vpop.permute.xlu0 %2998
        %3000 = vrot.lane.b32.xlu0 %v560, 7
        %v3001 = vpop.permute.xlu0 %3000
        %3002 = vrot.lane.b32.xlu0 %v561, 7
        %v3003 = vpop.permute.xlu0 %3002
        %3004 = vrot.lane.b32.xlu0 %v562, 7
        %v3005 = vpop.permute.xlu0 %3004
        %3006 = vrot.lane.b32.xlu0 %v563, 7
        %v3007 = vpop.permute.xlu0 %3006
        %3008 = vrot.lane.b32.xlu0 %v564, 7
        %v3009 = vpop.permute.xlu0 %3008
        %3010 = vrot.lane.b32.xlu0 %v565, 7
        %v3011 = vpop.permute.xlu0 %3010
        %3012 = vrot.lane.b32.xlu0 %v566, 7
        %v3013 = vpop.permute.xlu0 %3012
        %3014 = vrot.lane.b32.xlu0 %v567, 7
        %v3015 = vpop.permute.xlu0 %3014
        %3016 = vrot.lane.b32.xlu0 %v568, 7
        %v3017 = vpop.permute.xlu0 %3016
        %3018 = vrot.lane.b32.xlu0 %v569, 7
        %v3019 = vpop.permute.xlu0 %3018
        %3020 = vrot.lane.b32.xlu0 %v570, 7
        %v3021 = vpop.permute.xlu0 %3020
        %3022 = vrot.lane.b32.xlu0 %v571, 7
        %v3023 = vpop.permute.xlu0 %3022
        %3024 = vrot.lane.b32.xlu0 %v572, 7
        %v3025 = vpop.permute.xlu0 %3024
        %3026 = vrot.lane.b32.xlu0 %v573, 7
        %v3027 = vpop.permute.xlu0 %3026
        %3028 = vrot.lane.b32.xlu0 %v574, 7
        %v3029 = vpop.permute.xlu0 %3028
        %3030 = vrot.lane.b32.xlu0 %v575, 7
        %v3031 = vpop.permute.xlu0 %3030
        %3032 = vrot.lane.b32.xlu0 %v576, 7
        %v3033 = vpop.permute.xlu0 %3032
        %3034 = vrot.lane.b32.xlu0 %v577, 7
        %v3035 = vpop.permute.xlu0 %3034
        %3036 = vrot.lane.b32.xlu0 %v578, 7
        %v3037 = vpop.permute.xlu0 %3036
        %3038 = vrot.lane.b32.xlu0 %v579, 7
        %v3039 = vpop.permute.xlu0 %3038
        %3040 = vrot.lane.b32.xlu0 %v580, 7
        %v3041 = vpop.permute.xlu0 %3040
        %3042 = vrot.lane.b32.xlu0 %v581, 7
        %v3043 = vpop.permute.xlu0 %3042
        %3044 = vrot.lane.b32.xlu0 %v582, 7
        %v3045 = vpop.permute.xlu0 %3044
        %3046 = vrot.lane.b32.xlu0 %v583, 7
        %v3047 = vpop.permute.xlu0 %3046
        %3048 = vrot.lane.b32.xlu0 %v584, 7
        %v3049 = vpop.permute.xlu0 %3048
        %3050 = vrot.lane.b32.xlu0 %v585, 7
        %v3051 = vpop.permute.xlu0 %3050
        %3052 = vrot.lane.b32.xlu0 %v586, 7
        %v3053 = vpop.permute.xlu0 %3052
        %3054 = vrot.lane.b32.xlu0 %v587, 7
        %v3055 = vpop.permute.xlu0 %3054
        %3056 = vrot.lane.b32.xlu0 0.0, 7
        %v3057 = vpop.permute.xlu0 %3056
        %3151 = vrot.lane.b32.xlu0 %v977, 8
        %v3152 = vpop.permute.xlu0 %3151
        %3153 = vrot.lane.b32.xlu0 %v979, 8
        %v3154 = vpop.permute.xlu0 %3153
        %3155 = vrot.lane.b32.xlu0 %v981, 8
        %v3156 = vpop.permute.xlu0 %3155
        %3157 = vrot.lane.b32.xlu0 %v982, 8
        %v3158 = vpop.permute.xlu0 %3157
        %3159 = vrot.lane.b32.xlu0 %v985, 8
        %v3160 = vpop.permute.xlu0 %3159
        %3161 = vrot.lane.b32.xlu0 %v987, 8
        %v3162 = vpop.permute.xlu0 %3161
        %3163 = vrot.lane.b32.xlu0 %v989, 8
        %v3164 = vpop.permute.xlu0 %3163
        %3165 = vrot.lane.b32.xlu0 %v990, 8
        %v3166 = vpop.permute.xlu0 %3165
        %3167 = vrot.lane.b32.xlu0 %v993, 8
        %v3168 = vpop.permute.xlu0 %3167
        %3169 = vrot.lane.b32.xlu0 %v995, 8
        %v3170 = vpop.permute.xlu0 %3169
        %3171 = vrot.lane.b32.xlu0 %v997, 8
        %v3172 = vpop.permute.xlu0 %3171
        %3173 = vrot.lane.b32.xlu0 %v998, 8
        %v3174 = vpop.permute.xlu0 %3173
        %3175 = vrot.lane.b32.xlu0 %v1001, 8
        %v3176 = vpop.permute.xlu0 %3175
        %3177 = vrot.lane.b32.xlu0 %v1003, 8
        %v3178 = vpop.permute.xlu0 %3177
        %3179 = vrot.lane.b32.xlu0 %v1005, 8
        %v3180 = vpop.permute.xlu0 %3179
        %3181 = vrot.lane.b32.xlu0 %v1006, 8
        %v3182 = vpop.permute.xlu0 %3181
        %3183 = vrot.lane.b32.xlu0 %v1009, 8
        %v3184 = vpop.permute.xlu0 %3183
        %3185 = vrot.lane.b32.xlu0 %v1011, 8
        %v3186 = vpop.permute.xlu0 %3185
        %3187 = vrot.lane.b32.xlu0 %v1013, 8
        %v3188 = vpop.permute.xlu0 %3187
        %3189 = vrot.lane.b32.xlu0 %v1014, 8
        %v3190 = vpop.permute.xlu0 %3189
        %3191 = vrot.lane.b32.xlu0 %v1017, 8
        %v3192 = vpop.permute.xlu0 %3191
        %3193 = vrot.lane.b32.xlu0 %v1019, 8
        %v3194 = vpop.permute.xlu0 %3193
        %3195 = vrot.lane.b32.xlu0 %v1021, 8
        %v3196 = vpop.permute.xlu0 %3195
        %3197 = vrot.lane.b32.xlu0 %v1022, 8
        %v3198 = vpop.permute.xlu0 %3197
        %3199 = vrot.lane.b32.xlu0 %v1025, 8
        %v3200 = vpop.permute.xlu0 %3199
        %3201 = vrot.lane.b32.xlu0 %v1027, 8
        %v3202 = vpop.permute.xlu0 %3201
        %3203 = vrot.lane.b32.xlu0 %v1029, 8
        %v3204 = vpop.permute.xlu0 %3203
        %3205 = vrot.lane.b32.xlu0 %v1030, 8
        %v3206 = vpop.permute.xlu0 %3205
        %3207 = vrot.lane.b32.xlu0 %v1033, 8
        %v3208 = vpop.permute.xlu0 %3207
        %3209 = vrot.lane.b32.xlu0 %v1035, 8
        %v3210 = vpop.permute.xlu0 %3209
        %3211 = vrot.lane.b32.xlu0 %v1037, 8
        %v3212 = vpop.permute.xlu0 %3211
        %3213 = vrot.lane.b32.xlu0 %v1038, 8
        %v3214 = vpop.permute.xlu0 %3213
        %3215 = vrot.lane.b32.xlu0 %v1041, 8
        %v3216 = vpop.permute.xlu0 %3215
        %3217 = vrot.lane.b32.xlu0 %v1043, 8
        %v3218 = vpop.permute.xlu0 %3217
        %3219 = vrot.lane.b32.xlu0 %v1045, 8
        %v3220 = vpop.permute.xlu0 %3219
        %3221 = vrot.lane.b32.xlu0 %v1046, 8
        %v3222 = vpop.permute.xlu0 %3221
        %3223 = vrot.lane.b32.xlu0 %v1049, 8
        %v3224 = vpop.permute.xlu0 %3223
        %3225 = vrot.lane.b32.xlu0 %v1051, 8
        %v3226 = vpop.permute.xlu0 %3225
        %3227 = vrot.lane.b32.xlu0 %v1053, 8
        %v3228 = vpop.permute.xlu0 %3227
        %3229 = vrot.lane.b32.xlu0 %v1054, 8
        %v3230 = vpop.permute.xlu0 %3229
        %3231 = vrot.lane.b32.xlu0 %v1057, 8
        %v3232 = vpop.permute.xlu0 %3231
        %3233 = vrot.lane.b32.xlu0 %v1059, 8
        %v3234 = vpop.permute.xlu0 %3233
        %3235 = vrot.lane.b32.xlu0 %v1061, 8
        %v3236 = vpop.permute.xlu0 %3235
        %3237 = vrot.lane.b32.xlu0 %v1062, 8
        %v3238 = vpop.permute.xlu0 %3237
        %3239 = vrot.lane.b32.xlu0 %v1065, 8
        %v3240 = vpop.permute.xlu0 %3239
        %3241 = vrot.lane.b32.xlu0 %v1067, 8
        %v3242 = vpop.permute.xlu0 %3241
        %3243 = vrot.lane.b32.xlu0 %v1069, 8
        %v3244 = vpop.permute.xlu0 %3243
        %3245 = vrot.lane.b32.xlu0 %v1070, 8
        %v3246 = vpop.permute.xlu0 %3245
        %3247 = vrot.lane.b32.xlu0 %v1073, 8
        %v3248 = vpop.permute.xlu0 %3247
        %3249 = vrot.lane.b32.xlu0 %v1075, 8
        %v3250 = vpop.permute.xlu0 %3249
        %3251 = vrot.lane.b32.xlu0 %v1077, 8
        %v3252 = vpop.permute.xlu0 %3251
        %3253 = vrot.lane.b32.xlu0 %v1078, 8
        %v3254 = vpop.permute.xlu0 %3253
        %3255 = vrot.lane.b32.xlu0 %v1081, 8
        %v3256 = vpop.permute.xlu0 %3255
        %3257 = vrot.lane.b32.xlu0 %v1083, 8
        %v3258 = vpop.permute.xlu0 %3257
        %3259 = vrot.lane.b32.xlu0 %v1085, 8
        %v3260 = vpop.permute.xlu0 %3259
        %3261 = vrot.lane.b32.xlu0 %v1086, 8
        %v3262 = vpop.permute.xlu0 %3261
        %3263 = vrot.lane.b32.xlu0 %v1089, 8
        %v3264 = vpop.permute.xlu0 %3263
        %3265 = vrot.lane.b32.xlu0 %v1091, 8
        %v3266 = vpop.permute.xlu0 %3265
        %3267 = vrot.lane.b32.xlu0 %v1093, 8
        %v3268 = vpop.permute.xlu0 %3267
        %3269 = vrot.lane.b32.xlu0 %v1094, 8
        %v3270 = vpop.permute.xlu0 %3269
        %3271 = vrot.lane.b32.xlu0 %v1097, 8
        %v3272 = vpop.permute.xlu0 %3271
        %3273 = vrot.lane.b32.xlu0 %v1099, 8
        %v3274 = vpop.permute.xlu0 %3273
        %3275 = vrot.lane.b32.xlu0 %v1101, 8
        %v3276 = vpop.permute.xlu0 %3275
        %3277 = vrot.lane.b32.xlu0 %v1102, 8
        %v3278 = vpop.permute.xlu0 %3277
        %3279 = vrot.lane.b32.xlu0 %v1105, 8
        %v3280 = vpop.permute.xlu0 %3279
        %3281 = vrot.lane.b32.xlu0 %v1107, 8
        %v3282 = vpop.permute.xlu0 %3281
        %3283 = vrot.lane.b32.xlu0 %v1109, 8
        %v3284 = vpop.permute.xlu0 %3283
        %3285 = vrot.lane.b32.xlu0 %v1110, 8
        %v3286 = vpop.permute.xlu0 %3285
        %3287 = vrot.lane.b32.xlu0 %v1113, 8
        %v3288 = vpop.permute.xlu0 %3287
        %3289 = vrot.lane.b32.xlu0 %v1115, 8
        %v3290 = vpop.permute.xlu0 %3289
        %3291 = vrot.lane.b32.xlu0 %v1117, 8
        %v3292 = vpop.permute.xlu0 %3291
        %3293 = vrot.lane.b32.xlu0 %v1118, 8
        %v3294 = vpop.permute.xlu0 %3293
        %3295 = vrot.lane.b32.xlu0 %v1121, 8
        %v3296 = vpop.permute.xlu0 %3295
        %3297 = vrot.lane.b32.xlu0 %v1123, 8
        %v3298 = vpop.permute.xlu0 %3297
        %3299 = vrot.lane.b32.xlu0 %v1125, 8
        %v3300 = vpop.permute.xlu0 %3299
        %3301 = vrot.lane.b32.xlu0 %v1126, 8
        %v3302 = vpop.permute.xlu0 %3301
        %3303 = vrot.lane.b32.xlu0 %v1129, 8
        %v3304 = vpop.permute.xlu0 %3303
        %3305 = vrot.lane.b32.xlu0 %v1131, 8
        %v3306 = vpop.permute.xlu0 %3305
        %3307 = vrot.lane.b32.xlu0 %v1133, 8
        %v3308 = vpop.permute.xlu0 %3307
        %3309 = vrot.lane.b32.xlu0 %v1134, 8
        %v3310 = vpop.permute.xlu0 %3309
        %3311 = vrot.lane.b32.xlu0 %v1137, 8
        %v3312 = vpop.permute.xlu0 %3311
        %3313 = vrot.lane.b32.xlu0 %v1139, 8
        %v3314 = vpop.permute.xlu0 %3313
        %3315 = vrot.lane.b32.xlu0 %v1141, 8
        %v3316 = vpop.permute.xlu0 %3315
        %3317 = vrot.lane.b32.xlu0 %v1142, 8
        %v3318 = vpop.permute.xlu0 %3317
        %3319 = vrot.lane.b32.xlu0 %v1145, 8
        %v3320 = vpop.permute.xlu0 %3319
        %3321 = vrot.lane.b32.xlu0 %v1147, 8
        %v3322 = vpop.permute.xlu0 %3321
        %3323 = vrot.lane.b32.xlu0 %v1149, 8
        %v3324 = vpop.permute.xlu0 %3323
        %3325 = vrot.lane.b32.xlu0 %v1150, 8
        %v3326 = vpop.permute.xlu0 %3325
        %3327 = vrot.lane.b32.xlu0 %v1165, 8
        %v3328 = vpop.permute.xlu0 %3327
        %3329 = vrot.lane.b32.xlu0 %v1167, 8
        %v3330 = vpop.permute.xlu0 %3329
        %3331 = vrot.lane.b32.xlu0 %v1169, 8
        %v3332 = vpop.permute.xlu0 %3331
        %3333 = vrot.lane.b32.xlu0 %v1170, 8
        %v3334 = vpop.permute.xlu0 %3333
        %3335 = vrot.lane.b32.xlu0 %v966, 8
        %v3336 = vpop.permute.xlu0 %3335
        %vm3430 = vcmask 7168
        %v3431 = vsel %vm3430, %v686, %v1172
        %v3432 = vsel %vm3430, %v688, %v1174
        %v3433 = vsel %vm3430, %v690, %v1176
        %v3434 = vsel %vm3430, %v692, %v1178
        %v3435 = vsel %vm3430, %v694, %v1180
        %v3436 = vsel %vm3430, %v696, %v1182
        %v3437 = vsel %vm3430, %v698, %v1184
        %v3438 = vsel %vm3430, %v700, %v1186
        %v3439 = vsel %vm3430, %v702, %v1188
        %v3440 = vsel %vm3430, %v704, %v1190
        %v3441 = vsel %vm3430, %v706, %v1192
        %v3442 = vsel %vm3430, %v708, %v1194
        %v3443 = vsel %vm3430, %v710, %v1196
        %v3444 = vsel %vm3430, %v712, %v1198
        %v3445 = vsel %vm3430, %v714, %v1200
        %v3446 = vsel %vm3430, %v716, %v1202
        %v3447 = vsel %vm3430, %v718, %v1204
        %v3448 = vsel %vm3430, %v720, %v1206
        %v3449 = vsel %vm3430, %v722, %v1208
        %v3450 = vsel %vm3430, %v724, %v1210
        %v3451 = vsel %vm3430, %v726, %v1212
        %v3452 = vsel %vm3430, %v728, %v1214
        %v3453 = vsel %vm3430, %v730, %v1216
        %v3454 = vsel %vm3430, %v732, %v1218
        %v3455 = vsel %vm3430, %v734, %v1220
        %v3456 = vsel %vm3430, %v736, %v1222
        %v3457 = vsel %vm3430, %v738, %v1224
        %v3458 = vsel %vm3430, %v740, %v1226
        %v3459 = vsel %vm3430, %v742, %v1228
        %v3460 = vsel %vm3430, %v744, %v1230
        %v3461 = vsel %vm3430, %v746, %v1232
        %v3462 = vsel %vm3430, %v748, %v1234
        %v3463 = vsel %vm3430, %v750, %v1236
        %v3464 = vsel %vm3430, %v752, %v1238
        %v3465 = vsel %vm3430, %v754, %v1240
        %v3466 = vsel %vm3430, %v756, %v1242
        %v3467 = vsel %vm3430, %v758, %v1244
        %v3468 = vsel %vm3430, %v760, %v1246
        %v3469 = vsel %vm3430, %v762, %v1248
        %v3470 = vsel %vm3430, %v764, %v1250
        %v3471 = vsel %vm3430, %v766, %v1252
        %v3472 = vsel %vm3430, %v768, %v1254
        %v3473 = vsel %vm3430, %v770, %v1256
        %v3474 = vsel %vm3430, %v772, %v1258
        %v3475 = vsel %vm3430, %v774, %v1260
        %v3476 = vsel %vm3430, %v776, %v1262
        %v3477 = vsel %vm3430, %v778, %v1264
        %v3478 = vsel %vm3430, %v780, %v1266
        %v3479 = vsel %vm3430, %v782, %v1268
        %v3480 = vsel %vm3430, %v784, %v1270
        %v3481 = vsel %vm3430, %v786, %v1272
        %v3482 = vsel %vm3430, %v788, %v1274
        %v3483 = vsel %vm3430, %v790, %v1276
        %v3484 = vsel %vm3430, %v792, %v1278
        %v3485 = vsel %vm3430, %v794, %v1280
        %v3486 = vsel %vm3430, %v796, %v1282
        %v3487 = vsel %vm3430, %v798, %v1284
        %v3488 = vsel %vm3430, %v800, %v1286
        %v3489 = vsel %vm3430, %v802, %v1288
        %v3490 = vsel %vm3430, %v804, %v1290
        %v3491 = vsel %vm3430, %v806, %v1292
        %v3492 = vsel %vm3430, %v808, %v1294
        %v3493 = vsel %vm3430, %v810, %v1296
        %v3494 = vsel %vm3430, %v812, %v1298
        %v3495 = vsel %vm3430, %v814, %v1300
        %v3496 = vsel %vm3430, %v816, %v1302
        %v3497 = vsel %vm3430, %v818, %v1304
        %v3498 = vsel %vm3430, %v820, %v1306
        %v3499 = vsel %vm3430, %v822, %v1308
        %v3500 = vsel %vm3430, %v824, %v1310
        %v3501 = vsel %vm3430, %v826, %v1312
        %v3502 = vsel %vm3430, %v828, %v1314
        %v3503 = vsel %vm3430, %v830, %v1316
        %v3504 = vsel %vm3430, %v832, %v1318
        %v3505 = vsel %vm3430, %v834, %v1320
        %v3506 = vsel %vm3430, %v836, %v1322
        %v3507 = vsel %vm3430, %v838, %v1324
        %v3508 = vsel %vm3430, %v840, %v1326
        %v3509 = vsel %vm3430, %v842, %v1328
        %v3510 = vsel %vm3430, %v844, %v1330
        %v3511 = vsel %vm3430, %v846, %v1332
        %v3512 = vsel %vm3430, %v848, %v1334
        %v3513 = vsel %vm3430, %v850, %v1336
        %v3514 = vsel %vm3430, %v852, %v1338
        %v3515 = vsel %vm3430, %v854, %v1340
        %v3516 = vsel %vm3430, %v856, %v1342
        %v3517 = vsel %vm3430, %v858, %v1344
        %v3518 = vsel %vm3430, %v860, %v1346
        %v3519 = vsel %vm3430, %v862, %v1348
        %v3520 = vsel %vm3430, %v864, %v1350
        %v3521 = vsel %vm3430, %v866, %v1352
        %v3522 = vsel %vm3430, %v868, %v1354
        %v3523 = vsel %vm3430, %v870, %v1356
        %vm3524 = vcmask 15360
        %v3525 = vsel %vm3524, %v3431, %v1451
        %v3526 = vsel %vm3524, %v3432, %v1453
        %v3527 = vsel %vm3524, %v3433, %v1455
        %v3528 = vsel %vm3524, %v3434, %v1457
        %v3529 = vsel %vm3524, %v3435, %v1459
        %v3530 = vsel %vm3524, %v3436, %v1461
        %v3531 = vsel %vm3524, %v3437, %v1463
        %v3532 = vsel %vm3524, %v3438, %v1465
        %v3533 = vsel %vm3524, %v3439, %v1467
        %v3534 = vsel %vm3524, %v3440, %v1469
        %v3535 = vsel %vm3524, %v3441, %v1471
        %v3536 = vsel %vm3524, %v3442, %v1473
        %v3537 = vsel %vm3524, %v3443, %v1475
        %v3538 = vsel %vm3524, %v3444, %v1477
        %v3539 = vsel %vm3524, %v3445, %v1479
        %v3540 = vsel %vm3524, %v3446, %v1481
        %v3541 = vsel %vm3524, %v3447, %v1483
        %v3542 = vsel %vm3524, %v3448, %v1485
        %v3543 = vsel %vm3524, %v3449, %v1487
        %v3544 = vsel %vm3524, %v3450, %v1489
        %v3545 = vsel %vm3524, %v3451, %v1491
        %v3546 = vsel %vm3524, %v3452, %v1493
        %v3547 = vsel %vm3524, %v3453, %v1495
        %v3548 = vsel %vm3524, %v3454, %v1497
        %v3549 = vsel %vm3524, %v3455, %v1499
        %v3550 = vsel %vm3524, %v3456, %v1501
        %v3551 = vsel %vm3524, %v3457, %v1503
        %v3552 = vsel %vm3524, %v3458, %v1505
        %v3553 = vsel %vm3524, %v3459, %v1507
        %v3554 = vsel %vm3524, %v3460, %v1509
        %v3555 = vsel %vm3524, %v3461, %v1511
        %v3556 = vsel %vm3524, %v3462, %v1513
        %v3557 = vsel %vm3524, %v3463, %v1515
        %v3558 = vsel %vm3524, %v3464, %v1517
        %v3559 = vsel %vm3524, %v3465, %v1519
        %v3560 = vsel %vm3524, %v3466, %v1521
        %v3561 = vsel %vm3524, %v3467, %v1523
        %v3562 = vsel %vm3524, %v3468, %v1525
        %v3563 = vsel %vm3524, %v3469, %v1527
        %v3564 = vsel %vm3524, %v3470, %v1529
        %v3565 = vsel %vm3524, %v3471, %v1531
        %v3566 = vsel %vm3524, %v3472, %v1533
        %v3567 = vsel %vm3524, %v3473, %v1535
        %v3568 = vsel %vm3524, %v3474, %v1537
        %v3569 = vsel %vm3524, %v3475, %v1539
        %v3570 = vsel %vm3524, %v3476, %v1541
        %v3571 = vsel %vm3524, %v3477, %v1543
        %v3572 = vsel %vm3524, %v3478, %v1545
        %v3573 = vsel %vm3524, %v3479, %v1547
        %v3574 = vsel %vm3524, %v3480, %v1549
        %v3575 = vsel %vm3524, %v3481, %v1551
        %v3576 = vsel %vm3524, %v3482, %v1553
        %v3577 = vsel %vm3524, %v3483, %v1555
        %v3578 = vsel %vm3524, %v3484, %v1557
        %v3579 = vsel %vm3524, %v3485, %v1559
        %v3580 = vsel %vm3524, %v3486, %v1561
        %v3581 = vsel %vm3524, %v3487, %v1563
        %v3582 = vsel %vm3524, %v3488, %v1565
        %v3583 = vsel %vm3524, %v3489, %v1567
        %v3584 = vsel %vm3524, %v3490, %v1569
        %v3585 = vsel %vm3524, %v3491, %v1571
        %v3586 = vsel %vm3524, %v3492, %v1573
        %v3587 = vsel %vm3524, %v3493, %v1575
        %v3588 = vsel %vm3524, %v3494, %v1577
        %v3589 = vsel %vm3524, %v3495, %v1579
        %v3590 = vsel %vm3524, %v3496, %v1581
        %v3591 = vsel %vm3524, %v3497, %v1583
        %v3592 = vsel %vm3524, %v3498, %v1585
        %v3593 = vsel %vm3524, %v3499, %v1587
        %v3594 = vsel %vm3524, %v3500, %v1589
        %v3595 = vsel %vm3524, %v3501, %v1591
        %v3596 = vsel %vm3524, %v3502, %v1593
        %v3597 = vsel %vm3524, %v3503, %v1595
        %v3598 = vsel %vm3524, %v3504, %v1597
        %v3599 = vsel %vm3524, %v3505, %v1599
        %v3600 = vsel %vm3524, %v3506, %v1601
        %v3601 = vsel %vm3524, %v3507, %v1603
        %v3602 = vsel %vm3524, %v3508, %v1605
        %v3603 = vsel %vm3524, %v3509, %v1607
        %v3604 = vsel %vm3524, %v3510, %v1609
        %v3605 = vsel %vm3524, %v3511, %v1611
        %v3606 = vsel %vm3524, %v3512, %v1613
        %v3607 = vsel %vm3524, %v3513, %v1615
        %v3608 = vsel %vm3524, %v3514, %v1617
        %v3609 = vsel %vm3524, %v3515, %v1619
        %v3610 = vsel %vm3524, %v3516, %v1621
        %v3611 = vsel %vm3524, %v3517, %v1623
        %v3612 = vsel %vm3524, %v3518, %v1625
        %v3613 = vsel %vm3524, %v3519, %v1627
        %v3614 = vsel %vm3524, %v3520, %v1629
        %v3615 = vsel %vm3524, %v3521, %v1631
        %v3616 = vsel %vm3524, %v3522, %v1633
        %v3617 = vsel %vm3524, %v3523, %v1635
        %vm3618 = vcmask 23552
        %v3619 = vsel %vm3618, %v3525, %v1730
        %v3620 = vsel %vm3618, %v3525, %v1732
        %v3621 = vsel %vm3618, %v3525, %v1734
        %v3622 = vsel %vm3618, %v3525, %v1736
        %v3623 = vsel %vm3618, %v3526, %v1738
        %v3624 = vsel %vm3618, %v3527, %v1740
        %v3625 = vsel %vm3618, %v3528, %v1742
        %v3626 = vsel %vm3618, %v3529, %v1744
        %v3627 = vsel %vm3618, %v3530, %v1746
        %v3628 = vsel %vm3618, %v3531, %v1748
        %v3629 = vsel %vm3618, %v3532, %v1750
        %v3630 = vsel %vm3618, %v3533, %v1752
        %v3631 = vsel %vm3618, %v3534, %v1754
        %v3632 = vsel %vm3618, %v3535, %v1756
        %v3633 = vsel %vm3618, %v3536, %v1758
        %v3634 = vsel %vm3618, %v3537, %v1760
        %v3635 = vsel %vm3618, %v3538, %v1762
        %v3636 = vsel %vm3618, %v3539, %v1764
        %v3637 = vsel %vm3618, %v3540, %v1766
        %v3638 = vsel %vm3618, %v3541, %v1768
        %v3639 = vsel %vm3618, %v3542, %v1770
        %v3640 = vsel %vm3618, %v3543, %v1772
        %v3641 = vsel %vm3618, %v3544, %v1774
        %v3642 = vsel %vm3618, %v3545, %v1776
        %v3643 = vsel %vm3618, %v3546, %v1778
        %v3644 = vsel %vm3618, %v3547, %v1780
        %v3645 = vsel %vm3618, %v3548, %v1782
        %v3646 = vsel %vm3618, %v3549, %v1784
        %v3647 = vsel %vm3618, %v3550, %v1786
        %v3648 = vsel %vm3618, %v3551, %v1788
        %v3649 = vsel %vm3618, %v3552, %v1790
        %v3650 = vsel %vm3618, %v3553, %v1792
        %v3651 = vsel %vm3618, %v3554, %v1794
        %v3652 = vsel %vm3618, %v3555, %v1796
        %v3653 = vsel %vm3618, %v3556, %v1798
        %v3654 = vsel %vm3618, %v3557, %v1800
        %v3655 = vsel %vm3618, %v3558, %v1802
        %v3656 = vsel %vm3618, %v3559, %v1804
        %v3657 = vsel %vm3618, %v3560, %v1806
        %v3658 = vsel %vm3618, %v3561, %v1808
        %v3659 = vsel %vm3618, %v3562, %v1810
        %v3660 = vsel %vm3618, %v3563, %v1812
        %v3661 = vsel %vm3618, %v3564, %v1814
        %v3662 = vsel %vm3618, %v3565, %v1816
        %v3663 = vsel %vm3618, %v3566, %v1818
        %v3664 = vsel %vm3618, %v3567, %v1820
        %v3665 = vsel %vm3618, %v3568, %v1822
        %v3666 = vsel %vm3618, %v3569, %v1824
        %v3667 = vsel %vm3618, %v3570, %v1826
        %v3668 = vsel %vm3618, %v3571, %v1828
        %v3669 = vsel %vm3618, %v3572, %v1830
        %v3670 = vsel %vm3618, %v3573, %v1832
        %v3671 = vsel %vm3618, %v3574, %v1834
        %v3672 = vsel %vm3618, %v3575, %v1836
        %v3673 = vsel %vm3618, %v3576, %v1838
        %v3674 = vsel %vm3618, %v3577, %v1840
        %v3675 = vsel %vm3618, %v3578, %v1842
        %v3676 = vsel %vm3618, %v3579, %v1844
        %v3677 = vsel %vm3618, %v3580, %v1846
        %v3678 = vsel %vm3618, %v3581, %v1848
        %v3679 = vsel %vm3618, %v3582, %v1850
        %v3680 = vsel %vm3618, %v3583, %v1852
        %v3681 = vsel %vm3618, %v3584, %v1854
        %v3682 = vsel %vm3618, %v3585, %v1856
        %v3683 = vsel %vm3618, %v3586, %v1858
        %v3684 = vsel %vm3618, %v3587, %v1860
        %v3685 = vsel %vm3618, %v3588, %v1862
        %v3686 = vsel %vm3618, %v3589, %v1864
        %v3687 = vsel %vm3618, %v3590, %v1866
        %v3688 = vsel %vm3618, %v3591, %v1868
        %v3689 = vsel %vm3618, %v3592, %v1870
        %v3690 = vsel %vm3618, %v3593, %v1872
        %v3691 = vsel %vm3618, %v3594, %v1874
        %v3692 = vsel %vm3618, %v3595, %v1876
        %v3693 = vsel %vm3618, %v3596, %v1878
        %v3694 = vsel %vm3618, %v3597, %v1880
        %v3695 = vsel %vm3618, %v3598, %v1882
        %v3696 = vsel %vm3618, %v3599, %v1884
        %v3697 = vsel %vm3618, %v3600, %v1886
        %v3698 = vsel %vm3618, %v3601, %v1888
        %v3699 = vsel %vm3618, %v3602, %v1890
        %v3700 = vsel %vm3618, %v3603, %v1892
        %v3701 = vsel %vm3618, %v3604, %v1894
        %v3702 = vsel %vm3618, %v3605, %v1896
        %v3703 = vsel %vm3618, %v3606, %v1898
        %v3704 = vsel %vm3618, %v3607, %v1900
        %v3705 = vsel %vm3618, %v3608, %v1902
        %v3706 = vsel %vm3618, %v3609, %v1904
        %v3707 = vsel %vm3618, %v3610, %v1906
        %v3708 = vsel %vm3618, %v3611, %v1908
        %v3709 = vsel %vm3618, %v3612, %v1910
        %v3710 = vsel %vm3618, %v3613, %v1912
        %v3711 = vsel %vm3618, %v3614, %v1914
        %v3712 = vsel %vm3618, %v3615, %v1916
        %v3713 = vsel %vm3618, %v3616, %v1918
        %v3714 = vsel %vm3618, %v3617, %v1920
        %vm3715 = vcmask 31744
        %v3716 = vsel %vm3715, %v3619, %v2018
        %v3717 = vsel %vm3715, %v3620, %v2020
        %v3718 = vsel %vm3715, %v3621, %v2022
        %v3719 = vsel %vm3715, %v3622, %v2024
        %v3720 = vsel %vm3715, %v3623, %v2026
        %v3721 = vsel %vm3715, %v3624, %v2028
        %v3722 = vsel %vm3715, %v3625, %v2030
        %v3723 = vsel %vm3715, %v3626, %v2032
        %v3724 = vsel %vm3715, %v3627, %v2034
        %v3725 = vsel %vm3715, %v3628, %v2036
        %v3726 = vsel %vm3715, %v3629, %v2038
        %v3727 = vsel %vm3715, %v3630, %v2040
        %v3728 = vsel %vm3715, %v3631, %v2042
        %v3729 = vsel %vm3715, %v3632, %v2044
        %v3730 = vsel %vm3715, %v3633, %v2046
        %v3731 = vsel %vm3715, %v3634, %v2048
        %v3732 = vsel %vm3715, %v3635, %v2050
        %v3733 = vsel %vm3715, %v3636, %v2052
        %v3734 = vsel %vm3715, %v3637, %v2054
        %v3735 = vsel %vm3715, %v3638, %v2056
        %v3736 = vsel %vm3715, %v3639, %v2058
        %v3737 = vsel %vm3715, %v3640, %v2060
        %v3738 = vsel %vm3715, %v3641, %v2062
        %v3739 = vsel %vm3715, %v3642, %v2064
        %v3740 = vsel %vm3715, %v3643, %v2066
        %v3741 = vsel %vm3715, %v3644, %v2068
        %v3742 = vsel %vm3715, %v3645, %v2070
        %v3743 = vsel %vm3715, %v3646, %v2072
        %v3744 = vsel %vm3715, %v3647, %v2074
        %v3745 = vsel %vm3715, %v3648, %v2076
        %v3746 = vsel %vm3715, %v3649, %v2078
        %v3747 = vsel %vm3715, %v3650, %v2080
        %v3748 = vsel %vm3715, %v3651, %v2082
        %v3749 = vsel %vm3715, %v3652, %v2084
        %v3750 = vsel %vm3715, %v3653, %v2086
        %v3751 = vsel %vm3715, %v3654, %v2088
        %v3752 = vsel %vm3715, %v3655, %v2090
        %v3753 = vsel %vm3715, %v3656, %v2092
        %v3754 = vsel %vm3715, %v3657, %v2094
        %v3755 = vsel %vm3715, %v3658, %v2096
        %v3756 = vsel %vm3715, %v3659, %v2098
        %v3757 = vsel %vm3715, %v3660, %v2100
        %v3758 = vsel %vm3715, %v3661, %v2102
        %v3759 = vsel %vm3715, %v3662, %v2104
        %v3760 = vsel %vm3715, %v3663, %v2106
        %v3761 = vsel %vm3715, %v3664, %v2108
        %v3762 = vsel %vm3715, %v3665, %v2110
        %v3763 = vsel %vm3715, %v3666, %v2112
        %v3764 = vsel %vm3715, %v3667, %v2114
        %v3765 = vsel %vm3715, %v3668, %v2116
        %v3766 = vsel %vm3715, %v3669, %v2118
        %v3767 = vsel %vm3715, %v3670, %v2120
        %v3768 = vsel %vm3715, %v3671, %v2122
        %v3769 = vsel %vm3715, %v3672, %v2124
        %v3770 = vsel %vm3715, %v3673, %v2126
        %v3771 = vsel %vm3715, %v3674, %v2128
        %v3772 = vsel %vm3715, %v3675, %v2130
        %v3773 = vsel %vm3715, %v3676, %v2132
        %v3774 = vsel %vm3715, %v3677, %v2134
        %v3775 = vsel %vm3715, %v3678, %v2136
        %v3776 = vsel %vm3715, %v3679, %v2138
        %v3777 = vsel %vm3715, %v3680, %v2140
        %v3778 = vsel %vm3715, %v3681, %v2142
        %v3779 = vsel %vm3715, %v3682, %v2144
        %v3780 = vsel %vm3715, %v3683, %v2146
        %v3781 = vsel %vm3715, %v3684, %v2148
        %v3782 = vsel %vm3715, %v3685, %v2150
        %v3783 = vsel %vm3715, %v3686, %v2152
        %v3784 = vsel %vm3715, %v3687, %v2154
        %v3785 = vsel %vm3715, %v3688, %v2156
        %v3786 = vsel %vm3715, %v3689, %v2158
        %v3787 = vsel %vm3715, %v3690, %v2160
        %v3788 = vsel %vm3715, %v3691, %v2162
        %v3789 = vsel %vm3715, %v3692, %v2164
        %v3790 = vsel %vm3715, %v3693, %v2166
        %v3791 = vsel %vm3715, %v3694, %v2168
        %v3792 = vsel %vm3715, %v3695, %v2170
        %v3793 = vsel %vm3715, %v3696, %v2172
        %v3794 = vsel %vm3715, %v3697, %v2174
        %v3795 = vsel %vm3715, %v3698, %v2176
        %v3796 = vsel %vm3715, %v3699, %v2178
        %v3797 = vsel %vm3715, %v3700, %v2180
        %v3798 = vsel %vm3715, %v3701, %v2182
        %v3799 = vsel %vm3715, %v3702, %v2184
        %v3800 = vsel %vm3715, %v3703, %v2186
        %v3801 = vsel %vm3715, %v3704, %v2188
        %v3802 = vsel %vm3715, %v3705, %v2190
        %v3803 = vsel %vm3715, %v3706, %v2192
        %v3804 = vsel %vm3715, %v3707, %v2194
        %v3805 = vsel %vm3715, %v3708, %v2196
        %v3806 = vsel %vm3715, %v3709, %v2198
        %v3807 = vsel %vm3715, %v3710, %v2200
        %v3808 = vsel %vm3715, %v3711, %v2202
        %v3809 = vsel %vm3715, %v3712, %v2204
        %v3810 = vsel %vm3715, %v3713, %v2206
        %v3811 = vsel %vm3715, %v3714, %v2208
        %vm3812 = vcmask 39936
        %v3813 = vsel %vm3812, %v3716, %v2306
        %v3814 = vsel %vm3812, %v3717, %v2308
        %v3815 = vsel %vm3812, %v3718, %v2310
        %v3816 = vsel %vm3812, %v3719, %v2312
        %v3817 = vsel %vm3812, %v3720, %v2314
        %v3818 = vsel %vm3812, %v3721, %v2316
        %v3819 = vsel %vm3812, %v3722, %v2318
        %v3820 = vsel %vm3812, %v3723, %v2320
        %v3821 = vsel %vm3812, %v3724, %v2322
        %v3822 = vsel %vm3812, %v3725, %v2324
        %v3823 = vsel %vm3812, %v3726, %v2326
        %v3824 = vsel %vm3812, %v3727, %v2328
        %v3825 = vsel %vm3812, %v3728, %v2330
        %v3826 = vsel %vm3812, %v3729, %v2332
        %v3827 = vsel %vm3812, %v3730, %v2334
        %v3828 = vsel %vm3812, %v3731, %v2336
        %v3829 = vsel %vm3812, %v3732, %v2338
        %v3830 = vsel %vm3812, %v3733, %v2340
        %v3831 = vsel %vm3812, %v3734, %v2342
        %v3832 = vsel %vm3812, %v3735, %v2344
        %v3833 = vsel %vm3812, %v3736, %v2346
        %v3834 = vsel %vm3812, %v3737, %v2348
        %v3835 = vsel %vm3812, %v3738, %v2350
        %v3836 = vsel %vm3812, %v3739, %v2352
        %v3837 = vsel %vm3812, %v3740, %v2354
        %v3838 = vsel %vm3812, %v3741, %v2356
        %v3839 = vsel %vm3812, %v3742, %v2358
        %v3840 = vsel %vm3812, %v3743, %v2360
        %v3841 = vsel %vm3812, %v3744, %v2362
        %v3842 = vsel %vm3812, %v3745, %v2364
        %v3843 = vsel %vm3812, %v3746, %v2366
        %v3844 = vsel %vm3812, %v3747, %v2368
        %v3845 = vsel %vm3812, %v3748, %v2370
        %v3846 = vsel %vm3812, %v3749, %v2372
        %v3847 = vsel %vm3812, %v3750, %v2374
        %v3848 = vsel %vm3812, %v3751, %v2376
        %v3849 = vsel %vm3812, %v3752, %v2378
        %v3850 = vsel %vm3812, %v3753, %v2380
        %v3851 = vsel %vm3812, %v3754, %v2382
        %v3852 = vsel %vm3812, %v3755, %v2384
        %v3853 = vsel %vm3812, %v3756, %v2386
        %v3854 = vsel %vm3812, %v3757, %v2388
        %v3855 = vsel %vm3812, %v3758, %v2390
        %v3856 = vsel %vm3812, %v3759, %v2392
        %v3857 = vsel %vm3812, %v3760, %v2394
        %v3858 = vsel %vm3812, %v3761, %v2396
        %v3859 = vsel %vm3812, %v3762, %v2398
        %v3860 = vsel %vm3812, %v3763, %v2400
        %v3861 = vsel %vm3812, %v3764, %v2402
        %v3862 = vsel %vm3812, %v3765, %v2404
        %v3863 = vsel %vm3812, %v3766, %v2406
        %v3864 = vsel %vm3812, %v3767, %v2408
        %v3865 = vsel %vm3812, %v3768, %v2410
        %v3866 = vsel %vm3812, %v3769, %v2412
        %v3867 = vsel %vm3812, %v3770, %v2414
        %v3868 = vsel %vm3812, %v3771, %v2416
        %v3869 = vsel %vm3812, %v3772, %v2418
        %v3870 = vsel %vm3812, %v3773, %v2420
        %v3871 = vsel %vm3812, %v3774, %v2422
        %v3872 = vsel %vm3812, %v3775, %v2424
        %v3873 = vsel %vm3812, %v3776, %v2426
        %v3874 = vsel %vm3812, %v3777, %v2428
        %v3875 = vsel %vm3812, %v3778, %v2430
        %v3876 = vsel %vm3812, %v3779, %v2432
        %v3877 = vsel %vm3812, %v3780, %v2434
        %v3878 = vsel %vm3812, %v3781, %v2436
        %v3879 = vsel %vm3812, %v3782, %v2438
        %v3880 = vsel %vm3812, %v3783, %v2440
        %v3881 = vsel %vm3812, %v3784, %v2442
        %v3882 = vsel %vm3812, %v3785, %v2444
        %v3883 = vsel %vm3812, %v3786, %v2446
        %v3884 = vsel %vm3812, %v3787, %v2448
        %v3885 = vsel %vm3812, %v3788, %v2450
        %v3886 = vsel %vm3812, %v3789, %v2452
        %v3887 = vsel %vm3812, %v3790, %v2454
        %v3888 = vsel %vm3812, %v3791, %v2456
        %v3889 = vsel %vm3812, %v3792, %v2458
        %v3890 = vsel %vm3812, %v3793, %v2460
        %v3891 = vsel %vm3812, %v3794, %v2462
        %v3892 = vsel %vm3812, %v3795, %v2464
        %v3893 = vsel %vm3812, %v3796, %v2466
        %v3894 = vsel %vm3812, %v3797, %v2468
        %v3895 = vsel %vm3812, %v3798, %v2470
        %v3896 = vsel %vm3812, %v3799, %v2472
        %v3897 = vsel %vm3812, %v3800, %v2474
        %v3898 = vsel %vm3812, %v3801, %v2476
        %v3899 = vsel %vm3812, %v3802, %v2478
        %v3900 = vsel %vm3812, %v3803, %v2480
        %v3901 = vsel %vm3812, %v3804, %v2482
        %v3902 = vsel %vm3812, %v3805, %v2484
        %v3903 = vsel %vm3812, %v3806, %v2486
        %v3904 = vsel %vm3812, %v3807, %v2488
        %v3905 = vsel %vm3812, %v3808, %v2490
        %v3906 = vsel %vm3812, %v3809, %v2492
        %v3907 = vsel %vm3812, %v3810, %v2494
        %v3908 = vsel %vm3812, %v3811, %v2496
        %vm3909 = vcmask 48128
        %v3910 = vsel %vm3909, %v3813, %v2594
        %v3911 = vsel %vm3909, %v3814, %v2596
        %v3912 = vsel %vm3909, %v3815, %v2598
        %v3913 = vsel %vm3909, %v3816, %v2600
        %v3914 = vsel %vm3909, %v3817, %v2602
        %v3915 = vsel %vm3909, %v3818, %v2604
        %v3916 = vsel %vm3909, %v3819, %v2606
        %v3917 = vsel %vm3909, %v3820, %v2608
        %v3918 = vsel %vm3909, %v3821, %v2610
        %v3919 = vsel %vm3909, %v3822, %v2612
        %v3920 = vsel %vm3909, %v3823, %v2614
        %v3921 = vsel %vm3909, %v3824, %v2616
        %v3922 = vsel %vm3909, %v3825, %v2618
        %v3923 = vsel %vm3909, %v3826, %v2620
        %v3924 = vsel %vm3909, %v3827, %v2622
        %v3925 = vsel %vm3909, %v3828, %v2624
        %v3926 = vsel %vm3909, %v3829, %v2626
        %v3927 = vsel %vm3909, %v3830, %v2628
        %v3928 = vsel %vm3909, %v3831, %v2630
        %v3929 = vsel %vm3909, %v3832, %v2632
        %v3930 = vsel %vm3909, %v3833, %v2634
        %v3931 = vsel %vm3909, %v3834, %v2636
        %v3932 = vsel %vm3909, %v3835, %v2638
        %v3933 = vsel %vm3909, %v3836, %v2640
        %v3934 = vsel %vm3909, %v3837, %v2642
        %v3935 = vsel %vm3909, %v3838, %v2644
        %v3936 = vsel %vm3909, %v3839, %v2646
        %v3937 = vsel %vm3909, %v3840, %v2648
        %v3938 = vsel %vm3909, %v3841, %v2650
        %v3939 = vsel %vm3909, %v3842, %v2652
        %v3940 = vsel %vm3909, %v3843, %v2654
        %v3941 = vsel %vm3909, %v3844, %v2656
        %v3942 = vsel %vm3909, %v3845, %v2658
        %v3943 = vsel %vm3909, %v3846, %v2660
        %v3944 = vsel %vm3909, %v3847, %v2662
        %v3945 = vsel %vm3909, %v3848, %v2664
        %v3946 = vsel %vm3909, %v3849, %v2666
        %v3947 = vsel %vm3909, %v3850, %v2668
        %v3948 = vsel %vm3909, %v3851, %v2670
        %v3949 = vsel %vm3909, %v3852, %v2672
        %v3950 = vsel %vm3909, %v3853, %v2674
        %v3951 = vsel %vm3909, %v3854, %v2676
        %v3952 = vsel %vm3909, %v3855, %v2678
        %v3953 = vsel %vm3909, %v3856, %v2680
        %v3954 = vsel %vm3909, %v3857, %v2682
        %v3955 = vsel %vm3909, %v3858, %v2684
        %v3956 = vsel %vm3909, %v3859, %v2686
        %v3957 = vsel %vm3909, %v3860, %v2688
        %v3958 = vsel %vm3909, %v3861, %v2690
        %v3959 = vsel %vm3909, %v3862, %v2692
        %v3960 = vsel %vm3909, %v3863, %v2694
        %v3961 = vsel %vm3909, %v3864, %v2696
        %v3962 = vsel %vm3909, %v3865, %v2698
        %v3963 = vsel %vm3909, %v3866, %v2700
        %v3964 = vsel %vm3909, %v3867, %v2702
        %v3965 = vsel %vm3909, %v3868, %v2704
        %v3966 = vsel %vm3909, %v3869, %v2706
        %v3967 = vsel %vm3909, %v3870, %v2708
        %v3968 = vsel %vm3909, %v3871, %v2710
        %v3969 = vsel %vm3909, %v3872, %v2712
        %v3970 = vsel %vm3909, %v3873, %v2714
        %v3971 = vsel %vm3909, %v3874, %v2716
        %v3972 = vsel %vm3909, %v3875, %v2718
        %v3973 = vsel %vm3909, %v3876, %v2720
        %v3974 = vsel %vm3909, %v3877, %v2722
        %v3975 = vsel %vm3909, %v3878, %v2724
        %v3976 = vsel %vm3909, %v3879, %v2726
        %v3977 = vsel %vm3909, %v3880, %v2728
        %v3978 = vsel %vm3909, %v3881, %v2730
        %v3979 = vsel %vm3909, %v3882, %v2732
        %v3980 = vsel %vm3909, %v3883, %v2734
        %v3981 = vsel %vm3909, %v3884, %v2736
        %v3982 = vsel %vm3909, %v3885, %v2738
        %v3983 = vsel %vm3909, %v3886, %v2740
        %v3984 = vsel %vm3909, %v3887, %v2742
        %v3985 = vsel %vm3909, %v3888, %v2744
        %v3986 = vsel %vm3909, %v3889, %v2746
        %v3987 = vsel %vm3909, %v3890, %v2748
        %v3988 = vsel %vm3909, %v3891, %v2750
        %v3989 = vsel %vm3909, %v3892, %v2752
        %v3990 = vsel %vm3909, %v3893, %v2754
        %v3991 = vsel %vm3909, %v3894, %v2756
        %v3992 = vsel %vm3909, %v3895, %v2758
        %v3993 = vsel %vm3909, %v3896, %v2760
        %v3994 = vsel %vm3909, %v3897, %v2762
        %v3995 = vsel %vm3909, %v3898, %v2764
        %v3996 = vsel %vm3909, %v3899, %v2766
        %v3997 = vsel %vm3909, %v3900, %v2768
        %v3998 = vsel %vm3909, %v3901, %v2770
        %v3999 = vsel %vm3909, %v3902, %v2772
        %v4000 = vsel %vm3909, %v3903, %v2774
        %v4001 = vsel %vm3909, %v3904, %v2776
        %v4002 = vsel %vm3909, %v3905, %v2778
        %v4003 = vsel %vm3909, %v3906, %v2778
        %v4004 = vsel %vm3909, %v3907, %v2778
        %v4005 = vsel %vm3909, %v3908, %v2778
        %vm4006 = vcmask 56320
        %v4007 = vsel %vm4006, %v3910, %v2873
        %v4008 = vsel %vm4006, %v3911, %v2875
        %v4009 = vsel %vm4006, %v3912, %v2877
        %v4010 = vsel %vm4006, %v3913, %v2879
        %v4011 = vsel %vm4006, %v3914, %v2881
        %v4012 = vsel %vm4006, %v3915, %v2883
        %v4013 = vsel %vm4006, %v3916, %v2885
        %v4014 = vsel %vm4006, %v3917, %v2887
        %v4015 = vsel %vm4006, %v3918, %v2889
        %v4016 = vsel %vm4006, %v3919, %v2891
        %v4017 = vsel %vm4006, %v3920, %v2893
        %v4018 = vsel %vm4006, %v3921, %v2895
        %v4019 = vsel %vm4006, %v3922, %v2897
        %v4020 = vsel %vm4006, %v3923, %v2899
        %v4021 = vsel %vm4006, %v3924, %v2901
        %v4022 = vsel %vm4006, %v3925, %v2903
        %v4023 = vsel %vm4006, %v3926, %v2905
        %v4024 = vsel %vm4006, %v3927, %v2907
        %v4025 = vsel %vm4006, %v3928, %v2909
        %v4026 = vsel %vm4006, %v3929, %v2911
        %v4027 = vsel %vm4006, %v3930, %v2913
        %v4028 = vsel %vm4006, %v3931, %v2915
        %v4029 = vsel %vm4006, %v3932, %v2917
        %v4030 = vsel %vm4006, %v3933, %v2919
        %v4031 = vsel %vm4006, %v3934, %v2921
        %v4032 = vsel %vm4006, %v3935, %v2923
        %v4033 = vsel %vm4006, %v3936, %v2925
        %v4034 = vsel %vm4006, %v3937, %v2927
        %v4035 = vsel %vm4006, %v3938, %v2929
        %v4036 = vsel %vm4006, %v3939, %v2931
        %v4037 = vsel %vm4006, %v3940, %v2933
        %v4038 = vsel %vm4006, %v3941, %v2935
        %v4039 = vsel %vm4006, %v3942, %v2937
        %v4040 = vsel %vm4006, %v3943, %v2939
        %v4041 = vsel %vm4006, %v3944, %v2941
        %v4042 = vsel %vm4006, %v3945, %v2943
        %v4043 = vsel %vm4006, %v3946, %v2945
        %v4044 = vsel %vm4006, %v3947, %v2947
        %v4045 = vsel %vm4006, %v3948, %v2949
        %v4046 = vsel %vm4006, %v3949, %v2951
        %v4047 = vsel %vm4006, %v3950, %v2953
        %v4048 = vsel %vm4006, %v3951, %v2955
        %v4049 = vsel %vm4006, %v3952, %v2957
        %v4050 = vsel %vm4006, %v3953, %v2959
        %v4051 = vsel %vm4006, %v3954, %v2961
        %v4052 = vsel %vm4006, %v3955, %v2963
        %v4053 = vsel %vm4006, %v3956, %v2965
        %v4054 = vsel %vm4006, %v3957, %v2967
        %v4055 = vsel %vm4006, %v3958, %v2969
        %v4056 = vsel %vm4006, %v3959, %v2971
        %v4057 = vsel %vm4006, %v3960, %v2973
        %v4058 = vsel %vm4006, %v3961, %v2975
        %v4059 = vsel %vm4006, %v3962, %v2977
        %v4060 = vsel %vm4006, %v3963, %v2979
        %v4061 = vsel %vm4006, %v3964, %v2981
        %v4062 = vsel %vm4006, %v3965, %v2983
        %v4063 = vsel %vm4006, %v3966, %v2985
        %v4064 = vsel %vm4006, %v3967, %v2987
        %v4065 = vsel %vm4006, %v3968, %v2989
        %v4066 = vsel %vm4006, %v3969, %v2991
        %v4067 = vsel %vm4006, %v3970, %v2993
        %v4068 = vsel %vm4006, %v3971, %v2995
        %v4069 = vsel %vm4006, %v3972, %v2997
        %v4070 = vsel %vm4006, %v3973, %v2999
        %v4071 = vsel %vm4006, %v3974, %v3001
        %v4072 = vsel %vm4006, %v3975, %v3003
        %v4073 = vsel %vm4006, %v3976, %v3005
        %v4074 = vsel %vm4006, %v3977, %v3007
        %v4075 = vsel %vm4006, %v3978, %v3009
        %v4076 = vsel %vm4006, %v3979, %v3011
        %v4077 = vsel %vm4006, %v3980, %v3013
        %v4078 = vsel %vm4006, %v3981, %v3015
        %v4079 = vsel %vm4006, %v3982, %v3017
        %v4080 = vsel %vm4006, %v3983, %v3019
        %v4081 = vsel %vm4006, %v3984, %v3021
        %v4082 = vsel %vm4006, %v3985, %v3023
        %v4083 = vsel %vm4006, %v3986, %v3025
        %v4084 = vsel %vm4006, %v3987, %v3027
        %v4085 = vsel %vm4006, %v3988, %v3029
        %v4086 = vsel %vm4006, %v3989, %v3031
        %v4087 = vsel %vm4006, %v3990, %v3033
        %v4088 = vsel %vm4006, %v3991, %v3035
        %v4089 = vsel %vm4006, %v3992, %v3037
        %v4090 = vsel %vm4006, %v3993, %v3039
        %v4091 = vsel %vm4006, %v3994, %v3041
        %v4092 = vsel %vm4006, %v3995, %v3043
        %v4093 = vsel %vm4006, %v3996, %v3045
        %v4094 = vsel %vm4006, %v3997, %v3047
        %v4095 = vsel %vm4006, %v3998, %v3049
        %v4096 = vsel %vm4006, %v3999, %v3051
        %v4097 = vsel %vm4006, %v4000, %v3053
        %v4098 = vsel %vm4006, %v4001, %v3055
        %v4099 = vsel %vm4006, %v4002, %v3057
        %v4100 = vsel %vm4006, %v4003, %v3057
        %v4101 = vsel %vm4006, %v4004, %v3057
        %v4102 = vsel %vm4006, %v4005, %v3057
        %vm4103 = vcmask 64512
        %v4104 = vsel %vm4103, %v4007, %v3152
        %v4105 = vsel %vm4103, %v4008, %v3154
        %v4106 = vsel %vm4103, %v4009, %v3156
        %v4107 = vsel %vm4103, %v4010, %v3158
        %v4108 = vsel %vm4103, %v4011, %v3160
        %v4109 = vsel %vm4103, %v4012, %v3162
        %v4110 = vsel %vm4103, %v4013, %v3164
        %v4111 = vsel %vm4103, %v4014, %v3166
        %v4112 = vsel %vm4103, %v4015, %v3168
        %v4113 = vsel %vm4103, %v4016, %v3170
        %v4114 = vsel %vm4103, %v4017, %v3172
        %v4115 = vsel %vm4103, %v4018, %v3174
        %v4116 = vsel %vm4103, %v4019, %v3176
        %v4117 = vsel %vm4103, %v4020, %v3178
        %v4118 = vsel %vm4103, %v4021, %v3180
        %v4119 = vsel %vm4103, %v4022, %v3182
        %v4120 = vsel %vm4103, %v4023, %v3184
        %v4121 = vsel %vm4103, %v4024, %v3186
        %v4122 = vsel %vm4103, %v4025, %v3188
        %v4123 = vsel %vm4103, %v4026, %v3190
        %v4124 = vsel %vm4103, %v4027, %v3192
        %v4125 = vsel %vm4103, %v4028, %v3194
        %v4126 = vsel %vm4103, %v4029, %v3196
        %v4127 = vsel %vm4103, %v4030, %v3198
        %v4128 = vsel %vm4103, %v4031, %v3200
        %v4129 = vsel %vm4103, %v4032, %v3202
        %v4130 = vsel %vm4103, %v4033, %v3204
        %v4131 = vsel %vm4103, %v4034, %v3206
        %v4132 = vsel %vm4103, %v4035, %v3208
        %v4133 = vsel %vm4103, %v4036, %v3210
        %v4134 = vsel %vm4103, %v4037, %v3212
        %v4135 = vsel %vm4103, %v4038, %v3214
        %v4136 = vsel %vm4103, %v4039, %v3216
        %v4137 = vsel %vm4103, %v4040, %v3218
        %v4138 = vsel %vm4103, %v4041, %v3220
        %v4139 = vsel %vm4103, %v4042, %v3222
        %v4140 = vsel %vm4103, %v4043, %v3224
        %v4141 = vsel %vm4103, %v4044, %v3226
        %v4142 = vsel %vm4103, %v4045, %v3228
        %v4143 = vsel %vm4103, %v4046, %v3230
        %v4144 = vsel %vm4103, %v4047, %v3232
        %v4145 = vsel %vm4103, %v4048, %v3234
        %v4146 = vsel %vm4103, %v4049, %v3236
        %v4147 = vsel %vm4103, %v4050, %v3238
        %v4148 = vsel %vm4103, %v4051, %v3240
        %v4149 = vsel %vm4103, %v4052, %v3242
        %v4150 = vsel %vm4103, %v4053, %v3244
        %v4151 = vsel %vm4103, %v4054, %v3246
        %v4152 = vsel %vm4103, %v4055, %v3248
        %v4153 = vsel %vm4103, %v4056, %v3250
        %v4154 = vsel %vm4103, %v4057, %v3252
        %v4155 = vsel %vm4103, %v4058, %v3254
        %v4156 = vsel %vm4103, %v4059, %v3256
        %v4157 = vsel %vm4103, %v4060, %v3258
        %v4158 = vsel %vm4103, %v4061, %v3260
        %v4159 = vsel %vm4103, %v4062, %v3262
        %v4160 = vsel %vm4103, %v4063, %v3264
        %v4161 = vsel %vm4103, %v4064, %v3266
        %v4162 = vsel %vm4103, %v4065, %v3268
        %v4163 = vsel %vm4103, %v4066, %v3270
        %v4164 = vsel %vm4103, %v4067, %v3272
        %v4165 = vsel %vm4103, %v4068, %v3274
        %v4166 = vsel %vm4103, %v4069, %v3276
        %v4167 = vsel %vm4103, %v4070, %v3278
        %v4168 = vsel %vm4103, %v4071, %v3280
        %v4169 = vsel %vm4103, %v4072, %v3282
        %v4170 = vsel %vm4103, %v4073, %v3284
        %v4171 = vsel %vm4103, %v4074, %v3286
        %v4172 = vsel %vm4103, %v4075, %v3288
        %v4173 = vsel %vm4103, %v4076, %v3290
        %v4174 = vsel %vm4103, %v4077, %v3292
        %v4175 = vsel %vm4103, %v4078, %v3294
        %v4176 = vsel %vm4103, %v4079, %v3296
        %v4177 = vsel %vm4103, %v4080, %v3298
        %v4178 = vsel %vm4103, %v4081, %v3300
        %v4179 = vsel %vm4103, %v4082, %v3302
        %v4180 = vsel %vm4103, %v4083, %v3304
        %v4181 = vsel %vm4103, %v4084, %v3306
        %v4182 = vsel %vm4103, %v4085, %v3308
        %v4183 = vsel %vm4103, %v4086, %v3310
        %v4184 = vsel %vm4103, %v4087, %v3312
        %v4185 = vsel %vm4103, %v4088, %v3314
        %v4186 = vsel %vm4103, %v4089, %v3316
        %v4187 = vsel %vm4103, %v4090, %v3318
        %v4188 = vsel %vm4103, %v4091, %v3320
        %v4189 = vsel %vm4103, %v4092, %v3322
        %v4190 = vsel %vm4103, %v4093, %v3324
        %v4191 = vsel %vm4103, %v4094, %v3326
        %v4192 = vsel %vm4103, %v4095, %v3328
        %v4193 = vsel %vm4103, %v4096, %v3330
        %v4194 = vsel %vm4103, %v4097, %v3332
        %v4195 = vsel %vm4103, %v4098, %v3334
        %v4196 = vsel %vm4103, %v4099, %v3336
        %v4197 = vsel %vm4103, %v4100, %v3336
        %v4198 = vsel %vm4103, %v4101, %v3336
        %v4199 = vsel %vm4103, %v4102, %v3336
        %v4201 = vlaneseq
        %v4202 = vshrl.u32 %v4201, 7
        %v4203 = vsub.s32 0, %v4202
        %v4204 = vrot.slane %v590, %v4203
        %vm4206 = vcmask 72704
        %v4208 = vsel %vm4206, %v4104, 0
        %v4211 = vsel %vm4206, %v4105, 0
        %v4214 = vsel %vm4206, %v4106, 0
        %v4217 = vsel %vm4206, %v4107, 0
        %v4220 = vsel %vm4206, %v4108, 0
        %v4223 = vsel %vm4206, %v4109, 0
        %v4226 = vsel %vm4206, %v4110, 0
        %v4229 = vsel %vm4206, %v4111, 0
        %v4232 = vsel %vm4206, %v4112, 0
        %v4235 = vsel %vm4206, %v4113, 0
        %v4238 = vsel %vm4206, %v4114, 0
        %v4241 = vsel %vm4206, %v4115, 0
        %v4244 = vsel %vm4206, %v4116, 0
        %v4247 = vsel %vm4206, %v4117, 0
        %v4250 = vsel %vm4206, %v4118, 0
        %v4253 = vsel %vm4206, %v4119, 0
        %v4256 = vsel %vm4206, %v4120, 0
        %v4259 = vsel %vm4206, %v4121, 0
        %v4262 = vsel %vm4206, %v4122, 0
        %v4265 = vsel %vm4206, %v4123, 0
        %v4268 = vsel %vm4206, %v4124, 0
        %v4271 = vsel %vm4206, %v4125, 0
        %v4274 = vsel %vm4206, %v4126, 0
        %v4277 = vsel %vm4206, %v4127, 0
        %v4280 = vsel %vm4206, %v4128, 0
        %v4283 = vsel %vm4206, %v4129, 0
        %v4286 = vsel %vm4206, %v4130, 0
        %v4289 = vsel %vm4206, %v4131, 0
        %v4292 = vsel %vm4206, %v4132, 0
        %v4295 = vsel %vm4206, %v4133, 0
        %v4298 = vsel %vm4206, %v4134, 0
        %v4301 = vsel %vm4206, %v4135, 0
        %v4304 = vsel %vm4206, %v4136, 0
        %v4307 = vsel %vm4206, %v4137, 0
        %v4310 = vsel %vm4206, %v4138, 0
        %v4313 = vsel %vm4206, %v4139, 0
        %v4316 = vsel %vm4206, %v4140, 0
        %v4319 = vsel %vm4206, %v4141, 0
        %v4322 = vsel %vm4206, %v4142, 0
        %v4325 = vsel %vm4206, %v4143, 0
        %v4328 = vsel %vm4206, %v4144, 0
        %v4331 = vsel %vm4206, %v4145, 0
        %v4334 = vsel %vm4206, %v4146, 0
        %v4337 = vsel %vm4206, %v4147, 0
        %v4340 = vsel %vm4206, %v4148, 0
        %v4343 = vsel %vm4206, %v4149, 0
        %v4346 = vsel %vm4206, %v4150, 0
        %v4349 = vsel %vm4206, %v4151, 0
        %v4352 = vsel %vm4206, %v4152, 0
        %v4355 = vsel %vm4206, %v4153, 0
        %v4358 = vsel %vm4206, %v4154, 0
        %v4361 = vsel %vm4206, %v4155, 0
        %v4364 = vsel %vm4206, %v4156, 0
        %v4367 = vsel %vm4206, %v4157, 0
        %v4370 = vsel %vm4206, %v4158, 0
        %v4373 = vsel %vm4206, %v4159, 0
        %v4376 = vsel %vm4206, %v4160, 0
        %v4379 = vsel %vm4206, %v4161, 0
        %v4382 = vsel %vm4206, %v4162, 0
        %v4385 = vsel %vm4206, %v4163, 0
        %v4388 = vsel %vm4206, %v4164, 0
        %v4391 = vsel %vm4206, %v4165, 0
        %v4394 = vsel %vm4206, %v4166, 0
        %v4397 = vsel %vm4206, %v4167, 0
        %v4400 = vsel %vm4206, %v4168, 0
        %v4403 = vsel %vm4206, %v4169, 0
        %v4406 = vsel %vm4206, %v4170, 0
        %v4409 = vsel %vm4206, %v4171, 0
        %v4412 = vsel %vm4206, %v4172, 0
        %v4415 = vsel %vm4206, %v4173, 0
        %v4418 = vsel %vm4206, %v4174, 0
        %v4421 = vsel %vm4206, %v4175, 0
        %v4424 = vsel %vm4206, %v4176, 0
        %v4427 = vsel %vm4206, %v4177, 0
        %v4430 = vsel %vm4206, %v4178, 0
        %v4433 = vsel %vm4206, %v4179, 0
        %v4436 = vsel %vm4206, %v4180, 0
        %v4439 = vsel %vm4206, %v4181, 0
        %v4442 = vsel %vm4206, %v4182, 0
        %v4445 = vsel %vm4206, %v4183, 0
        %v4448 = vsel %vm4206, %v4184, 0
        %v4451 = vsel %vm4206, %v4185, 0
        %v4454 = vsel %vm4206, %v4186, 0
        %v4457 = vsel %vm4206, %v4187, 0
        %v4460 = vsel %vm4206, %v4188, 0
        %v4463 = vsel %vm4206, %v4189, 0
        %v4466 = vsel %vm4206, %v4190, 0
        %v4469 = vsel %vm4206, %v4191, 0
        %v4472 = vsel %vm4206, %v4192, 0
        %v4475 = vsel %vm4206, %v4193, 0
        %v4478 = vsel %vm4206, %v4194, 0
        %v4481 = vsel %vm4206, %v4195, 0
        %v4484 = vsel %vm4206, %v4196, 0
        %v4487 = vsel %vm4206, %v4197, 0
        %v4490 = vsel %vm4206, %v4198, 0
        %v4493 = vsel %vm4206, %v4199, 0
        %v4496 = vsel %vm684, %v589, 0
        %4498 = vmatprep.subr.mxu0 0.0
        %4499 = vmatpush1.msra.mxu0 %v588
        %4500 = vmatprep.subr.mxu0 0.0
        %4501 = vmatpush1.msra.mxu0 %v4496
        %4502 = vmatprep.subr.mxu0 0.0
        %4503 = vmatpush1.msra.mxu0 0.0
        %4504 = vmatprep.subr.mxu0 0.0
        %4505 = vmatpush1.msra.mxu0 0.0
        %4506 = vmatprep.subr.mxu0 0.0
        %4507 = vmatpush1.msra.mxu0 0.0
        %4508 = vmatprep.subr.mxu0 0.0
        %4509 = vmatpush1.msra.mxu0 0.0
        %4510 = vmatprep.subr.mxu0 0.0
        %4511 = vmatpush1.msra.mxu0 0.0
        %4512 = vmatprep.subr.mxu0 0.0
        %4513 = vmatpush1.msra.mxu0 0.0
        %4514 = vmatprep.subr.mxu0 0.0
        %4515 = vmatpush1.msra.mxu0 0.0
        %4516 = vmatprep.subr.mxu0 0.0
        %4517 = vmatpush1.msra.mxu0 0.0
        %4518 = vmatprep.subr.mxu0 0.0
        %4519 = vmatpush1.msra.mxu0 0.0
        %4520 = vmatprep.subr.mxu0 0.0
        %4521 = vmatpush1.msra.mxu0 0.0
        %4522 = vmatprep.subr.mxu0 0.0
        %4523 = vmatpush1.msra.mxu0 0.0
        %4524 = vmatprep.subr.mxu0 0.0
        %4525 = vmatpush1.msra.mxu0 0.0
        %4526 = vmatprep.subr.mxu0 0.0
        %4527 = vmatpush1.msra.mxu0 0.0
        %4528 = vmatprep.subr.mxu0 0.0
        %4529 = vmatpush1.msra.mxu0 0.0
        %4530 = vmatprep.subr.mxu0 0.0
        %4531 = vmatpush1.msra.mxu0 0.0
        %4532 = vmatprep.subr.mxu0 0.0
        %4533 = vmatpush1.msra.mxu0 0.0
        %4534 = vmatprep.subr.mxu0 0.0
        %4535 = vmatpush1.msra.mxu0 0.0
        %4536 = vmatprep.subr.mxu0 0.0
        %4537 = vmatpush1.msra.mxu0 0.0
        %4538 = vmatprep.subr.mxu0 0.0
        %4539 = vmatpush1.msra.mxu0 0.0
        %4540 = vmatprep.subr.mxu0 0.0
        %4541 = vmatpush1.msra.mxu0 0.0
        %4542 = vmatprep.subr.mxu0 0.0
        %4543 = vmatpush1.msra.mxu0 0.0
        %4544 = vmatprep.subr.mxu0 0.0
        %4545 = vmatpush1.msra.mxu0 0.0
        %4546 = vmatprep.subr.mxu0 0.0
        %4547 = vmatpush1.msra.mxu0 0.0
        %4548 = vmatprep.subr.mxu0 0.0
        %4549 = vmatpush1.msra.mxu0 0.0
        %4550 = vmatprep.subr.mxu0 0.0
        %4551 = vmatpush1.msra.mxu0 0.0
        %4552 = vmatprep.subr.mxu0 0.0
        %4553 = vmatpush1.msra.mxu0 0.0
        %4554 = vmatprep.subr.mxu0 0.0
        %4555 = vmatpush1.msra.mxu0 0.0
        %4556 = vmatprep.subr.mxu0 0.0
        %4557 = vmatpush1.msra.mxu0 0.0
        %4558 = vmatprep.subr.mxu0 0.0
        %4559 = vmatpush1.msra.mxu0 0.0
        %4560 = vmatprep.subr.mxu0 0.0
        %4561 = vmatpush1.msra.mxu0 0.0
        %4562 = vmatprep.mubr.f32.mxu0 0.0
        %4563 = vmatmul.mubr.f32.gmra.mrb[0].mxu0 %v4208
        %v4564 = vpop.f32.mrb[0].mxu0
        %v4565 = vadd.f32 %v4204, %v4564
        %v4566 = vpop.f32.mrb[0].mxu0
        %4567 = vmatprep.mubr.f32.mxu0 0.0
        %4568 = vmatmul.mubr.f32.gmra.mrb[0].mxu0 %v4211
        %v4569 = vpop.f32.mrb[0].mxu0
        %v4570 = vadd.f32 %v4204, %v4569
        %v4571 = vpop.f32.mrb[0].mxu0
        %4572 = vmatprep.mubr.f32.mxu0 0.0
        %4573 = vmatmul.mubr.f32.gmra.mrb[0].mxu0 %v4214
        %v4574 = vpop.f32.mrb[0].mxu0
        %v4575 = vadd.f32 %v4204, %v4574
        %v4576 = vpop.f32.mrb[0].mxu0
        %4577 = vmatprep.mubr.f32.mxu0 0.0
        %4578 = vmatmul.mubr.f32.gmra.mrb[0].mxu0 %v4217
        %v4579 = vpop.f32.mrb[0].mxu0
        %v4580 = vadd.f32 %v4204, %v4579
        %v4581 = vpop.f32.mrb[0].mxu0
        %4582 = vmatprep.mubr.f32.mxu0 0.0
        %4583 = vmatmul.mubr.f32.gmra.mrb[0].mxu0 %v4220
        %v4584 = vpop.f32.mrb[0].mxu0
        %v4585 = vadd.f32 %v4204, %v4584
        %v4586 = vpop.f32.mrb[0].mxu0
        %4587 = vmatprep.mubr.f32.mxu0 0.0
        %4588 = vmatmul.mubr.f32.gmra.mrb[0].mxu0 %v4223
        %v4589 = vpop.f32.mrb[0].mxu0
        %v4590 = vadd.f32 %v4204, %v4589
        %v4591 = vpop.f32.mrb[0].mxu0
        %4592 = vmatprep.mubr.f32.mxu0 0.0
        %4593 = vmatmul.mubr.f32.gmra.mrb[0].mxu0 %v4226
        %v4594 = vpop.f32.mrb[0].mxu0
        %v4595 = vadd.f32 %v4204, %v4594
        %v4596 = vpop.f32.mrb[0].mxu0
        %4597 = vmatprep.mubr.f32.mxu0 0.0
        %4598 = vmatmul.mubr.f32.gmra.mrb[0].mxu0 %v4229
        %v4599 = vpop.f32.mrb[0].mxu0
        %v4600 = vadd.f32 %v4204, %v4599
        %v4601 = vpop.f32.mrb[0].mxu0
        %4602 = vmatprep.mubr.f32.mxu0 0.0
        %4603 = vmatmul.mubr.f32.gmra.mrb[0].mxu0 %v4232
        %v4604 = vpop.f32.mrb[0].mxu0
        %v4605 = vadd.f32 %v4204, %v4604
        %v4606 = vpop.f32.mrb[0].mxu0
        %4607 = vmatprep.mubr.f32.mxu0 0.0
        %4608 = vmatmul.mubr.f32.gmra.mrb[0].mxu0 %v4235
        %v4609 = vpop.f32.mrb[0].mxu0
        %v4610 = vadd.f32 %v4204, %v4609
        %v4611 = vpop.f32.mrb[0].mxu0
        %4612 = vmatprep.mubr.f32.mxu0 0.0
        %4613 = vmatmul.mubr.f32.gmra.mrb[0].mxu0 %v4238
        %v4614 = vpop.f32.mrb[0].mxu0
        %v4615 = vadd.f32 %v4204, %v4614
        %v4616 = vpop.f32.mrb[0].mxu0
        %4617 = vmatprep.mubr.f32.mxu0 0.0
        %4618 = vmatmul.mubr.f32.gmra.mrb[0].mxu0 %v4241
        %v4619 = vpop.f32.mrb[0].mxu0
        %v4620 = vadd.f32 %v4204, %v4619
        %v4621 = vpop.f32.mrb[0].mxu0
        %4622 = vmatprep.mubr.f32.mxu0 0.0
        %4623 = vmatmul.mubr.f32.gmra.mrb[0].mxu0 %v4244
        %v4624 = vpop.f32.mrb[0].mxu0
        %v4625 = vadd.f32 %v4204, %v4624
        %v4626 = vpop.f32.mrb[0].mxu0
        %4627 = vmatprep.mubr.f32.mxu0 0.0
        %4628 = vmatmul.mubr.f32.gmra.mrb[0].mxu0 %v4247
        %v4629 = vpop.f32.mrb[0].mxu0
        %v4630 = vadd.f32 %v4204, %v4629
        %v4631 = vpop.f32.mrb[0].mxu0
        %4632 = vmatprep.mubr.f32.mxu0 0.0
        %4633 = vmatmul.mubr.f32.gmra.mrb[0].mxu0 %v4250
        %v4634 = vpop.f32.mrb[0].mxu0
        %v4635 = vadd.f32 %v4204, %v4634
        %v4636 = vpop.f32.mrb[0].mxu0
        %4637 = vmatprep.mubr.f32.mxu0 0.0
        %4638 = vmatmul.mubr.f32.gmra.mrb[0].mxu0 %v4253
        %v4639 = vpop.f32.mrb[0].mxu0
        %v4640 = vadd.f32 %v4204, %v4639
        %v4641 = vpop.f32.mrb[0].mxu0
        %4642 = vmatprep.mubr.f32.mxu0 0.0
        %4643 = vmatmul.mubr.f32.gmra.mrb[0].mxu0 %v4256
        %v4644 = vpop.f32.mrb[0].mxu0
        %v4645 = vadd.f32 %v4204, %v4644
        %v4646 = vpop.f32.mrb[0].mxu0
        %4647 = vmatprep.mubr.f32.mxu0 0.0
        %4648 = vmatmul.mubr.f32.gmra.mrb[0].mxu0 %v4259
        %v4649 = vpop.f32.mrb[0].mxu0
        %v4650 = vadd.f32 %v4204, %v4649
        %v4651 = vpop.f32.mrb[0].mxu0
        %4652 = vmatprep.mubr.f32.mxu0 0.0
        %4653 = vmatmul.mubr.f32.gmra.mrb[0].mxu0 %v4262
        %v4654 = vpop.f32.mrb[0].mxu0
        %v4655 = vadd.f32 %v4204, %v4654
        %v4656 = vpop.f32.mrb[0].mxu0
        %4657 = vmatprep.mubr.f32.mxu0 0.0
        %4658 = vmatmul.mubr.f32.gmra.mrb[0].mxu0 %v4265
        %v4659 = vpop.f32.mrb[0].mxu0
        %v4660 = vadd.f32 %v4204, %v4659
        %v4661 = vpop.f32.mrb[0].mxu0
        %4662 = vmatprep.mubr.f32.mxu0 0.0
        %4663 = vmatmul.mubr.f32.gmra.mrb[0].mxu0 %v4268
        %v4664 = vpop.f32.mrb[0].mxu0
        %v4665 = vadd.f32 %v4204, %v4664
        %v4666 = vpop.f32.mrb[0].mxu0
        %4667 = vmatprep.mubr.f32.mxu0 0.0
        %4668 = vmatmul.mubr.f32.gmra.mrb[0].mxu0 %v4271
        %v4669 = vpop.f32.mrb[0].mxu0
        %v4670 = vadd.f32 %v4204, %v4669
        %v4671 = vpop.f32.mrb[0].mxu0
        %4672 = vmatprep.mubr.f32.mxu0 0.0
        %4673 = vmatmul.mubr.f32.gmra.mrb[0].mxu0 %v4274
        %v4674 = vpop.f32.mrb[0].mxu0
        %v4675 = vadd.f32 %v4204, %v4674
        %v4676 = vpop.f32.mrb[0].mxu0
        %4677 = vmatprep.mubr.f32.mxu0 0.0
        %4678 = vmatmul.mubr.f32.gmra.mrb[0].mxu0 %v4277
        %v4679 = vpop.f32.mrb[0].mxu0
        %v4680 = vadd.f32 %v4204, %v4679
        %v4681 = vpop.f32.mrb[0].mxu0
        %4682 = vmatprep.mubr.f32.mxu0 0.0
        %4683 = vmatmul.mubr.f32.gmra.mrb[0].mxu0 %v4280
        %v4684 = vpop.f32.mrb[0].mxu0
        %v4685 = vadd.f32 %v4204, %v4684
        %v4686 = vpop.f32.mrb[0].mxu0
        %4687 = vmatprep.mubr.f32.mxu0 0.0
        %4688 = vmatmul.mubr.f32.gmra.mrb[0].mxu0 %v4283
        %v4689 = vpop.f32.mrb[0].mxu0
        %v4690 = vadd.f32 %v4204, %v4689
        %v4691 = vpop.f32.mrb[0].mxu0
        %4692 = vmatprep.mubr.f32.mxu0 0.0
        %4693 = vmatmul.mubr.f32.gmra.mrb[0].mxu0 %v4286
        %v4694 = vpop.f32.mrb[0].mxu0
        %v4695 = vadd.f32 %v4204, %v4694
        %v4696 = vpop.f32.mrb[0].mxu0
        %4697 = vmatprep.mubr.f32.mxu0 0.0
        %4698 = vmatmul.mubr.f32.gmra.mrb[0].mxu0 %v4289
        %v4699 = vpop.f32.mrb[0].mxu0
        %v4700 = vadd.f32 %v4204, %v4699
        %v4701 = vpop.f32.mrb[0].mxu0
        %4702 = vmatprep.mubr.f32.mxu0 0.0
        %4703 = vmatmul.mubr.f32.gmra.mrb[0].mxu0 %v4292
        %v4704 = vpop.f32.mrb[0].mxu0
        %v4705 = vadd.f32 %v4204, %v4704
        %v4706 = vpop.f32.mrb[0].mxu0
        %4707 = vmatprep.mubr.f32.mxu0 0.0
        %4708 = vmatmul.mubr.f32.gmra.mrb[0].mxu0 %v4295
        %v4709 = vpop.f32.mrb[0].mxu0
        %v4710 = vadd.f32 %v4204, %v4709
        %v4711 = vpop.f32.mrb[0].mxu0
        %4712 = vmatprep.mubr.f32.mxu0 0.0
        %4713 = vmatmul.mubr.f32.gmra.mrb[0].mxu0 %v4298
        %v4714 = vpop.f32.mrb[0].mxu0
        %v4715 = vadd.f32 %v4204, %v4714
        %v4716 = vpop.f32.mrb[0].mxu0
        %4717 = vmatprep.mubr.f32.mxu0 0.0
        %4718 = vmatmul.mubr.f32.gmra.mrb[0].mxu0 %v4301
        %v4719 = vpop.f32.mrb[0].mxu0
        %v4720 = vadd.f32 %v4204, %v4719
        %v4721 = vpop.f32.mrb[0].mxu0
        %4722 = vmatprep.mubr.f32.mxu0 0.0
        %4723 = vmatmul.mubr.f32.gmra.mrb[0].mxu0 %v4304
        %v4724 = vpop.f32.mrb[0].mxu0
        %v4725 = vadd.f32 %v4204, %v4724
        %v4726 = vpop.f32.mrb[0].mxu0
        %4727 = vmatprep.mubr.f32.mxu0 0.0
        %4728 = vmatmul.mubr.f32.gmra.mrb[0].mxu0 %v4307
        %v4729 = vpop.f32.mrb[0].mxu0
        %v4730 = vadd.f32 %v4204, %v4729
        %v4731 = vpop.f32.mrb[0].mxu0
        %4732 = vmatprep.mubr.f32.mxu0 0.0
        %4733 = vmatmul.mubr.f32.gmra.mrb[0].mxu0 %v4310
        %v4734 = vpop.f32.mrb[0].mxu0
        %v4735 = vadd.f32 %v4204, %v4734
        %v4736 = vpop.f32.mrb[0].mxu0
        %4737 = vmatprep.mubr.f32.mxu0 0.0
        %4738 = vmatmul.mubr.f32.gmra.mrb[0].mxu0 %v4313
        %v4739 = vpop.f32.mrb[0].mxu0
        %v4740 = vadd.f32 %v4204, %v4739
        %v4741 = vpop.f32.mrb[0].mxu0
        %4742 = vmatprep.mubr.f32.mxu0 0.0
        %4743 = vmatmul.mubr.f32.gmra.mrb[0].mxu0 %v4316
        %v4744 = vpop.f32.mrb[0].mxu0
        %v4745 = vadd.f32 %v4204, %v4744
        %v4746 = vpop.f32.mrb[0].mxu0
        %4747 = vmatprep.mubr.f32.mxu0 0.0
        %4748 = vmatmul.mubr.f32.gmra.mrb[0].mxu0 %v4319
        %v4749 = vpop.f32.mrb[0].mxu0
        %v4750 = vadd.f32 %v4204, %v4749
        %v4751 = vpop.f32.mrb[0].mxu0
        %4752 = vmatprep.mubr.f32.mxu0 0.0
        %4753 = vmatmul.mubr.f32.gmra.mrb[0].mxu0 %v4322
        %v4754 = vpop.f32.mrb[0].mxu0
        %v4755 = vadd.f32 %v4204, %v4754
        %v4756 = vpop.f32.mrb[0].mxu0
        %4757 = vmatprep.mubr.f32.mxu0 0.0
        %4758 = vmatmul.mubr.f32.gmra.mrb[0].mxu0 %v4325
        %v4759 = vpop.f32.mrb[0].mxu0
        %v4760 = vadd.f32 %v4204, %v4759
        %v4761 = vpop.f32.mrb[0].mxu0
        %4762 = vmatprep.mubr.f32.mxu0 0.0
        %4763 = vmatmul.mubr.f32.gmra.mrb[0].mxu0 %v4328
        %v4764 = vpop.f32.mrb[0].mxu0
        %v4765 = vadd.f32 %v4204, %v4764
        %v4766 = vpop.f32.mrb[0].mxu0
        %4767 = vmatprep.mubr.f32.mxu0 0.0
        %4768 = vmatmul.mubr.f32.gmra.mrb[0].mxu0 %v4331
        %v4769 = vpop.f32.mrb[0].mxu0
        %v4770 = vadd.f32 %v4204, %v4769
        %v4771 = vpop.f32.mrb[0].mxu0
        %4772 = vmatprep.mubr.f32.mxu0 0.0
        %4773 = vmatmul.mubr.f32.gmra.mrb[0].mxu0 %v4334
        %v4774 = vpop.f32.mrb[0].mxu0
        %v4775 = vadd.f32 %v4204, %v4774
        %v4776 = vpop.f32.mrb[0].mxu0
        %4777 = vmatprep.mubr.f32.mxu0 0.0
        %4778 = vmatmul.mubr.f32.gmra.mrb[0].mxu0 %v4337
        %v4779 = vpop.f32.mrb[0].mxu0
        %v4780 = vadd.f32 %v4204, %v4779
        %v4781 = vpop.f32.mrb[0].mxu0
        %4782 = vmatprep.mubr.f32.mxu0 0.0
        %4783 = vmatmul.mubr.f32.gmra.mrb[0].mxu0 %v4340
        %v4784 = vpop.f32.mrb[0].mxu0
        %v4785 = vadd.f32 %v4204, %v4784
        %v4786 = vpop.f32.mrb[0].mxu0
        %4787 = vmatprep.mubr.f32.mxu0 0.0
        %4788 = vmatmul.mubr.f32.gmra.mrb[0].mxu0 %v4343
        %v4789 = vpop.f32.mrb[0].mxu0
        %v4790 = vadd.f32 %v4204, %v4789
        %v4791 = vpop.f32.mrb[0].mxu0
        %4792 = vmatprep.mubr.f32.mxu0 0.0
        %4793 = vmatmul.mubr.f32.gmra.mrb[0].mxu0 %v4346
        %v4794 = vpop.f32.mrb[0].mxu0
        %v4795 = vadd.f32 %v4204, %v4794
        %v4796 = vpop.f32.mrb[0].mxu0
        %4797 = vmatprep.mubr.f32.mxu0 0.0
        %4798 = vmatmul.mubr.f32.gmra.mrb[0].mxu0 %v4349
        %v4799 = vpop.f32.mrb[0].mxu0
        %v4800 = vadd.f32 %v4204, %v4799
        %v4801 = vpop.f32.mrb[0].mxu0
        %4802 = vmatprep.mubr.f32.mxu0 0.0
        %4803 = vmatmul.mubr.f32.gmra.mrb[0].mxu0 %v4352
        %v4804 = vpop.f32.mrb[0].mxu0
        %v4805 = vadd.f32 %v4204, %v4804
        %v4806 = vpop.f32.mrb[0].mxu0
        %4807 = vmatprep.mubr.f32.mxu0 0.0
        %4808 = vmatmul.mubr.f32.gmra.mrb[0].mxu0 %v4355
        %v4809 = vpop.f32.mrb[0].mxu0
        %v4810 = vadd.f32 %v4204, %v4809
        %v4811 = vpop.f32.mrb[0].mxu0
        %4812 = vmatprep.mubr.f32.mxu0 0.0
        %4813 = vmatmul.mubr.f32.gmra.mrb[0].mxu0 %v4358
        %v4814 = vpop.f32.mrb[0].mxu0
        %v4815 = vadd.f32 %v4204, %v4814
        %v4816 = vpop.f32.mrb[0].mxu0
        %4817 = vmatprep.mubr.f32.mxu0 0.0
        %4818 = vmatmul.mubr.f32.gmra.mrb[0].mxu0 %v4361
        %v4819 = vpop.f32.mrb[0].mxu0
        %v4820 = vadd.f32 %v4204, %v4819
        %v4821 = vpop.f32.mrb[0].mxu0
        %4822 = vmatprep.mubr.f32.mxu0 0.0
        %4823 = vmatmul.mubr.f32.gmra.mrb[0].mxu0 %v4364
        %v4824 = vpop.f32.mrb[0].mxu0
        %v4825 = vadd.f32 %v4204, %v4824
        %v4826 = vpop.f32.mrb[0].mxu0
        %4827 = vmatprep.mubr.f32.mxu0 0.0
        %4828 = vmatmul.mubr.f32.gmra.mrb[0].mxu0 %v4367
        %v4829 = vpop.f32.mrb[0].mxu0
        %v4830 = vadd.f32 %v4204, %v4829
        %v4831 = vpop.f32.mrb[0].mxu0
        %4832 = vmatprep.mubr.f32.mxu0 0.0
        %4833 = vmatmul.mubr.f32.gmra.mrb[0].mxu0 %v4370
        %v4834 = vpop.f32.mrb[0].mxu0
        %v4835 = vadd.f32 %v4204, %v4834
        %v4836 = vpop.f32.mrb[0].mxu0
        %4837 = vmatprep.mubr.f32.mxu0 0.0
        %4838 = vmatmul.mubr.f32.gmra.mrb[0].mxu0 %v4373
        %v4839 = vpop.f32.mrb[0].mxu0
        %v4840 = vadd.f32 %v4204, %v4839
        %v4841 = vpop.f32.mrb[0].mxu0
        %4842 = vmatprep.mubr.f32.mxu0 0.0
        %4843 = vmatmul.mubr.f32.gmra.mrb[0].mxu0 %v4376
        %v4844 = vpop.f32.mrb[0].mxu0
        %v4845 = vadd.f32 %v4204, %v4844
        %v4846 = vpop.f32.mrb[0].mxu0
        %4847 = vmatprep.mubr.f32.mxu0 0.0
        %4848 = vmatmul.mubr.f32.gmra.mrb[0].mxu0 %v4379
        %v4849 = vpop.f32.mrb[0].mxu0
        %v4850 = vadd.f32 %v4204, %v4849
        %v4851 = vpop.f32.mrb[0].mxu0
        %4852 = vmatprep.mubr.f32.mxu0 0.0
        %4853 = vmatmul.mubr.f32.gmra.mrb[0].mxu0 %v4382
        %v4854 = vpop.f32.mrb[0].mxu0
        %v4855 = vadd.f32 %v4204, %v4854
        %v4856 = vpop.f32.mrb[0].mxu0
        %4857 = vmatprep.mubr.f32.mxu0 0.0
        %4858 = vmatmul.mubr.f32.gmra.mrb[0].mxu0 %v4385
        %v4859 = vpop.f32.mrb[0].mxu0
        %v4860 = vadd.f32 %v4204, %v4859
        %v4861 = vpop.f32.mrb[0].mxu0
        %4862 = vmatprep.mubr.f32.mxu0 0.0
        %4863 = vmatmul.mubr.f32.gmra.mrb[0].mxu0 %v4388
        %v4864 = vpop.f32.mrb[0].mxu0
        %v4865 = vadd.f32 %v4204, %v4864
        %v4866 = vpop.f32.mrb[0].mxu0
        %4867 = vmatprep.mubr.f32.mxu0 0.0
        %4868 = vmatmul.mubr.f32.gmra.mrb[0].mxu0 %v4391
        %v4869 = vpop.f32.mrb[0].mxu0
        %v4870 = vadd.f32 %v4204, %v4869
        %v4871 = vpop.f32.mrb[0].mxu0
        %4872 = vmatprep.mubr.f32.mxu0 0.0
        %4873 = vmatmul.mubr.f32.gmra.mrb[0].mxu0 %v4394
        %v4874 = vpop.f32.mrb[0].mxu0
        %v4875 = vadd.f32 %v4204, %v4874
        %v4876 = vpop.f32.mrb[0].mxu0
        %4877 = vmatprep.mubr.f32.mxu0 0.0
        %4878 = vmatmul.mubr.f32.gmra.mrb[0].mxu0 %v4397
        %v4879 = vpop.f32.mrb[0].mxu0
        %v4880 = vadd.f32 %v4204, %v4879
        %v4881 = vpop.f32.mrb[0].mxu0
        %4882 = vmatprep.mubr.f32.mxu0 0.0
        %4883 = vmatmul.mubr.f32.gmra.mrb[0].mxu0 %v4400
        %v4884 = vpop.f32.mrb[0].mxu0
        %v4885 = vadd.f32 %v4204, %v4884
        %v4886 = vpop.f32.mrb[0].mxu0
        %4887 = vmatprep.mubr.f32.mxu0 0.0
        %4888 = vmatmul.mubr.f32.gmra.mrb[0].mxu0 %v4403
        %v4889 = vpop.f32.mrb[0].mxu0
        %v4890 = vadd.f32 %v4204, %v4889
        %v4891 = vpop.f32.mrb[0].mxu0
        %4892 = vmatprep.mubr.f32.mxu0 0.0
        %4893 = vmatmul.mubr.f32.gmra.mrb[0].mxu0 %v4406
        %v4894 = vpop.f32.mrb[0].mxu0
        %v4895 = vadd.f32 %v4204, %v4894
        %v4896 = vpop.f32.mrb[0].mxu0
        %4897 = vmatprep.mubr.f32.mxu0 0.0
        %4898 = vmatmul.mubr.f32.gmra.mrb[0].mxu0 %v4409
        %v4899 = vpop.f32.mrb[0].mxu0
        %v4900 = vadd.f32 %v4204, %v4899
        %v4901 = vpop.f32.mrb[0].mxu0
        %4902 = vmatprep.mubr.f32.mxu0 0.0
        %4903 = vmatmul.mubr.f32.gmra.mrb[0].mxu0 %v4412
        %v4904 = vpop.f32.mrb[0].mxu0
        %v4905 = vadd.f32 %v4204, %v4904
        %v4906 = vpop.f32.mrb[0].mxu0
        %4907 = vmatprep.mubr.f32.mxu0 0.0
        %4908 = vmatmul.mubr.f32.gmra.mrb[0].mxu0 %v4415
        %v4909 = vpop.f32.mrb[0].mxu0
        %v4910 = vadd.f32 %v4204, %v4909
        %v4911 = vpop.f32.mrb[0].mxu0
        %4912 = vmatprep.mubr.f32.mxu0 0.0
        %4913 = vmatmul.mubr.f32.gmra.mrb[0].mxu0 %v4418
        %v4914 = vpop.f32.mrb[0].mxu0
        %v4915 = vadd.f32 %v4204, %v4914
        %v4916 = vpop.f32.mrb[0].mxu0
        %4917 = vmatprep.mubr.f32.mxu0 0.0
        %4918 = vmatmul.mubr.f32.gmra.mrb[0].mxu0 %v4421
        %v4919 = vpop.f32.mrb[0].mxu0
        %v4920 = vadd.f32 %v4204, %v4919
        %v4921 = vpop.f32.mrb[0].mxu0
        %4922 = vmatprep.mubr.f32.mxu0 0.0
        %4923 = vmatmul.mubr.f32.gmra.mrb[0].mxu0 %v4424
        %v4924 = vpop.f32.mrb[0].mxu0
        %v4925 = vadd.f32 %v4204, %v4924
        %v4926 = vpop.f32.mrb[0].mxu0
        %4927 = vmatprep.mubr.f32.mxu0 0.0
        %4928 = vmatmul.mubr.f32.gmra.mrb[0].mxu0 %v4427
        %v4929 = vpop.f32.mrb[0].mxu0
        %v4930 = vadd.f32 %v4204, %v4929
        %v4931 = vpop.f32.mrb[0].mxu0
        %4932 = vmatprep.mubr.f32.mxu0 0.0
        %4933 = vmatmul.mubr.f32.gmra.mrb[0].mxu0 %v4430
        %v4934 = vpop.f32.mrb[0].mxu0
        %v4935 = vadd.f32 %v4204, %v4934
        %v4936 = vpop.f32.mrb[0].mxu0
        %4937 = vmatprep.mubr.f32.mxu0 0.0
        %4938 = vmatmul.mubr.f32.gmra.mrb[0].mxu0 %v4433
        %v4939 = vpop.f32.mrb[0].mxu0
        %v4940 = vadd.f32 %v4204, %v4939
        %v4941 = vpop.f32.mrb[0].mxu0
        %4942 = vmatprep.mubr.f32.mxu0 0.0
        %4943 = vmatmul.mubr.f32.gmra.mrb[0].mxu0 %v4436
        %v4944 = vpop.f32.mrb[0].mxu0
        %v4945 = vadd.f32 %v4204, %v4944
        %v4946 = vpop.f32.mrb[0].mxu0
        %4947 = vmatprep.mubr.f32.mxu0 0.0
        %4948 = vmatmul.mubr.f32.gmra.mrb[0].mxu0 %v4439
        %v4949 = vpop.f32.mrb[0].mxu0
        %v4950 = vadd.f32 %v4204, %v4949
        %v4951 = vpop.f32.mrb[0].mxu0
        %4952 = vmatprep.mubr.f32.mxu0 0.0
        %4953 = vmatmul.mubr.f32.gmra.mrb[0].mxu0 %v4442
        %v4954 = vpop.f32.mrb[0].mxu0
        %v4955 = vadd.f32 %v4204, %v4954
        %v4956 = vpop.f32.mrb[0].mxu0
        %4957 = vmatprep.mubr.f32.mxu0 0.0
        %4958 = vmatmul.mubr.f32.gmra.mrb[0].mxu0 %v4445
        %v4959 = vpop.f32.mrb[0].mxu0
        %v4960 = vadd.f32 %v4204, %v4959
        %v4961 = vpop.f32.mrb[0].mxu0
        %4962 = vmatprep.mubr.f32.mxu0 0.0
        %4963 = vmatmul.mubr.f32.gmra.mrb[0].mxu0 %v4448
        %v4964 = vpop.f32.mrb[0].mxu0
        %v4965 = vadd.f32 %v4204, %v4964
        %v4966 = vpop.f32.mrb[0].mxu0
        %4967 = vmatprep.mubr.f32.mxu0 0.0
        %4968 = vmatmul.mubr.f32.gmra.mrb[0].mxu0 %v4451
        %v4969 = vpop.f32.mrb[0].mxu0
        %v4970 = vadd.f32 %v4204, %v4969
        %v4971 = vpop.f32.mrb[0].mxu0
        %4972 = vmatprep.mubr.f32.mxu0 0.0
        %4973 = vmatmul.mubr.f32.gmra.mrb[0].mxu0 %v4454
        %v4974 = vpop.f32.mrb[0].mxu0
        %v4975 = vadd.f32 %v4204, %v4974
        %v4976 = vpop.f32.mrb[0].mxu0
        %4977 = vmatprep.mubr.f32.mxu0 0.0
        %4978 = vmatmul.mubr.f32.gmra.mrb[0].mxu0 %v4457
        %v4979 = vpop.f32.mrb[0].mxu0
        %v4980 = vadd.f32 %v4204, %v4979
        %v4981 = vpop.f32.mrb[0].mxu0
        %4982 = vmatprep.mubr.f32.mxu0 0.0
        %4983 = vmatmul.mubr.f32.gmra.mrb[0].mxu0 %v4460
        %v4984 = vpop.f32.mrb[0].mxu0
        %v4985 = vadd.f32 %v4204, %v4984
        %v4986 = vpop.f32.mrb[0].mxu0
        %4987 = vmatprep.mubr.f32.mxu0 0.0
        %4988 = vmatmul.mubr.f32.gmra.mrb[0].mxu0 %v4463
        %v4989 = vpop.f32.mrb[0].mxu0
        %v4990 = vadd.f32 %v4204, %v4989
        %v4991 = vpop.f32.mrb[0].mxu0
        %4992 = vmatprep.mubr.f32.mxu0 0.0
        %4993 = vmatmul.mubr.f32.gmra.mrb[0].mxu0 %v4466
        %v4994 = vpop.f32.mrb[0].mxu0
        %v4995 = vadd.f32 %v4204, %v4994
        %v4996 = vpop.f32.mrb[0].mxu0
        %4997 = vmatprep.mubr.f32.mxu0 0.0
        %4998 = vmatmul.mubr.f32.gmra.mrb[0].mxu0 %v4469
        %v4999 = vpop.f32.mrb[0].mxu0
        %v5000 = vadd.f32 %v4204, %v4999
        %v5001 = vpop.f32.mrb[0].mxu0
        %5002 = vmatprep.mubr.f32.mxu0 0.0
        %5003 = vmatmul.mubr.f32.gmra.mrb[0].mxu0 %v4472
        %v5004 = vpop.f32.mrb[0].mxu0
        %v5005 = vadd.f32 %v4204, %v5004
        %v5006 = vpop.f32.mrb[0].mxu0
        %5007 = vmatprep.mubr.f32.mxu0 0.0
        %5008 = vmatmul.mubr.f32.gmra.mrb[0].mxu0 %v4475
        %v5009 = vpop.f32.mrb[0].mxu0
        %v5010 = vadd.f32 %v4204, %v5009
        %v5011 = vpop.f32.mrb[0].mxu0
        %5012 = vmatprep.mubr.f32.mxu0 0.0
        %5013 = vmatmul.mubr.f32.gmra.mrb[0].mxu0 %v4478
        %v5014 = vpop.f32.mrb[0].mxu0
        %v5015 = vadd.f32 %v4204, %v5014
        %v5016 = vpop.f32.mrb[0].mxu0
        %5017 = vmatprep.mubr.f32.mxu0 0.0
        %5018 = vmatmul.mubr.f32.gmra.mrb[0].mxu0 %v4481
        %v5019 = vpop.f32.mrb[0].mxu0
        %v5020 = vadd.f32 %v4204, %v5019
        %v5021 = vpop.f32.mrb[0].mxu0
        %5022 = vmatprep.mubr.f32.mxu0 0.0
        %5023 = vmatmul.mubr.f32.gmra.mrb[0].mxu0 %v4484
        %v5024 = vpop.f32.mrb[0].mxu0
        %v5025 = vadd.f32 %v4204, %v5024
        %v5026 = vpop.f32.mrb[0].mxu0
        %5027 = vmatprep.mubr.f32.mxu0 0.0
        %5028 = vmatmul.mubr.f32.gmra.mrb[0].mxu0 %v4487
        %v5029 = vpop.f32.mrb[0].mxu0
        %v5030 = vadd.f32 %v4204, %v5029
        %v5031 = vpop.f32.mrb[0].mxu0
        %5032 = vmatprep.mubr.f32.mxu0 0.0
        %5033 = vmatmul.mubr.f32.gmra.mrb[0].mxu0 %v4490
        %v5034 = vpop.f32.mrb[0].mxu0
        %v5035 = vadd.f32 %v4204, %v5034
        %v5036 = vpop.f32.mrb[0].mxu0
        %5037 = vmatprep.mubr.f32.mxu0 0.0
        %5038 = vmatmul.mubr.f32.gmra.mrb[0].mxu0 %v4493
        %v5039 = vpop.f32.mrb[0].mxu0
        %v5040 = vadd.f32 %v4204, %v5039
        %v5041 = vpop.f32.mrb[0].mxu0
        %5042 = vdwg.mxu0
        %v5043 = vmax.f32 %v4565, 0.0
        %v5044 = vmax.f32 %v4570, 0.0
        %v5045 = vmax.f32 %v4575, 0.0
        %v5046 = vmax.f32 %v4580, 0.0
        %v5047 = vmax.f32 %v4585, 0.0
        %v5048 = vmax.f32 %v4590, 0.0
        %v5049 = vmax.f32 %v4595, 0.0
        %v5050 = vmax.f32 %v4600, 0.0
        %v5051 = vmax.f32 %v4605, 0.0
        %v5052 = vmax.f32 %v4610, 0.0
        %v5053 = vmax.f32 %v4615, 0.0
        %v5054 = vmax.f32 %v4620, 0.0
        %v5055 = vmax.f32 %v4625, 0.0
        %v5056 = vmax.f32 %v4630, 0.0
        %v5057 = vmax.f32 %v4635, 0.0
        %v5058 = vmax.f32 %v4640, 0.0
        %v5059 = vmax.f32 %v4645, 0.0
        %v5060 = vmax.f32 %v4650, 0.0
        %v5061 = vmax.f32 %v4655, 0.0
        %v5062 = vmax.f32 %v4660, 0.0
        %v5063 = vmax.f32 %v4665, 0.0
        %v5064 = vmax.f32 %v4670, 0.0
        %v5065 = vmax.f32 %v4675, 0.0
        %v5066 = vmax.f32 %v4680, 0.0
        %v5067 = vmax.f32 %v4685, 0.0
        %v5068 = vmax.f32 %v4690, 0.0
        %v5069 = vmax.f32 %v4695, 0.0
        %v5070 = vmax.f32 %v4700, 0.0
        %v5071 = vmax.f32 %v4705, 0.0
        %v5072 = vmax.f32 %v4710, 0.0
        %v5073 = vmax.f32 %v4715, 0.0
        %v5074 = vmax.f32 %v4720, 0.0
        %v5075 = vmax.f32 %v4725, 0.0
        %v5076 = vmax.f32 %v4730, 0.0
        %v5077 = vmax.f32 %v4735, 0.0
        %v5078 = vmax.f32 %v4740, 0.0
        %v5079 = vmax.f32 %v4745, 0.0
        %v5080 = vmax.f32 %v4750, 0.0
        %v5081 = vmax.f32 %v4755, 0.0
        %v5082 = vmax.f32 %v4760, 0.0
        %v5083 = vmax.f32 %v4765, 0.0
        %v5084 = vmax.f32 %v4770, 0.0
        %v5085 = vmax.f32 %v4775, 0.0
        %v5086 = vmax.f32 %v4780, 0.0
        %v5087 = vmax.f32 %v4785, 0.0
        %v5088 = vmax.f32 %v4790, 0.0
        %v5089 = vmax.f32 %v4795, 0.0
        %v5090 = vmax.f32 %v4800, 0.0
        %v5091 = vmax.f32 %v4805, 0.0
        %v5092 = vmax.f32 %v4810, 0.0
        %v5093 = vmax.f32 %v4815, 0.0
        %v5094 = vmax.f32 %v4820, 0.0
        %v5095 = vmax.f32 %v4825, 0.0
        %v5096 = vmax.f32 %v4830, 0.0
        %v5097 = vmax.f32 %v4835, 0.0
        %v5098 = vmax.f32 %v4840, 0.0
        %v5099 = vmax.f32 %v4845, 0.0
        %v5100 = vmax.f32 %v4850, 0.0
        %v5101 = vmax.f32 %v4855, 0.0
        %v5102 = vmax.f32 %v4860, 0.0
        %v5103 = vmax.f32 %v4865, 0.0
        %v5104 = vmax.f32 %v4870, 0.0
        %v5105 = vmax.f32 %v4875, 0.0
        %v5106 = vmax.f32 %v4880, 0.0
        %v5107 = vmax.f32 %v4885, 0.0
        %v5108 = vmax.f32 %v4890, 0.0
        %v5109 = vmax.f32 %v4895, 0.0
        %v5110 = vmax.f32 %v4900, 0.0
        %v5111 = vmax.f32 %v4905, 0.0
        %v5112 = vmax.f32 %v4910, 0.0
        %v5113 = vmax.f32 %v4915, 0.0
        %v5114 = vmax.f32 %v4920, 0.0
        %v5115 = vmax.f32 %v4925, 0.0
        %v5116 = vmax.f32 %v4930, 0.0
        %v5117 = vmax.f32 %v4935, 0.0
        %v5118 = vmax.f32 %v4940, 0.0
        %v5119 = vmax.f32 %v4945, 0.0
        %v5120 = vmax.f32 %v4950, 0.0
        %v5121 = vmax.f32 %v4955, 0.0
        %v5122 = vmax.f32 %v4960, 0.0
        %v5123 = vmax.f32 %v4965, 0.0
        %v5124 = vmax.f32 %v4970, 0.0
        %v5125 = vmax.f32 %v4975, 0.0
        %v5126 = vmax.f32 %v4980, 0.0
        %v5127 = vmax.f32 %v4985, 0.0
        %v5128 = vmax.f32 %v4990, 0.0
        %v5129 = vmax.f32 %v4995, 0.0
        %v5130 = vmax.f32 %v5000, 0.0
        %v5131 = vmax.f32 %v5005, 0.0
        %v5132 = vmax.f32 %v5010, 0.0
        %v5133 = vmax.f32 %v5015, 0.0
        %v5134 = vmax.f32 %v5020, 0.0
        %v5135 = vmax.f32 %v5025, 0.0
        %v5136 = vmax.f32 %v5030, 0.0
        %v5137 = vmax.f32 %v5035, 0.0
        %v5138 = vmax.f32 %v5040, 0.0
        %v5235 = vrot.slane %v5043, 1
        %v5236 = vrot.slane %v5044, 1
        %v5237 = vsel %vm964, %v5235, %v5236
        %v5238 = vrot.slane %v5045, 1
        %v5239 = vsel %vm964, %v5236, %v5238
        %v5240 = vrot.slane %v5046, 1
        %v5241 = vsel %vm964, %v5238, %v5240
        %v5242 = vrot.slane %v5047, 1
        %v5243 = vsel %vm964, %v5240, %v5242
        %v5244 = vrot.slane %v5048, 1
        %v5245 = vsel %vm964, %v5242, %v5244
        %v5246 = vrot.slane %v5049, 1
        %v5247 = vsel %vm964, %v5244, %v5246
        %v5248 = vrot.slane %v5050, 1
        %v5249 = vsel %vm964, %v5246, %v5248
        %v5250 = vrot.slane %v5051, 1
        %v5251 = vsel %vm964, %v5248, %v5250
        %v5252 = vrot.slane %v5052, 1
        %v5253 = vsel %vm964, %v5250, %v5252
        %v5254 = vrot.slane %v5053, 1
        %v5255 = vsel %vm964, %v5252, %v5254
        %v5256 = vrot.slane %v5054, 1
        %v5257 = vsel %vm964, %v5254, %v5256
        %v5258 = vrot.slane %v5055, 1
        %v5259 = vsel %vm964, %v5256, %v5258
        %v5260 = vrot.slane %v5056, 1
        %v5261 = vsel %vm964, %v5258, %v5260
        %v5262 = vrot.slane %v5057, 1
        %v5263 = vsel %vm964, %v5260, %v5262
        %v5264 = vrot.slane %v5058, 1
        %v5265 = vsel %vm964, %v5262, %v5264
        %v5266 = vrot.slane %v5059, 1
        %v5267 = vsel %vm964, %v5264, %v5266
        %v5268 = vrot.slane %v5060, 1
        %v5269 = vsel %vm964, %v5266, %v5268
        %v5270 = vrot.slane %v5061, 1
        %v5271 = vsel %vm964, %v5268, %v5270
        %v5272 = vrot.slane %v5062, 1
        %v5273 = vsel %vm964, %v5270, %v5272
        %v5274 = vrot.slane %v5063, 1
        %v5275 = vsel %vm964, %v5272, %v5274
        %v5276 = vrot.slane %v5064, 1
        %v5277 = vsel %vm964, %v5274, %v5276
        %v5278 = vrot.slane %v5065, 1
        %v5279 = vsel %vm964, %v5276, %v5278
        %v5280 = vrot.slane %v5066, 1
        %v5281 = vsel %vm964, %v5278, %v5280
        %v5282 = vrot.slane %v5067, 1
        %v5283 = vsel %vm964, %v5280, %v5282
        %v5284 = vrot.slane %v5068, 1
        %v5285 = vsel %vm964, %v5282, %v5284
        %v5286 = vrot.slane %v5069, 1
        %v5287 = vsel %vm964, %v5284, %v5286
        %v5288 = vrot.slane %v5070, 1
        %v5289 = vsel %vm964, %v5286, %v5288
        %v5290 = vrot.slane %v5071, 1
        %v5291 = vsel %vm964, %v5288, %v5290
        %v5292 = vrot.slane %v5072, 1
        %v5293 = vsel %vm964, %v5290, %v5292
        %v5294 = vrot.slane %v5073, 1
        %v5295 = vsel %vm964, %v5292, %v5294
        %v5296 = vrot.slane %v5074, 1
        %v5297 = vsel %vm964, %v5294, %v5296
        %v5298 = vrot.slane %v5075, 1
        %v5299 = vsel %vm964, %v5296, %v5298
        %v5300 = vrot.slane %v5076, 1
        %v5301 = vsel %vm964, %v5298, %v5300
        %v5302 = vrot.slane %v5077, 1
        %v5303 = vsel %vm964, %v5300, %v5302
        %v5304 = vrot.slane %v5078, 1
        %v5305 = vsel %vm964, %v5302, %v5304
        %v5306 = vrot.slane %v5079, 1
        %v5307 = vsel %vm964, %v5304, %v5306
        %v5308 = vrot.slane %v5080, 1
        %v5309 = vsel %vm964, %v5306, %v5308
        %v5310 = vrot.slane %v5081, 1
        %v5311 = vsel %vm964, %v5308, %v5310
        %v5312 = vrot.slane %v5082, 1
        %v5313 = vsel %vm964, %v5310, %v5312
        %v5314 = vrot.slane %v5083, 1
        %v5315 = vsel %vm964, %v5312, %v5314
        %v5316 = vrot.slane %v5084, 1
        %v5317 = vsel %vm964, %v5314, %v5316
        %v5318 = vrot.slane %v5085, 1
        %v5319 = vsel %vm964, %v5316, %v5318
        %v5320 = vrot.slane %v5086, 1
        %v5321 = vsel %vm964, %v5318, %v5320
        %v5322 = vrot.slane %v5087, 1
        %v5323 = vsel %vm964, %v5320, %v5322
        %v5324 = vrot.slane %v5088, 1
        %v5325 = vsel %vm964, %v5322, %v5324
        %v5326 = vrot.slane %v5089, 1
        %v5327 = vsel %vm964, %v5324, %v5326
        %v5328 = vrot.slane %v5090, 1
        %v5329 = vsel %vm964, %v5326, %v5328
        %v5330 = vrot.slane %v5091, 1
        %v5331 = vsel %vm964, %v5328, %v5330
        %v5332 = vrot.slane %v5092, 1
        %v5333 = vsel %vm964, %v5330, %v5332
        %v5334 = vrot.slane %v5093, 1
        %v5335 = vsel %vm964, %v5332, %v5334
        %v5336 = vrot.slane %v5094, 1
        %v5337 = vsel %vm964, %v5334, %v5336
        %v5338 = vrot.slane %v5095, 1
        %v5339 = vsel %vm964, %v5336, %v5338
        %v5340 = vrot.slane %v5096, 1
        %v5341 = vsel %vm964, %v5338, %v5340
        %v5342 = vrot.slane %v5097, 1
        %v5343 = vsel %vm964, %v5340, %v5342
        %v5344 = vrot.slane %v5098, 1
        %v5345 = vsel %vm964, %v5342, %v5344
        %v5346 = vrot.slane %v5099, 1
        %v5347 = vsel %vm964, %v5344, %v5346
        %v5348 = vrot.slane %v5100, 1
        %v5349 = vsel %vm964, %v5346, %v5348
        %v5350 = vrot.slane %v5101, 1
        %v5351 = vsel %vm964, %v5348, %v5350
        %v5352 = vrot.slane %v5102, 1
        %v5353 = vsel %vm964, %v5350, %v5352
        %v5354 = vrot.slane %v5103, 1
        %v5355 = vsel %vm964, %v5352, %v5354
        %v5356 = vrot.slane %v5104, 1
        %v5357 = vsel %vm964, %v5354, %v5356
        %v5358 = vrot.slane %v5105, 1
        %v5359 = vsel %vm964, %v5356, %v5358
        %v5360 = vrot.slane %v5106, 1
        %v5361 = vsel %vm964, %v5358, %v5360
        %v5362 = vrot.slane %v5107, 1
        %v5363 = vsel %vm964, %v5360, %v5362
        %v5364 = vrot.slane %v5108, 1
        %v5365 = vsel %vm964, %v5362, %v5364
        %v5366 = vrot.slane %v5109, 1
        %v5367 = vsel %vm964, %v5364, %v5366
        %v5368 = vrot.slane %v5110, 1
        %v5369 = vsel %vm964, %v5366, %v5368
        %v5370 = vrot.slane %v5111, 1
        %v5371 = vsel %vm964, %v5368, %v5370
        %v5372 = vrot.slane %v5112, 1
        %v5373 = vsel %vm964, %v5370, %v5372
        %v5374 = vrot.slane %v5113, 1
        %v5375 = vsel %vm964, %v5372, %v5374
        %v5376 = vrot.slane %v5114, 1
        %v5377 = vsel %vm964, %v5374, %v5376
        %v5378 = vrot.slane %v5115, 1
        %v5379 = vsel %vm964, %v5376, %v5378
        %v5380 = vrot.slane %v5116, 1
        %v5381 = vsel %vm964, %v5378, %v5380
        %v5382 = vrot.slane %v5117, 1
        %v5383 = vsel %vm964, %v5380, %v5382
        %v5384 = vrot.slane %v5118, 1
        %v5385 = vsel %vm964, %v5382, %v5384
        %v5386 = vrot.slane %v5119, 1
        %v5387 = vsel %vm964, %v5384, %v5386
        %v5388 = vrot.slane %v5120, 1
        %v5389 = vsel %vm964, %v5386, %v5388
        %v5390 = vrot.slane %v5121, 1
        %v5391 = vsel %vm964, %v5388, %v5390
        %v5392 = vrot.slane %v5122, 1
        %v5393 = vsel %vm964, %v5390, %v5392
        %v5394 = vrot.slane %v5123, 1
        %v5395 = vsel %vm964, %v5392, %v5394
        %v5396 = vrot.slane %v5124, 1
        %v5397 = vsel %vm964, %v5394, %v5396
        %v5398 = vrot.slane %v5125, 1
        %v5399 = vsel %vm964, %v5396, %v5398
        %v5400 = vrot.slane %v5126, 1
        %v5401 = vsel %vm964, %v5398, %v5400
        %v5402 = vrot.slane %v5127, 1
        %v5403 = vsel %vm964, %v5400, %v5402
        %v5404 = vrot.slane %v5128, 1
        %v5405 = vsel %vm964, %v5402, %v5404
        %v5406 = vrot.slane %v5129, 1
        %v5407 = vsel %vm964, %v5404, %v5406
        %v5408 = vrot.slane %v5130, 1
        %v5409 = vsel %vm964, %v5406, %v5408
        %v5410 = vrot.slane %v5131, 1
        %v5411 = vsel %vm964, %v5408, %v5410
        %v5412 = vrot.slane %v5132, 1
        %v5413 = vsel %vm964, %v5410, %v5412
        %v5414 = vrot.slane %v5133, 1
        %v5415 = vsel %vm964, %v5412, %v5414
        %v5416 = vrot.slane %v5134, 1
        %v5417 = vsel %vm964, %v5414, %v5416
        %v5418 = vrot.slane %v5135, 1
        %v5419 = vsel %vm964, %v5416, %v5418
        %v5420 = vrot.slane %v5136, 1
        %v5421 = vsel %vm964, %v5418, %v5420
        %v5422 = vrot.slane %v5137, 1
        %v5423 = vsel %vm964, %v5420, %v5422
        %v5424 = vrot.slane %v5138, 1
        %v5425 = vsel %vm964, %v5422, %v5424
        %v5522 = vmax.f32 %v5043, %v5237
        %v5523 = vmax.f32 %v5044, %v5239
        %v5524 = vmax.f32 %v5045, %v5241
        %v5525 = vmax.f32 %v5046, %v5243
        %v5526 = vmax.f32 %v5047, %v5245
        %v5527 = vmax.f32 %v5048, %v5247
        %v5528 = vmax.f32 %v5049, %v5249
        %v5529 = vmax.f32 %v5050, %v5251
        %v5530 = vmax.f32 %v5051, %v5253
        %v5531 = vmax.f32 %v5052, %v5255
        %v5532 = vmax.f32 %v5053, %v5257
        %v5533 = vmax.f32 %v5054, %v5259
        %v5534 = vmax.f32 %v5055, %v5261
        %v5535 = vmax.f32 %v5056, %v5263
        %v5536 = vmax.f32 %v5057, %v5265
        %v5537 = vmax.f32 %v5058, %v5267
        %v5538 = vmax.f32 %v5059, %v5269
        %v5539 = vmax.f32 %v5060, %v5271
        %v5540 = vmax.f32 %v5061, %v5273
        %v5541 = vmax.f32 %v5062, %v5275
        %v5542 = vmax.f32 %v5063, %v5277
        %v5543 = vmax.f32 %v5064, %v5279
        %v5544 = vmax.f32 %v5065, %v5281
        %v5545 = vmax.f32 %v5066, %v5283
        %v5546 = vmax.f32 %v5067, %v5285
        %v5547 = vmax.f32 %v5068, %v5287
        %v5548 = vmax.f32 %v5069, %v5289
        %v5549 = vmax.f32 %v5070, %v5291
        %v5550 = vmax.f32 %v5071, %v5293
        %v5551 = vmax.f32 %v5072, %v5295
        %v5552 = vmax.f32 %v5073, %v5297
        %v5553 = vmax.f32 %v5074, %v5299
        %v5554 = vmax.f32 %v5075, %v5301
        %v5555 = vmax.f32 %v5076, %v5303
        %v5556 = vmax.f32 %v5077, %v5305
        %v5557 = vmax.f32 %v5078, %v5307
        %v5558 = vmax.f32 %v5079, %v5309
        %v5559 = vmax.f32 %v5080, %v5311
        %v5560 = vmax.f32 %v5081, %v5313
        %v5561 = vmax.f32 %v5082, %v5315
        %v5562 = vmax.f32 %v5083, %v5317
        %v5563 = vmax.f32 %v5084, %v5319
        %v5564 = vmax.f32 %v5085, %v5321
        %v5565 = vmax.f32 %v5086, %v5323
        %v5566 = vmax.f32 %v5087, %v5325
        %v5567 = vmax.f32 %v5088, %v5327
        %v5568 = vmax.f32 %v5089, %v5329
        %v5569 = vmax.f32 %v5090, %v5331
        %v5570 = vmax.f32 %v5091, %v5333
        %v5571 = vmax.f32 %v5092, %v5335
        %v5572 = vmax.f32 %v5093, %v5337
        %v5573 = vmax.f32 %v5094, %v5339
        %v5574 = vmax.f32 %v5095, %v5341
        %v5575 = vmax.f32 %v5096, %v5343
        %v5576 = vmax.f32 %v5097, %v5345
        %v5577 = vmax.f32 %v5098, %v5347
        %v5578 = vmax.f32 %v5099, %v5349
        %v5579 = vmax.f32 %v5100, %v5351
        %v5580 = vmax.f32 %v5101, %v5353
        %v5581 = vmax.f32 %v5102, %v5355
        %v5582 = vmax.f32 %v5103, %v5357
        %v5583 = vmax.f32 %v5104, %v5359
        %v5584 = vmax.f32 %v5105, %v5361
        %v5585 = vmax.f32 %v5106, %v5363
        %v5586 = vmax.f32 %v5107, %v5365
        %v5587 = vmax.f32 %v5108, %v5367
        %v5588 = vmax.f32 %v5109, %v5369
        %v5589 = vmax.f32 %v5110, %v5371
        %v5590 = vmax.f32 %v5111, %v5373
        %v5591 = vmax.f32 %v5112, %v5375
        %v5592 = vmax.f32 %v5113, %v5377
        %v5593 = vmax.f32 %v5114, %v5379
        %v5594 = vmax.f32 %v5115, %v5381
        %v5595 = vmax.f32 %v5116, %v5383
        %v5596 = vmax.f32 %v5117, %v5385
        %v5597 = vmax.f32 %v5118, %v5387
        %v5598 = vmax.f32 %v5119, %v5389
        %v5599 = vmax.f32 %v5120, %v5391
        %v5600 = vmax.f32 %v5121, %v5393
        %v5601 = vmax.f32 %v5122, %v5395
        %v5602 = vmax.f32 %v5123, %v5397
        %v5603 = vmax.f32 %v5124, %v5399
        %v5604 = vmax.f32 %v5125, %v5401
        %v5605 = vmax.f32 %v5126, %v5403
        %v5606 = vmax.f32 %v5127, %v5405
        %v5607 = vmax.f32 %v5128, %v5407
        %v5608 = vmax.f32 %v5129, %v5409
        %v5609 = vmax.f32 %v5130, %v5411
        %v5610 = vmax.f32 %v5131, %v5413
        %v5611 = vmax.f32 %v5132, %v5415
        %v5612 = vmax.f32 %v5133, %v5417
        %v5613 = vmax.f32 %v5134, %v5419
        %v5614 = vmax.f32 %v5135, %v5421
        %v5615 = vmax.f32 %v5136, %v5423
        %v5616 = vmax.f32 %v5137, %v5425
        %v5617 = vmax.f32 %v5138, %v5424
        %v5618 = vmax.f32 %v5522, %v5526
        %v5619 = vmax.f32 %v5523, %v5527
        %v5620 = vmax.f32 %v5524, %v5528
        %v5621 = vmax.f32 %v5525, %v5529
        %v5622 = vmax.f32 %v5526, %v5530
        %v5623 = vmax.f32 %v5527, %v5531
        %v5624 = vmax.f32 %v5528, %v5532
        %v5625 = vmax.f32 %v5529, %v5533
        %v5626 = vmax.f32 %v5530, %v5534
        %v5627 = vmax.f32 %v5531, %v5535
        %v5628 = vmax.f32 %v5532, %v5536
        %v5629 = vmax.f32 %v5533, %v5537
        %v5630 = vmax.f32 %v5534, %v5538
        %v5631 = vmax.f32 %v5535, %v5539
        %v5632 = vmax.f32 %v5536, %v5540
        %v5633 = vmax.f32 %v5537, %v5541
        %v5634 = vmax.f32 %v5538, %v5542
        %v5635 = vmax.f32 %v5539, %v5543
        %v5636 = vmax.f32 %v5540, %v5544
        %v5637 = vmax.f32 %v5541, %v5545
        %v5638 = vmax.f32 %v5542, %v5546
        %v5639 = vmax.f32 %v5543, %v5547
        %v5640 = vmax.f32 %v5544, %v5548
        %v5641 = vmax.f32 %v5545, %v5549
        %v5642 = vmax.f32 %v5546, %v5550
        %v5643 = vmax.f32 %v5547, %v5551
        %v5644 = vmax.f32 %v5548, %v5552
        %v5645 = vmax.f32 %v5549, %v5553
        %v5646 = vmax.f32 %v5550, %v5554
        %v5647 = vmax.f32 %v5551, %v5555
        %v5648 = vmax.f32 %v5552, %v5556
        %v5649 = vmax.f32 %v5553, %v5557
        %v5650 = vmax.f32 %v5554, %v5558
        %v5651 = vmax.f32 %v5555, %v5559
        %v5652 = vmax.f32 %v5556, %v5560
        %v5653 = vmax.f32 %v5557, %v5561
        %v5654 = vmax.f32 %v5558, %v5562
        %v5655 = vmax.f32 %v5559, %v5563
        %v5656 = vmax.f32 %v5560, %v5564
        %v5657 = vmax.f32 %v5561, %v5565
        %v5658 = vmax.f32 %v5562, %v5566
        %v5659 = vmax.f32 %v5563, %v5567
        %v5660 = vmax.f32 %v5564, %v5568
        %v5661 = vmax.f32 %v5565, %v5569
        %v5662 = vmax.f32 %v5566, %v5570
        %v5663 = vmax.f32 %v5567, %v5571
        %v5664 = vmax.f32 %v5568, %v5572
        %v5665 = vmax.f32 %v5569, %v5573
        %v5666 = vmax.f32 %v5570, %v5574
        %v5667 = vmax.f32 %v5571, %v5575
        %v5668 = vmax.f32 %v5572, %v5576
        %v5669 = vmax.f32 %v5573, %v5577
        %v5670 = vmax.f32 %v5574, %v5578
        %v5671 = vmax.f32 %v5575, %v5579
        %v5672 = vmax.f32 %v5576, %v5580
        %v5673 = vmax.f32 %v5577, %v5581
        %v5674 = vmax.f32 %v5578, %v5582
        %v5675 = vmax.f32 %v5579, %v5583
        %v5676 = vmax.f32 %v5580, %v5584
        %v5677 = vmax.f32 %v5581, %v5585
        %v5678 = vmax.f32 %v5582, %v5586
        %v5679 = vmax.f32 %v5583, %v5587
        %v5680 = vmax.f32 %v5584, %v5588
        %v5681 = vmax.f32 %v5585, %v5589
        %v5682 = vmax.f32 %v5586, %v5590
        %v5683 = vmax.f32 %v5587, %v5591
        %v5684 = vmax.f32 %v5588, %v5592
        %v5685 = vmax.f32 %v5589, %v5593
        %v5686 = vmax.f32 %v5590, %v5594
        %v5687 = vmax.f32 %v5591, %v5595
        %v5688 = vmax.f32 %v5592, %v5596
        %v5689 = vmax.f32 %v5593, %v5597
        %v5690 = vmax.f32 %v5594, %v5598
        %v5691 = vmax.f32 %v5595, %v5599
        %v5692 = vmax.f32 %v5596, %v5600
        %v5693 = vmax.f32 %v5597, %v5601
        %v5694 = vmax.f32 %v5598, %v5602
        %v5695 = vmax.f32 %v5599, %v5603
        %v5696 = vmax.f32 %v5600, %v5604
        %v5697 = vmax.f32 %v5601, %v5605
        %v5698 = vmax.f32 %v5602, %v5606
        %v5699 = vmax.f32 %v5603, %v5607
        %v5700 = vmax.f32 %v5604, %v5608
        %v5701 = vmax.f32 %v5605, %v5609
        %v5702 = vmax.f32 %v5606, %v5610
        %v5703 = vmax.f32 %v5607, %v5611
        %v5704 = vmax.f32 %v5608, %v5612
        %v5705 = vmax.f32 %v5609, %v5613
        %v5706 = vmax.f32 %v5610, %v5614
        %v5707 = vmax.f32 %v5611, %v5615
        %v5708 = vmax.f32 %v5612, %v5616
        %v5709 = vmax.f32 %v5613, %v5617
        %v5710 = vlaneseq
        %v5711 = vshrl.u32 %v5710, 7
        %v5712 = vadd.s32 %v5711, 8
        %v5713 = vadd.s32 %v5711, 16
        %v5714 = vadd.s32 %v5711, 24
        %v5715 = vadd.s32 %v5711, 32
        %v5716 = vadd.s32 %v5711, 40
        %v5717 = vadd.s32 %v5711, 48
        %v5718 = vadd.s32 %v5711, 56
        %v5719 = vadd.s32 %v5711, 64
        %v5720 = vadd.s32 %v5711, 72
        %v5721 = vadd.s32 %v5711, 80
        %v5722 = vadd.s32 %v5711, 88
        %v5723 = vadd.s32 %v5711, 96
        %v5724 = vadd.s32 %v5711, 104
        %v5725 = vadd.s32 %v5711, 112
        %v5726 = vadd.s32 %v5711, 120
        %v5727 = vadd.s32 %v5711, 128
        %v5728 = vadd.s32 %v5711, 136
        %v5729 = vadd.s32 %v5711, 144
        %v5730 = vadd.s32 %v5711, 152
        %v5731 = vadd.s32 %v5711, 160
        %v5732 = vadd.s32 %v5711, 168
        %v5733 = vadd.s32 %v5711, 176
        %v5734 = vadd.s32 %v5711, 184
        %v5735 = vlaneseq
        %v5736 = vand.u32 %v5735, 127
        %v5737 = vadd.s32 %v5736, 128
        %v5738 = vadd.s32 %v5736, 256
        %v5739 = vadd.s32 %v5736, 384
        %v5740 = vadd.s32 %v5736, 512
        %v5741 = vadd.s32 %v5736, 640
        %v5742 = vshra.s32 %v5711, 4
        %v5743 = vshra.s32 %v5712, 4
        %v5744 = vshra.s32 %v5713, 4
        %v5745 = vshra.s32 %v5714, 4
        %v5746 = vshra.s32 %v5715, 4
        %v5747 = vshra.s32 %v5716, 4
        %v5748 = vshra.s32 %v5717, 4
        %v5749 = vshra.s32 %v5718, 4
        %v5750 = vshra.s32 %v5719, 4
        %v5751 = vshra.s32 %v5720, 4
        %v5752 = vshra.s32 %v5721, 4
        %v5753 = vshra.s32 %v5722, 4
        %v5754 = vshra.s32 %v5723, 4
        %v5755 = vshra.s32 %v5724, 4
        %v5756 = vshra.s32 %v5725, 4
        %v5757 = vshra.s32 %v5726, 4
        %v5758 = vshra.s32 %v5727, 4
        %v5759 = vshra.s32 %v5728, 4
        %v5760 = vshra.s32 %v5729, 4
        %v5761 = vshra.s32 %v5730, 4
        %v5762 = vshra.s32 %v5731, 4
        %v5763 = vshra.s32 %v5732, 4
        %v5764 = vshra.s32 %v5733, 4
        %v5765 = vshra.s32 %v5734, 4
        %v5766 = vmul.u32 %v5742, 64
        %v5767 = vmul.u32 %v5743, 64
        %v5768 = vmul.u32 %v5744, 64
        %v5769 = vmul.u32 %v5745, 64
        %v5770 = vmul.u32 %v5746, 64
        %v5771 = vmul.u32 %v5747, 64
        %v5772 = vmul.u32 %v5748, 64
        %v5773 = vmul.u32 %v5749, 64
        %v5774 = vmul.u32 %v5750, 64
        %v5775 = vmul.u32 %v5751, 64
        %v5776 = vmul.u32 %v5752, 64
        %v5777 = vmul.u32 %v5753, 64
        %v5778 = vmul.u32 %v5754, 64
        %v5779 = vmul.u32 %v5755, 64
        %v5780 = vmul.u32 %v5756, 64
        %v5781 = vmul.u32 %v5757, 64
        %v5782 = vmul.u32 %v5758, 64
        %v5783 = vmul.u32 %v5759, 64
        %v5784 = vmul.u32 %v5760, 64
        %v5785 = vmul.u32 %v5761, 64
        %v5786 = vmul.u32 %v5762, 64
        %v5787 = vmul.u32 %v5763, 64
        %v5788 = vmul.u32 %v5764, 64
        %v5789 = vmul.u32 %v5765, 64
        %v5790 = vand.u32 %v5711, 15
        %v5791 = vand.u32 %v5712, 15
        %v5792 = vand.u32 %v5713, 15
        %v5793 = vand.u32 %v5714, 15
        %v5794 = vand.u32 %v5715, 15
        %v5795 = vand.u32 %v5716, 15
        %v5796 = vand.u32 %v5717, 15
        %v5797 = vand.u32 %v5718, 15
        %v5798 = vand.u32 %v5719, 15
        %v5799 = vand.u32 %v5720, 15
        %v5800 = vand.u32 %v5721, 15
        %v5801 = vand.u32 %v5722, 15
        %v5802 = vand.u32 %v5723, 15
        %v5803 = vand.u32 %v5724, 15
        %v5804 = vand.u32 %v5725, 15
        %v5805 = vand.u32 %v5726, 15
        %v5806 = vand.u32 %v5727, 15
        %v5807 = vand.u32 %v5728, 15
        %v5808 = vand.u32 %v5729, 15
        %v5809 = vand.u32 %v5730, 15
        %v5810 = vand.u32 %v5731, 15
        %v5811 = vand.u32 %v5732, 15
        %v5812 = vand.u32 %v5733, 15
        %v5813 = vand.u32 %v5734, 15
        %v5814 = vmul.u32 %v5790, 2
        %v5815 = vmul.u32 %v5791, 2
        %v5816 = vmul.u32 %v5792, 2
        %v5817 = vmul.u32 %v5793, 2
        %v5818 = vmul.u32 %v5794, 2
        %v5819 = vmul.u32 %v5795, 2
        %v5820 = vmul.u32 %v5796, 2
        %v5821 = vmul.u32 %v5797, 2
        %v5822 = vmul.u32 %v5798, 2
        %v5823 = vmul.u32 %v5799, 2
        %v5824 = vmul.u32 %v5800, 2
        %v5825 = vmul.u32 %v5801, 2
        %v5826 = vmul.u32 %v5802, 2
        %v5827 = vmul.u32 %v5803, 2
        %v5828 = vmul.u32 %v5804, 2
        %v5829 = vmul.u32 %v5805, 2
        %v5830 = vmul.u32 %v5806, 2
        %v5831 = vmul.u32 %v5807, 2
        %v5832 = vmul.u32 %v5808, 2
        %v5833 = vmul.u32 %v5809, 2
        %v5834 = vmul.u32 %v5810, 2
        %v5835 = vmul.u32 %v5811, 2
        %v5836 = vmul.u32 %v5812, 2
        %v5837 = vmul.u32 %v5813, 2
        %v5838 = vadd.s32 %v5766, %v5814
        %v5839 = vadd.s32 %v5767, %v5815
        %v5840 = vadd.s32 %v5768, %v5816
        %v5841 = vadd.s32 %v5769, %v5817
        %v5842 = vadd.s32 %v5770, %v5818
        %v5843 = vadd.s32 %v5771, %v5819
        %v5844 = vadd.s32 %v5772, %v5820
        %v5845 = vadd.s32 %v5773, %v5821
        %v5846 = vadd.s32 %v5774, %v5822
        %v5847 = vadd.s32 %v5775, %v5823
        %v5848 = vadd.s32 %v5776, %v5824
        %v5849 = vadd.s32 %v5777, %v5825
        %v5850 = vadd.s32 %v5778, %v5826
        %v5851 = vadd.s32 %v5779, %v5827
        %v5852 = vadd.s32 %v5780, %v5828
        %v5853 = vadd.s32 %v5781, %v5829
        %v5854 = vadd.s32 %v5782, %v5830
        %v5855 = vadd.s32 %v5783, %v5831
        %v5856 = vadd.s32 %v5784, %v5832
        %v5857 = vadd.s32 %v5785, %v5833
        %v5858 = vadd.s32 %v5786, %v5834
        %v5859 = vadd.s32 %v5787, %v5835
        %v5860 = vadd.s32 %v5788, %v5836
        %v5861 = vadd.s32 %v5789, %v5837
        %vm5862 = vcmp.eq.s32.totalorder %v5736, %v5838
        %vm5863 = vcmp.eq.s32.totalorder %v5737, %v5838
        %vm5864 = vcmp.eq.s32.totalorder %v5738, %v5838
        %vm5865 = vcmp.eq.s32.totalorder %v5739, %v5838
        %vm5866 = vcmp.eq.s32.totalorder %v5740, %v5838
        %vm5867 = vcmp.eq.s32.totalorder %v5741, %v5838
        %vm5868 = vcmp.eq.s32.totalorder %v5736, %v5839
        %vm5869 = vcmp.eq.s32.totalorder %v5737, %v5839
        %vm5870 = vcmp.eq.s32.totalorder %v5738, %v5839
        %vm5871 = vcmp.eq.s32.totalorder %v5739, %v5839
        %vm5872 = vcmp.eq.s32.totalorder %v5740, %v5839
        %vm5873 = vcmp.eq.s32.totalorder %v5741, %v5839
        %vm5874 = vcmp.eq.s32.totalorder %v5736, %v5840
        %vm5875 = vcmp.eq.s32.totalorder %v5737, %v5840
        %vm5876 = vcmp.eq.s32.totalorder %v5738, %v5840
        %vm5877 = vcmp.eq.s32.totalorder %v5739, %v5840
        %vm5878 = vcmp.eq.s32.totalorder %v5740, %v5840
        %vm5879 = vcmp.eq.s32.totalorder %v5741, %v5840
        %vm5880 = vcmp.eq.s32.totalorder %v5736, %v5841
        %vm5881 = vcmp.eq.s32.totalorder %v5737, %v5841
        %vm5882 = vcmp.eq.s32.totalorder %v5738, %v5841
        %vm5883 = vcmp.eq.s32.totalorder %v5739, %v5841
        %vm5884 = vcmp.eq.s32.totalorder %v5740, %v5841
        %vm5885 = vcmp.eq.s32.totalorder %v5741, %v5841
        %vm5886 = vcmp.eq.s32.totalorder %v5736, %v5842
        %vm5887 = vcmp.eq.s32.totalorder %v5737, %v5842
        %vm5888 = vcmp.eq.s32.totalorder %v5738, %v5842
        %vm5889 = vcmp.eq.s32.totalorder %v5739, %v5842
        %vm5890 = vcmp.eq.s32.totalorder %v5740, %v5842
        %vm5891 = vcmp.eq.s32.totalorder %v5741, %v5842
        %vm5892 = vcmp.eq.s32.totalorder %v5736, %v5843
        %vm5893 = vcmp.eq.s32.totalorder %v5737, %v5843
        %vm5894 = vcmp.eq.s32.totalorder %v5738, %v5843
        %vm5895 = vcmp.eq.s32.totalorder %v5739, %v5843
        %vm5896 = vcmp.eq.s32.totalorder %v5740, %v5843
        %vm5897 = vcmp.eq.s32.totalorder %v5741, %v5843
        %vm5898 = vcmp.eq.s32.totalorder %v5736, %v5844
        %vm5899 = vcmp.eq.s32.totalorder %v5737, %v5844
        %vm5900 = vcmp.eq.s32.totalorder %v5738, %v5844
        %vm5901 = vcmp.eq.s32.totalorder %v5739, %v5844
        %vm5902 = vcmp.eq.s32.totalorder %v5740, %v5844
        %vm5903 = vcmp.eq.s32.totalorder %v5741, %v5844
        %vm5904 = vcmp.eq.s32.totalorder %v5736, %v5845
        %vm5905 = vcmp.eq.s32.totalorder %v5737, %v5845
        %vm5906 = vcmp.eq.s32.totalorder %v5738, %v5845
        %vm5907 = vcmp.eq.s32.totalorder %v5739, %v5845
        %vm5908 = vcmp.eq.s32.totalorder %v5740, %v5845
        %vm5909 = vcmp.eq.s32.totalorder %v5741, %v5845
        %vm5910 = vcmp.eq.s32.totalorder %v5736, %v5846
        %vm5911 = vcmp.eq.s32.totalorder %v5737, %v5846
        %vm5912 = vcmp.eq.s32.totalorder %v5738, %v5846
        %vm5913 = vcmp.eq.s32.totalorder %v5739, %v5846
        %vm5914 = vcmp.eq.s32.totalorder %v5740, %v5846
        %vm5915 = vcmp.eq.s32.totalorder %v5741, %v5846
        %vm5916 = vcmp.eq.s32.totalorder %v5736, %v5847
        %vm5917 = vcmp.eq.s32.totalorder %v5737, %v5847
        %vm5918 = vcmp.eq.s32.totalorder %v5738, %v5847
        %vm5919 = vcmp.eq.s32.totalorder %v5739, %v5847
        %vm5920 = vcmp.eq.s32.totalorder %v5740, %v5847
        %vm5921 = vcmp.eq.s32.totalorder %v5741, %v5847
        %vm5922 = vcmp.eq.s32.totalorder %v5736, %v5848
        %vm5923 = vcmp.eq.s32.totalorder %v5737, %v5848
        %vm5924 = vcmp.eq.s32.totalorder %v5738, %v5848
        %vm5925 = vcmp.eq.s32.totalorder %v5739, %v5848
        %vm5926 = vcmp.eq.s32.totalorder %v5740, %v5848
        %vm5927 = vcmp.eq.s32.totalorder %v5741, %v5848
        %vm5928 = vcmp.eq.s32.totalorder %v5736, %v5849
        %vm5929 = vcmp.eq.s32.totalorder %v5737, %v5849
        %vm5930 = vcmp.eq.s32.totalorder %v5738, %v5849
        %vm5931 = vcmp.eq.s32.totalorder %v5739, %v5849
        %vm5932 = vcmp.eq.s32.totalorder %v5740, %v5849
        %vm5933 = vcmp.eq.s32.totalorder %v5741, %v5849
        %vm5934 = vcmp.eq.s32.totalorder %v5736, %v5850
        %vm5935 = vcmp.eq.s32.totalorder %v5737, %v5850
        %vm5936 = vcmp.eq.s32.totalorder %v5738, %v5850
        %vm5937 = vcmp.eq.s32.totalorder %v5739, %v5850
        %vm5938 = vcmp.eq.s32.totalorder %v5740, %v5850
        %vm5939 = vcmp.eq.s32.totalorder %v5741, %v5850
        %vm5940 = vcmp.eq.s32.totalorder %v5736, %v5851
        %vm5941 = vcmp.eq.s32.totalorder %v5737, %v5851
        %vm5942 = vcmp.eq.s32.totalorder %v5738, %v5851
        %vm5943 = vcmp.eq.s32.totalorder %v5739, %v5851
        %vm5944 = vcmp.eq.s32.totalorder %v5740, %v5851
        %vm5945 = vcmp.eq.s32.totalorder %v5741, %v5851
        %vm5946 = vcmp.eq.s32.totalorder %v5736, %v5852
        %vm5947 = vcmp.eq.s32.totalorder %v5737, %v5852
        %vm5948 = vcmp.eq.s32.totalorder %v5738, %v5852
        %vm5949 = vcmp.eq.s32.totalorder %v5739, %v5852
        %vm5950 = vcmp.eq.s32.totalorder %v5740, %v5852
        %vm5951 = vcmp.eq.s32.totalorder %v5741, %v5852
        %vm5952 = vcmp.eq.s32.totalorder %v5736, %v5853
        %vm5953 = vcmp.eq.s32.totalorder %v5737, %v5853
        %vm5954 = vcmp.eq.s32.totalorder %v5738, %v5853
        %vm5955 = vcmp.eq.s32.totalorder %v5739, %v5853
        %vm5956 = vcmp.eq.s32.totalorder %v5740, %v5853
        %vm5957 = vcmp.eq.s32.totalorder %v5741, %v5853
        %vm5958 = vcmp.eq.s32.totalorder %v5736, %v5854
        %vm5959 = vcmp.eq.s32.totalorder %v5737, %v5854
        %vm5960 = vcmp.eq.s32.totalorder %v5738, %v5854
        %vm5961 = vcmp.eq.s32.totalorder %v5739, %v5854
        %vm5962 = vcmp.eq.s32.totalorder %v5740, %v5854
        %vm5963 = vcmp.eq.s32.totalorder %v5741, %v5854
        %vm5964 = vcmp.eq.s32.totalorder %v5736, %v5855
        %vm5965 = vcmp.eq.s32.totalorder %v5737, %v5855
        %vm5966 = vcmp.eq.s32.totalorder %v5738, %v5855
        %vm5967 = vcmp.eq.s32.totalorder %v5739, %v5855
        %vm5968 = vcmp.eq.s32.totalorder %v5740, %v5855
        %vm5969 = vcmp.eq.s32.totalorder %v5741, %v5855
        %vm5970 = vcmp.eq.s32.totalorder %v5736, %v5856
        %vm5971 = vcmp.eq.s32.totalorder %v5737, %v5856
        %vm5972 = vcmp.eq.s32.totalorder %v5738, %v5856
        %vm5973 = vcmp.eq.s32.totalorder %v5739, %v5856
        %vm5974 = vcmp.eq.s32.totalorder %v5740, %v5856
        %vm5975 = vcmp.eq.s32.totalorder %v5741, %v5856
        %vm5976 = vcmp.eq.s32.totalorder %v5736, %v5857
        %vm5977 = vcmp.eq.s32.totalorder %v5737, %v5857
        %vm5978 = vcmp.eq.s32.totalorder %v5738, %v5857
        %vm5979 = vcmp.eq.s32.totalorder %v5739, %v5857
        %vm5980 = vcmp.eq.s32.totalorder %v5740, %v5857
        %vm5981 = vcmp.eq.s32.totalorder %v5741, %v5857
        %vm5982 = vcmp.eq.s32.totalorder %v5736, %v5858
        %vm5983 = vcmp.eq.s32.totalorder %v5737, %v5858
        %vm5984 = vcmp.eq.s32.totalorder %v5738, %v5858
        %vm5985 = vcmp.eq.s32.totalorder %v5739, %v5858
        %vm5986 = vcmp.eq.s32.totalorder %v5740, %v5858
        %vm5987 = vcmp.eq.s32.totalorder %v5741, %v5858
        %vm5988 = vcmp.eq.s32.totalorder %v5736, %v5859
        %vm5989 = vcmp.eq.s32.totalorder %v5737, %v5859
        %vm5990 = vcmp.eq.s32.totalorder %v5738, %v5859
        %vm5991 = vcmp.eq.s32.totalorder %v5739, %v5859
        %vm5992 = vcmp.eq.s32.totalorder %v5740, %v5859
        %vm5993 = vcmp.eq.s32.totalorder %v5741, %v5859
        %vm5994 = vcmp.eq.s32.totalorder %v5736, %v5860
        %vm5995 = vcmp.eq.s32.totalorder %v5737, %v5860
        %vm5996 = vcmp.eq.s32.totalorder %v5738, %v5860
        %vm5997 = vcmp.eq.s32.totalorder %v5739, %v5860
        %vm5998 = vcmp.eq.s32.totalorder %v5740, %v5860
        %vm5999 = vcmp.eq.s32.totalorder %v5741, %v5860
        %vm6000 = vcmp.eq.s32.totalorder %v5736, %v5861
        %vm6001 = vcmp.eq.s32.totalorder %v5737, %v5861
        %vm6002 = vcmp.eq.s32.totalorder %v5738, %v5861
        %vm6003 = vcmp.eq.s32.totalorder %v5739, %v5861
        %vm6004 = vcmp.eq.s32.totalorder %v5740, %v5861
        %vm6005 = vcmp.eq.s32.totalorder %v5741, %v5861
        %v6006 = vsel %vm5862, 1.0, 0.0
        %v6007 = vsel %vm5863, 1.0, 0.0
        %v6008 = vsel %vm5864, 1.0, 0.0
        %v6009 = vsel %vm5865, 1.0, 0.0
        %v6010 = vsel %vm5866, 1.0, 0.0
        %v6011 = vsel %vm5867, 1.0, 0.0
        %v6012 = vsel %vm5868, 1.0, 0.0
        %v6013 = vsel %vm5869, 1.0, 0.0
        %v6014 = vsel %vm5870, 1.0, 0.0
        %v6015 = vsel %vm5871, 1.0, 0.0
        %v6016 = vsel %vm5872, 1.0, 0.0
        %v6017 = vsel %vm5873, 1.0, 0.0
        %v6018 = vsel %vm5874, 1.0, 0.0
        %v6019 = vsel %vm5875, 1.0, 0.0
        %v6020 = vsel %vm5876, 1.0, 0.0
        %v6021 = vsel %vm5877, 1.0, 0.0
        %v6022 = vsel %vm5878, 1.0, 0.0
        %v6023 = vsel %vm5879, 1.0, 0.0
        %v6024 = vsel %vm5880, 1.0, 0.0
        %v6025 = vsel %vm5881, 1.0, 0.0
        %v6026 = vsel %vm5882, 1.0, 0.0
        %v6027 = vsel %vm5883, 1.0, 0.0
        %v6028 = vsel %vm5884, 1.0, 0.0
        %v6029 = vsel %vm5885, 1.0, 0.0
        %v6030 = vsel %vm5886, 1.0, 0.0
        %v6031 = vsel %vm5887, 1.0, 0.0
        %v6032 = vsel %vm5888, 1.0, 0.0
        %v6033 = vsel %vm5889, 1.0, 0.0
        %v6034 = vsel %vm5890, 1.0, 0.0
        %v6035 = vsel %vm5891, 1.0, 0.0
        %v6036 = vsel %vm5892, 1.0, 0.0
        %v6037 = vsel %vm5893, 1.0, 0.0
        %v6038 = vsel %vm5894, 1.0, 0.0
        %v6039 = vsel %vm5895, 1.0, 0.0
        %v6040 = vsel %vm5896, 1.0, 0.0
        %v6041 = vsel %vm5897, 1.0, 0.0
        %v6042 = vsel %vm5898, 1.0, 0.0
        %v6043 = vsel %vm5899, 1.0, 0.0
        %v6044 = vsel %vm5900, 1.0, 0.0
        %v6045 = vsel %vm5901, 1.0, 0.0
        %v6046 = vsel %vm5902, 1.0, 0.0
        %v6047 = vsel %vm5903, 1.0, 0.0
        %v6048 = vsel %vm5904, 1.0, 0.0
        %v6049 = vsel %vm5905, 1.0, 0.0
        %v6050 = vsel %vm5906, 1.0, 0.0
        %v6051 = vsel %vm5907, 1.0, 0.0
        %v6052 = vsel %vm5908, 1.0, 0.0
        %v6053 = vsel %vm5909, 1.0, 0.0
        %v6054 = vsel %vm5910, 1.0, 0.0
        %v6055 = vsel %vm5911, 1.0, 0.0
        %v6056 = vsel %vm5912, 1.0, 0.0
        %v6057 = vsel %vm5913, 1.0, 0.0
        %v6058 = vsel %vm5914, 1.0, 0.0
        %v6059 = vsel %vm5915, 1.0, 0.0
        %v6060 = vsel %vm5916, 1.0, 0.0
        %v6061 = vsel %vm5917, 1.0, 0.0
        %v6062 = vsel %vm5918, 1.0, 0.0
        %v6063 = vsel %vm5919, 1.0, 0.0
        %v6064 = vsel %vm5920, 1.0, 0.0
        %v6065 = vsel %vm5921, 1.0, 0.0
        %v6066 = vsel %vm5922, 1.0, 0.0
        %v6067 = vsel %vm5923, 1.0, 0.0
        %v6068 = vsel %vm5924, 1.0, 0.0
        %v6069 = vsel %vm5925, 1.0, 0.0
        %v6070 = vsel %vm5926, 1.0, 0.0
        %v6071 = vsel %vm5927, 1.0, 0.0
        %v6072 = vsel %vm5928, 1.0, 0.0
        %v6073 = vsel %vm5929, 1.0, 0.0
        %v6074 = vsel %vm5930, 1.0, 0.0
        %v6075 = vsel %vm5931, 1.0, 0.0
        %v6076 = vsel %vm5932, 1.0, 0.0
        %v6077 = vsel %vm5933, 1.0, 0.0
        %v6078 = vsel %vm5934, 1.0, 0.0
        %v6079 = vsel %vm5935, 1.0, 0.0
        %v6080 = vsel %vm5936, 1.0, 0.0
        %v6081 = vsel %vm5937, 1.0, 0.0
        %v6082 = vsel %vm5938, 1.0, 0.0
        %v6083 = vsel %vm5939, 1.0, 0.0
        %v6084 = vsel %vm5940, 1.0, 0.0
        %v6085 = vsel %vm5941, 1.0, 0.0
        %v6086 = vsel %vm5942, 1.0, 0.0
        %v6087 = vsel %vm5943, 1.0, 0.0
        %v6088 = vsel %vm5944, 1.0, 0.0
        %v6089 = vsel %vm5945, 1.0, 0.0
        %v6090 = vsel %vm5946, 1.0, 0.0
        %v6091 = vsel %vm5947, 1.0, 0.0
        %v6092 = vsel %vm5948, 1.0, 0.0
        %v6093 = vsel %vm5949, 1.0, 0.0
        %v6094 = vsel %vm5950, 1.0, 0.0
        %v6095 = vsel %vm5951, 1.0, 0.0
        %v6096 = vsel %vm5952, 1.0, 0.0
        %v6097 = vsel %vm5953, 1.0, 0.0
        %v6098 = vsel %vm5954, 1.0, 0.0
        %v6099 = vsel %vm5955, 1.0, 0.0
        %v6100 = vsel %vm5956, 1.0, 0.0
        %v6101 = vsel %vm5957, 1.0, 0.0
        %v6102 = vsel %vm5958, 1.0, 0.0
        %v6103 = vsel %vm5959, 1.0, 0.0
        %v6104 = vsel %vm5960, 1.0, 0.0
        %v6105 = vsel %vm5961, 1.0, 0.0
        %v6106 = vsel %vm5962, 1.0, 0.0
        %v6107 = vsel %vm5963, 1.0, 0.0
        %v6108 = vsel %vm5964, 1.0, 0.0
        %v6109 = vsel %vm5965, 1.0, 0.0
        %v6110 = vsel %vm5966, 1.0, 0.0
        %v6111 = vsel %vm5967, 1.0, 0.0
        %v6112 = vsel %vm5968, 1.0, 0.0
        %v6113 = vsel %vm5969, 1.0, 0.0
        %v6114 = vsel %vm5970, 1.0, 0.0
        %v6115 = vsel %vm5971, 1.0, 0.0
        %v6116 = vsel %vm5972, 1.0, 0.0
        %v6117 = vsel %vm5973, 1.0, 0.0
        %v6118 = vsel %vm5974, 1.0, 0.0
        %v6119 = vsel %vm5975, 1.0, 0.0
        %v6120 = vsel %vm5976, 1.0, 0.0
        %v6121 = vsel %vm5977, 1.0, 0.0
        %v6122 = vsel %vm5978, 1.0, 0.0
        %v6123 = vsel %vm5979, 1.0, 0.0
        %v6124 = vsel %vm5980, 1.0, 0.0
        %v6125 = vsel %vm5981, 1.0, 0.0
        %v6126 = vsel %vm5982, 1.0, 0.0
        %v6127 = vsel %vm5983, 1.0, 0.0
        %v6128 = vsel %vm5984, 1.0, 0.0
        %v6129 = vsel %vm5985, 1.0, 0.0
        %v6130 = vsel %vm5986, 1.0, 0.0
        %v6131 = vsel %vm5987, 1.0, 0.0
        %v6132 = vsel %vm5988, 1.0, 0.0
        %v6133 = vsel %vm5989, 1.0, 0.0
        %v6134 = vsel %vm5990, 1.0, 0.0
        %v6135 = vsel %vm5991, 1.0, 0.0
        %v6136 = vsel %vm5992, 1.0, 0.0
        %v6137 = vsel %vm5993, 1.0, 0.0
        %v6138 = vsel %vm5994, 1.0, 0.0
        %v6139 = vsel %vm5995, 1.0, 0.0
        %v6140 = vsel %vm5996, 1.0, 0.0
        %v6141 = vsel %vm5997, 1.0, 0.0
        %v6142 = vsel %vm5998, 1.0, 0.0
        %v6143 = vsel %vm5999, 1.0, 0.0
        %v6144 = vsel %vm6000, 1.0, 0.0
        %v6145 = vsel %vm6001, 1.0, 0.0
        %v6146 = vsel %vm6002, 1.0, 0.0
        %v6147 = vsel %vm6003, 1.0, 0.0
        %v6148 = vsel %vm6004, 1.0, 0.0
        %v6149 = vsel %vm6005, 1.0, 0.0
        %vm6150 = vcmask 777216
        %v6152 = vsel %vm6150, %v6011, 0
        %v6155 = vsel %vm6150, %v6017, 0
        %v6158 = vsel %vm6150, %v6023, 0
        %v6161 = vsel %vm6150, %v6029, 0
        %v6164 = vsel %vm6150, %v6035, 0
        %v6167 = vsel %vm6150, %v6041, 0
        %v6170 = vsel %vm6150, %v6047, 0
        %v6173 = vsel %vm6150, %v6053, 0
        %v6176 = vsel %vm6150, %v6059, 0
        %v6179 = vsel %vm6150, %v6065, 0
        %v6182 = vsel %vm6150, %v6071, 0
        %v6185 = vsel %vm6150, %v6077, 0
        %v6188 = vsel %vm6150, %v6083, 0
        %v6191 = vsel %vm6150, %v6089, 0
        %v6194 = vsel %vm6150, %v6095, 0
        %v6197 = vsel %vm6150, %v6101, 0
        %v6200 = vsel %vm6150, %v6107, 0
        %v6203 = vsel %vm6150, %v6113, 0
        %v6206 = vsel %vm6150, %v6119, 0
        %v6209 = vsel %vm6150, %v6125, 0
        %v6212 = vsel %vm6150, %v6131, 0
        %v6215 = vsel %vm6150, %v6137, 0
        %v6218 = vsel %vm6150, %v6143, 0
        %v6221 = vsel %vm6150, %v6149, 0
        %v6224 = vsel %vm964, %v5709, 0
        %6226 = vmatprep.subr.mxu0 0.0
        %6227 = vmatpush1.msra.mxu0 %v5618
        %6228 = vmatprep.subr.mxu0 0.0
        %6229 = vmatpush1.msra.mxu0 %v5619
        %6230 = vmatprep.subr.mxu0 0.0
        %6231 = vmatpush1.msra.mxu0 %v5620
        %6232 = vmatprep.subr.mxu0 0.0
        %6233 = vmatpush1.msra.mxu0 %v5621
        %6234 = vmatprep.subr.mxu0 0.0
        %6235 = vmatpush1.msra.mxu0 %v5622
        %6236 = vmatprep.subr.mxu0 0.0
        %6237 = vmatpush1.msra.mxu0 %v5623
        %6238 = vmatprep.subr.mxu0 0.0
        %6239 = vmatpush1.msra.mxu0 %v5624
        %6240 = vmatprep.subr.mxu0 0.0
        %6241 = vmatpush1.msra.mxu0 %v5625
        %6242 = vmatprep.subr.mxu0 0.0
        %6243 = vmatpush1.msra.mxu0 %v5626
        %6244 = vmatprep.subr.mxu0 0.0
        %6245 = vmatpush1.msra.mxu0 %v5627
        %6246 = vmatprep.subr.mxu0 0.0
        %6247 = vmatpush1.msra.mxu0 %v5628
        %6248 = vmatprep.subr.mxu0 0.0
        %6249 = vmatpush1.msra.mxu0 %v5629
        %6250 = vmatprep.subr.mxu0 0.0
        %6251 = vmatpush1.msra.mxu0 %v5630
        %6252 = vmatprep.subr.mxu0 0.0
        %6253 = vmatpush1.msra.mxu0 %v5631
        %6254 = vmatprep.subr.mxu0 0.0
        %6255 = vmatpush1.msra.mxu0 %v5632
        %6256 = vmatprep.subr.mxu0 0.0
        %6257 = vmatpush1.msra.mxu0 %v5633
        %6258 = vmatprep.subr.mxu0 0.0
        %6259 = vmatpush1.msra.mxu0 %v5634
        %6260 = vmatprep.subr.mxu0 0.0
        %6261 = vmatpush1.msra.mxu0 %v5635
        %6262 = vmatprep.subr.mxu0 0.0
        %6263 = vmatpush1.msra.mxu0 %v5636
        %6264 = vmatprep.subr.mxu0 0.0
        %6265 = vmatpush1.msra.mxu0 %v5637
        %6266 = vmatprep.subr.mxu0 0.0
        %6267 = vmatpush1.msra.mxu0 %v5638
        %6268 = vmatprep.subr.mxu0 0.0
        %6269 = vmatpush1.msra.mxu0 %v5639
        %6270 = vmatprep.subr.mxu0 0.0
        %6271 = vmatpush1.msra.mxu0 %v5640
        %6272 = vmatprep.subr.mxu0 0.0
        %6273 = vmatpush1.msra.mxu0 %v5641
        %6274 = vmatprep.subr.mxu0 0.0
        %6275 = vmatpush1.msra.mxu0 %v5642
        %6276 = vmatprep.subr.mxu0 0.0
        %6277 = vmatpush1.msra.mxu0 %v5643
        %6278 = vmatprep.subr.mxu0 0.0
        %6279 = vmatpush1.msra.mxu0 %v5644
        %6280 = vmatprep.subr.mxu0 0.0
        %6281 = vmatpush1.msra.mxu0 %v5645
        %6282 = vmatprep.subr.mxu0 0.0
        %6283 = vmatpush1.msra.mxu0 %v5646
        %6284 = vmatprep.subr.mxu0 0.0
        %6285 = vmatpush1.msra.mxu0 %v5647
        %6286 = vmatprep.subr.mxu0 0.0
        %6287 = vmatpush1.msra.mxu0 %v5648
        %6288 = vmatprep.subr.mxu0 0.0
        %6289 = vmatpush1.msra.mxu0 %v5649
        %6290 = vmatprep.mubr.f32.mxu0 %v6007
        %6291 = vmatmul.mubr.f32.gmra.mrb[0].mxu0 %v6006
        %v6292 = vpop.f32.mrb[0].mxu0
        %v6293 = vadd.f32 0.0, %v6292
        %v6294 = vpop.f32.mrb[0].mxu0
        %6295 = vmatprep.mubr.f32.mxu0 %v6013
        %6296 = vmatmul.mubr.f32.gmra.mrb[0].mxu0 %v6012
        %v6297 = vpop.f32.mrb[0].mxu0
        %v6298 = vadd.f32 0.0, %v6297
        %v6299 = vpop.f32.mrb[0].mxu0
        %6300 = vmatprep.mubr.f32.mxu0 %v6019
        %6301 = vmatmul.mubr.f32.gmra.mrb[0].mxu0 %v6018
        %v6302 = vpop.f32.mrb[0].mxu0
        %v6303 = vadd.f32 0.0, %v6302
        %v6304 = vpop.f32.mrb[0].mxu0
        %6305 = vmatprep.mubr.f32.mxu0 %v6025
        %6306 = vmatmul.mubr.f32.gmra.mrb[0].mxu0 %v6024
        %v6307 = vpop.f32.mrb[0].mxu0
        %v6308 = vadd.f32 0.0, %v6307
        %v6309 = vpop.f32.mrb[0].mxu0
        %6310 = vmatprep.mubr.f32.mxu0 %v6031
        %6311 = vmatmul.mubr.f32.gmra.mrb[0].mxu0 %v6030
        %v6312 = vpop.f32.mrb[0].mxu0
        %v6313 = vadd.f32 0.0, %v6312
        %v6314 = vpop.f32.mrb[0].mxu0
        %6315 = vmatprep.mubr.f32.mxu0 %v6037
        %6316 = vmatmul.mubr.f32.gmra.mrb[0].mxu0 %v6036
        %v6317 = vpop.f32.mrb[0].mxu0
        %v6318 = vadd.f32 0.0, %v6317
        %v6319 = vpop.f32.mrb[0].mxu0
        %6320 = vmatprep.mubr.f32.mxu0 %v6043
        %6321 = vmatmul.mubr.f32.gmra.mrb[0].mxu0 %v6042
        %v6322 = vpop.f32.mrb[0].mxu0
        %v6323 = vadd.f32 0.0, %v6322
        %v6324 = vpop.f32.mrb[0].mxu0
        %6325 = vmatprep.mubr.f32.mxu0 %v6049
        %6326 = vmatmul.mubr.f32.gmra.mrb[0].mxu0 %v6048
        %v6327 = vpop.f32.mrb[0].mxu0
        %v6328 = vadd.f32 0.0, %v6327
        %v6329 = vpop.f32.mrb[0].mxu0
        %6330 = vmatprep.mubr.f32.mxu0 %v6055
        %6331 = vmatmul.mubr.f32.gmra.mrb[0].mxu0 %v6054
        %v6332 = vpop.f32.mrb[0].mxu0
        %v6333 = vadd.f32 0.0, %v6332
        %v6334 = vpop.f32.mrb[0].mxu0
        %6335 = vmatprep.mubr.f32.mxu0 %v6061
        %6336 = vmatmul.mubr.f32.gmra.mrb[0].mxu0 %v6060
        %v6337 = vpop.f32.mrb[0].mxu0
        %v6338 = vadd.f32 0.0, %v6337
        %v6339 = vpop.f32.mrb[0].mxu0
        %6340 = vmatprep.mubr.f32.mxu0 %v6067
        %6341 = vmatmul.mubr.f32.gmra.mrb[0].mxu0 %v6066
        %v6342 = vpop.f32.mrb[0].mxu0
        %v6343 = vadd.f32 0.0, %v6342
        %v6344 = vpop.f32.mrb[0].mxu0
        %6345 = vmatprep.mubr.f32.mxu0 %v6073
        %6346 = vmatmul.mubr.f32.gmra.mrb[0].mxu0 %v6072
        %v6347 = vpop.f32.mrb[0].mxu0
        %v6348 = vadd.f32 0.0, %v6347
        %v6349 = vpop.f32.mrb[0].mxu0
        %6350 = vmatprep.mubr.f32.mxu0 %v6079
        %6351 = vmatmul.mubr.f32.gmra.mrb[0].mxu0 %v6078
        %v6352 = vpop.f32.mrb[0].mxu0
        %v6353 = vadd.f32 0.0, %v6352
        %v6354 = vpop.f32.mrb[0].mxu0
        %6355 = vmatprep.mubr.f32.mxu0 %v6085
        %6356 = vmatmul.mubr.f32.gmra.mrb[0].mxu0 %v6084
        %v6357 = vpop.f32.mrb[0].mxu0
        %v6358 = vadd.f32 0.0, %v6357
        %v6359 = vpop.f32.mrb[0].mxu0
        %6360 = vmatprep.mubr.f32.mxu0 %v6091
        %6361 = vmatmul.mubr.f32.gmra.mrb[0].mxu0 %v6090
        %v6362 = vpop.f32.mrb[0].mxu0
        %v6363 = vadd.f32 0.0, %v6362
        %v6364 = vpop.f32.mrb[0].mxu0
        %6365 = vmatprep.mubr.f32.mxu0 %v6097
        %6366 = vmatmul.mubr.f32.gmra.mrb[0].mxu0 %v6096
        %v6367 = vpop.f32.mrb[0].mxu0
        %v6368 = vadd.f32 0.0, %v6367
        %v6369 = vpop.f32.mrb[0].mxu0
        %6370 = vmatprep.mubr.f32.mxu0 %v6103
        %6371 = vmatmul.mubr.f32.gmra.mrb[0].mxu0 %v6102
        %v6372 = vpop.f32.mrb[0].mxu0
        %v6373 = vadd.f32 0.0, %v6372
        %v6374 = vpop.f32.mrb[0].mxu0
        %6375 = vmatprep.mubr.f32.mxu0 %v6109
        %6376 = vmatmul.mubr.f32.gmra.mrb[0].mxu0 %v6108
        %v6377 = vpop.f32.mrb[0].mxu0
        %v6378 = vadd.f32 0.0, %v6377
        %v6379 = vpop.f32.mrb[0].mxu0
        %6380 = vmatprep.mubr.f32.mxu0 %v6115
        %6381 = vmatmul.mubr.f32.gmra.mrb[0].mxu0 %v6114
        %v6382 = vpop.f32.mrb[0].mxu0
        %v6383 = vadd.f32 0.0, %v6382
        %v6384 = vpop.f32.mrb[0].mxu0
        %6385 = vmatprep.mubr.f32.mxu0 %v6121
        %6386 = vmatmul.mubr.f32.gmra.mrb[0].mxu0 %v6120
        %v6387 = vpop.f32.mrb[0].mxu0
        %v6388 = vadd.f32 0.0, %v6387
        %v6389 = vpop.f32.mrb[0].mxu0
        %6390 = vmatprep.mubr.f32.mxu0 %v6127
        %6391 = vmatmul.mubr.f32.gmra.mrb[0].mxu0 %v6126
        %v6392 = vpop.f32.mrb[0].mxu0
        %v6393 = vadd.f32 0.0, %v6392
        %v6394 = vpop.f32.mrb[0].mxu0
        %6395 = vmatprep.mubr.f32.mxu0 %v6133
        %6396 = vmatmul.mubr.f32.gmra.mrb[0].mxu0 %v6132
        %v6397 = vpop.f32.mrb[0].mxu0
        %v6398 = vadd.f32 0.0, %v6397
        %v6399 = vpop.f32.mrb[0].mxu0
        %6400 = vmatprep.mubr.f32.mxu0 %v6139
        %6401 = vmatmul.mubr.f32.gmra.mrb[0].mxu0 %v6138
        %v6402 = vpop.f32.mrb[0].mxu0
        %v6403 = vadd.f32 0.0, %v6402
        %v6404 = vpop.f32.mrb[0].mxu0
        %6405 = vmatprep.mubr.f32.mxu0 %v6145
        %6406 = vmatmul.mubr.f32.gmra.mrb[0].mxu0 %v6144
        %v6407 = vpop.f32.mrb[0].mxu0
        %v6408 = vadd.f32 0.0, %v6407
        %v6409 = vpop.f32.mrb[0].mxu0
        %6410 = vdwg.mxu0
        %6411 = vmatprep.subr.mxu0 0.0
        %6412 = vmatpush1.msra.mxu0 %v5650
        %6413 = vmatprep.subr.mxu0 0.0
        %6414 = vmatpush1.msra.mxu0 %v5651
        %6415 = vmatprep.subr.mxu0 0.0
        %6416 = vmatpush1.msra.mxu0 %v5652
        %6417 = vmatprep.subr.mxu0 0.0
        %6418 = vmatpush1.msra.mxu0 %v5653
        %6419 = vmatprep.subr.mxu0 0.0
        %6420 = vmatpush1.msra.mxu0 %v5654
        %6421 = vmatprep.subr.mxu0 0.0
        %6422 = vmatpush1.msra.mxu0 %v5655
        %6423 = vmatprep.subr.mxu0 0.0
        %6424 = vmatpush1.msra.mxu0 %v5656
        %6425 = vmatprep.subr.mxu0 0.0
        %6426 = vmatpush1.msra.mxu0 %v5657
        %6427 = vmatprep.subr.mxu0 0.0
        %6428 = vmatpush1.msra.mxu0 %v5658
        %6429 = vmatprep.subr.mxu0 0.0
        %6430 = vmatpush1.msra.mxu0 %v5659
        %6431 = vmatprep.subr.mxu0 0.0
        %6432 = vmatpush1.msra.mxu0 %v5660
        %6433 = vmatprep.subr.mxu0 0.0
        %6434 = vmatpush1.msra.mxu0 %v5661
        %6435 = vmatprep.subr.mxu0 0.0
        %6436 = vmatpush1.msra.mxu0 %v5662
        %6437 = vmatprep.subr.mxu0 0.0
        %6438 = vmatpush1.msra.mxu0 %v5663
        %6439 = vmatprep.subr.mxu0 0.0
        %6440 = vmatpush1.msra.mxu0 %v5664
        %6441 = vmatprep.subr.mxu0 0.0
        %6442 = vmatpush1.msra.mxu0 %v5665
        %6443 = vmatprep.subr.mxu0 0.0
        %6444 = vmatpush1.msra.mxu0 %v5666
        %6445 = vmatprep.subr.mxu0 0.0
        %6446 = vmatpush1.msra.mxu0 %v5667
        %6447 = vmatprep.subr.mxu0 0.0
        %6448 = vmatpush1.msra.mxu0 %v5668
        %6449 = vmatprep.subr.mxu0 0.0
        %6450 = vmatpush1.msra.mxu0 %v5669
        %6451 = vmatprep.subr.mxu0 0.0
        %6452 = vmatpush1.msra.mxu0 %v5670
        %6453 = vmatprep.subr.mxu0 0.0
        %6454 = vmatpush1.msra.mxu0 %v5671
        %6455 = vmatprep.subr.mxu0 0.0
        %6456 = vmatpush1.msra.mxu0 %v5672
        %6457 = vmatprep.subr.mxu0 0.0
        %6458 = vmatpush1.msra.mxu0 %v5673
        %6459 = vmatprep.subr.mxu0 0.0
        %6460 = vmatpush1.msra.mxu0 %v5674
        %6461 = vmatprep.subr.mxu0 0.0
        %6462 = vmatpush1.msra.mxu0 %v5675
        %6463 = vmatprep.subr.mxu0 0.0
        %6464 = vmatpush1.msra.mxu0 %v5676
        %6465 = vmatprep.subr.mxu0 0.0
        %6466 = vmatpush1.msra.mxu0 %v5677
        %6467 = vmatprep.subr.mxu0 0.0
        %6468 = vmatpush1.msra.mxu0 %v5678
        %6469 = vmatprep.subr.mxu0 0.0
        %6470 = vmatpush1.msra.mxu0 %v5679
        %6471 = vmatprep.subr.mxu0 0.0
        %6472 = vmatpush1.msra.mxu0 %v5680
        %6473 = vmatprep.subr.mxu0 0.0
        %6474 = vmatpush1.msra.mxu0 %v5681
        %6475 = vmatprep.mubr.f32.mxu0 %v6009
        %6476 = vmatmul.mubr.f32.gmra.mrb[0].mxu0 %v6008
        %v6477 = vpop.f32.mrb[0].mxu0
        %v6478 = vadd.f32 %v6293, %v6477
        %v6479 = vpop.f32.mrb[0].mxu0
        %6480 = vmatprep.mubr.f32.mxu0 %v6015
        %6481 = vmatmul.mubr.f32.gmra.mrb[0].mxu0 %v6014
        %v6482 = vpop.f32.mrb[0].mxu0
        %v6483 = vadd.f32 %v6298, %v6482
        %v6484 = vpop.f32.mrb[0].mxu0
        %6485 = vmatprep.mubr.f32.mxu0 %v6021
        %6486 = vmatmul.mubr.f32.gmra.mrb[0].mxu0 %v6020
        %v6487 = vpop.f32.mrb[0].mxu0
        %v6488 = vadd.f32 %v6303, %v6487
        %v6489 = vpop.f32.mrb[0].mxu0
        %6490 = vmatprep.mubr.f32.mxu0 %v6027
        %6491 = vmatmul.mubr.f32.gmra.mrb[0].mxu0 %v6026
        %v6492 = vpop.f32.mrb[0].mxu0
        %v6493 = vadd.f32 %v6308, %v6492
        %v6494 = vpop.f32.mrb[0].mxu0
        %6495 = vmatprep.mubr.f32.mxu0 %v6033
        %6496 = vmatmul.mubr.f32.gmra.mrb[0].mxu0 %v6032
        %v6497 = vpop.f32.mrb[0].mxu0
        %v6498 = vadd.f32 %v6313, %v6497
        %v6499 = vpop.f32.mrb[0].mxu0
        %6500 = vmatprep.mubr.f32.mxu0 %v6039
        %6501 = vmatmul.mubr.f32.gmra.mrb[0].mxu0 %v6038
        %v6502 = vpop.f32.mrb[0].mxu0
        %v6503 = vadd.f32 %v6318, %v6502
        %v6504 = vpop.f32.mrb[0].mxu0
        %6505 = vmatprep.mubr.f32.mxu0 %v6045
        %6506 = vmatmul.mubr.f32.gmra.mrb[0].mxu0 %v6044
        %v6507 = vpop.f32.mrb[0].mxu0
        %v6508 = vadd.f32 %v6323, %v6507
        %v6509 = vpop.f32.mrb[0].mxu0
        %6510 = vmatprep.mubr.f32.mxu0 %v6051
        %6511 = vmatmul.mubr.f32.gmra.mrb[0].mxu0 %v6050
        %v6512 = vpop.f32.mrb[0].mxu0
        %v6513 = vadd.f32 %v6328, %v6512
        %v6514 = vpop.f32.mrb[0].mxu0
        %6515 = vmatprep.mubr.f32.mxu0 %v6057
        %6516 = vmatmul.mubr.f32.gmra.mrb[0].mxu0 %v6056
        %v6517 = vpop.f32.mrb[0].mxu0
        %v6518 = vadd.f32 %v6333, %v6517
        %v6519 = vpop.f32.mrb[0].mxu0
        %6520 = vmatprep.mubr.f32.mxu0 %v6063
        %6521 = vmatmul.mubr.f32.gmra.mrb[0].mxu0 %v6062
        %v6522 = vpop.f32.mrb[0].mxu0
        %v6523 = vadd.f32 %v6338, %v6522
        %v6524 = vpop.f32.mrb[0].mxu0
        %6525 = vmatprep.mubr.f32.mxu0 %v6069
        %6526 = vmatmul.mubr.f32.gmra.mrb[0].mxu0 %v6068
        %v6527 = vpop.f32.mrb[0].mxu0
        %v6528 = vadd.f32 %v6343, %v6527
        %v6529 = vpop.f32.mrb[0].mxu0
        %6530 = vmatprep.mubr.f32.mxu0 %v6075
        %6531 = vmatmul.mubr.f32.gmra.mrb[0].mxu0 %v6074
        %v6532 = vpop.f32.mrb[0].mxu0
        %v6533 = vadd.f32 %v6348, %v6532
        %v6534 = vpop.f32.mrb[0].mxu0
        %6535 = vmatprep.mubr.f32.mxu0 %v6081
        %6536 = vmatmul.mubr.f32.gmra.mrb[0].mxu0 %v6080
        %v6537 = vpop.f32.mrb[0].mxu0
        %v6538 = vadd.f32 %v6353, %v6537
        %v6539 = vpop.f32.mrb[0].mxu0
        %6540 = vmatprep.mubr.f32.mxu0 %v6087
        %6541 = vmatmul.mubr.f32.gmra.mrb[0].mxu0 %v6086
        %v6542 = vpop.f32.mrb[0].mxu0
        %v6543 = vadd.f32 %v6358, %v6542
        %v6544 = vpop.f32.mrb[0].mxu0
        %6545 = vmatprep.mubr.f32.mxu0 %v6093
        %6546 = vmatmul.mubr.f32.gmra.mrb[0].mxu0 %v6092
        %v6547 = vpop.f32.mrb[0].mxu0
        %v6548 = vadd.f32 %v6363, %v6547
        %v6549 = vpop.f32.mrb[0].mxu0
        %6550 = vmatprep.mubr.f32.mxu0 %v6099
        %6551 = vmatmul.mubr.f32.gmra.mrb[0].mxu0 %v6098
        %v6552 = vpop.f32.mrb[0].mxu0
        %v6553 = vadd.f32 %v6368, %v6552
        %v6554 = vpop.f32.mrb[0].mxu0
        %6555 = vmatprep.mubr.f32.mxu0 %v6105
        %6556 = vmatmul.mubr.f32.gmra.mrb[0].mxu0 %v6104
        %v6557 = vpop.f32.mrb[0].mxu0
        %v6558 = vadd.f32 %v6373, %v6557
        %v6559 = vpop.f32.mrb[0].mxu0
        %6560 = vmatprep.mubr.f32.mxu0 %v6111
        %6561 = vmatmul.mubr.f32.gmra.mrb[0].mxu0 %v6110
        %v6562 = vpop.f32.mrb[0].mxu0
        %v6563 = vadd.f32 %v6378, %v6562
        %v6564 = vpop.f32.mrb[0].mxu0
        %6565 = vmatprep.mubr.f32.mxu0 %v6117
        %6566 = vmatmul.mubr.f32.gmra.mrb[0].mxu0 %v6116
        %v6567 = vpop.f32.mrb[0].mxu0
        %v6568 = vadd.f32 %v6383, %v6567
        %v6569 = vpop.f32.mrb[0].mxu0
        %6570 = vmatprep.mubr.f32.mxu0 %v6123
        %6571 = vmatmul.mubr.f32.gmra.mrb[0].mxu0 %v6122
        %v6572 = vpop.f32.mrb[0].mxu0
        %v6573 = vadd.f32 %v6388, %v6572
        %v6574 = vpop.f32.mrb[0].mxu0
        %6575 = vmatprep.mubr.f32.mxu0 %v6129
        %6576 = vmatmul.mubr.f32.gmra.mrb[0].mxu0 %v6128
        %v6577 = vpop.f32.mrb[0].mxu0
        %v6578 = vadd.f32 %v6393, %v6577
        %v6579 = vpop.f32.mrb[0].mxu0
        %6580 = vmatprep.mubr.f32.mxu0 %v6135
        %6581 = vmatmul.mubr.f32.gmra.mrb[0].mxu0 %v6134
        %v6582 = vpop.f32.mrb[0].mxu0
        %v6583 = vadd.f32 %v6398, %v6582
        %v6584 = vpop.f32.mrb[0].mxu0
        %6585 = vmatprep.mubr.f32.mxu0 %v6141
        %6586 = vmatmul.mubr.f32.gmra.mrb[0].mxu0 %v6140
        %v6587 = vpop.f32.mrb[0].mxu0
        %v6588 = vadd.f32 %v6403, %v6587
        %v6589 = vpop.f32.mrb[0].mxu0
        %6590 = vmatprep.mubr.f32.mxu0 %v6147
        %6591 = vmatmul.mubr.f32.gmra.mrb[0].mxu0 %v6146
        %v6592 = vpop.f32.mrb[0].mxu0
        %v6593 = vadd.f32 %v6408, %v6592
        %v6594 = vpop.f32.mrb[0].mxu0
        %6595 = vdwg.mxu0
        %6596 = vmatprep.subr.mxu0 0.0
        %6597 = vmatpush1.msra.mxu0 %v5682
        %6598 = vmatprep.subr.mxu0 0.0
        %6599 = vmatpush1.msra.mxu0 %v5683
        %6600 = vmatprep.subr.mxu0 0.0
        %6601 = vmatpush1.msra.mxu0 %v5684
        %6602 = vmatprep.subr.mxu0 0.0
        %6603 = vmatpush1.msra.mxu0 %v5685
        %6604 = vmatprep.subr.mxu0 0.0
        %6605 = vmatpush1.msra.mxu0 %v5686
        %6606 = vmatprep.subr.mxu0 0.0
        %6607 = vmatpush1.msra.mxu0 %v5687
        %6608 = vmatprep.subr.mxu0 0.0
        %6609 = vmatpush1.msra.mxu0 %v5688
        %6610 = vmatprep.subr.mxu0 0.0
        %6611 = vmatpush1.msra.mxu0 %v5689
        %6612 = vmatprep.subr.mxu0 0.0
        %6613 = vmatpush1.msra.mxu0 %v5690
        %6614 = vmatprep.subr.mxu0 0.0
        %6615 = vmatpush1.msra.mxu0 %v5691
        %6616 = vmatprep.subr.mxu0 0.0
        %6617 = vmatpush1.msra.mxu0 %v5692
        %6618 = vmatprep.subr.mxu0 0.0
        %6619 = vmatpush1.msra.mxu0 %v5693
        %6620 = vmatprep.subr.mxu0 0.0
        %6621 = vmatpush1.msra.mxu0 %v5694
        %6622 = vmatprep.subr.mxu0 0.0
        %6623 = vmatpush1.msra.mxu0 %v5695
        %6624 = vmatprep.subr.mxu0 0.0
        %6625 = vmatpush1.msra.mxu0 %v5696
        %6626 = vmatprep.subr.mxu0 0.0
        %6627 = vmatpush1.msra.mxu0 %v5697
        %6628 = vmatprep.subr.mxu0 0.0
        %6629 = vmatpush1.msra.mxu0 %v5698
        %6630 = vmatprep.subr.mxu0 0.0
        %6631 = vmatpush1.msra.mxu0 %v5699
        %6632 = vmatprep.subr.mxu0 0.0
        %6633 = vmatpush1.msra.mxu0 %v5700
        %6634 = vmatprep.subr.mxu0 0.0
        %6635 = vmatpush1.msra.mxu0 %v5701
        %6636 = vmatprep.subr.mxu0 0.0
        %6637 = vmatpush1.msra.mxu0 %v5702
        %6638 = vmatprep.subr.mxu0 0.0
        %6639 = vmatpush1.msra.mxu0 %v5703
        %6640 = vmatprep.subr.mxu0 0.0
        %6641 = vmatpush1.msra.mxu0 %v5704
        %6642 = vmatprep.subr.mxu0 0.0
        %6643 = vmatpush1.msra.mxu0 %v5705
        %6644 = vmatprep.subr.mxu0 0.0
        %6645 = vmatpush1.msra.mxu0 %v5706
        %6646 = vmatprep.subr.mxu0 0.0
        %6647 = vmatpush1.msra.mxu0 %v5707
        %6648 = vmatprep.subr.mxu0 0.0
        %6649 = vmatpush1.msra.mxu0 %v5708
        %6650 = vmatprep.subr.mxu0 0.0
        %6651 = vmatpush1.msra.mxu0 %v6224
        %6652 = vmatprep.subr.mxu0 0.0
        %6653 = vmatpush1.msra.mxu0 0.0
        %6654 = vmatprep.subr.mxu0 0.0
        %6655 = vmatpush1.msra.mxu0 0.0
        %6656 = vmatprep.subr.mxu0 0.0
        %6657 = vmatpush1.msra.mxu0 0.0
        %6658 = vmatprep.subr.mxu0 0.0
        %6659 = vmatpush1.msra.mxu0 0.0
        %6660 = vmatprep.mubr.f32.mxu0 %v6152
        %6661 = vmatmul.mubr.f32.gmra.mrb[0].mxu0 %v6010
        %v6662 = vpop.f32.mrb[0].mxu0
        %v6663 = vadd.f32 %v6478, %v6662
        %v6664 = vpop.f32.mrb[0].mxu0
        %6665 = vmatprep.mubr.f32.mxu0 %v6155
        %6666 = vmatmul.mubr.f32.gmra.mrb[0].mxu0 %v6016
        %v6667 = vpop.f32.mrb[0].mxu0
        %v6668 = vadd.f32 %v6483, %v6667
        %v6669 = vpop.f32.mrb[0].mxu0
        %6670 = vmatprep.mubr.f32.mxu0 %v6158
        %6671 = vmatmul.mubr.f32.gmra.mrb[0].mxu0 %v6022
        %v6672 = vpop.f32.mrb[0].mxu0
        %v6673 = vadd.f32 %v6488, %v6672
        %v6674 = vpop.f32.mrb[0].mxu0
        %6675 = vmatprep.mubr.f32.mxu0 %v6161
        %6676 = vmatmul.mubr.f32.gmra.mrb[0].mxu0 %v6028
        %v6677 = vpop.f32.mrb[0].mxu0
        %v6678 = vadd.f32 %v6493, %v6677
        %v6679 = vpop.f32.mrb[0].mxu0
        %6680 = vmatprep.mubr.f32.mxu0 %v6164
        %6681 = vmatmul.mubr.f32.gmra.mrb[0].mxu0 %v6034
        %v6682 = vpop.f32.mrb[0].mxu0
        %v6683 = vadd.f32 %v6498, %v6682
        %v6684 = vpop.f32.mrb[0].mxu0
        %6685 = vmatprep.mubr.f32.mxu0 %v6167
        %6686 = vmatmul.mubr.f32.gmra.mrb[0].mxu0 %v6040
        %v6687 = vpop.f32.mrb[0].mxu0
        %v6688 = vadd.f32 %v6503, %v6687
        %v6689 = vpop.f32.mrb[0].mxu0
        %6690 = vmatprep.mubr.f32.mxu0 %v6170
        %6691 = vmatmul.mubr.f32.gmra.mrb[0].mxu0 %v6046
        %v6692 = vpop.f32.mrb[0].mxu0
        %v6693 = vadd.f32 %v6508, %v6692
        %v6694 = vpop.f32.mrb[0].mxu0
        %6695 = vmatprep.mubr.f32.mxu0 %v6173
        %6696 = vmatmul.mubr.f32.gmra.mrb[0].mxu0 %v6052
        %v6697 = vpop.f32.mrb[0].mxu0
        %v6698 = vadd.f32 %v6513, %v6697
        %v6699 = vpop.f32.mrb[0].mxu0
        %6700 = vmatprep.mubr.f32.mxu0 %v6176
        %6701 = vmatmul.mubr.f32.gmra.mrb[0].mxu0 %v6058
        %v6702 = vpop.f32.mrb[0].mxu0
        %v6703 = vadd.f32 %v6518, %v6702
        %v6704 = vpop.f32.mrb[0].mxu0
        %6705 = vmatprep.mubr.f32.mxu0 %v6179
        %6706 = vmatmul.mubr.f32.gmra.mrb[0].mxu0 %v6064
        %v6707 = vpop.f32.mrb[0].mxu0
        %v6708 = vadd.f32 %v6523, %v6707
        %v6709 = vpop.f32.mrb[0].mxu0
        %6710 = vmatprep.mubr.f32.mxu0 %v6182
        %6711 = vmatmul.mubr.f32.gmra.mrb[0].mxu0 %v6070
        %v6712 = vpop.f32.mrb[0].mxu0
        %v6713 = vadd.f32 %v6528, %v6712
        %v6714 = vpop.f32.mrb[0].mxu0
        %6715 = vmatprep.mubr.f32.mxu0 %v6185
        %6716 = vmatmul.mubr.f32.gmra.mrb[0].mxu0 %v6076
        %v6717 = vpop.f32.mrb[0].mxu0
        %v6718 = vadd.f32 %v6533, %v6717
        %v6719 = vpop.f32.mrb[0].mxu0
        %6720 = vmatprep.mubr.f32.mxu0 %v6188
        %6721 = vmatmul.mubr.f32.gmra.mrb[0].mxu0 %v6082
        %v6722 = vpop.f32.mrb[0].mxu0
        %v6723 = vadd.f32 %v6538, %v6722
        %v6724 = vpop.f32.mrb[0].mxu0
        %6725 = vmatprep.mubr.f32.mxu0 %v6191
        %6726 = vmatmul.mubr.f32.gmra.mrb[0].mxu0 %v6088
        %v6727 = vpop.f32.mrb[0].mxu0
        %v6728 = vadd.f32 %v6543, %v6727
        %v6729 = vpop.f32.mrb[0].mxu0
        %6730 = vmatprep.mubr.f32.mxu0 %v6194
        %6731 = vmatmul.mubr.f32.gmra.mrb[0].mxu0 %v6094
        %v6732 = vpop.f32.mrb[0].mxu0
        %v6733 = vadd.f32 %v6548, %v6732
        %v6734 = vpop.f32.mrb[0].mxu0
        %6735 = vmatprep.mubr.f32.mxu0 %v6197
        %6736 = vmatmul.mubr.f32.gmra.mrb[0].mxu0 %v6100
        %v6737 = vpop.f32.mrb[0].mxu0
        %v6738 = vadd.f32 %v6553, %v6737
        %v6739 = vpop.f32.mrb[0].mxu0
        %6740 = vmatprep.mubr.f32.mxu0 %v6200
        %6741 = vmatmul.mubr.f32.gmra.mrb[0].mxu0 %v6106
        %v6742 = vpop.f32.mrb[0].mxu0
        %v6743 = vadd.f32 %v6558, %v6742
        %v6744 = vpop.f32.mrb[0].mxu0
        %6745 = vmatprep.mubr.f32.mxu0 %v6203
        %6746 = vmatmul.mubr.f32.gmra.mrb[0].mxu0 %v6112
        %v6747 = vpop.f32.mrb[0].mxu0
        %v6748 = vadd.f32 %v6563, %v6747
        %v6749 = vpop.f32.mrb[0].mxu0
        %6750 = vmatprep.mubr.f32.mxu0 %v6206
        %6751 = vmatmul.mubr.f32.gmra.mrb[0].mxu0 %v6118
        %v6752 = vpop.f32.mrb[0].mxu0
        %v6753 = vadd.f32 %v6568, %v6752
        %v6754 = vpop.f32.mrb[0].mxu0
        %6755 = vmatprep.mubr.f32.mxu0 %v6209
        %6756 = vmatmul.mubr.f32.gmra.mrb[0].mxu0 %v6124
        %v6757 = vpop.f32.mrb[0].mxu0
        %v6758 = vadd.f32 %v6573, %v6757
        %v6759 = vpop.f32.mrb[0].mxu0
        %6760 = vmatprep.mubr.f32.mxu0 %v6212
        %6761 = vmatmul.mubr.f32.gmra.mrb[0].mxu0 %v6130
        %v6762 = vpop.f32.mrb[0].mxu0
        %v6763 = vadd.f32 %v6578, %v6762
        %v6764 = vpop.f32.mrb[0].mxu0
        %6765 = vmatprep.mubr.f32.mxu0 %v6215
        %6766 = vmatmul.mubr.f32.gmra.mrb[0].mxu0 %v6136
        %v6767 = vpop.f32.mrb[0].mxu0
        %v6768 = vadd.f32 %v6583, %v6767
        %v6769 = vpop.f32.mrb[0].mxu0
        %6770 = vmatprep.mubr.f32.mxu0 %v6218
        %6771 = vmatmul.mubr.f32.gmra.mrb[0].mxu0 %v6142
        %v6772 = vpop.f32.mrb[0].mxu0
        %v6773 = vadd.f32 %v6588, %v6772
        %v6774 = vpop.f32.mrb[0].mxu0
        %6775 = vmatprep.mubr.f32.mxu0 %v6221
        %6776 = vmatmul.mubr.f32.gmra.mrb[0].mxu0 %v6148
        %v6777 = vpop.f32.mrb[0].mxu0
        %v6778 = vadd.f32 %v6593, %v6777
        %v6779 = vpop.f32.mrb[0].mxu0
        %6780 = vdwg.mxu0
        %v6781 = vld [vmem:[%s3] sm:$0xff]
        %v6782 = vld [vmem:[%s3 + $0x8] sm:$0xff]
        %v6783 = vld [vmem:[%s3 + $0x10] sm:$0xff]
        %v6784 = vld [vmem:[%s3 + $0x18] sm:$0xff]
        %v6785 = vld [vmem:[%s3 + $0x20] sm:$0xff]
        %v6786 = vld [vmem:[%s3 + $0x28] sm:$0xff]
        %v6787 = vld [vmem:[%s3 + $0x30] sm:$0xff]
        %v6788 = vld [vmem:[%s3 + $0x38] sm:$0xff]
        %v6789 = vld [vmem:[%s3 + $0x40] sm:$0xff]
        %v6790 = vld [vmem:[%s3 + $0x48] sm:$0xff]
        %v6791 = vld [vmem:[%s3 + $0x50] sm:$0xff]
        %v6792 = vld [vmem:[%s3 + $0x58] sm:$0xff]
        %v6793 = vld [vmem:[%s3 + $0x60] sm:$0xff]
        %v6794 = vld [vmem:[%s3 + $0x68] sm:$0xff]
        %v6795 = vld [vmem:[%s3 + $0x70] sm:$0xff]
        %v6796 = vld [vmem:[%s3 + $0x78] sm:$0xff]
        %v6797 = vld [vmem:[%s3 + $0x80] sm:$0xff]
        %v6798 = vld [vmem:[%s3 + $0x88] sm:$0xff]
        %v6799 = vld [vmem:[%s3 + $0x90] sm:$0xff]
        %v6800 = vld [vmem:[%s3 + $0x98] sm:$0xff]
        %v6801 = vld [vmem:[%s3 + $0xa0] sm:$0xff]
        %v6802 = vld [vmem:[%s3 + $0xa8] sm:$0xff]
        %v6803 = vld [vmem:[%s3 + $0xb0] sm:$0xff]
        %v6804 = vld [vmem:[%s3 + $0xb8] sm:$0xff]
        %v6805 = vld [vmem:[%s3 + $0xc0] sm:$0xff]
        %v6806 = vld [vmem:[%s3 + $0xc8] sm:$0xff]
        %v6807 = vld [vmem:[%s3 + $0xd0] sm:$0xff]
        %v6808 = vld [vmem:[%s3 + $0xd8] sm:$0xff]
        %v6809 = vld [vmem:[%s3 + $0xe0] sm:$0xff]
        %v6810 = vld [vmem:[%s3 + $0xe8] sm:$0xff]
        %v6811 = vld [vmem:[%s3 + $0xf0] sm:$0xff]
        %v6812 = vld [vmem:[%s3 + $0xf8] sm:$0xff]
        %v6813 = vld [vmem:[%s3 + $0x100] sm:$0xff]
        %v6814 = vld [vmem:[%s3 + $0x108] sm:$0xff]
        %v6815 = vld [vmem:[%s3 + $0x110] sm:$0xff]
        %v6816 = vld [vmem:[%s3 + $0x118] sm:$0xff]
        %v6817 = vld [vmem:[#allocation7] sm:$0x1]
        %v6840 = vrot.slane %v6663, 7
        %v6841 = vsel %vm684, %v685, %v6840
        %v6842 = vrot.slane %v6668, 7
        %v6843 = vsel %vm684, %v6840, %v6842
        %v6844 = vrot.slane %v6673, 7
        %v6845 = vsel %vm684, %v685, %v6844
        %v6846 = vrot.slane %v6678, 7
        %v6847 = vsel %vm684, %v6844, %v6846
        %v6848 = vrot.slane %v6683, 7
        %v6849 = vsel %vm684, %v685, %v6848
        %v6850 = vrot.slane %v6688, 7
        %v6851 = vsel %vm684, %v6848, %v6850
        %v6852 = vrot.slane %v6693, 7
        %v6853 = vsel %vm684, %v685, %v6852
        %v6854 = vrot.slane %v6698, 7
        %v6855 = vsel %vm684, %v6852, %v6854
        %v6856 = vrot.slane %v6703, 7
        %v6857 = vsel %vm684, %v685, %v6856
        %v6858 = vrot.slane %v6708, 7
        %v6859 = vsel %vm684, %v6856, %v6858
        %v6860 = vrot.slane %v6713, 7
        %v6861 = vsel %vm684, %v685, %v6860
        %v6862 = vrot.slane %v6718, 7
        %v6863 = vsel %vm684, %v6860, %v6862
        %v6864 = vrot.slane %v6723, 7
        %v6865 = vsel %vm684, %v685, %v6864
        %v6866 = vrot.slane %v6728, 7
        %v6867 = vsel %vm684, %v6864, %v6866
        %v6868 = vrot.slane %v6733, 7
        %v6869 = vsel %vm684, %v685, %v6868
        %v6870 = vrot.slane %v6738, 7
        %v6871 = vsel %vm684, %v6868, %v6870
        %v6872 = vrot.slane %v6743, 7
        %v6873 = vsel %vm684, %v685, %v6872
        %v6874 = vrot.slane %v6748, 7
        %v6875 = vsel %vm684, %v6872, %v6874
        %v6876 = vrot.slane %v6753, 7
        %v6877 = vsel %vm684, %v685, %v6876
        %v6878 = vrot.slane %v6758, 7
        %v6879 = vsel %vm684, %v6876, %v6878
        %v6880 = vrot.slane %v6763, 7
        %v6881 = vsel %vm684, %v685, %v6880
        %v6882 = vrot.slane %v6768, 7
        %v6883 = vsel %vm684, %v6880, %v6882
        %v6906 = vrot.slane %v6663, 1
        %v6907 = vrot.slane %v6668, 1
        %v6908 = vsel %vm964, %v6906, %v6907
        %v6909 = vsel %vm964, %v6907, %v965
        %v6910 = vrot.slane %v6673, 1
        %v6911 = vrot.slane %v6678, 1
        %v6912 = vsel %vm964, %v6910, %v6911
        %v6913 = vsel %vm964, %v6911, %v965
        %v6914 = vrot.slane %v6683, 1
        %v6915 = vrot.slane %v6688, 1
        %v6916 = vsel %vm964, %v6914, %v6915
        %v6917 = vsel %vm964, %v6915, %v965
        %v6918 = vrot.slane %v6693, 1
        %v6919 = vrot.slane %v6698, 1
        %v6920 = vsel %vm964, %v6918, %v6919
        %v6921 = vsel %vm964, %v6919, %v965
        %v6922 = vrot.slane %v6703, 1
        %v6923 = vrot.slane %v6708, 1
        %v6924 = vsel %vm964, %v6922, %v6923
        %v6925 = vsel %vm964, %v6923, %v965
        %v6926 = vrot.slane %v6713, 1
        %v6927 = vrot.slane %v6718, 1
        %v6928 = vsel %vm964, %v6926, %v6927
        %v6929 = vsel %vm964, %v6927, %v965
        %v6930 = vrot.slane %v6723, 1
        %v6931 = vrot.slane %v6728, 1
        %v6932 = vsel %vm964, %v6930, %v6931
        %v6933 = vsel %vm964, %v6931, %v965
        %v6934 = vrot.slane %v6733, 1
        %v6935 = vrot.slane %v6738, 1
        %v6936 = vsel %vm964, %v6934, %v6935
        %v6937 = vsel %vm964, %v6935, %v965
        %v6938 = vrot.slane %v6743, 1
        %v6939 = vrot.slane %v6748, 1
        %v6940 = vsel %vm964, %v6938, %v6939
        %v6941 = vsel %vm964, %v6939, %v965
        %v6942 = vrot.slane %v6753, 1
        %v6943 = vrot.slane %v6758, 1
        %v6944 = vsel %vm964, %v6942, %v6943
        %v6945 = vsel %vm964, %v6943, %v965
        %v6946 = vrot.slane %v6763, 1
        %v6947 = vrot.slane %v6768, 1
        %v6948 = vsel %vm964, %v6946, %v6947
        %v6949 = vsel %vm964, %v6947, %v965
        %v6952 = vrot.slane %v6773, 7
        %v6953 = vsel %vm684, %v685, %v6952
        %v6954 = vrot.slane %v6778, 7
        %v6955 = vsel %vm684, %v6952, %v6954
        %v6956 = vrot.slane %v6773, 1
        %v6957 = vrot.slane %v6778, 1
        %v6958 = vsel %vm964, %v6956, %v6957
        %v6959 = vsel %vm964, %v6957, %v965
        %6960 = vrot.lane.b32.xlu0 0.0, 32
        %v6961 = vpop.permute.xlu0 %6960
        %6962 = vrot.lane.b32.xlu0 %v6663, 32
        %v6963 = vpop.permute.xlu0 %6962
        %6964 = vrot.lane.b32.xlu0 %v6668, 32
        %v6965 = vpop.permute.xlu0 %6964
        %6966 = vrot.lane.b32.xlu0 %v6673, 32
        %v6967 = vpop.permute.xlu0 %6966
        %6968 = vrot.lane.b32.xlu0 %v6678, 32
        %v6969 = vpop.permute.xlu0 %6968
        %6970 = vrot.lane.b32.xlu0 %v6683, 32
        %v6971 = vpop.permute.xlu0 %6970
        %6972 = vrot.lane.b32.xlu0 %v6688, 32
        %v6973 = vpop.permute.xlu0 %6972
        %6974 = vrot.lane.b32.xlu0 %v6693, 32
        %v6975 = vpop.permute.xlu0 %6974
        %6976 = vrot.lane.b32.xlu0 %v6698, 32
        %v6977 = vpop.permute.xlu0 %6976
        %6978 = vrot.lane.b32.xlu0 %v6703, 32
        %v6979 = vpop.permute.xlu0 %6978
        %6980 = vrot.lane.b32.xlu0 %v6708, 32
        %v6981 = vpop.permute.xlu0 %6980
        %6982 = vrot.lane.b32.xlu0 %v6713, 32
        %v6983 = vpop.permute.xlu0 %6982
        %6984 = vrot.lane.b32.xlu0 %v6718, 32
        %v6985 = vpop.permute.xlu0 %6984
        %6986 = vrot.lane.b32.xlu0 %v6723, 32
        %v6987 = vpop.permute.xlu0 %6986
        %6988 = vrot.lane.b32.xlu0 %v6728, 32
        %v6989 = vpop.permute.xlu0 %6988
        %6990 = vrot.lane.b32.xlu0 %v6733, 32
        %v6991 = vpop.permute.xlu0 %6990
        %6992 = vrot.lane.b32.xlu0 %v6738, 32
        %v6993 = vpop.permute.xlu0 %6992
        %6994 = vrot.lane.b32.xlu0 %v6743, 32
        %v6995 = vpop.permute.xlu0 %6994
        %6996 = vrot.lane.b32.xlu0 %v6748, 32
        %v6997 = vpop.permute.xlu0 %6996
        %6998 = vrot.lane.b32.xlu0 %v6753, 32
        %v6999 = vpop.permute.xlu0 %6998
        %7000 = vrot.lane.b32.xlu0 %v6758, 32
        %v7001 = vpop.permute.xlu0 %7000
        %7002 = vrot.lane.b32.xlu0 %v6763, 32
        %v7003 = vpop.permute.xlu0 %7002
        %7004 = vrot.lane.b32.xlu0 %v6768, 32
        %v7005 = vpop.permute.xlu0 %7004
        %7029 = vrot.lane.b32.xlu0 %v966, 64
        %v7030 = vpop.permute.xlu0 %7029
        %7031 = vrot.lane.b32.xlu0 %v6908, 64
        %v7032 = vpop.permute.xlu0 %7031
        %7033 = vrot.lane.b32.xlu0 %v6909, 64
        %v7034 = vpop.permute.xlu0 %7033
        %7035 = vrot.lane.b32.xlu0 %v6912, 64
        %v7036 = vpop.permute.xlu0 %7035
        %7037 = vrot.lane.b32.xlu0 %v6913, 64
        %v7038 = vpop.permute.xlu0 %7037
        %7039 = vrot.lane.b32.xlu0 %v6916, 64
        %v7040 = vpop.permute.xlu0 %7039
        %7041 = vrot.lane.b32.xlu0 %v6917, 64
        %v7042 = vpop.permute.xlu0 %7041
        %7043 = vrot.lane.b32.xlu0 %v6920, 64
        %v7044 = vpop.permute.xlu0 %7043
        %7045 = vrot.lane.b32.xlu0 %v6921, 64
        %v7046 = vpop.permute.xlu0 %7045
        %7047 = vrot.lane.b32.xlu0 %v6924, 64
        %v7048 = vpop.permute.xlu0 %7047
        %7049 = vrot.lane.b32.xlu0 %v6925, 64
        %v7050 = vpop.permute.xlu0 %7049
        %7051 = vrot.lane.b32.xlu0 %v6928, 64
        %v7052 = vpop.permute.xlu0 %7051
        %7053 = vrot.lane.b32.xlu0 %v6929, 64
        %v7054 = vpop.permute.xlu0 %7053
        %7055 = vrot.lane.b32.xlu0 %v6932, 64
        %v7056 = vpop.permute.xlu0 %7055
        %7057 = vrot.lane.b32.xlu0 %v6933, 64
        %v7058 = vpop.permute.xlu0 %7057
        %7059 = vrot.lane.b32.xlu0 %v6936, 64
        %v7060 = vpop.permute.xlu0 %7059
        %7061 = vrot.lane.b32.xlu0 %v6937, 64
        %v7062 = vpop.permute.xlu0 %7061
        %7063 = vrot.lane.b32.xlu0 %v6940, 64
        %v7064 = vpop.permute.xlu0 %7063
        %7065 = vrot.lane.b32.xlu0 %v6941, 64
        %v7066 = vpop.permute.xlu0 %7065
        %7067 = vrot.lane.b32.xlu0 %v6944, 64
        %v7068 = vpop.permute.xlu0 %7067
        %7069 = vrot.lane.b32.xlu0 %v6945, 64
        %v7070 = vpop.permute.xlu0 %7069
        %7071 = vrot.lane.b32.xlu0 %v6948, 64
        %v7072 = vpop.permute.xlu0 %7071
        %7073 = vrot.lane.b32.xlu0 %v6949, 64
        %v7074 = vpop.permute.xlu0 %7073
        %7098 = vrot.lane.b32.xlu0 %v6841, 96
        %v7099 = vpop.permute.xlu0 %7098
        %7100 = vrot.lane.b32.xlu0 %v6843, 96
        %v7101 = vpop.permute.xlu0 %7100
        %7102 = vrot.lane.b32.xlu0 %v6845, 96
        %v7103 = vpop.permute.xlu0 %7102
        %7104 = vrot.lane.b32.xlu0 %v6847, 96
        %v7105 = vpop.permute.xlu0 %7104
        %7106 = vrot.lane.b32.xlu0 %v6849, 96
        %v7107 = vpop.permute.xlu0 %7106
        %7108 = vrot.lane.b32.xlu0 %v6851, 96
        %v7109 = vpop.permute.xlu0 %7108
        %7110 = vrot.lane.b32.xlu0 %v6853, 96
        %v7111 = vpop.permute.xlu0 %7110
        %7112 = vrot.lane.b32.xlu0 %v6855, 96
        %v7113 = vpop.permute.xlu0 %7112
        %7114 = vrot.lane.b32.xlu0 %v6857, 96
        %v7115 = vpop.permute.xlu0 %7114
        %7116 = vrot.lane.b32.xlu0 %v6859, 96
        %v7117 = vpop.permute.xlu0 %7116
        %7118 = vrot.lane.b32.xlu0 %v6861, 96
        %v7119 = vpop.permute.xlu0 %7118
        %7120 = vrot.lane.b32.xlu0 %v6863, 96
        %v7121 = vpop.permute.xlu0 %7120
        %7122 = vrot.lane.b32.xlu0 %v6865, 96
        %v7123 = vpop.permute.xlu0 %7122
        %7124 = vrot.lane.b32.xlu0 %v6867, 96
        %v7125 = vpop.permute.xlu0 %7124
        %7126 = vrot.lane.b32.xlu0 %v6869, 96
        %v7127 = vpop.permute.xlu0 %7126
        %7128 = vrot.lane.b32.xlu0 %v6871, 96
        %v7129 = vpop.permute.xlu0 %7128
        %7130 = vrot.lane.b32.xlu0 %v6873, 96
        %v7131 = vpop.permute.xlu0 %7130
        %7132 = vrot.lane.b32.xlu0 %v6875, 96
        %v7133 = vpop.permute.xlu0 %7132
        %7134 = vrot.lane.b32.xlu0 %v6877, 96
        %v7135 = vpop.permute.xlu0 %7134
        %7136 = vrot.lane.b32.xlu0 %v6879, 96
        %v7137 = vpop.permute.xlu0 %7136
        %7138 = vrot.lane.b32.xlu0 %v6881, 96
        %v7139 = vpop.permute.xlu0 %7138
        %7140 = vrot.lane.b32.xlu0 %v6883, 96
        %v7141 = vpop.permute.xlu0 %7140
        %7142 = vrot.lane.b32.xlu0 %v6953, 96
        %v7143 = vpop.permute.xlu0 %7142
        %7144 = vrot.lane.b32.xlu0 %v6955, 96
        %v7145 = vpop.permute.xlu0 %7144
        %7170 = vrot.lane.b32.xlu0 %v6908, 32
        %v7171 = vpop.permute.xlu0 %7170
        %7172 = vrot.lane.b32.xlu0 %v6909, 32
        %v7173 = vpop.permute.xlu0 %7172
        %7174 = vrot.lane.b32.xlu0 %v6912, 32
        %v7175 = vpop.permute.xlu0 %7174
        %7176 = vrot.lane.b32.xlu0 %v6913, 32
        %v7177 = vpop.permute.xlu0 %7176
        %7178 = vrot.lane.b32.xlu0 %v6916, 32
        %v7179 = vpop.permute.xlu0 %7178
        %7180 = vrot.lane.b32.xlu0 %v6917, 32
        %v7181 = vpop.permute.xlu0 %7180
        %7182 = vrot.lane.b32.xlu0 %v6920, 32
        %v7183 = vpop.permute.xlu0 %7182
        %7184 = vrot.lane.b32.xlu0 %v6921, 32
        %v7185 = vpop.permute.xlu0 %7184
        %7186 = vrot.lane.b32.xlu0 %v6924, 32
        %v7187 = vpop.permute.xlu0 %7186
        %7188 = vrot.lane.b32.xlu0 %v6925, 32
        %v7189 = vpop.permute.xlu0 %7188
        %7190 = vrot.lane.b32.xlu0 %v6928, 32
        %v7191 = vpop.permute.xlu0 %7190
        %7192 = vrot.lane.b32.xlu0 %v6929, 32
        %v7193 = vpop.permute.xlu0 %7192
        %7194 = vrot.lane.b32.xlu0 %v6932, 32
        %v7195 = vpop.permute.xlu0 %7194
        %7196 = vrot.lane.b32.xlu0 %v6933, 32
        %v7197 = vpop.permute.xlu0 %7196
        %7198 = vrot.lane.b32.xlu0 %v6936, 32
        %v7199 = vpop.permute.xlu0 %7198
        %7200 = vrot.lane.b32.xlu0 %v6937, 32
        %v7201 = vpop.permute.xlu0 %7200
        %7202 = vrot.lane.b32.xlu0 %v6940, 32
        %v7203 = vpop.permute.xlu0 %7202
        %7204 = vrot.lane.b32.xlu0 %v6941, 32
        %v7205 = vpop.permute.xlu0 %7204
        %7206 = vrot.lane.b32.xlu0 %v6944, 32
        %v7207 = vpop.permute.xlu0 %7206
        %7208 = vrot.lane.b32.xlu0 %v6945, 32
        %v7209 = vpop.permute.xlu0 %7208
        %7210 = vrot.lane.b32.xlu0 %v6948, 32
        %v7211 = vpop.permute.xlu0 %7210
        %7212 = vrot.lane.b32.xlu0 %v6949, 32
        %v7213 = vpop.permute.xlu0 %7212
        %7214 = vrot.lane.b32.xlu0 %v6958, 32
        %v7215 = vpop.permute.xlu0 %7214
        %7216 = vrot.lane.b32.xlu0 %v6959, 32
        %v7217 = vpop.permute.xlu0 %7216
        %7242 = vrot.lane.b32.xlu0 %v6845, 64
        %v7243 = vpop.permute.xlu0 %7242
        %7244 = vrot.lane.b32.xlu0 %v6847, 64
        %v7245 = vpop.permute.xlu0 %7244
        %7246 = vrot.lane.b32.xlu0 %v6849, 64
        %v7247 = vpop.permute.xlu0 %7246
        %7248 = vrot.lane.b32.xlu0 %v6851, 64
        %v7249 = vpop.permute.xlu0 %7248
        %7250 = vrot.lane.b32.xlu0 %v6853, 64
        %v7251 = vpop.permute.xlu0 %7250
        %7252 = vrot.lane.b32.xlu0 %v6855, 64
        %v7253 = vpop.permute.xlu0 %7252
        %7254 = vrot.lane.b32.xlu0 %v6857, 64
        %v7255 = vpop.permute.xlu0 %7254
        %7256 = vrot.lane.b32.xlu0 %v6859, 64
        %v7257 = vpop.permute.xlu0 %7256
        %7258 = vrot.lane.b32.xlu0 %v6861, 64
        %v7259 = vpop.permute.xlu0 %7258
        %7260 = vrot.lane.b32.xlu0 %v6863, 64
        %v7261 = vpop.permute.xlu0 %7260
        %7262 = vrot.lane.b32.xlu0 %v6865, 64
        %v7263 = vpop.permute.xlu0 %7262
        %7264 = vrot.lane.b32.xlu0 %v6867, 64
        %v7265 = vpop.permute.xlu0 %7264
        %7266 = vrot.lane.b32.xlu0 %v6869, 64
        %v7267 = vpop.permute.xlu0 %7266
        %7268 = vrot.lane.b32.xlu0 %v6871, 64
        %v7269 = vpop.permute.xlu0 %7268
        %7270 = vrot.lane.b32.xlu0 %v6873, 64
        %v7271 = vpop.permute.xlu0 %7270
        %7272 = vrot.lane.b32.xlu0 %v6875, 64
        %v7273 = vpop.permute.xlu0 %7272
        %7274 = vrot.lane.b32.xlu0 %v6877, 64
        %v7275 = vpop.permute.xlu0 %7274
        %7276 = vrot.lane.b32.xlu0 %v6879, 64
        %v7277 = vpop.permute.xlu0 %7276
        %7278 = vrot.lane.b32.xlu0 %v6881, 64
        %v7279 = vpop.permute.xlu0 %7278
        %7280 = vrot.lane.b32.xlu0 %v6883, 64
        %v7281 = vpop.permute.xlu0 %7280
        %7282 = vrot.lane.b32.xlu0 %v6953, 64
        %v7283 = vpop.permute.xlu0 %7282
        %7284 = vrot.lane.b32.xlu0 %v6955, 64
        %v7285 = vpop.permute.xlu0 %7284
        %7286 = vrot.lane.b32.xlu0 %v686, 64
        %v7287 = vpop.permute.xlu0 %7286
        %7311 = vrot.lane.b32.xlu0 %v6673, 96
        %v7312 = vpop.permute.xlu0 %7311
        %7313 = vrot.lane.b32.xlu0 %v6678, 96
        %v7314 = vpop.permute.xlu0 %7313
        %7315 = vrot.lane.b32.xlu0 %v6683, 96
        %v7316 = vpop.permute.xlu0 %7315
        %7317 = vrot.lane.b32.xlu0 %v6688, 96
        %v7318 = vpop.permute.xlu0 %7317
        %7319 = vrot.lane.b32.xlu0 %v6693, 96
        %v7320 = vpop.permute.xlu0 %7319
        %7321 = vrot.lane.b32.xlu0 %v6698, 96
        %v7322 = vpop.permute.xlu0 %7321
        %7323 = vrot.lane.b32.xlu0 %v6703, 96
        %v7324 = vpop.permute.xlu0 %7323
        %7325 = vrot.lane.b32.xlu0 %v6708, 96
        %v7326 = vpop.permute.xlu0 %7325
        %7327 = vrot.lane.b32.xlu0 %v6713, 96
        %v7328 = vpop.permute.xlu0 %7327
        %7329 = vrot.lane.b32.xlu0 %v6718, 96
        %v7330 = vpop.permute.xlu0 %7329
        %7331 = vrot.lane.b32.xlu0 %v6723, 96
        %v7332 = vpop.permute.xlu0 %7331
        %7333 = vrot.lane.b32.xlu0 %v6728, 96
        %v7334 = vpop.permute.xlu0 %7333
        %7335 = vrot.lane.b32.xlu0 %v6733, 96
        %v7336 = vpop.permute.xlu0 %7335
        %7337 = vrot.lane.b32.xlu0 %v6738, 96
        %v7338 = vpop.permute.xlu0 %7337
        %7339 = vrot.lane.b32.xlu0 %v6743, 96
        %v7340 = vpop.permute.xlu0 %7339
        %7341 = vrot.lane.b32.xlu0 %v6748, 96
        %v7342 = vpop.permute.xlu0 %7341
        %7343 = vrot.lane.b32.xlu0 %v6753, 96
        %v7344 = vpop.permute.xlu0 %7343
        %7345 = vrot.lane.b32.xlu0 %v6758, 96
        %v7346 = vpop.permute.xlu0 %7345
        %7347 = vrot.lane.b32.xlu0 %v6763, 96
        %v7348 = vpop.permute.xlu0 %7347
        %7349 = vrot.lane.b32.xlu0 %v6768, 96
        %v7350 = vpop.permute.xlu0 %7349
        %7351 = vrot.lane.b32.xlu0 %v6773, 96
        %v7352 = vpop.permute.xlu0 %7351
        %7353 = vrot.lane.b32.xlu0 %v6778, 96
        %v7354 = vpop.permute.xlu0 %7353
        %7355 = vrot.lane.b32.xlu0 0.0, 96
        %v7356 = vpop.permute.xlu0 %7355
        %vm7380 = vcmask 261120
        %v7381 = vsel %vm7380, %v686, %v6961
        %v7382 = vsel %vm7380, %v6841, %v6963
        %v7383 = vsel %vm7380, %v6843, %v6965
        %v7384 = vsel %vm7380, %v6845, %v6967
        %v7385 = vsel %vm7380, %v6847, %v6969
        %v7386 = vsel %vm7380, %v6849, %v6971
        %v7387 = vsel %vm7380, %v6851, %v6973
        %v7388 = vsel %vm7380, %v6853, %v6975
        %v7389 = vsel %vm7380, %v6855, %v6977
        %v7390 = vsel %vm7380, %v6857, %v6979
        %v7391 = vsel %vm7380, %v6859, %v6981
        %v7392 = vsel %vm7380, %v6861, %v6983
        %v7393 = vsel %vm7380, %v6863, %v6985
        %v7394 = vsel %vm7380, %v6865, %v6987
        %v7395 = vsel %vm7380, %v6867, %v6989
        %v7396 = vsel %vm7380, %v6869, %v6991
        %v7397 = vsel %vm7380, %v6871, %v6993
        %v7398 = vsel %vm7380, %v6873, %v6995
        %v7399 = vsel %vm7380, %v6875, %v6997
        %v7400 = vsel %vm7380, %v6877, %v6999
        %v7401 = vsel %vm7380, %v6879, %v7001
        %v7402 = vsel %vm7380, %v6881, %v7003
        %v7403 = vsel %vm7380, %v6883, %v7005
        %vm7404 = vcmask 523264
        %v7405 = vsel %vm7404, %v7381, %v7030
        %v7406 = vsel %vm7404, %v7382, %v7032
        %v7407 = vsel %vm7404, %v7383, %v7034
        %v7408 = vsel %vm7404, %v7384, %v7036
        %v7409 = vsel %vm7404, %v7385, %v7038
        %v7410 = vsel %vm7404, %v7386, %v7040
        %v7411 = vsel %vm7404, %v7387, %v7042
        %v7412 = vsel %vm7404, %v7388, %v7044
        %v7413 = vsel %vm7404, %v7389, %v7046
        %v7414 = vsel %vm7404, %v7390, %v7048
        %v7415 = vsel %vm7404, %v7391, %v7050
        %v7416 = vsel %vm7404, %v7392, %v7052
        %v7417 = vsel %vm7404, %v7393, %v7054
        %v7418 = vsel %vm7404, %v7394, %v7056
        %v7419 = vsel %vm7404, %v7395, %v7058
        %v7420 = vsel %vm7404, %v7396, %v7060
        %v7421 = vsel %vm7404, %v7397, %v7062
        %v7422 = vsel %vm7404, %v7398, %v7064
        %v7423 = vsel %vm7404, %v7399, %v7066
        %v7424 = vsel %vm7404, %v7400, %v7068
        %v7425 = vsel %vm7404, %v7401, %v7070
        %v7426 = vsel %vm7404, %v7402, %v7072
        %v7427 = vsel %vm7404, %v7403, %v7074
        %vm7428 = vcmask 785408
        %v7429 = vsel %vm7428, %v7405, %v7099
        %v7430 = vsel %vm7428, %v7405, %v7101
        %v7431 = vsel %vm7428, %v7406, %v7103
        %v7432 = vsel %vm7428, %v7407, %v7105
        %v7433 = vsel %vm7428, %v7408, %v7107
        %v7434 = vsel %vm7428, %v7409, %v7109
        %v7435 = vsel %vm7428, %v7410, %v7111
        %v7436 = vsel %vm7428, %v7411, %v7113
        %v7437 = vsel %vm7428, %v7412, %v7115
        %v7438 = vsel %vm7428, %v7413, %v7117
        %v7439 = vsel %vm7428, %v7414, %v7119
        %v7440 = vsel %vm7428, %v7415, %v7121
        %v7441 = vsel %vm7428, %v7416, %v7123
        %v7442 = vsel %vm7428, %v7417, %v7125
        %v7443 = vsel %vm7428, %v7418, %v7127
        %v7444 = vsel %vm7428, %v7419, %v7129
        %v7445 = vsel %vm7428, %v7420, %v7131
        %v7446 = vsel %vm7428, %v7421, %v7133
        %v7447 = vsel %vm7428, %v7422, %v7135
        %v7448 = vsel %vm7428, %v7423, %v7137
        %v7449 = vsel %vm7428, %v7424, %v7139
        %v7450 = vsel %vm7428, %v7425, %v7141
        %v7451 = vsel %vm7428, %v7426, %v7143
        %v7452 = vsel %vm7428, %v7427, %v7145
        %v7453 = vsel %vm7380, %v6663, %v7171
        %v7454 = vsel %vm7380, %v6668, %v7173
        %v7455 = vsel %vm7380, %v6673, %v7175
        %v7456 = vsel %vm7380, %v6678, %v7177
        %v7457 = vsel %vm7380, %v6683, %v7179
        %v7458 = vsel %vm7380, %v6688, %v7181
        %v7459 = vsel %vm7380, %v6693, %v7183
        %v7460 = vsel %vm7380, %v6698, %v7185
        %v7461 = vsel %vm7380, %v6703, %v7187
        %v7462 = vsel %vm7380, %v6708, %v7189
        %v7463 = vsel %vm7380, %v6713, %v7191
        %v7464 = vsel %vm7380, %v6718, %v7193
        %v7465 = vsel %vm7380, %v6723, %v7195
        %v7466 = vsel %vm7380, %v6728, %v7197
        %v7467 = vsel %vm7380, %v6733, %v7199
        %v7468 = vsel %vm7380, %v6738, %v7201
        %v7469 = vsel %vm7380, %v6743, %v7203
        %v7470 = vsel %vm7380, %v6748, %v7205
        %v7471 = vsel %vm7380, %v6753, %v7207
        %v7472 = vsel %vm7380, %v6758, %v7209
        %v7473 = vsel %vm7380, %v6763, %v7211
        %v7474 = vsel %vm7380, %v6768, %v7213
        %v7475 = vsel %vm7380, %v6773, %v7215
        %v7476 = vsel %vm7380, %v6778, %v7217
        %v7477 = vsel %vm7404, %v7453, %v7243
        %v7478 = vsel %vm7404, %v7454, %v7245
        %v7479 = vsel %vm7404, %v7455, %v7247
        %v7480 = vsel %vm7404, %v7456, %v7249
        %v7481 = vsel %vm7404, %v7457, %v7251
        %v7482 = vsel %vm7404, %v7458, %v7253
        %v7483 = vsel %vm7404, %v7459, %v7255
        %v7484 = vsel %vm7404, %v7460, %v7257
        %v7485 = vsel %vm7404, %v7461, %v7259
        %v7486 = vsel %vm7404, %v7462, %v7261
        %v7487 = vsel %vm7404, %v7463, %v7263
        %v7488 = vsel %vm7404, %v7464, %v7265
        %v7489 = vsel %vm7404, %v7465, %v7267
        %v7490 = vsel %vm7404, %v7466, %v7269
        %v7491 = vsel %vm7404, %v7467, %v7271
        %v7492 = vsel %vm7404, %v7468, %v7273
        %v7493 = vsel %vm7404, %v7469, %v7275
        %v7494 = vsel %vm7404, %v7470, %v7277
        %v7495 = vsel %vm7404, %v7471, %v7279
        %v7496 = vsel %vm7404, %v7472, %v7281
        %v7497 = vsel %vm7404, %v7473, %v7283
        %v7498 = vsel %vm7404, %v7474, %v7285
        %v7499 = vsel %vm7404, %v7475, %v7287
        %v7500 = vsel %vm7404, %v7476, %v7287
        %v7501 = vsel %vm7428, %v7477, %v7312
        %v7502 = vsel %vm7428, %v7478, %v7314
        %v7503 = vsel %vm7428, %v7479, %v7316
        %v7504 = vsel %vm7428, %v7480, %v7318
        %v7505 = vsel %vm7428, %v7481, %v7320
        %v7506 = vsel %vm7428, %v7482, %v7322
        %v7507 = vsel %vm7428, %v7483, %v7324
        %v7508 = vsel %vm7428, %v7484, %v7326
        %v7509 = vsel %vm7428, %v7485, %v7328
        %v7510 = vsel %vm7428, %v7486, %v7330
        %v7511 = vsel %vm7428, %v7487, %v7332
        %v7512 = vsel %vm7428, %v7488, %v7334
        %v7513 = vsel %vm7428, %v7489, %v7336
        %v7514 = vsel %vm7428, %v7490, %v7338
        %v7515 = vsel %vm7428, %v7491, %v7340
        %v7516 = vsel %vm7428, %v7492, %v7342
        %v7517 = vsel %vm7428, %v7493, %v7344
        %v7518 = vsel %vm7428, %v7494, %v7346
        %v7519 = vsel %vm7428, %v7495, %v7348
        %v7520 = vsel %vm7428, %v7496, %v7350
        %v7521 = vsel %vm7428, %v7497, %v7352
        %v7522 = vsel %vm7428, %v7498, %v7354
        %v7523 = vsel %vm7428, %v7499, %v7356
        %v7524 = vsel %vm7428, %v7500, %v7356
        %v7526 = vlaneseq
        %v7527 = vshrl.u32 %v7526, 7
        %v7528 = vsub.s32 0, %v7527
        %v7529 = vrot.slane %v6817, %v7528
        %v7531 = vsel %vm7380, %v6912, 0
        %v7533 = vsel %vm7380, %v6913, 0
        %v7535 = vsel %vm7380, %v6916, 0
        %v7537 = vsel %vm7380, %v6917, 0
        %v7539 = vsel %vm7380, %v6920, 0
        %v7541 = vsel %vm7380, %v6921, 0
        %v7543 = vsel %vm7380, %v6924, 0
        %v7545 = vsel %vm7380, %v6925, 0
        %v7547 = vsel %vm7380, %v6928, 0
        %v7549 = vsel %vm7380, %v6929, 0
        %v7551 = vsel %vm7380, %v6932, 0
        %v7553 = vsel %vm7380, %v6933, 0
        %v7555 = vsel %vm7380, %v6936, 0
        %v7557 = vsel %vm7380, %v6937, 0
        %v7559 = vsel %vm7380, %v6940, 0
        %v7561 = vsel %vm7380, %v6941, 0
        %v7563 = vsel %vm7380, %v6944, 0
        %v7565 = vsel %vm7380, %v6945, 0
        %v7567 = vsel %vm7380, %v6948, 0
        %v7569 = vsel %vm7380, %v6949, 0
        %v7571 = vsel %vm7380, %v6958, 0
        %v7573 = vsel %vm7380, %v6959, 0
        %v7575 = vsel %vm7380, %v966, 0
        %7577 = vmatprep.subr.mxu0 0.0
        %7578 = vmatpush1.msra.mxu0 %v6781
        %7579 = vmatprep.subr.mxu0 0.0
        %7580 = vmatpush1.msra.mxu0 %v6782
        %7581 = vmatprep.subr.mxu0 0.0
        %7582 = vmatpush1.msra.mxu0 %v6783
        %7583 = vmatprep.subr.mxu0 0.0
        %7584 = vmatpush1.msra.mxu0 %v6784
        %7585 = vmatprep.subr.mxu0 0.0
        %7586 = vmatpush1.msra.mxu0 %v6785
        %7587 = vmatprep.subr.mxu0 0.0
        %7588 = vmatpush1.msra.mxu0 %v6786
        %7589 = vmatprep.subr.mxu0 0.0
        %7590 = vmatpush1.msra.mxu0 %v6787
        %7591 = vmatprep.subr.mxu0 0.0
        %7592 = vmatpush1.msra.mxu0 %v6788
        %7593 = vmatprep.subr.mxu0 0.0
        %7594 = vmatpush1.msra.mxu0 %v6789
        %7595 = vmatprep.subr.mxu0 0.0
        %7596 = vmatpush1.msra.mxu0 %v6790
        %7597 = vmatprep.subr.mxu0 0.0
        %7598 = vmatpush1.msra.mxu0 %v6791
        %7599 = vmatprep.subr.mxu0 0.0
        %7600 = vmatpush1.msra.mxu0 %v6792
        %7601 = vmatprep.subr.mxu0 0.0
        %7602 = vmatpush1.msra.mxu0 %v6793
        %7603 = vmatprep.subr.mxu0 0.0
        %7604 = vmatpush1.msra.mxu0 %v6794
        %7605 = vmatprep.subr.mxu0 0.0
        %7606 = vmatpush1.msra.mxu0 %v6795
        %7607 = vmatprep.subr.mxu0 0.0
        %7608 = vmatpush1.msra.mxu0 %v6796
        %7609 = vmatprep.subr.mxu0 0.0
        %7610 = vmatpush1.msra.mxu0 %v6797
        %7611 = vmatprep.subr.mxu0 0.0
        %7612 = vmatpush1.msra.mxu0 %v6798
        %7613 = vmatprep.subr.mxu0 0.0
        %7614 = vmatpush1.msra.mxu0 %v6799
        %7615 = vmatprep.subr.mxu0 0.0
        %7616 = vmatpush1.msra.mxu0 %v6800
        %7617 = vmatprep.subr.mxu0 0.0
        %7618 = vmatpush1.msra.mxu0 %v6801
        %7619 = vmatprep.subr.mxu0 0.0
        %7620 = vmatpush1.msra.mxu0 %v6802
        %7621 = vmatprep.subr.mxu0 0.0
        %7622 = vmatpush1.msra.mxu0 %v6803
        %7623 = vmatprep.subr.mxu0 0.0
        %7624 = vmatpush1.msra.mxu0 %v6804
        %7625 = vmatprep.subr.mxu0 0.0
        %7626 = vmatpush1.msra.mxu0 %v6805
        %7627 = vmatprep.subr.mxu0 0.0
        %7628 = vmatpush1.msra.mxu0 %v6806
        %7629 = vmatprep.subr.mxu0 0.0
        %7630 = vmatpush1.msra.mxu0 %v6807
        %7631 = vmatprep.subr.mxu0 0.0
        %7632 = vmatpush1.msra.mxu0 %v6808
        %7633 = vmatprep.subr.mxu0 0.0
        %7634 = vmatpush1.msra.mxu0 %v6809
        %7635 = vmatprep.subr.mxu0 0.0
        %7636 = vmatpush1.msra.mxu0 %v6810
        %7637 = vmatprep.subr.mxu0 0.0
        %7638 = vmatpush1.msra.mxu0 %v6811
        %7639 = vmatprep.subr.mxu0 0.0
        %7640 = vmatpush1.msra.mxu0 %v6812
        %7641 = vmatprep.mubr.f32.mxu0 %v7501
        %7642 = vmatmul.mubr.f32.gmra.mrb[0].mxu0 %v7429
        %v7643 = vpop.f32.mrb[0].mxu0
        %v7644 = vadd.f32 %v7529, %v7643
        %v7645 = vpop.f32.mrb[0].mxu0
        %7646 = vmatprep.mubr.f32.mxu0 %v7502
        %7647 = vmatmul.mubr.f32.gmra.mrb[0].mxu0 %v7430
        %v7648 = vpop.f32.mrb[0].mxu0
        %v7649 = vadd.f32 %v7529, %v7648
        %v7650 = vpop.f32.mrb[0].mxu0
        %7651 = vmatprep.mubr.f32.mxu0 %v7503
        %7652 = vmatmul.mubr.f32.gmra.mrb[0].mxu0 %v7431
        %v7653 = vpop.f32.mrb[0].mxu0
        %v7654 = vadd.f32 %v7529, %v7653
        %v7655 = vpop.f32.mrb[0].mxu0
        %7656 = vmatprep.mubr.f32.mxu0 %v7504
        %7657 = vmatmul.mubr.f32.gmra.mrb[0].mxu0 %v7432
        %v7658 = vpop.f32.mrb[0].mxu0
        %v7659 = vadd.f32 %v7529, %v7658
        %v7660 = vpop.f32.mrb[0].mxu0
        %7661 = vmatprep.mubr.f32.mxu0 %v7505
        %7662 = vmatmul.mubr.f32.gmra.mrb[0].mxu0 %v7433
        %v7663 = vpop.f32.mrb[0].mxu0
        %v7664 = vadd.f32 %v7529, %v7663
        %v7665 = vpop.f32.mrb[0].mxu0
        %7666 = vmatprep.mubr.f32.mxu0 %v7506
        %7667 = vmatmul.mubr.f32.gmra.mrb[0].mxu0 %v7434
        %v7668 = vpop.f32.mrb[0].mxu0
        %v7669 = vadd.f32 %v7529, %v7668
        %v7670 = vpop.f32.mrb[0].mxu0
        %7671 = vmatprep.mubr.f32.mxu0 %v7507
        %7672 = vmatmul.mubr.f32.gmra.mrb[0].mxu0 %v7435
        %v7673 = vpop.f32.mrb[0].mxu0
        %v7674 = vadd.f32 %v7529, %v7673
        %v7675 = vpop.f32.mrb[0].mxu0
        %7676 = vmatprep.mubr.f32.mxu0 %v7508
        %7677 = vmatmul.mubr.f32.gmra.mrb[0].mxu0 %v7436
        %v7678 = vpop.f32.mrb[0].mxu0
        %v7679 = vadd.f32 %v7529, %v7678
        %v7680 = vpop.f32.mrb[0].mxu0
        %7681 = vmatprep.mubr.f32.mxu0 %v7509
        %7682 = vmatmul.mubr.f32.gmra.mrb[0].mxu0 %v7437
        %v7683 = vpop.f32.mrb[0].mxu0
        %v7684 = vadd.f32 %v7529, %v7683
        %v7685 = vpop.f32.mrb[0].mxu0
        %7686 = vmatprep.mubr.f32.mxu0 %v7510
        %7687 = vmatmul.mubr.f32.gmra.mrb[0].mxu0 %v7438
        %v7688 = vpop.f32.mrb[0].mxu0
        %v7689 = vadd.f32 %v7529, %v7688
        %v7690 = vpop.f32.mrb[0].mxu0
        %7691 = vmatprep.mubr.f32.mxu0 %v7511
        %7692 = vmatmul.mubr.f32.gmra.mrb[0].mxu0 %v7439
        %v7693 = vpop.f32.mrb[0].mxu0
        %v7694 = vadd.f32 %v7529, %v7693
        %v7695 = vpop.f32.mrb[0].mxu0
        %7696 = vmatprep.mubr.f32.mxu0 %v7512
        %7697 = vmatmul.mubr.f32.gmra.mrb[0].mxu0 %v7440
        %v7698 = vpop.f32.mrb[0].mxu0
        %v7699 = vadd.f32 %v7529, %v7698
        %v7700 = vpop.f32.mrb[0].mxu0
        %7701 = vmatprep.mubr.f32.mxu0 %v7513
        %7702 = vmatmul.mubr.f32.gmra.mrb[0].mxu0 %v7441
        %v7703 = vpop.f32.mrb[0].mxu0
        %v7704 = vadd.f32 %v7529, %v7703
        %v7705 = vpop.f32.mrb[0].mxu0
        %7706 = vmatprep.mubr.f32.mxu0 %v7514
        %7707 = vmatmul.mubr.f32.gmra.mrb[0].mxu0 %v7442
        %v7708 = vpop.f32.mrb[0].mxu0
        %v7709 = vadd.f32 %v7529, %v7708
        %v7710 = vpop.f32.mrb[0].mxu0
        %7711 = vmatprep.mubr.f32.mxu0 %v7515
        %7712 = vmatmul.mubr.f32.gmra.mrb[0].mxu0 %v7443
        %v7713 = vpop.f32.mrb[0].mxu0
        %v7714 = vadd.f32 %v7529, %v7713
        %v7715 = vpop.f32.mrb[0].mxu0
        %7716 = vmatprep.mubr.f32.mxu0 %v7516
        %7717 = vmatmul.mubr.f32.gmra.mrb[0].mxu0 %v7444
        %v7718 = vpop.f32.mrb[0].mxu0
        %v7719 = vadd.f32 %v7529, %v7718
        %v7720 = vpop.f32.mrb[0].mxu0
        %7721 = vmatprep.mubr.f32.mxu0 %v7517
        %7722 = vmatmul.mubr.f32.gmra.mrb[0].mxu0 %v7445
        %v7723 = vpop.f32.mrb[0].mxu0
        %v7724 = vadd.f32 %v7529, %v7723
        %v7725 = vpop.f32.mrb[0].mxu0
        %7726 = vmatprep.mubr.f32.mxu0 %v7518
        %7727 = vmatmul.mubr.f32.gmra.mrb[0].mxu0 %v7446
        %v7728 = vpop.f32.mrb[0].mxu0
        %v7729 = vadd.f32 %v7529, %v7728
        %v7730 = vpop.f32.mrb[0].mxu0
        %7731 = vmatprep.mubr.f32.mxu0 %v7519
        %7732 = vmatmul.mubr.f32.gmra.mrb[0].mxu0 %v7447
        %v7733 = vpop.f32.mrb[0].mxu0
        %v7734 = vadd.f32 %v7529, %v7733
        %v7735 = vpop.f32.mrb[0].mxu0
        %7736 = vmatprep.mubr.f32.mxu0 %v7520
        %7737 = vmatmul.mubr.f32.gmra.mrb[0].mxu0 %v7448
        %v7738 = vpop.f32.mrb[0].mxu0
        %v7739 = vadd.f32 %v7529, %v7738
        %v7740 = vpop.f32.mrb[0].mxu0
        %7741 = vmatprep.mubr.f32.mxu0 %v7521
        %7742 = vmatmul.mubr.f32.gmra.mrb[0].mxu0 %v7449
        %v7743 = vpop.f32.mrb[0].mxu0
        %v7744 = vadd.f32 %v7529, %v7743
        %v7745 = vpop.f32.mrb[0].mxu0
        %7746 = vmatprep.mubr.f32.mxu0 %v7522
        %7747 = vmatmul.mubr.f32.gmra.mrb[0].mxu0 %v7450
        %v7748 = vpop.f32.mrb[0].mxu0
        %v7749 = vadd.f32 %v7529, %v7748
        %v7750 = vpop.f32.mrb[0].mxu0
        %7751 = vmatprep.mubr.f32.mxu0 %v7523
        %7752 = vmatmul.mubr.f32.gmra.mrb[0].mxu0 %v7451
        %v7753 = vpop.f32.mrb[0].mxu0
        %v7754 = vadd.f32 %v7529, %v7753
        %v7755 = vpop.f32.mrb[0].mxu0
        %7756 = vmatprep.mubr.f32.mxu0 %v7524
        %7757 = vmatmul.mubr.f32.gmra.mrb[0].mxu0 %v7452
        %v7758 = vpop.f32.mrb[0].mxu0
        %v7759 = vadd.f32 %v7529, %v7758
        %v7760 = vpop.f32.mrb[0].mxu0
        %7761 = vdwg.mxu0
        %7762 = vmatprep.subr.mxu0 0.0
        %7763 = vmatpush1.msra.mxu0 %v6813
        %7764 = vmatprep.subr.mxu0 0.0
        %7765 = vmatpush1.msra.mxu0 %v6814
        %7766 = vmatprep.subr.mxu0 0.0
        %7767 = vmatpush1.msra.mxu0 %v6815
        %7768 = vmatprep.subr.mxu0 0.0
        %7769 = vmatpush1.msra.mxu0 %v6816
        %7770 = vmatprep.subr.mxu0 0.0
        %7771 = vmatpush1.msra.mxu0 0.0
        %7772 = vmatprep.subr.mxu0 0.0
        %7773 = vmatpush1.msra.mxu0 0.0
        %7774 = vmatprep.subr.mxu0 0.0
        %7775 = vmatpush1.msra.mxu0 0.0
        %7776 = vmatprep.subr.mxu0 0.0
        %7777 = vmatpush1.msra.mxu0 0.0
        %7778 = vmatprep.subr.mxu0 0.0
        %7779 = vmatpush1.msra.mxu0 0.0
        %7780 = vmatprep.subr.mxu0 0.0
        %7781 = vmatpush1.msra.mxu0 0.0
        %7782 = vmatprep.subr.mxu0 0.0
        %7783 = vmatpush1.msra.mxu0 0.0
        %7784 = vmatprep.subr.mxu0 0.0
        %7785 = vmatpush1.msra.mxu0 0.0
        %7786 = vmatprep.subr.mxu0 0.0
        %7787 = vmatpush1.msra.mxu0 0.0
        %7788 = vmatprep.subr.mxu0 0.0
        %7789 = vmatpush1.msra.mxu0 0.0
        %7790 = vmatprep.subr.mxu0 0.0
        %7791 = vmatpush1.msra.mxu0 0.0
        %7792 = vmatprep.subr.mxu0 0.0
        %7793 = vmatpush1.msra.mxu0 0.0
        %7794 = vmatprep.subr.mxu0 0.0
        %7795 = vmatpush1.msra.mxu0 0.0
        %7796 = vmatprep.subr.mxu0 0.0
        %7797 = vmatpush1.msra.mxu0 0.0
        %7798 = vmatprep.subr.mxu0 0.0
        %7799 = vmatpush1.msra.mxu0 0.0
        %7800 = vmatprep.subr.mxu0 0.0
        %7801 = vmatpush1.msra.mxu0 0.0
        %7802 = vmatprep.subr.mxu0 0.0
        %7803 = vmatpush1.msra.mxu0 0.0
        %7804 = vmatprep.subr.mxu0 0.0
        %7805 = vmatpush1.msra.mxu0 0.0
        %7806 = vmatprep.subr.mxu0 0.0
        %7807 = vmatpush1.msra.mxu0 0.0
        %7808 = vmatprep.subr.mxu0 0.0
        %7809 = vmatpush1.msra.mxu0 0.0
        %7810 = vmatprep.subr.mxu0 0.0
        %7811 = vmatpush1.msra.mxu0 0.0
        %7812 = vmatprep.subr.mxu0 0.0
        %7813 = vmatpush1.msra.mxu0 0.0
        %7814 = vmatprep.subr.mxu0 0.0
        %7815 = vmatpush1.msra.mxu0 0.0
        %7816 = vmatprep.subr.mxu0 0.0
        %7817 = vmatpush1.msra.mxu0 0.0
        %7818 = vmatprep.subr.mxu0 0.0
        %7819 = vmatpush1.msra.mxu0 0.0
        %7820 = vmatprep.subr.mxu0 0.0
        %7821 = vmatpush1.msra.mxu0 0.0
        %7822 = vmatprep.subr.mxu0 0.0
        %7823 = vmatpush1.msra.mxu0 0.0
        %7824 = vmatprep.subr.mxu0 0.0
        %7825 = vmatpush1.msra.mxu0 0.0
        %7826 = vmatprep.mubr.f32.mxu0 0.0
        %7827 = vmatmul.mubr.f32.gmra.mrb[0].mxu0 %v7531
        %v7828 = vpop.f32.mrb[0].mxu0
        %v7829 = vadd.f32 %v7644, %v7828
        %v7830 = vpop.f32.mrb[0].mxu0
        %7831 = vmatprep.mubr.f32.mxu0 0.0
        %7832 = vmatmul.mubr.f32.gmra.mrb[0].mxu0 %v7533
        %v7833 = vpop.f32.mrb[0].mxu0
        %v7834 = vadd.f32 %v7649, %v7833
        %v7835 = vpop.f32.mrb[0].mxu0
        %7836 = vmatprep.mubr.f32.mxu0 0.0
        %7837 = vmatmul.mubr.f32.gmra.mrb[0].mxu0 %v7535
        %v7838 = vpop.f32.mrb[0].mxu0
        %v7839 = vadd.f32 %v7654, %v7838
        %v7840 = vpop.f32.mrb[0].mxu0
        %7841 = vmatprep.mubr.f32.mxu0 0.0
        %7842 = vmatmul.mubr.f32.gmra.mrb[0].mxu0 %v7537
        %v7843 = vpop.f32.mrb[0].mxu0
        %v7844 = vadd.f32 %v7659, %v7843
        %v7845 = vpop.f32.mrb[0].mxu0
        %7846 = vmatprep.mubr.f32.mxu0 0.0
        %7847 = vmatmul.mubr.f32.gmra.mrb[0].mxu0 %v7539
        %v7848 = vpop.f32.mrb[0].mxu0
        %v7849 = vadd.f32 %v7664, %v7848
        %v7850 = vpop.f32.mrb[0].mxu0
        %7851 = vmatprep.mubr.f32.mxu0 0.0
        %7852 = vmatmul.mubr.f32.gmra.mrb[0].mxu0 %v7541
        %v7853 = vpop.f32.mrb[0].mxu0
        %v7854 = vadd.f32 %v7669, %v7853
        %v7855 = vpop.f32.mrb[0].mxu0
        %7856 = vmatprep.mubr.f32.mxu0 0.0
        %7857 = vmatmul.mubr.f32.gmra.mrb[0].mxu0 %v7543
        %v7858 = vpop.f32.mrb[0].mxu0
        %v7859 = vadd.f32 %v7674, %v7858
        %v7860 = vpop.f32.mrb[0].mxu0
        %7861 = vmatprep.mubr.f32.mxu0 0.0
        %7862 = vmatmul.mubr.f32.gmra.mrb[0].mxu0 %v7545
        %v7863 = vpop.f32.mrb[0].mxu0
        %v7864 = vadd.f32 %v7679, %v7863
        %v7865 = vpop.f32.mrb[0].mxu0
        %7866 = vmatprep.mubr.f32.mxu0 0.0
        %7867 = vmatmul.mubr.f32.gmra.mrb[0].mxu0 %v7547
        %v7868 = vpop.f32.mrb[0].mxu0
        %v7869 = vadd.f32 %v7684, %v7868
        %v7870 = vpop.f32.mrb[0].mxu0
        %7871 = vmatprep.mubr.f32.mxu0 0.0
        %7872 = vmatmul.mubr.f32.gmra.mrb[0].mxu0 %v7549
        %v7873 = vpop.f32.mrb[0].mxu0
        %v7874 = vadd.f32 %v7689, %v7873
        %v7875 = vpop.f32.mrb[0].mxu0
        %7876 = vmatprep.mubr.f32.mxu0 0.0
        %7877 = vmatmul.mubr.f32.gmra.mrb[0].mxu0 %v7551
        %v7878 = vpop.f32.mrb[0].mxu0
        %v7879 = vadd.f32 %v7694, %v7878
        %v7880 = vpop.f32.mrb[0].mxu0
        %7881 = vmatprep.mubr.f32.mxu0 0.0
        %7882 = vmatmul.mubr.f32.gmra.mrb[0].mxu0 %v7553
        %v7883 = vpop.f32.mrb[0].mxu0
        %v7884 = vadd.f32 %v7699, %v7883
        %v7885 = vpop.f32.mrb[0].mxu0
        %7886 = vmatprep.mubr.f32.mxu0 0.0
        %7887 = vmatmul.mubr.f32.gmra.mrb[0].mxu0 %v7555
        %v7888 = vpop.f32.mrb[0].mxu0
        %v7889 = vadd.f32 %v7704, %v7888
        %v7890 = vpop.f32.mrb[0].mxu0
        %7891 = vmatprep.mubr.f32.mxu0 0.0
        %7892 = vmatmul.mubr.f32.gmra.mrb[0].mxu0 %v7557
        %v7893 = vpop.f32.mrb[0].mxu0
        %v7894 = vadd.f32 %v7709, %v7893
        %v7895 = vpop.f32.mrb[0].mxu0
        %7896 = vmatprep.mubr.f32.mxu0 0.0
        %7897 = vmatmul.mubr.f32.gmra.mrb[0].mxu0 %v7559
        %v7898 = vpop.f32.mrb[0].mxu0
        %v7899 = vadd.f32 %v7714, %v7898
        %v7900 = vpop.f32.mrb[0].mxu0
        %7901 = vmatprep.mubr.f32.mxu0 0.0
        %7902 = vmatmul.mubr.f32.gmra.mrb[0].mxu0 %v7561
        %v7903 = vpop.f32.mrb[0].mxu0
        %v7904 = vadd.f32 %v7719, %v7903
        %v7905 = vpop.f32.mrb[0].mxu0
        %7906 = vmatprep.mubr.f32.mxu0 0.0
        %7907 = vmatmul.mubr.f32.gmra.mrb[0].mxu0 %v7563
        %v7908 = vpop.f32.mrb[0].mxu0
        %v7909 = vadd.f32 %v7724, %v7908
        %v7910 = vpop.f32.mrb[0].mxu0
        %7911 = vmatprep.mubr.f32.mxu0 0.0
        %7912 = vmatmul.mubr.f32.gmra.mrb[0].mxu0 %v7565
        %v7913 = vpop.f32.mrb[0].mxu0
        %v7914 = vadd.f32 %v7729, %v7913
        %v7915 = vpop.f32.mrb[0].mxu0
        %7916 = vmatprep.mubr.f32.mxu0 0.0
        %7917 = vmatmul.mubr.f32.gmra.mrb[0].mxu0 %v7567
        %v7918 = vpop.f32.mrb[0].mxu0
        %v7919 = vadd.f32 %v7734, %v7918
        %v7920 = vpop.f32.mrb[0].mxu0
        %7921 = vmatprep.mubr.f32.mxu0 0.0
        %7922 = vmatmul.mubr.f32.gmra.mrb[0].mxu0 %v7569
        %v7923 = vpop.f32.mrb[0].mxu0
        %v7924 = vadd.f32 %v7739, %v7923
        %v7925 = vpop.f32.mrb[0].mxu0
        %7926 = vmatprep.mubr.f32.mxu0 0.0
        %7927 = vmatmul.mubr.f32.gmra.mrb[0].mxu0 %v7571
        %v7928 = vpop.f32.mrb[0].mxu0
        %v7929 = vadd.f32 %v7744, %v7928
        %v7930 = vpop.f32.mrb[0].mxu0
        %7931 = vmatprep.mubr.f32.mxu0 0.0
        %7932 = vmatmul.mubr.f32.gmra.mrb[0].mxu0 %v7573
        %v7933 = vpop.f32.mrb[0].mxu0
        %v7934 = vadd.f32 %v7749, %v7933
        %v7935 = vpop.f32.mrb[0].mxu0
        %7936 = vmatprep.mubr.f32.mxu0 0.0
        %7937 = vmatmul.mubr.f32.gmra.mrb[0].mxu0 %v7575
        %v7938 = vpop.f32.mrb[0].mxu0
        %v7939 = vadd.f32 %v7754, %v7938
        %v7940 = vpop.f32.mrb[0].mxu0
        %7941 = vmatprep.mubr.f32.mxu0 0.0
        %7942 = vmatmul.mubr.f32.gmra.mrb[0].mxu0 %v7575
        %v7943 = vpop.f32.mrb[0].mxu0
        %v7944 = vadd.f32 %v7759, %v7943
        %v7945 = vpop.f32.mrb[0].mxu0
        %7946 = vdwg.mxu0
        %v7947 = vmax.f32 %v7829, 0.0
        %v7948 = vmax.f32 %v7834, 0.0
        %v7949 = vmax.f32 %v7839, 0.0
        %v7950 = vmax.f32 %v7844, 0.0
        %v7951 = vmax.f32 %v7849, 0.0
        %v7952 = vmax.f32 %v7854, 0.0
        %v7953 = vmax.f32 %v7859, 0.0
        %v7954 = vmax.f32 %v7864, 0.0
        %v7955 = vmax.f32 %v7869, 0.0
        %v7956 = vmax.f32 %v7874, 0.0
        %v7957 = vmax.f32 %v7879, 0.0
        %v7958 = vmax.f32 %v7884, 0.0
        %v7959 = vmax.f32 %v7889, 0.0
        %v7960 = vmax.f32 %v7894, 0.0
        %v7961 = vmax.f32 %v7899, 0.0
        %v7962 = vmax.f32 %v7904, 0.0
        %v7963 = vmax.f32 %v7909, 0.0
        %v7964 = vmax.f32 %v7914, 0.0
        %v7965 = vmax.f32 %v7919, 0.0
        %v7966 = vmax.f32 %v7924, 0.0
        %v7967 = vmax.f32 %v7929, 0.0
        %v7968 = vmax.f32 %v7934, 0.0
        %v7969 = vmax.f32 %v7939, 0.0
        %v7970 = vmax.f32 %v7944, 0.0
        %v7995 = vrot.slane %v7947, 1
        %v7996 = vrot.slane %v7948, 1
        %v7997 = vsel %vm964, %v7995, %v7996
        %v7998 = vrot.slane %v7949, 1
        %v7999 = vsel %vm964, %v7996, %v7998
        %v8000 = vrot.slane %v7950, 1
        %v8001 = vsel %vm964, %v7998, %v8000
        %v8002 = vrot.slane %v7951, 1
        %v8003 = vsel %vm964, %v8000, %v8002
        %v8004 = vrot.slane %v7952, 1
        %v8005 = vsel %vm964, %v8002, %v8004
        %v8006 = vrot.slane %v7953, 1
        %v8007 = vsel %vm964, %v8004, %v8006
        %v8008 = vrot.slane %v7954, 1
        %v8009 = vsel %vm964, %v8006, %v8008
        %v8010 = vrot.slane %v7955, 1
        %v8011 = vsel %vm964, %v8008, %v8010
        %v8012 = vrot.slane %v7956, 1
        %v8013 = vsel %vm964, %v8010, %v8012
        %v8014 = vrot.slane %v7957, 1
        %v8015 = vsel %vm964, %v8012, %v8014
        %v8016 = vrot.slane %v7958, 1
        %v8017 = vsel %vm964, %v8014, %v8016
        %v8018 = vrot.slane %v7959, 1
        %v8019 = vsel %vm964, %v8016, %v8018
        %v8020 = vrot.slane %v7960, 1
        %v8021 = vsel %vm964, %v8018, %v8020
        %v8022 = vrot.slane %v7961, 1
        %v8023 = vsel %vm964, %v8020, %v8022
        %v8024 = vrot.slane %v7962, 1
        %v8025 = vsel %vm964, %v8022, %v8024
        %v8026 = vrot.slane %v7963, 1
        %v8027 = vsel %vm964, %v8024, %v8026
        %v8028 = vrot.slane %v7964, 1
        %v8029 = vsel %vm964, %v8026, %v8028
        %v8030 = vrot.slane %v7965, 1
        %v8031 = vsel %vm964, %v8028, %v8030
        %v8032 = vrot.slane %v7966, 1
        %v8033 = vsel %vm964, %v8030, %v8032
        %v8034 = vrot.slane %v7967, 1
        %v8035 = vsel %vm964, %v8032, %v8034
        %v8036 = vrot.slane %v7968, 1
        %v8037 = vsel %vm964, %v8034, %v8036
        %v8038 = vrot.slane %v7969, 1
        %v8039 = vsel %vm964, %v8036, %v8038
        %v8040 = vrot.slane %v7970, 1
        %v8041 = vsel %vm964, %v8038, %v8040
        %v8066 = vmax.f32 %v7947, %v7997
        %v8067 = vmax.f32 %v7948, %v7999
        %v8068 = vmax.f32 %v7949, %v8001
        %v8069 = vmax.f32 %v7950, %v8003
        %v8070 = vmax.f32 %v7951, %v8005
        %v8071 = vmax.f32 %v7952, %v8007
        %v8072 = vmax.f32 %v7953, %v8009
        %v8073 = vmax.f32 %v7954, %v8011
        %v8074 = vmax.f32 %v7955, %v8013
        %v8075 = vmax.f32 %v7956, %v8015
        %v8076 = vmax.f32 %v7957, %v8017
        %v8077 = vmax.f32 %v7958, %v8019
        %v8078 = vmax.f32 %v7959, %v8021
        %v8079 = vmax.f32 %v7960, %v8023
        %v8080 = vmax.f32 %v7961, %v8025
        %v8081 = vmax.f32 %v7962, %v8027
        %v8082 = vmax.f32 %v7963, %v8029
        %v8083 = vmax.f32 %v7964, %v8031
        %v8084 = vmax.f32 %v7965, %v8033
        %v8085 = vmax.f32 %v7966, %v8035
        %v8086 = vmax.f32 %v7967, %v8037
        %v8087 = vmax.f32 %v7968, %v8039
        %v8088 = vmax.f32 %v7969, %v8041
        %v8089 = vmax.f32 %v7970, %v8040
        %v8090 = vmax.f32 %v8066, %v8068
        %v8091 = vmax.f32 %v8067, %v8069
        %v8092 = vmax.f32 %v8068, %v8070
        %v8093 = vmax.f32 %v8069, %v8071
        %v8094 = vmax.f32 %v8070, %v8072
        %v8095 = vmax.f32 %v8071, %v8073
        %v8096 = vmax.f32 %v8072, %v8074
        %v8097 = vmax.f32 %v8073, %v8075
        %v8098 = vmax.f32 %v8074, %v8076
        %v8099 = vmax.f32 %v8075, %v8077
        %v8100 = vmax.f32 %v8076, %v8078
        %v8101 = vmax.f32 %v8077, %v8079
        %v8102 = vmax.f32 %v8078, %v8080
        %v8103 = vmax.f32 %v8079, %v8081
        %v8104 = vmax.f32 %v8080, %v8082
        %v8105 = vmax.f32 %v8081, %v8083
        %v8106 = vmax.f32 %v8082, %v8084
        %v8107 = vmax.f32 %v8083, %v8085
        %v8108 = vmax.f32 %v8084, %v8086
        %v8109 = vmax.f32 %v8085, %v8087
        %v8110 = vmax.f32 %v8086, %v8088
        %v8111 = vmax.f32 %v8087, %v8089
        %v8112 = vshra.s32 %v5711, 3
        %v8113 = vshra.s32 %v5712, 3
        %v8114 = vshra.s32 %v5713, 3
        %v8115 = vshra.s32 %v5714, 3
        %v8116 = vshra.s32 %v5715, 3
        %v8117 = vshra.s32 %v5716, 3
        %v8118 = vmul.u32 %v8112, 32
        %v8119 = vmul.u32 %v8113, 32
        %v8120 = vmul.u32 %v8114, 32
        %v8121 = vmul.u32 %v8115, 32
        %v8122 = vmul.u32 %v8116, 32
        %v8123 = vmul.u32 %v8117, 32
        %v8124 = vand.u32 %v5711, 7
        %v8125 = vand.u32 %v5712, 7
        %v8126 = vand.u32 %v5713, 7
        %v8127 = vand.u32 %v5714, 7
        %v8128 = vand.u32 %v5715, 7
        %v8129 = vand.u32 %v5716, 7
        %v8130 = vmul.u32 %v8124, 2
        %v8131 = vmul.u32 %v8125, 2
        %v8132 = vmul.u32 %v8126, 2
        %v8133 = vmul.u32 %v8127, 2
        %v8134 = vmul.u32 %v8128, 2
        %v8135 = vmul.u32 %v8129, 2
        %v8136 = vadd.s32 %v8118, %v8130
        %v8137 = vadd.s32 %v8119, %v8131
        %v8138 = vadd.s32 %v8120, %v8132
        %v8139 = vadd.s32 %v8121, %v8133
        %v8140 = vadd.s32 %v8122, %v8134
        %v8141 = vadd.s32 %v8123, %v8135
        %vm8142 = vcmp.eq.s32.totalorder %v5736, %v8136
        %vm8143 = vcmp.eq.s32.totalorder %v5737, %v8136
        %vm8144 = vcmp.eq.s32.totalorder %v5736, %v8137
        %vm8145 = vcmp.eq.s32.totalorder %v5737, %v8137
        %vm8146 = vcmp.eq.s32.totalorder %v5736, %v8138
        %vm8147 = vcmp.eq.s32.totalorder %v5737, %v8138
        %vm8148 = vcmp.eq.s32.totalorder %v5736, %v8139
        %vm8149 = vcmp.eq.s32.totalorder %v5737, %v8139
        %vm8150 = vcmp.eq.s32.totalorder %v5736, %v8140
        %vm8151 = vcmp.eq.s32.totalorder %v5737, %v8140
        %vm8152 = vcmp.eq.s32.totalorder %v5736, %v8141
        %vm8153 = vcmp.eq.s32.totalorder %v5737, %v8141
        %v8154 = vsel %vm8142, 1.0, 0.0
        %v8155 = vsel %vm8143, 1.0, 0.0
        %v8156 = vsel %vm8144, 1.0, 0.0
        %v8157 = vsel %vm8145, 1.0, 0.0
        %v8158 = vsel %vm8146, 1.0, 0.0
        %v8159 = vsel %vm8147, 1.0, 0.0
        %v8160 = vsel %vm8148, 1.0, 0.0
        %v8161 = vsel %vm8149, 1.0, 0.0
        %v8162 = vsel %vm8150, 1.0, 0.0
        %v8163 = vsel %vm8151, 1.0, 0.0
        %v8164 = vsel %vm8152, 1.0, 0.0
        %v8165 = vsel %vm8153, 1.0, 0.0
        %vm8166 = vcmask 384000
        %v8168 = vsel %vm8166, %v8155, 0
        %v8171 = vsel %vm8166, %v8157, 0
        %v8174 = vsel %vm8166, %v8159, 0
        %v8177 = vsel %vm8166, %v8161, 0
        %v8180 = vsel %vm8166, %v8163, 0
        %v8183 = vsel %vm8166, %v8165, 0
        %v8186 = vsel %vm964, %v8111, 0
        %8188 = vmatprep.subr.mxu0 0.0
        %8189 = vmatpush1.msra.mxu0 %v8090
        %8190 = vmatprep.subr.mxu0 0.0
        %8191 = vmatpush1.msra.mxu0 %v8091
        %8192 = vmatprep.subr.mxu0 0.0
        %8193 = vmatpush1.msra.mxu0 %v8092
        %8194 = vmatprep.subr.mxu0 0.0
        %8195 = vmatpush1.msra.mxu0 %v8093
        %8196 = vmatprep.subr.mxu0 0.0
        %8197 = vmatpush1.msra.mxu0 %v8094
        %8198 = vmatprep.subr.mxu0 0.0
        %8199 = vmatpush1.msra.mxu0 %v8095
        %8200 = vmatprep.subr.mxu0 0.0
        %8201 = vmatpush1.msra.mxu0 %v8096
        %8202 = vmatprep.subr.mxu0 0.0
        %8203 = vmatpush1.msra.mxu0 %v8097
        %8204 = vmatprep.subr.mxu0 0.0
        %8205 = vmatpush1.msra.mxu0 %v8098
        %8206 = vmatprep.subr.mxu0 0.0
        %8207 = vmatpush1.msra.mxu0 %v8099
        %8208 = vmatprep.subr.mxu0 0.0
        %8209 = vmatpush1.msra.mxu0 %v8100
        %8210 = vmatprep.subr.mxu0 0.0
        %8211 = vmatpush1.msra.mxu0 %v8101
        %8212 = vmatprep.subr.mxu0 0.0
        %8213 = vmatpush1.msra.mxu0 %v8102
        %8214 = vmatprep.subr.mxu0 0.0
        %8215 = vmatpush1.msra.mxu0 %v8103
        %8216 = vmatprep.subr.mxu0 0.0
        %8217 = vmatpush1.msra.mxu0 %v8104
        %8218 = vmatprep.subr.mxu0 0.0
        %8219 = vmatpush1.msra.mxu0 %v8105
        %8220 = vmatprep.subr.mxu0 0.0
        %8221 = vmatpush1.msra.mxu0 %v8106
        %8222 = vmatprep.subr.mxu0 0.0
        %8223 = vmatpush1.msra.mxu0 %v8107
        %8224 = vmatprep.subr.mxu0 0.0
        %8225 = vmatpush1.msra.mxu0 %v8108
        %8226 = vmatprep.subr.mxu0 0.0
        %8227 = vmatpush1.msra.mxu0 %v8109
        %8228 = vmatprep.subr.mxu0 0.0
        %8229 = vmatpush1.msra.mxu0 %v8110
        %8230 = vmatprep.subr.mxu0 0.0
        %8231 = vmatpush1.msra.mxu0 %v8186
        %8232 = vmatprep.subr.mxu0 0.0
        %8233 = vmatpush1.msra.mxu0 0.0
        %8234 = vmatprep.subr.mxu0 0.0
        %8235 = vmatpush1.msra.mxu0 0.0
        %8236 = vmatprep.subr.mxu0 0.0
        %8237 = vmatpush1.msra.mxu0 0.0
        %8238 = vmatprep.subr.mxu0 0.0
        %8239 = vmatpush1.msra.mxu0 0.0
        %8240 = vmatprep.subr.mxu0 0.0
        %8241 = vmatpush1.msra.mxu0 0.0
        %8242 = vmatprep.subr.mxu0 0.0
        %8243 = vmatpush1.msra.mxu0 0.0
        %8244 = vmatprep.subr.mxu0 0.0
        %8245 = vmatpush1.msra.mxu0 0.0
        %8246 = vmatprep.subr.mxu0 0.0
        %8247 = vmatpush1.msra.mxu0 0.0
        %8248 = vmatprep.subr.mxu0 0.0
        %8249 = vmatpush1.msra.mxu0 0.0
        %8250 = vmatprep.subr.mxu0 0.0
        %8251 = vmatpush1.msra.mxu0 0.0
        %8252 = vmatprep.mubr.f32.mxu0 %v8168
        %8253 = vmatmul.mubr.f32.gmra.mrb[0].mxu0 %v8154
        %v8254 = vpop.f32.mrb[0].mxu0
        %v8255 = vadd.f32 0.0, %v8254
        %v8256 = vpop.f32.mrb[0].mxu0
        %8257 = vmatprep.mubr.f32.mxu0 %v8171
        %8258 = vmatmul.mubr.f32.gmra.mrb[0].mxu0 %v8156
        %v8259 = vpop.f32.mrb[0].mxu0
        %v8260 = vadd.f32 0.0, %v8259
        %v8261 = vpop.f32.mrb[0].mxu0
        %8262 = vmatprep.mubr.f32.mxu0 %v8174
        %8263 = vmatmul.mubr.f32.gmra.mrb[0].mxu0 %v8158
        %v8264 = vpop.f32.mrb[0].mxu0
        %v8265 = vadd.f32 0.0, %v8264
        %v8266 = vpop.f32.mrb[0].mxu0
        %8267 = vmatprep.mubr.f32.mxu0 %v8177
        %8268 = vmatmul.mubr.f32.gmra.mrb[0].mxu0 %v8160
        %v8269 = vpop.f32.mrb[0].mxu0
        %v8270 = vadd.f32 0.0, %v8269
        %v8271 = vpop.f32.mrb[0].mxu0
        %8272 = vmatprep.mubr.f32.mxu0 %v8180
        %8273 = vmatmul.mubr.f32.gmra.mrb[0].mxu0 %v8162
        %v8274 = vpop.f32.mrb[0].mxu0
        %v8275 = vadd.f32 0.0, %v8274
        %v8276 = vpop.f32.mrb[0].mxu0
        %8277 = vmatprep.mubr.f32.mxu0 %v8183
        %8278 = vmatmul.mubr.f32.gmra.mrb[0].mxu0 %v8164
        %v8279 = vpop.f32.mrb[0].mxu0
        %v8280 = vadd.f32 0.0, %v8279
        %v8281 = vpop.f32.mrb[0].mxu0
        %8282 = vdwg.mxu0
        %v8283 = vld [vmem:[#allocation8] sm:$0xff]
        %v8284 = vld [vmem:[#allocation8 + $0x8] sm:$0xff]
        %v8285 = vld [vmem:[#allocation8 + $0x10] sm:$0xff]
        %v8286 = vld [vmem:[#allocation8 + $0x18] sm:$0xff]
        %v8287 = vld [vmem:[#allocation8 + $0x20] sm:$0xff]
        %v8288 = vld [vmem:[#allocation8 + $0x28] sm:$0xff]
        %v8289 = vld [vmem:[#allocation8 + $0x30] sm:$0xff]
        %v8290 = vld [vmem:[#allocation8 + $0x38] sm:$0xff]
        %v8291 = vld [vmem:[#allocation8 + $0x40] sm:$0xff]
        %v8292 = vld [vmem:[#allocation8 + $0x48] sm:$0xff]
        %v8293 = vld [vmem:[#allocation8 + $0x50] sm:$0xff]
        %v8294 = vld [vmem:[#allocation8 + $0x58] sm:$0xff]
        %v8295 = vld [vmem:[#allocation8 + $0x60] sm:$0xff]
        %v8296 = vld [vmem:[#allocation8 + $0x68] sm:$0xff]
        %v8297 = vld [vmem:[#allocation8 + $0x70] sm:$0xff]
        %v8298 = vld [vmem:[#allocation8 + $0x78] sm:$0xff]
        %v8299 = vld [vmem:[#allocation8 + $0x80] sm:$0xff]
        %v8300 = vld [vmem:[#allocation8 + $0x88] sm:$0xff]
        %v8301 = vld [vmem:[#allocation8 + $0x90] sm:$0xff]
        %v8302 = vld [vmem:[#allocation8 + $0x98] sm:$0xff]
        %v8303 = vld [vmem:[#allocation8 + $0xa0] sm:$0xff]
        %v8304 = vld [vmem:[#allocation8 + $0xa8] sm:$0xff]
        %v8305 = vld [vmem:[#allocation8 + $0xb0] sm:$0xff]
        %v8306 = vld [vmem:[#allocation8 + $0xb8] sm:$0xff]
        %v8307 = vld [vmem:[#allocation8 + $0xc0] sm:$0xff]
        %v8308 = vld [vmem:[#allocation8 + $0xc8] sm:$0xff]
        %v8309 = vld [vmem:[#allocation8 + $0xd0] sm:$0xff]
        %v8310 = vld [vmem:[#allocation8 + $0xd8] sm:$0xff]
        %v8311 = vld [vmem:[#allocation8 + $0xe0] sm:$0xff]
        %v8312 = vld [vmem:[#allocation8 + $0xe8] sm:$0xff]
        %v8313 = vld [vmem:[#allocation8 + $0xf0] sm:$0xff]
        %v8314 = vld [vmem:[#allocation8 + $0xf8] sm:$0xff]
        %v8315 = vld [vmem:[#allocation8 + $0x100] sm:$0xff]
        %v8316 = vld [vmem:[#allocation8 + $0x108] sm:$0xff]
        %v8317 = vld [vmem:[#allocation8 + $0x110] sm:$0xff]
        %v8318 = vld [vmem:[#allocation8 + $0x118] sm:$0xff]
        %v8319 = vld [vmem:[#allocation8 + $0x120] sm:$0xff]
        %v8320 = vld [vmem:[#allocation8 + $0x128] sm:$0xff]
        %v8321 = vld [vmem:[#allocation8 + $0x130] sm:$0xff]
        %v8322 = vld [vmem:[#allocation8 + $0x138] sm:$0xff]
        %v8323 = vld [vmem:[#allocation8 + $0x140] sm:$0xff]
        %v8324 = vld [vmem:[#allocation8 + $0x148] sm:$0xff]
        %v8325 = vld [vmem:[#allocation8 + $0x150] sm:$0xff]
        %v8326 = vld [vmem:[#allocation8 + $0x158] sm:$0xff]
        %v8327 = vld [vmem:[#allocation8 + $0x160] sm:$0xff]
        %v8328 = vld [vmem:[#allocation8 + $0x168] sm:$0xff]
        %v8329 = vld [vmem:[#allocation8 + $0x170] sm:$0xff]
        %v8330 = vld [vmem:[#allocation8 + $0x178] sm:$0xff]
        %v8331 = vld [vmem:[#allocation8 + $0x180] sm:$0xff]
        %v8332 = vld [vmem:[#allocation8 + $0x188] sm:$0xff]
        %v8333 = vld [vmem:[#allocation8 + $0x190] sm:$0xff]
        %v8334 = vld [vmem:[#allocation8 + $0x198] sm:$0xff]
        %v8335 = vld [vmem:[#allocation8 + $0x1a0] sm:$0xff]
        %v8336 = vld [vmem:[#allocation8 + $0x1a8] sm:$0xff]
        %v8337 = vld [vmem:[#allocation8 + $0x1b0] sm:$0xff]
        %v8338 = vld [vmem:[#allocation8 + $0x1b8] sm:$0xff]
        %v8339 = vld [vmem:[#allocation8 + $0x1c0] sm:$0xff]
        %v8340 = vld [vmem:[#allocation8 + $0x1c8] sm:$0xff]
        %v8341 = vld [vmem:[#allocation8 + $0x1d0] sm:$0xff]
        %v8342 = vld [vmem:[#allocation8 + $0x1d8] sm:$0xff]
        %v8343 = vld [vmem:[#allocation8 + $0x1e0] sm:$0xff]
        %v8344 = vld [vmem:[#allocation8 + $0x1e8] sm:$0xff]
        %v8345 = vld [vmem:[#allocation8 + $0x1f0] sm:$0xff]
        %v8346 = vld [vmem:[#allocation8 + $0x1f8] sm:$0xff]
        %v8347 = vld [vmem:[#allocation8 + $0x200] sm:$0xff]
        %v8348 = vld [vmem:[#allocation8 + $0x208] sm:$0xff]
        %v8349 = vld [vmem:[#allocation8 + $0x210] sm:$0xff]
        %v8350 = vld [vmem:[#allocation8 + $0x218] sm:$0xff]
        %v8351 = vld [vmem:[#allocation8 + $0x220] sm:$0xff]
        %v8352 = vld [vmem:[#allocation8 + $0x228] sm:$0xff]
        %v8353 = vld [vmem:[#allocation8 + $0x230] sm:$0xff]
        %v8354 = vld [vmem:[#allocation8 + $0x238] sm:$0xff]
        %v8355 = vld [vmem:[#allocation10] sm:$0x1]
        %v8361 = vrot.slane %v8255, 7
        %v8362 = vsel %vm684, %v685, %v8361
        %v8363 = vrot.slane %v8260, 7
        %v8364 = vsel %vm684, %v685, %v8363
        %v8365 = vrot.slane %v8265, 7
        %v8366 = vsel %vm684, %v685, %v8365
        %v8367 = vrot.slane %v8270, 7
        %v8368 = vsel %vm684, %v685, %v8367
        %v8369 = vrot.slane %v8275, 7
        %v8370 = vsel %vm684, %v685, %v8369
        %v8376 = vrot.slane %v8255, 1
        %v8377 = vsel %vm964, %v8376, %v965
        %v8378 = vrot.slane %v8260, 1
        %v8379 = vsel %vm964, %v8378, %v965
        %v8380 = vrot.slane %v8265, 1
        %v8381 = vsel %vm964, %v8380, %v965
        %v8382 = vrot.slane %v8270, 1
        %v8383 = vsel %vm964, %v8382, %v965
        %v8384 = vrot.slane %v8275, 1
        %v8385 = vsel %vm964, %v8384, %v965
        %v8393 = vrot.slane %v8280, 7
        %v8394 = vsel %vm684, %v685, %v8393
        %v8395 = vrot.slane %v8280, 1
        %v8396 = vsel %vm964, %v8395, %v965
        %8398 = vrot.lane.b32.xlu0 0.0, 64
        %v8399 = vpop.permute.xlu0 %8398
        %8400 = vrot.lane.b32.xlu0 %v8255, 64
        %v8401 = vpop.permute.xlu0 %8400
        %8402 = vrot.lane.b32.xlu0 %v8260, 64
        %v8403 = vpop.permute.xlu0 %8402
        %8404 = vrot.lane.b32.xlu0 %v8265, 64
        %v8405 = vpop.permute.xlu0 %8404
        %8406 = vrot.lane.b32.xlu0 %v8270, 64
        %v8407 = vpop.permute.xlu0 %8406
        %8408 = vrot.lane.b32.xlu0 %v8275, 64
        %v8409 = vpop.permute.xlu0 %8408
        %8416 = vrot.lane.b32.xlu0 %v8362, 64
        %v8417 = vpop.permute.xlu0 %8416
        %8418 = vrot.lane.b32.xlu0 %v8364, 64
        %v8419 = vpop.permute.xlu0 %8418
        %8420 = vrot.lane.b32.xlu0 %v8366, 64
        %v8421 = vpop.permute.xlu0 %8420
        %8422 = vrot.lane.b32.xlu0 %v8368, 64
        %v8423 = vpop.permute.xlu0 %8422
        %8424 = vrot.lane.b32.xlu0 %v8370, 64
        %v8425 = vpop.permute.xlu0 %8424
        %8426 = vrot.lane.b32.xlu0 %v8394, 64
        %v8427 = vpop.permute.xlu0 %8426
        %8434 = vrot.lane.b32.xlu0 %v8377, 64
        %v8435 = vpop.permute.xlu0 %8434
        %8436 = vrot.lane.b32.xlu0 %v8379, 64
        %v8437 = vpop.permute.xlu0 %8436
        %8438 = vrot.lane.b32.xlu0 %v8381, 64
        %v8439 = vpop.permute.xlu0 %8438
        %8440 = vrot.lane.b32.xlu0 %v8383, 64
        %v8441 = vpop.permute.xlu0 %8440
        %8442 = vrot.lane.b32.xlu0 %v8385, 64
        %v8443 = vpop.permute.xlu0 %8442
        %8444 = vrot.lane.b32.xlu0 %v8396, 64
        %v8445 = vpop.permute.xlu0 %8444
        %8452 = vrot.lane.b32.xlu0 %v8280, 64
        %v8453 = vpop.permute.xlu0 %8452
        %v8455 = vsel %vm7404, %v686, %v8399
        %v8456 = vsel %vm7404, %v8362, %v8401
        %v8457 = vsel %vm7404, %v8364, %v8403
        %v8458 = vsel %vm7404, %v8366, %v8405
        %v8459 = vsel %vm7404, %v8368, %v8407
        %v8460 = vsel %vm7404, %v8370, %v8409
        %v8461 = vsel %vm7404, %v966, %v8417
        %v8462 = vsel %vm7404, %v8377, %v8419
        %v8463 = vsel %vm7404, %v8379, %v8421
        %v8464 = vsel %vm7404, %v8381, %v8423
        %v8465 = vsel %vm7404, %v8383, %v8425
        %v8466 = vsel %vm7404, %v8385, %v8427
        %v8467 = vsel %vm7404, %v8255, %v8435
        %v8468 = vsel %vm7404, %v8260, %v8437
        %v8469 = vsel %vm7404, %v8265, %v8439
        %v8470 = vsel %vm7404, %v8270, %v8441
        %v8471 = vsel %vm7404, %v8275, %v8443
        %v8472 = vsel %vm7404, %v8280, %v8445
        %v8473 = vsel %vm7404, %v8394, %v8453
        %v8475 = vlaneseq
        %v8476 = vshrl.u32 %v8475, 7
        %v8477 = vsub.s32 0, %v8476
        %v8478 = vrot.slane %v8355, %v8477
        %v8480 = vsel %vm7404, %v8379, 0
        %v8482 = vsel %vm7404, %v8381, 0
        %v8484 = vsel %vm7404, %v8383, 0
        %v8486 = vsel %vm7404, %v8385, 0
        %v8488 = vsel %vm7404, %v8396, 0
        %v8490 = vsel %vm7404, %v966, 0
        %8492 = vmatprep.subr.mxu0 0.0
        %8493 = vmatpush1.msra.mxu0 %v8283
        %8494 = vmatprep.subr.mxu0 0.0
        %8495 = vmatpush1.msra.mxu0 %v8284
        %8496 = vmatprep.subr.mxu0 0.0
        %8497 = vmatpush1.msra.mxu0 %v8285
        %8498 = vmatprep.subr.mxu0 0.0
        %8499 = vmatpush1.msra.mxu0 %v8286
        %8500 = vmatprep.subr.mxu0 0.0
        %8501 = vmatpush1.msra.mxu0 %v8287
        %8502 = vmatprep.subr.mxu0 0.0
        %8503 = vmatpush1.msra.mxu0 %v8288
        %8504 = vmatprep.subr.mxu0 0.0
        %8505 = vmatpush1.msra.mxu0 %v8289
        %8506 = vmatprep.subr.mxu0 0.0
        %8507 = vmatpush1.msra.mxu0 %v8290
        %8508 = vmatprep.subr.mxu0 0.0
        %8509 = vmatpush1.msra.mxu0 %v8291
        %8510 = vmatprep.subr.mxu0 0.0
        %8511 = vmatpush1.msra.mxu0 %v8292
        %8512 = vmatprep.subr.mxu0 0.0
        %8513 = vmatpush1.msra.mxu0 %v8293
        %8514 = vmatprep.subr.mxu0 0.0
        %8515 = vmatpush1.msra.mxu0 %v8294
        %8516 = vmatprep.subr.mxu0 0.0
        %8517 = vmatpush1.msra.mxu0 %v8295
        %8518 = vmatprep.subr.mxu0 0.0
        %8519 = vmatpush1.msra.mxu0 %v8296
        %8520 = vmatprep.subr.mxu0 0.0
        %8521 = vmatpush1.msra.mxu0 %v8297
        %8522 = vmatprep.subr.mxu0 0.0
        %8523 = vmatpush1.msra.mxu0 %v8298
        %8524 = vmatprep.subr.mxu0 0.0
        %8525 = vmatpush1.msra.mxu0 %v8299
        %8526 = vmatprep.subr.mxu0 0.0
        %8527 = vmatpush1.msra.mxu0 %v8300
        %8528 = vmatprep.subr.mxu0 0.0
        %8529 = vmatpush1.msra.mxu0 %v8301
        %8530 = vmatprep.subr.mxu0 0.0
        %8531 = vmatpush1.msra.mxu0 %v8302
        %8532 = vmatprep.subr.mxu0 0.0
        %8533 = vmatpush1.msra.mxu0 %v8303
        %8534 = vmatprep.subr.mxu0 0.0
        %8535 = vmatpush1.msra.mxu0 %v8304
        %8536 = vmatprep.subr.mxu0 0.0
        %8537 = vmatpush1.msra.mxu0 %v8305
        %8538 = vmatprep.subr.mxu0 0.0
        %8539 = vmatpush1.msra.mxu0 %v8306
        %8540 = vmatprep.subr.mxu0 0.0
        %8541 = vmatpush1.msra.mxu0 %v8307
        %8542 = vmatprep.subr.mxu0 0.0
        %8543 = vmatpush1.msra.mxu0 %v8308
        %8544 = vmatprep.subr.mxu0 0.0
        %8545 = vmatpush1.msra.mxu0 %v8309
        %8546 = vmatprep.subr.mxu0 0.0
        %8547 = vmatpush1.msra.mxu0 %v8310
        %8548 = vmatprep.subr.mxu0 0.0
        %8549 = vmatpush1.msra.mxu0 %v8311
        %8550 = vmatprep.subr.mxu0 0.0
        %8551 = vmatpush1.msra.mxu0 %v8312
        %8552 = vmatprep.subr.mxu0 0.0
        %8553 = vmatpush1.msra.mxu0 %v8313
        %8554 = vmatprep.subr.mxu0 0.0
        %8555 = vmatpush1.msra.mxu0 %v8314
        %8556 = vmatprep.mubr.f32.mxu0 %v8461
        %8557 = vmatmul.mubr.f32.gmra.mrb[0].mxu0 %v8455
        %v8558 = vpop.f32.mrb[0].mxu0
        %v8559 = vadd.f32 %v8478, %v8558
        %v8560 = vpop.f32.mrb[0].mxu0
        %8561 = vmatprep.mubr.f32.mxu0 %v8462
        %8562 = vmatmul.mubr.f32.gmra.mrb[0].mxu0 %v8456
        %v8563 = vpop.f32.mrb[0].mxu0
        %v8564 = vadd.f32 %v8478, %v8563
        %v8565 = vpop.f32.mrb[0].mxu0
        %8566 = vmatprep.mubr.f32.mxu0 %v8463
        %8567 = vmatmul.mubr.f32.gmra.mrb[0].mxu0 %v8457
        %v8568 = vpop.f32.mrb[0].mxu0
        %v8569 = vadd.f32 %v8478, %v8568
        %v8570 = vpop.f32.mrb[0].mxu0
        %8571 = vmatprep.mubr.f32.mxu0 %v8464
        %8572 = vmatmul.mubr.f32.gmra.mrb[0].mxu0 %v8458
        %v8573 = vpop.f32.mrb[0].mxu0
        %v8574 = vadd.f32 %v8478, %v8573
        %v8575 = vpop.f32.mrb[0].mxu0
        %8576 = vmatprep.mubr.f32.mxu0 %v8465
        %8577 = vmatmul.mubr.f32.gmra.mrb[0].mxu0 %v8459
        %v8578 = vpop.f32.mrb[0].mxu0
        %v8579 = vadd.f32 %v8478, %v8578
        %v8580 = vpop.f32.mrb[0].mxu0
        %8581 = vmatprep.mubr.f32.mxu0 %v8466
        %8582 = vmatmul.mubr.f32.gmra.mrb[0].mxu0 %v8460
        %v8583 = vpop.f32.mrb[0].mxu0
        %v8584 = vadd.f32 %v8478, %v8583
        %v8585 = vpop.f32.mrb[0].mxu0
        %8586 = vdwg.mxu0
        %8587 = vmatprep.subr.mxu0 0.0
        %8588 = vmatpush1.msra.mxu0 %v8315
        %8589 = vmatprep.subr.mxu0 0.0
        %8590 = vmatpush1.msra.mxu0 %v8316
        %8591 = vmatprep.subr.mxu0 0.0
        %8592 = vmatpush1.msra.mxu0 %v8317
        %8593 = vmatprep.subr.mxu0 0.0
        %8594 = vmatpush1.msra.mxu0 %v8318
        %8595 = vmatprep.subr.mxu0 0.0
        %8596 = vmatpush1.msra.mxu0 %v8319
        %8597 = vmatprep.subr.mxu0 0.0
        %8598 = vmatpush1.msra.mxu0 %v8320
        %8599 = vmatprep.subr.mxu0 0.0
        %8600 = vmatpush1.msra.mxu0 %v8321
        %8601 = vmatprep.subr.mxu0 0.0
        %8602 = vmatpush1.msra.mxu0 %v8322
        %8603 = vmatprep.subr.mxu0 0.0
        %8604 = vmatpush1.msra.mxu0 %v8323
        %8605 = vmatprep.subr.mxu0 0.0
        %8606 = vmatpush1.msra.mxu0 %v8324
        %8607 = vmatprep.subr.mxu0 0.0
        %8608 = vmatpush1.msra.mxu0 %v8325
        %8609 = vmatprep.subr.mxu0 0.0
        %8610 = vmatpush1.msra.mxu0 %v8326
        %8611 = vmatprep.subr.mxu0 0.0
        %8612 = vmatpush1.msra.mxu0 %v8327
        %8613 = vmatprep.subr.mxu0 0.0
        %8614 = vmatpush1.msra.mxu0 %v8328
        %8615 = vmatprep.subr.mxu0 0.0
        %8616 = vmatpush1.msra.mxu0 %v8329
        %8617 = vmatprep.subr.mxu0 0.0
        %8618 = vmatpush1.msra.mxu0 %v8330
        %8619 = vmatprep.subr.mxu0 0.0
        %8620 = vmatpush1.msra.mxu0 %v8331
        %8621 = vmatprep.subr.mxu0 0.0
        %8622 = vmatpush1.msra.mxu0 %v8332
        %8623 = vmatprep.subr.mxu0 0.0
        %8624 = vmatpush1.msra.mxu0 %v8333
        %8625 = vmatprep.subr.mxu0 0.0
        %8626 = vmatpush1.msra.mxu0 %v8334
        %8627 = vmatprep.subr.mxu0 0.0
        %8628 = vmatpush1.msra.mxu0 %v8335
        %8629 = vmatprep.subr.mxu0 0.0
        %8630 = vmatpush1.msra.mxu0 %v8336
        %8631 = vmatprep.subr.mxu0 0.0
        %8632 = vmatpush1.msra.mxu0 %v8337
        %8633 = vmatprep.subr.mxu0 0.0
        %8634 = vmatpush1.msra.mxu0 %v8338
        %8635 = vmatprep.subr.mxu0 0.0
        %8636 = vmatpush1.msra.mxu0 %v8339
        %8637 = vmatprep.subr.mxu0 0.0
        %8638 = vmatpush1.msra.mxu0 %v8340
        %8639 = vmatprep.subr.mxu0 0.0
        %8640 = vmatpush1.msra.mxu0 %v8341
        %8641 = vmatprep.subr.mxu0 0.0
        %8642 = vmatpush1.msra.mxu0 %v8342
        %8643 = vmatprep.subr.mxu0 0.0
        %8644 = vmatpush1.msra.mxu0 %v8343
        %8645 = vmatprep.subr.mxu0 0.0
        %8646 = vmatpush1.msra.mxu0 %v8344
        %8647 = vmatprep.subr.mxu0 0.0
        %8648 = vmatpush1.msra.mxu0 %v8345
        %8649 = vmatprep.subr.mxu0 0.0
        %8650 = vmatpush1.msra.mxu0 %v8346
        %8651 = vmatprep.mubr.f32.mxu0 %v8457
        %8652 = vmatmul.mubr.f32.gmra.mrb[0].mxu0 %v8467
        %v8653 = vpop.f32.mrb[0].mxu0
        %v8654 = vadd.f32 %v8559, %v8653
        %v8655 = vpop.f32.mrb[0].mxu0
        %8656 = vmatprep.mubr.f32.mxu0 %v8458
        %8657 = vmatmul.mubr.f32.gmra.mrb[0].mxu0 %v8468
        %v8658 = vpop.f32.mrb[0].mxu0
        %v8659 = vadd.f32 %v8564, %v8658
        %v8660 = vpop.f32.mrb[0].mxu0
        %8661 = vmatprep.mubr.f32.mxu0 %v8459
        %8662 = vmatmul.mubr.f32.gmra.mrb[0].mxu0 %v8469
        %v8663 = vpop.f32.mrb[0].mxu0
        %v8664 = vadd.f32 %v8569, %v8663
        %v8665 = vpop.f32.mrb[0].mxu0
        %8666 = vmatprep.mubr.f32.mxu0 %v8460
        %8667 = vmatmul.mubr.f32.gmra.mrb[0].mxu0 %v8470
        %v8668 = vpop.f32.mrb[0].mxu0
        %v8669 = vadd.f32 %v8574, %v8668
        %v8670 = vpop.f32.mrb[0].mxu0
        %8671 = vmatprep.mubr.f32.mxu0 %v8473
        %8672 = vmatmul.mubr.f32.gmra.mrb[0].mxu0 %v8471
        %v8673 = vpop.f32.mrb[0].mxu0
        %v8674 = vadd.f32 %v8579, %v8673
        %v8675 = vpop.f32.mrb[0].mxu0
        %8676 = vmatprep.mubr.f32.mxu0 %v8455
        %8677 = vmatmul.mubr.f32.gmra.mrb[0].mxu0 %v8472
        %v8678 = vpop.f32.mrb[0].mxu0
        %v8679 = vadd.f32 %v8584, %v8678
        %v8680 = vpop.f32.mrb[0].mxu0
        %8681 = vdwg.mxu0
        %8682 = vmatprep.subr.mxu0 0.0
        %8683 = vmatpush1.msra.mxu0 %v8347
        %8684 = vmatprep.subr.mxu0 0.0
        %8685 = vmatpush1.msra.mxu0 %v8348
        %8686 = vmatprep.subr.mxu0 0.0
        %8687 = vmatpush1.msra.mxu0 %v8349
        %8688 = vmatprep.subr.mxu0 0.0
        %8689 = vmatpush1.msra.mxu0 %v8350
        %8690 = vmatprep.subr.mxu0 0.0
        %8691 = vmatpush1.msra.mxu0 %v8351
        %8692 = vmatprep.subr.mxu0 0.0
        %8693 = vmatpush1.msra.mxu0 %v8352
        %8694 = vmatprep.subr.mxu0 0.0
        %8695 = vmatpush1.msra.mxu0 %v8353
        %8696 = vmatprep.subr.mxu0 0.0
        %8697 = vmatpush1.msra.mxu0 %v8354
        %8698 = vmatprep.subr.mxu0 0.0
        %8699 = vmatpush1.msra.mxu0 0.0
        %8700 = vmatprep.subr.mxu0 0.0
        %8701 = vmatpush1.msra.mxu0 0.0
        %8702 = vmatprep.subr.mxu0 0.0
        %8703 = vmatpush1.msra.mxu0 0.0
        %8704 = vmatprep.subr.mxu0 0.0
        %8705 = vmatpush1.msra.mxu0 0.0
        %8706 = vmatprep.subr.mxu0 0.0
        %8707 = vmatpush1.msra.mxu0 0.0
        %8708 = vmatprep.subr.mxu0 0.0
        %8709 = vmatpush1.msra.mxu0 0.0
        %8710 = vmatprep.subr.mxu0 0.0
        %8711 = vmatpush1.msra.mxu0 0.0
        %8712 = vmatprep.subr.mxu0 0.0
        %8713 = vmatpush1.msra.mxu0 0.0
        %8714 = vmatprep.subr.mxu0 0.0
        %8715 = vmatpush1.msra.mxu0 0.0
        %8716 = vmatprep.subr.mxu0 0.0
        %8717 = vmatpush1.msra.mxu0 0.0
        %8718 = vmatprep.subr.mxu0 0.0
        %8719 = vmatpush1.msra.mxu0 0.0
        %8720 = vmatprep.subr.mxu0 0.0
        %8721 = vmatpush1.msra.mxu0 0.0
        %8722 = vmatprep.subr.mxu0 0.0
        %8723 = vmatpush1.msra.mxu0 0.0
        %8724 = vmatprep.subr.mxu0 0.0
        %8725 = vmatpush1.msra.mxu0 0.0
        %8726 = vmatprep.subr.mxu0 0.0
        %8727 = vmatpush1.msra.mxu0 0.0
        %8728 = vmatprep.subr.mxu0 0.0
        %8729 = vmatpush1.msra.mxu0 0.0
        %8730 = vmatprep.subr.mxu0 0.0
        %8731 = vmatpush1.msra.mxu0 0.0
        %8732 = vmatprep.subr.mxu0 0.0
        %8733 = vmatpush1.msra.mxu0 0.0
        %8734 = vmatprep.subr.mxu0 0.0
        %8735 = vmatpush1.msra.mxu0 0.0
        %8736 = vmatprep.subr.mxu0 0.0
        %8737 = vmatpush1.msra.mxu0 0.0
        %8738 = vmatprep.subr.mxu0 0.0
        %8739 = vmatpush1.msra.mxu0 0.0
        %8740 = vmatprep.subr.mxu0 0.0
        %8741 = vmatpush1.msra.mxu0 0.0
        %8742 = vmatprep.subr.mxu0 0.0
        %8743 = vmatpush1.msra.mxu0 0.0
        %8744 = vmatprep.subr.mxu0 0.0
        %8745 = vmatpush1.msra.mxu0 0.0
        %8746 = vmatprep.mubr.f32.mxu0 0.0
        %8747 = vmatmul.mubr.f32.gmra.mrb[0].mxu0 %v8480
        %v8748 = vpop.f32.mrb[0].mxu0
        %v8749 = vadd.f32 %v8654, %v8748
        %v8750 = vpop.f32.mrb[0].mxu0
        %8751 = vmatprep.mubr.f32.mxu0 0.0
        %8752 = vmatmul.mubr.f32.gmra.mrb[0].mxu0 %v8482
        %v8753 = vpop.f32.mrb[0].mxu0
        %v8754 = vadd.f32 %v8659, %v8753
        %v8755 = vpop.f32.mrb[0].mxu0
        %8756 = vmatprep.mubr.f32.mxu0 0.0
        %8757 = vmatmul.mubr.f32.gmra.mrb[0].mxu0 %v8484
        %v8758 = vpop.f32.mrb[0].mxu0
        %v8759 = vadd.f32 %v8664, %v8758
        %v8760 = vpop.f32.mrb[0].mxu0
        %8761 = vmatprep.mubr.f32.mxu0 0.0
        %8762 = vmatmul.mubr.f32.gmra.mrb[0].mxu0 %v8486
        %v8763 = vpop.f32.mrb[0].mxu0
        %v8764 = vadd.f32 %v8669, %v8763
        %v8765 = vpop.f32.mrb[0].mxu0
        %8766 = vmatprep.mubr.f32.mxu0 0.0
        %8767 = vmatmul.mubr.f32.gmra.mrb[0].mxu0 %v8488
        %v8768 = vpop.f32.mrb[0].mxu0
        %v8769 = vadd.f32 %v8674, %v8768
        %v8770 = vpop.f32.mrb[0].mxu0
        %8771 = vmatprep.mubr.f32.mxu0 0.0
        %8772 = vmatmul.mubr.f32.gmra.mrb[0].mxu0 %v8490
        %v8773 = vpop.f32.mrb[0].mxu0
        %v8774 = vadd.f32 %v8679, %v8773
        %v8775 = vpop.f32.mrb[0].mxu0
        %8776 = vdwg.mxu0
        %v8777 = vmax.f32 %v8749, 0.0
        %v8778 = vmax.f32 %v8754, 0.0
        %v8779 = vmax.f32 %v8759, 0.0
        %v8780 = vmax.f32 %v8764, 0.0
        %v8781 = vmax.f32 %v8769, 0.0
        %v8782 = vmax.f32 %v8774, 0.0
        %v8789 = vrot.slane %v8777, 1
        %v8790 = vrot.slane %v8778, 1
        %v8791 = vsel %vm964, %v8789, %v8790
        %v8792 = vrot.slane %v8779, 1
        %v8793 = vsel %vm964, %v8790, %v8792
        %v8794 = vrot.slane %v8780, 1
        %v8795 = vsel %vm964, %v8792, %v8794
        %v8796 = vrot.slane %v8781, 1
        %v8797 = vsel %vm964, %v8794, %v8796
        %v8798 = vrot.slane %v8782, 1
        %v8799 = vsel %vm964, %v8796, %v8798
        %v8806 = vmax.f32 %v8777, %v8791
        %v8807 = vmax.f32 %v8778, %v8793
        %v8808 = vmax.f32 %v8779, %v8795
        %v8809 = vmax.f32 %v8780, %v8797
        %v8810 = vmax.f32 %v8781, %v8799
        %v8811 = vmax.f32 %v8782, %v8798
        %v8812 = vmax.f32 %v8806, %v8807
        %v8813 = vmax.f32 %v8807, %v8808
        %v8814 = vmax.f32 %v8808, %v8809
        %v8815 = vmax.f32 %v8809, %v8810
        %v8816 = vmax.f32 %v8810, %v8811
        %v8817 = vshra.s32 %v5711, 2
        %v8818 = vshra.s32 %v5712, 2
        %v8819 = vmul.u32 %v8817, 16
        %v8820 = vmul.u32 %v8818, 16
        %v8821 = vand.u32 %v5711, 3
        %v8822 = vand.u32 %v5712, 3
        %v8823 = vmul.u32 %v8821, 2
        %v8824 = vmul.u32 %v8822, 2
        %v8825 = vadd.s32 %v8819, %v8823
        %v8826 = vadd.s32 %v8820, %v8824
        %vm8827 = vcmp.eq.s32.totalorder %v5736, %v8825
        %vm8828 = vcmp.eq.s32.totalorder %v5736, %v8826
        %v8829 = vsel %vm8827, 1.0, 0.0
        %v8830 = vsel %vm8828, 1.0, 0.0
        %vm8831 = vcmask 318464
        %v8833 = vsel %vm8831, %v8829, 0
        %v8836 = vsel %vm8831, %v8830, 0
        %v8839 = vsel %vm964, %v8816, 0
        %8841 = vmatprep.subr.mxu0 0.0
        %8842 = vmatpush1.msra.mxu0 %v8812
        %8843 = vmatprep.subr.mxu0 0.0
        %8844 = vmatpush1.msra.mxu0 %v8813
        %8845 = vmatprep.subr.mxu0 0.0
        %8846 = vmatpush1.msra.mxu0 %v8814
        %8847 = vmatprep.subr.mxu0 0.0
        %8848 = vmatpush1.msra.mxu0 %v8815
        %8849 = vmatprep.subr.mxu0 0.0
        %8850 = vmatpush1.msra.mxu0 %v8839
        %8851 = vmatprep.subr.mxu0 0.0
        %8852 = vmatpush1.msra.mxu0 0.0
        %8853 = vmatprep.subr.mxu0 0.0
        %8854 = vmatpush1.msra.mxu0 0.0
        %8855 = vmatprep.subr.mxu0 0.0
        %8856 = vmatpush1.msra.mxu0 0.0
        %8857 = vmatprep.subr.mxu0 0.0
        %8858 = vmatpush1.msra.mxu0 0.0
        %8859 = vmatprep.subr.mxu0 0.0
        %8860 = vmatpush1.msra.mxu0 0.0
        %8861 = vmatprep.subr.mxu0 0.0
        %8862 = vmatpush1.msra.mxu0 0.0
        %8863 = vmatprep.subr.mxu0 0.0
        %8864 = vmatpush1.msra.mxu0 0.0
        %8865 = vmatprep.subr.mxu0 0.0
        %8866 = vmatpush1.msra.mxu0 0.0
        %8867 = vmatprep.subr.mxu0 0.0
        %8868 = vmatpush1.msra.mxu0 0.0
        %8869 = vmatprep.subr.mxu0 0.0
        %8870 = vmatpush1.msra.mxu0 0.0
        %8871 = vmatprep.subr.mxu0 0.0
        %8872 = vmatpush1.msra.mxu0 0.0
        %8873 = vmatprep.subr.mxu0 0.0
        %8874 = vmatpush1.msra.mxu0 0.0
        %8875 = vmatprep.subr.mxu0 0.0
        %8876 = vmatpush1.msra.mxu0 0.0
        %8877 = vmatprep.subr.mxu0 0.0
        %8878 = vmatpush1.msra.mxu0 0.0
        %8879 = vmatprep.subr.mxu0 0.0
        %8880 = vmatpush1.msra.mxu0 0.0
        %8881 = vmatprep.subr.mxu0 0.0
        %8882 = vmatpush1.msra.mxu0 0.0
        %8883 = vmatprep.subr.mxu0 0.0
        %8884 = vmatpush1.msra.mxu0 0.0
        %8885 = vmatprep.subr.mxu0 0.0
        %8886 = vmatpush1.msra.mxu0 0.0
        %8887 = vmatprep.subr.mxu0 0.0
        %8888 = vmatpush1.msra.mxu0 0.0
        %8889 = vmatprep.subr.mxu0 0.0
        %8890 = vmatpush1.msra.mxu0 0.0
        %8891 = vmatprep.subr.mxu0 0.0
        %8892 = vmatpush1.msra.mxu0 0.0
        %8893 = vmatprep.subr.mxu0 0.0
        %8894 = vmatpush1.msra.mxu0 0.0
        %8895 = vmatprep.subr.mxu0 0.0
        %8896 = vmatpush1.msra.mxu0 0.0
        %8897 = vmatprep.subr.mxu0 0.0
        %8898 = vmatpush1.msra.mxu0 0.0
        %8899 = vmatprep.subr.mxu0 0.0
        %8900 = vmatpush1.msra.mxu0 0.0
        %8901 = vmatprep.subr.mxu0 0.0
        %8902 = vmatpush1.msra.mxu0 0.0
        %8903 = vmatprep.subr.mxu0 0.0
        %8904 = vmatpush1.msra.mxu0 0.0
        %8905 = vmatprep.mubr.f32.mxu0 0.0
        %8906 = vmatmul.mubr.f32.gmra.mrb[0].mxu0 %v8833
        %v8907 = vpop.f32.mrb[0].mxu0
        %v8908 = vadd.f32 0.0, %v8907
        %v8909 = vpop.f32.mrb[0].mxu0
        %8910 = vmatprep.mubr.f32.mxu0 0.0
        %8911 = vmatmul.mubr.f32.gmra.mrb[0].mxu0 %v8836
        %v8912 = vpop.f32.mrb[0].mxu0
        %v8913 = vadd.f32 0.0, %v8912
        %v8914 = vpop.f32.mrb[0].mxu0
        %8915 = vdwg.mxu0
        %v8917 = vrot.slane %v8908, 1
        %v8919 = vrot.slane %v8908, 2
        %v8921 = vrot.slane %v8908, 3
        %v8923 = vrot.slane %v8908, 4
        %v8925 = vrot.slane %v8908, 5
        %v8927 = vrot.slane %v8908, 6
        %v8929 = vrot.slane %v8908, 7
        %v8932 = vrot.slane %v8913, 1
        %v8934 = vrot.slane %v8913, 2
        %v8936 = vrot.slane %v8913, 3
        %v8938 = vld [vmem:[#allocation11] sm:$0xff]
        %v8939 = vld [vmem:[#allocation11 + $0x8] sm:$0xff]
        %v8940 = vld [vmem:[#allocation11 + $0x10] sm:$0xff]
        %v8941 = vld [vmem:[#allocation11 + $0x18] sm:$0xff]
        %v8942 = vld [vmem:[#allocation11 + $0x20] sm:$0xff]
        %v8943 = vld [vmem:[#allocation11 + $0x28] sm:$0xff]
        %v8944 = vld [vmem:[#allocation11 + $0x30] sm:$0xff]
        %v8945 = vld [vmem:[#allocation11 + $0x38] sm:$0xff]
        %v8946 = vld [vmem:[#allocation11 + $0x40] sm:$0xff]
        %v8947 = vld [vmem:[#allocation11 + $0x48] sm:$0xff]
        %v8948 = vld [vmem:[#allocation11 + $0x50] sm:$0xff]
        %v8949 = vld [vmem:[#allocation11 + $0x58] sm:$0xff]
        %v8950 = vld [vmem:[#allocation11 + $0x60] sm:$0xff]
        %v8951 = vld [vmem:[#allocation11 + $0x68] sm:$0xff]
        %v8952 = vld [vmem:[#allocation11 + $0x70] sm:$0xff]
        %v8953 = vld [vmem:[#allocation11 + $0x78] sm:$0xff]
        %v8954 = vld [vmem:[#allocation11 + $0x80] sm:$0xff]
        %v8955 = vld [vmem:[#allocation11 + $0x88] sm:$0xff]
        %v8956 = vld [vmem:[#allocation11 + $0x90] sm:$0xff]
        %v8957 = vld [vmem:[#allocation11 + $0x98] sm:$0xff]
        %v8958 = vld [vmem:[#allocation11 + $0xa0] sm:$0xff]
        %v8959 = vld [vmem:[#allocation11 + $0xa8] sm:$0xff]
        %v8960 = vld [vmem:[#allocation11 + $0xb0] sm:$0xff]
        %v8961 = vld [vmem:[#allocation11 + $0xb8] sm:$0xff]
        %v8962 = vld [vmem:[#allocation11 + $0xc0] sm:$0xff]
        %v8963 = vld [vmem:[#allocation11 + $0xc8] sm:$0xff]
        %v8964 = vld [vmem:[#allocation11 + $0xd0] sm:$0xff]
        %v8965 = vld [vmem:[#allocation11 + $0xd8] sm:$0xff]
        %v8966 = vld [vmem:[#allocation11 + $0xe0] sm:$0xff]
        %v8967 = vld [vmem:[#allocation11 + $0xe8] sm:$0xff]
        %v8968 = vld [vmem:[#allocation11 + $0xf0] sm:$0xff]
        %v8969 = vld [vmem:[#allocation11 + $0xf8] sm:$0xff]
        %v8970 = vld [vmem:[#allocation11 + $0x100] sm:$0xff]
        %v8971 = vld [vmem:[#allocation11 + $0x108] sm:$0xff]
        %v8972 = vld [vmem:[#allocation11 + $0x110] sm:$0xff]
        %v8973 = vld [vmem:[#allocation11 + $0x118] sm:$0xff]
        %v8974 = vld [vmem:[#allocation11 + $0x120] sm:$0xff]
        %v8975 = vld [vmem:[#allocation11 + $0x128] sm:$0xff]
        %v8976 = vld [vmem:[#allocation11 + $0x130] sm:$0xff]
        %v8977 = vld [vmem:[#allocation11 + $0x138] sm:$0xff]
        %v8978 = vld [vmem:[#allocation11 + $0x140] sm:$0xff]
        %v8979 = vld [vmem:[#allocation11 + $0x148] sm:$0xff]
        %v8980 = vld [vmem:[#allocation11 + $0x150] sm:$0xff]
        %v8981 = vld [vmem:[#allocation11 + $0x158] sm:$0xff]
        %v8982 = vld [vmem:[#allocation11 + $0x160] sm:$0xff]
        %v8983 = vld [vmem:[#allocation11 + $0x168] sm:$0xff]
        %v8984 = vld [vmem:[#allocation11 + $0x170] sm:$0xff]
        %v8985 = vld [vmem:[#allocation11 + $0x178] sm:$0xff]
        %v8986 = vld [vmem:[#allocation11 + $0x180] sm:$0xff]
        %v8987 = vld [vmem:[#allocation11 + $0x188] sm:$0xff]
        %v8988 = vld [vmem:[#allocation11 + $0x190] sm:$0xff]
        %v8989 = vld [vmem:[#allocation11 + $0x198] sm:$0xff]
        %v8990 = vld [vmem:[#allocation11 + $0x1a0] sm:$0xff]
        %v8991 = vld [vmem:[#allocation11 + $0x1a8] sm:$0xff]
        %v8992 = vld [vmem:[#allocation11 + $0x1b0] sm:$0xff]
        %v8993 = vld [vmem:[#allocation11 + $0x1b8] sm:$0xff]
        %v8994 = vld [vmem:[#allocation11 + $0x1c0] sm:$0xff]
        %v8995 = vld [vmem:[#allocation11 + $0x1c8] sm:$0xff]
        %v8996 = vld [vmem:[#allocation11 + $0x1d0] sm:$0xff]
        %v8997 = vld [vmem:[#allocation11 + $0x1d8] sm:$0xff]
        %v8998 = vld [vmem:[#allocation11 + $0x1e0] sm:$0xff]
        %v8999 = vld [vmem:[#allocation11 + $0x1e8] sm:$0xff]
        %v9000 = vld [vmem:[#allocation11 + $0x1f0] sm:$0xff]
        %v9001 = vld [vmem:[#allocation11 + $0x1f8] sm:$0xff]
        %v9002 = vld [vmem:[#allocation11 + $0x200] sm:$0xff]
        %v9003 = vld [vmem:[#allocation11 + $0x208] sm:$0xff]
        %v9004 = vld [vmem:[#allocation11 + $0x210] sm:$0xff]
        %v9005 = vld [vmem:[#allocation11 + $0x218] sm:$0xff]
        %v9006 = vld [vmem:[#allocation11 + $0x220] sm:$0xff]
        %v9007 = vld [vmem:[#allocation11 + $0x228] sm:$0xff]
        %v9008 = vld [vmem:[#allocation11 + $0x230] sm:$0xff]
        %v9009 = vld [vmem:[#allocation11 + $0x238] sm:$0xff]
        %v9010 = vld [vmem:[#allocation11 + $0x240] sm:$0xff]
        %v9011 = vld [vmem:[#allocation11 + $0x248] sm:$0xff]
        %v9012 = vld [vmem:[#allocation11 + $0x250] sm:$0xff]
        %v9013 = vld [vmem:[#allocation11 + $0x258] sm:$0xff]
        %v9014 = vld [vmem:[#allocation11 + $0x260] sm:$0xff]
        %v9015 = vld [vmem:[#allocation11 + $0x268] sm:$0xff]
        %v9016 = vld [vmem:[#allocation11 + $0x270] sm:$0xff]
        %v9017 = vld [vmem:[#allocation11 + $0x278] sm:$0xff]
        %v9018 = vld [vmem:[#allocation11 + $0x280] sm:$0xff]
        %v9019 = vld [vmem:[#allocation11 + $0x288] sm:$0xff]
        %v9020 = vld [vmem:[#allocation11 + $0x290] sm:$0xff]
        %v9021 = vld [vmem:[#allocation11 + $0x298] sm:$0xff]
        %v9022 = vld [vmem:[#allocation11 + $0x2a0] sm:$0xff]
        %v9023 = vld [vmem:[#allocation11 + $0x2a8] sm:$0xff]
        %v9024 = vld [vmem:[#allocation11 + $0x2b0] sm:$0xff]
        %v9025 = vld [vmem:[#allocation11 + $0x2b8] sm:$0xff]
        %v9026 = vld [vmem:[#allocation11 + $0x2c0] sm:$0xff]
        %v9027 = vld [vmem:[#allocation11 + $0x2c8] sm:$0xff]
        %v9028 = vld [vmem:[#allocation11 + $0x2d0] sm:$0xff]
        %v9029 = vld [vmem:[#allocation11 + $0x2d8] sm:$0xff]
        %v9030 = vld [vmem:[#allocation11 + $0x2e0] sm:$0xff]
        %v9031 = vld [vmem:[#allocation11 + $0x2e8] sm:$0xff]
        %v9032 = vld [vmem:[#allocation11 + $0x2f0] sm:$0xff]
        %v9033 = vld [vmem:[#allocation11 + $0x2f8] sm:$0xff]
        %v9034 = vld [vmem:[#allocation11 + $0x300] sm:$0xff]
        %v9035 = vld [vmem:[#allocation11 + $0x308] sm:$0xff]
        %v9036 = vld [vmem:[#allocation11 + $0x310] sm:$0xff]
        %v9037 = vld [vmem:[#allocation11 + $0x318] sm:$0xff]
        %v9038 = vld [vmem:[#allocation11 + $0x320] sm:$0xff]
        %v9039 = vld [vmem:[#allocation11 + $0x328] sm:$0xff]
        %v9040 = vld [vmem:[#allocation11 + $0x330] sm:$0xff]
        %v9041 = vld [vmem:[#allocation11 + $0x338] sm:$0xff]
        %v9042 = vld [vmem:[#allocation11 + $0x340] sm:$0xff]
        %v9043 = vld [vmem:[#allocation11 + $0x348] sm:$0xff]
        %v9044 = vld [vmem:[#allocation11 + $0x350] sm:$0xff]
        %v9045 = vld [vmem:[#allocation11 + $0x358] sm:$0xff]
        %v9046 = vld [vmem:[#allocation11 + $0x360] sm:$0xff]
        %v9047 = vld [vmem:[#allocation11 + $0x368] sm:$0xff]
        %v9048 = vld [vmem:[#allocation11 + $0x370] sm:$0xff]
        %v9049 = vld [vmem:[#allocation11 + $0x378] sm:$0xff]
        %v9050 = vld [vmem:[#allocation11 + $0x380] sm:$0xff]
        %v9051 = vld [vmem:[#allocation11 + $0x388] sm:$0xff]
        %v9052 = vld [vmem:[#allocation11 + $0x390] sm:$0xff]
        %v9053 = vld [vmem:[#allocation11 + $0x398] sm:$0xff]
        %v9054 = vld [vmem:[#allocation11 + $0x3a0] sm:$0xff]
        %v9055 = vld [vmem:[#allocation11 + $0x3a8] sm:$0xff]
        %v9056 = vld [vmem:[#allocation11 + $0x3b0] sm:$0xff]
        %v9057 = vld [vmem:[#allocation11 + $0x3b8] sm:$0xff]
        %v9058 = vld [vmem:[#allocation11 + $0x3c0] sm:$0xff]
        %v9059 = vld [vmem:[#allocation11 + $0x3c8] sm:$0xff]
        %v9060 = vld [vmem:[#allocation11 + $0x3d0] sm:$0xff]
        %v9061 = vld [vmem:[#allocation11 + $0x3d8] sm:$0xff]
        %v9062 = vld [vmem:[#allocation11 + $0x3e0] sm:$0xff]
        %v9063 = vld [vmem:[#allocation11 + $0x3e8] sm:$0xff]
        %v9064 = vld [vmem:[#allocation11 + $0x3f0] sm:$0xff]
        %v9065 = vld [vmem:[#allocation11 + $0x3f8] sm:$0xff]
        %v9066 = vld [vmem:[#allocation11 + $0x400] sm:$0xff]
        %v9067 = vld [vmem:[#allocation11 + $0x408] sm:$0xff]
        %v9068 = vld [vmem:[#allocation11 + $0x410] sm:$0xff]
        %v9069 = vld [vmem:[#allocation11 + $0x418] sm:$0xff]
        %v9070 = vld [vmem:[#allocation11 + $0x420] sm:$0xff]
        %v9071 = vld [vmem:[#allocation11 + $0x428] sm:$0xff]
        %v9072 = vld [vmem:[#allocation11 + $0x430] sm:$0xff]
        %v9073 = vld [vmem:[#allocation11 + $0x438] sm:$0xff]
        %v9074 = vld [vmem:[#allocation11 + $0x440] sm:$0xff]
        %v9075 = vld [vmem:[#allocation11 + $0x448] sm:$0xff]
        %v9076 = vld [vmem:[#allocation11 + $0x450] sm:$0xff]
        %v9077 = vld [vmem:[#allocation11 + $0x458] sm:$0xff]
        %v9078 = vld [vmem:[#allocation11 + $0x460] sm:$0xff]
        %v9079 = vld [vmem:[#allocation11 + $0x468] sm:$0xff]
        %v9080 = vld [vmem:[#allocation11 + $0x470] sm:$0xff]
        %v9081 = vld [vmem:[#allocation11 + $0x478] sm:$0xff]
        %v9082 = vld [vmem:[#allocation11 + $0x480] sm:$0xff]
        %v9083 = vld [vmem:[#allocation11 + $0x488] sm:$0xff]
        %v9084 = vld [vmem:[#allocation11 + $0x490] sm:$0xff]
        %v9085 = vld [vmem:[#allocation11 + $0x498] sm:$0xff]
        %v9086 = vld [vmem:[#allocation11 + $0x4a0] sm:$0xff]
        %v9087 = vld [vmem:[#allocation11 + $0x4a8] sm:$0xff]
        %v9088 = vld [vmem:[#allocation11 + $0x4b0] sm:$0xff]
        %v9089 = vld [vmem:[#allocation11 + $0x4b8] sm:$0xff]
        %v9090 = vld [vmem:[#allocation11 + $0x4c0] sm:$0xff]
        %v9091 = vld [vmem:[#allocation11 + $0x4c8] sm:$0xff]
        %v9092 = vld [vmem:[#allocation11 + $0x4d0] sm:$0xff]
        %v9093 = vld [vmem:[#allocation11 + $0x4d8] sm:$0xff]
        %v9094 = vld [vmem:[#allocation11 + $0x4e0] sm:$0xff]
        %v9095 = vld [vmem:[#allocation11 + $0x4e8] sm:$0xff]
        %v9096 = vld [vmem:[#allocation11 + $0x4f0] sm:$0xff]
        %v9097 = vld [vmem:[#allocation11 + $0x4f8] sm:$0xff]
        %v9098 = vld [vmem:[#allocation11 + $0x500] sm:$0xff]
        %v9099 = vld [vmem:[#allocation11 + $0x508] sm:$0xff]
        %v9100 = vld [vmem:[#allocation11 + $0x510] sm:$0xff]
        %v9101 = vld [vmem:[#allocation11 + $0x518] sm:$0xff]
        %v9102 = vld [vmem:[#allocation11 + $0x520] sm:$0xff]
        %v9103 = vld [vmem:[#allocation11 + $0x528] sm:$0xff]
        %v9104 = vld [vmem:[#allocation11 + $0x530] sm:$0xff]
        %v9105 = vld [vmem:[#allocation11 + $0x538] sm:$0xff]
        %v9106 = vld [vmem:[#allocation11 + $0x540] sm:$0xff]
        %v9107 = vld [vmem:[#allocation11 + $0x548] sm:$0xff]
        %v9108 = vld [vmem:[#allocation11 + $0x550] sm:$0xff]
        %v9109 = vld [vmem:[#allocation11 + $0x558] sm:$0xff]
        %v9110 = vld [vmem:[#allocation11 + $0x560] sm:$0xff]
        %v9111 = vld [vmem:[#allocation11 + $0x568] sm:$0xff]
        %v9112 = vld [vmem:[#allocation11 + $0x570] sm:$0xff]
        %v9113 = vld [vmem:[#allocation11 + $0x578] sm:$0xff]
        %v9114 = vld [vmem:[#allocation11 + $0x580] sm:$0xff]
        %v9115 = vld [vmem:[#allocation11 + $0x588] sm:$0xff]
        %v9116 = vld [vmem:[#allocation11 + $0x590] sm:$0xff]
        %v9117 = vld [vmem:[#allocation11 + $0x598] sm:$0xff]
        %v9118 = vld [vmem:[#allocation11 + $0x5a0] sm:$0xff]
        %v9119 = vld [vmem:[#allocation11 + $0x5a8] sm:$0xff]
        %v9120 = vld [vmem:[#allocation11 + $0x5b0] sm:$0xff]
        %v9121 = vld [vmem:[#allocation11 + $0x5b8] sm:$0xff]
        %v9122 = vld [vmem:[#allocation11 + $0x5c0] sm:$0xff]
        %v9123 = vld [vmem:[#allocation11 + $0x5c8] sm:$0xff]
        %v9124 = vld [vmem:[#allocation11 + $0x5d0] sm:$0xff]
        %v9125 = vld [vmem:[#allocation11 + $0x5d8] sm:$0xff]
        %v9126 = vld [vmem:[#allocation11 + $0x5e0] sm:$0xff]
        %v9127 = vld [vmem:[#allocation11 + $0x5e8] sm:$0xff]
        %v9128 = vld [vmem:[#allocation11 + $0x5f0] sm:$0xff]
        %v9129 = vld [vmem:[#allocation11 + $0x5f8] sm:$0xff]
        %v9130 = vld [vmem:[#allocation11 + $0x600] sm:$0xff]
        %v9131 = vld [vmem:[#allocation11 + $0x608] sm:$0xff]
        %v9132 = vld [vmem:[#allocation11 + $0x610] sm:$0xff]
        %v9133 = vld [vmem:[#allocation11 + $0x618] sm:$0xff]
        %v9134 = vld [vmem:[#allocation11 + $0x620] sm:$0xff]
        %v9135 = vld [vmem:[#allocation11 + $0x628] sm:$0xff]
        %v9136 = vld [vmem:[#allocation11 + $0x630] sm:$0xff]
        %v9137 = vld [vmem:[#allocation11 + $0x638] sm:$0xff]
        %v9138 = vld [vmem:[#allocation11 + $0x640] sm:$0xff]
        %v9139 = vld [vmem:[#allocation11 + $0x648] sm:$0xff]
        %v9140 = vld [vmem:[#allocation11 + $0x650] sm:$0xff]
        %v9141 = vld [vmem:[#allocation11 + $0x658] sm:$0xff]
        %v9142 = vld [vmem:[#allocation11 + $0x660] sm:$0xff]
        %v9143 = vld [vmem:[#allocation11 + $0x668] sm:$0xff]
        %v9144 = vld [vmem:[#allocation11 + $0x670] sm:$0xff]
        %v9145 = vld [vmem:[#allocation11 + $0x678] sm:$0xff]
        %v9146 = vld [vmem:[#allocation11 + $0x680] sm:$0xff]
        %v9147 = vld [vmem:[#allocation11 + $0x688] sm:$0xff]
        %v9148 = vld [vmem:[#allocation11 + $0x690] sm:$0xff]
        %v9149 = vld [vmem:[#allocation11 + $0x698] sm:$0xff]
        %v9150 = vld [vmem:[#allocation11 + $0x6a0] sm:$0xff]
        %v9151 = vld [vmem:[#allocation11 + $0x6a8] sm:$0xff]
        %v9152 = vld [vmem:[#allocation11 + $0x6b0] sm:$0xff]
        %v9153 = vld [vmem:[#allocation11 + $0x6b8] sm:$0xff]
        %v9154 = vld [vmem:[#allocation11 + $0x6c0] sm:$0xff]
        %v9155 = vld [vmem:[#allocation11 + $0x6c8] sm:$0xff]
        %v9156 = vld [vmem:[#allocation11 + $0x6d0] sm:$0xff]
        %v9157 = vld [vmem:[#allocation11 + $0x6d8] sm:$0xff]
        %v9158 = vld [vmem:[#allocation11 + $0x6e0] sm:$0xff]
        %v9159 = vld [vmem:[#allocation11 + $0x6e8] sm:$0xff]
        %v9160 = vld [vmem:[#allocation11 + $0x6f0] sm:$0xff]
        %v9161 = vld [vmem:[#allocation11 + $0x6f8] sm:$0xff]
        %v9162 = vld [vmem:[#allocation11 + $0x700] sm:$0xff]
        %v9163 = vld [vmem:[#allocation11 + $0x708] sm:$0xff]
        %v9164 = vld [vmem:[#allocation11 + $0x710] sm:$0xff]
        %v9165 = vld [vmem:[#allocation11 + $0x718] sm:$0xff]
        %v9166 = vld [vmem:[#allocation11 + $0x720] sm:$0xff]
        %v9167 = vld [vmem:[#allocation11 + $0x728] sm:$0xff]
        %v9168 = vld [vmem:[#allocation11 + $0x730] sm:$0xff]
        %v9169 = vld [vmem:[#allocation11 + $0x738] sm:$0xff]
        %v9170 = vld [vmem:[#allocation11 + $0x740] sm:$0xff]
        %v9171 = vld [vmem:[#allocation11 + $0x748] sm:$0xff]
        %v9172 = vld [vmem:[#allocation11 + $0x750] sm:$0xff]
        %v9173 = vld [vmem:[#allocation11 + $0x758] sm:$0xff]
        %v9174 = vld [vmem:[#allocation11 + $0x760] sm:$0xff]
        %v9175 = vld [vmem:[#allocation11 + $0x768] sm:$0xff]
        %v9176 = vld [vmem:[#allocation11 + $0x770] sm:$0xff]
        %v9177 = vld [vmem:[#allocation11 + $0x778] sm:$0xff]
        %v9178 = vld [vmem:[#allocation11 + $0x780] sm:$0xff]
        %v9179 = vld [vmem:[#allocation11 + $0x788] sm:$0xff]
        %v9180 = vld [vmem:[#allocation11 + $0x790] sm:$0xff]
        %v9181 = vld [vmem:[#allocation11 + $0x798] sm:$0xff]
        %v9182 = vld [vmem:[#allocation11 + $0x7a0] sm:$0xff]
        %v9183 = vld [vmem:[#allocation11 + $0x7a8] sm:$0xff]
        %v9184 = vld [vmem:[#allocation11 + $0x7b0] sm:$0xff]
        %v9185 = vld [vmem:[#allocation11 + $0x7b8] sm:$0xff]
        %v9186 = vld [vmem:[#allocation11 + $0x7c0] sm:$0xff]
        %v9187 = vld [vmem:[#allocation11 + $0x7c8] sm:$0xff]
        %v9188 = vld [vmem:[#allocation11 + $0x7d0] sm:$0xff]
        %v9189 = vld [vmem:[#allocation11 + $0x7d8] sm:$0xff]
        %v9190 = vld [vmem:[#allocation11 + $0x7e0] sm:$0xff]
        %v9191 = vld [vmem:[#allocation11 + $0x7e8] sm:$0xff]
        %v9192 = vld [vmem:[#allocation11 + $0x7f0] sm:$0xff]
        %v9193 = vld [vmem:[#allocation11 + $0x7f8] sm:$0xff]
        %v9194 = vld [vmem:[#allocation11 + $0x800] sm:$0xff]
        %v9195 = vld [vmem:[#allocation11 + $0x808] sm:$0xff]
        %v9196 = vld [vmem:[#allocation11 + $0x810] sm:$0xff]
        %v9197 = vld [vmem:[#allocation11 + $0x818] sm:$0xff]
        %v9198 = vld [vmem:[#allocation11 + $0x820] sm:$0xff]
        %v9199 = vld [vmem:[#allocation11 + $0x828] sm:$0xff]
        %v9200 = vld [vmem:[#allocation11 + $0x830] sm:$0xff]
        %v9201 = vld [vmem:[#allocation11 + $0x838] sm:$0xff]
        %v9202 = vld [vmem:[#allocation11 + $0x840] sm:$0xff]
        %v9203 = vld [vmem:[#allocation11 + $0x848] sm:$0xff]
        %v9204 = vld [vmem:[#allocation11 + $0x850] sm:$0xff]
        %v9205 = vld [vmem:[#allocation11 + $0x858] sm:$0xff]
        %v9206 = vld [vmem:[#allocation11 + $0x860] sm:$0xff]
        %v9207 = vld [vmem:[#allocation11 + $0x868] sm:$0xff]
        %v9208 = vld [vmem:[#allocation11 + $0x870] sm:$0xff]
        %v9209 = vld [vmem:[#allocation11 + $0x878] sm:$0xff]
        %v9210 = vld [vmem:[#allocation11 + $0x880] sm:$0xff]
        %v9211 = vld [vmem:[#allocation11 + $0x888] sm:$0xff]
        %v9212 = vld [vmem:[#allocation11 + $0x890] sm:$0xff]
        %v9213 = vld [vmem:[#allocation11 + $0x898] sm:$0xff]
        %v9214 = vld [vmem:[#allocation11 + $0x8a0] sm:$0xff]
        %v9215 = vld [vmem:[#allocation11 + $0x8a8] sm:$0xff]
        %v9216 = vld [vmem:[#allocation11 + $0x8b0] sm:$0xff]
        %v9217 = vld [vmem:[#allocation11 + $0x8b8] sm:$0xff]
        %v9218 = vld [vmem:[#allocation11 + $0x8c0] sm:$0xff]
        %v9219 = vld [vmem:[#allocation11 + $0x8c8] sm:$0xff]
        %v9220 = vld [vmem:[#allocation11 + $0x8d0] sm:$0xff]
        %v9221 = vld [vmem:[#allocation11 + $0x8d8] sm:$0xff]
        %v9222 = vld [vmem:[#allocation11 + $0x8e0] sm:$0xff]
        %v9223 = vld [vmem:[#allocation11 + $0x8e8] sm:$0xff]
        %v9224 = vld [vmem:[#allocation11 + $0x8f0] sm:$0xff]
        %v9225 = vld [vmem:[#allocation11 + $0x8f8] sm:$0xff]
        %v9226 = vld [vmem:[#allocation11 + $0x900] sm:$0xff]
        %v9227 = vld [vmem:[#allocation11 + $0x908] sm:$0xff]
        %v9228 = vld [vmem:[#allocation11 + $0x910] sm:$0xff]
        %v9229 = vld [vmem:[#allocation11 + $0x918] sm:$0xff]
        %v9230 = vld [vmem:[#allocation11 + $0x920] sm:$0xff]
        %v9231 = vld [vmem:[#allocation11 + $0x928] sm:$0xff]
        %v9232 = vld [vmem:[#allocation11 + $0x930] sm:$0xff]
        %v9233 = vld [vmem:[#allocation11 + $0x938] sm:$0xff]
        %v9234 = vld [vmem:[#allocation11 + $0x940] sm:$0xff]
        %v9235 = vld [vmem:[#allocation11 + $0x948] sm:$0xff]
        %v9236 = vld [vmem:[#allocation11 + $0x950] sm:$0xff]
        %v9237 = vld [vmem:[#allocation11 + $0x958] sm:$0xff]
        %v9238 = vld [vmem:[#allocation11 + $0x960] sm:$0xff]
        %v9239 = vld [vmem:[#allocation11 + $0x968] sm:$0xff]
        %v9240 = vld [vmem:[#allocation11 + $0x970] sm:$0xff]
        %v9241 = vld [vmem:[#allocation11 + $0x978] sm:$0xff]
        %v9242 = vld [vmem:[#allocation11 + $0x980] sm:$0xff]
        %v9243 = vld [vmem:[#allocation11 + $0x988] sm:$0xff]
        %v9244 = vld [vmem:[#allocation11 + $0x990] sm:$0xff]
        %v9245 = vld [vmem:[#allocation11 + $0x998] sm:$0xff]
        %v9246 = vld [vmem:[#allocation11 + $0x9a0] sm:$0xff]
        %v9247 = vld [vmem:[#allocation11 + $0x9a8] sm:$0xff]
        %v9248 = vld [vmem:[#allocation11 + $0x9b0] sm:$0xff]
        %v9249 = vld [vmem:[#allocation11 + $0x9b8] sm:$0xff]
        %v9250 = vld [vmem:[#allocation11 + $0x9c0] sm:$0xff]
        %v9251 = vld [vmem:[#allocation11 + $0x9c8] sm:$0xff]
        %v9252 = vld [vmem:[#allocation11 + $0x9d0] sm:$0xff]
        %v9253 = vld [vmem:[#allocation11 + $0x9d8] sm:$0xff]
        %v9254 = vld [vmem:[#allocation11 + $0x9e0] sm:$0xff]
        %v9255 = vld [vmem:[#allocation11 + $0x9e8] sm:$0xff]
        %v9256 = vld [vmem:[#allocation11 + $0x9f0] sm:$0xff]
        %v9257 = vld [vmem:[#allocation11 + $0x9f8] sm:$0xff]
        %v9258 = vld [vmem:[#allocation11 + $0xa00] sm:$0xff]
        %v9259 = vld [vmem:[#allocation11 + $0xa08] sm:$0xff]
        %v9260 = vld [vmem:[#allocation11 + $0xa10] sm:$0xff]
        %v9261 = vld [vmem:[#allocation11 + $0xa18] sm:$0xff]
        %v9262 = vld [vmem:[#allocation11 + $0xa20] sm:$0xff]
        %v9263 = vld [vmem:[#allocation11 + $0xa28] sm:$0xff]
        %v9264 = vld [vmem:[#allocation11 + $0xa30] sm:$0xff]
        %v9265 = vld [vmem:[#allocation11 + $0xa38] sm:$0xff]
        %v9266 = vld [vmem:[#allocation11 + $0xa40] sm:$0xff]
        %v9267 = vld [vmem:[#allocation11 + $0xa48] sm:$0xff]
        %v9268 = vld [vmem:[#allocation11 + $0xa50] sm:$0xff]
        %v9269 = vld [vmem:[#allocation11 + $0xa58] sm:$0xff]
        %v9270 = vld [vmem:[#allocation11 + $0xa60] sm:$0xff]
        %v9271 = vld [vmem:[#allocation11 + $0xa68] sm:$0xff]
        %v9272 = vld [vmem:[#allocation11 + $0xa70] sm:$0xff]
        %v9273 = vld [vmem:[#allocation11 + $0xa78] sm:$0xff]
        %v9274 = vld [vmem:[#allocation11 + $0xa80] sm:$0xff]
        %v9275 = vld [vmem:[#allocation11 + $0xa88] sm:$0xff]
        %v9276 = vld [vmem:[#allocation11 + $0xa90] sm:$0xff]
        %v9277 = vld [vmem:[#allocation11 + $0xa98] sm:$0xff]
        %v9278 = vld [vmem:[#allocation11 + $0xaa0] sm:$0xff]
        %v9279 = vld [vmem:[#allocation11 + $0xaa8] sm:$0xff]
        %v9280 = vld [vmem:[#allocation11 + $0xab0] sm:$0xff]
        %v9281 = vld [vmem:[#allocation11 + $0xab8] sm:$0xff]
        %v9282 = vld [vmem:[#allocation11 + $0xac0] sm:$0xff]
        %v9283 = vld [vmem:[#allocation11 + $0xac8] sm:$0xff]
        %v9284 = vld [vmem:[#allocation11 + $0xad0] sm:$0xff]
        %v9285 = vld [vmem:[#allocation11 + $0xad8] sm:$0xff]
        %v9286 = vld [vmem:[#allocation11 + $0xae0] sm:$0xff]
        %v9287 = vld [vmem:[#allocation11 + $0xae8] sm:$0xff]
        %v9288 = vld [vmem:[#allocation11 + $0xaf0] sm:$0xff]
        %v9289 = vld [vmem:[#allocation11 + $0xaf8] sm:$0xff]
        %v9290 = vld [vmem:[#allocation11 + $0xb00] sm:$0xff]
        %v9291 = vld [vmem:[#allocation11 + $0xb08] sm:$0xff]
        %v9292 = vld [vmem:[#allocation11 + $0xb10] sm:$0xff]
        %v9293 = vld [vmem:[#allocation11 + $0xb18] sm:$0xff]
        %v9294 = vld [vmem:[#allocation11 + $0xb20] sm:$0xff]
        %v9295 = vld [vmem:[#allocation11 + $0xb28] sm:$0xff]
        %v9296 = vld [vmem:[#allocation11 + $0xb30] sm:$0xff]
        %v9297 = vld [vmem:[#allocation11 + $0xb38] sm:$0xff]
        %v9298 = vld [vmem:[#allocation11 + $0xb40] sm:$0xff]
        %v9299 = vld [vmem:[#allocation11 + $0xb48] sm:$0xff]
        %v9300 = vld [vmem:[#allocation11 + $0xb50] sm:$0xff]
        %v9301 = vld [vmem:[#allocation11 + $0xb58] sm:$0xff]
        %v9302 = vld [vmem:[#allocation11 + $0xb60] sm:$0xff]
        %v9303 = vld [vmem:[#allocation11 + $0xb68] sm:$0xff]
        %v9304 = vld [vmem:[#allocation11 + $0xb70] sm:$0xff]
        %v9305 = vld [vmem:[#allocation11 + $0xb78] sm:$0xff]
        %v9306 = vld [vmem:[#allocation11 + $0xb80] sm:$0xff]
        %v9307 = vld [vmem:[#allocation11 + $0xb88] sm:$0xff]
        %v9308 = vld [vmem:[#allocation11 + $0xb90] sm:$0xff]
        %v9309 = vld [vmem:[#allocation11 + $0xb98] sm:$0xff]
        %v9310 = vld [vmem:[#allocation11 + $0xba0] sm:$0xff]
        %v9311 = vld [vmem:[#allocation11 + $0xba8] sm:$0xff]
        %v9312 = vld [vmem:[#allocation11 + $0xbb0] sm:$0xff]
        %v9313 = vld [vmem:[#allocation11 + $0xbb8] sm:$0xff]
        %v9314 = vld [vmem:[#allocation11 + $0xbc0] sm:$0xff]
        %v9315 = vld [vmem:[#allocation11 + $0xbc8] sm:$0xff]
        %v9316 = vld [vmem:[#allocation11 + $0xbd0] sm:$0xff]
        %v9317 = vld [vmem:[#allocation11 + $0xbd8] sm:$0xff]
        %v9318 = vld [vmem:[#allocation11 + $0xbe0] sm:$0xff]
        %v9319 = vld [vmem:[#allocation11 + $0xbe8] sm:$0xff]
        %v9320 = vld [vmem:[#allocation11 + $0xbf0] sm:$0xff]
        %v9321 = vld [vmem:[#allocation11 + $0xbf8] sm:$0xff]
        %v9322 = vld [vmem:[#allocation11 + $0xc00] sm:$0xff]
        %v9323 = vld [vmem:[#allocation11 + $0xc08] sm:$0xff]
        %v9324 = vld [vmem:[#allocation11 + $0xc10] sm:$0xff]
        %v9325 = vld [vmem:[#allocation11 + $0xc18] sm:$0xff]
        %v9326 = vld [vmem:[#allocation11 + $0xc20] sm:$0xff]
        %v9327 = vld [vmem:[#allocation11 + $0xc28] sm:$0xff]
        %v9328 = vld [vmem:[#allocation11 + $0xc30] sm:$0xff]
        %v9329 = vld [vmem:[#allocation11 + $0xc38] sm:$0xff]
        %v9330 = vld [vmem:[#allocation11 + $0xc40] sm:$0xff]
        %v9331 = vld [vmem:[#allocation11 + $0xc48] sm:$0xff]
        %v9332 = vld [vmem:[#allocation11 + $0xc50] sm:$0xff]
        %v9333 = vld [vmem:[#allocation11 + $0xc58] sm:$0xff]
        %v9334 = vld [vmem:[#allocation11 + $0xc60] sm:$0xff]
        %v9335 = vld [vmem:[#allocation11 + $0xc68] sm:$0xff]
        %v9336 = vld [vmem:[#allocation11 + $0xc70] sm:$0xff]
        %v9337 = vld [vmem:[#allocation11 + $0xc78] sm:$0xff]
        %v9338 = vld [vmem:[#allocation11 + $0xc80] sm:$0xff]
        %v9339 = vld [vmem:[#allocation11 + $0xc88] sm:$0xff]
        %v9340 = vld [vmem:[#allocation11 + $0xc90] sm:$0xff]
        %v9341 = vld [vmem:[#allocation11 + $0xc98] sm:$0xff]
        %v9342 = vld [vmem:[#allocation11 + $0xca0] sm:$0xff]
        %v9343 = vld [vmem:[#allocation11 + $0xca8] sm:$0xff]
        %v9344 = vld [vmem:[#allocation11 + $0xcb0] sm:$0xff]
        %v9345 = vld [vmem:[#allocation11 + $0xcb8] sm:$0xff]
        %v9346 = vld [vmem:[#allocation11 + $0xcc0] sm:$0xff]
        %v9347 = vld [vmem:[#allocation11 + $0xcc8] sm:$0xff]
        %v9348 = vld [vmem:[#allocation11 + $0xcd0] sm:$0xff]
        %v9349 = vld [vmem:[#allocation11 + $0xcd8] sm:$0xff]
        %v9350 = vld [vmem:[#allocation11 + $0xce0] sm:$0xff]
        %v9351 = vld [vmem:[#allocation11 + $0xce8] sm:$0xff]
        %v9352 = vld [vmem:[#allocation11 + $0xcf0] sm:$0xff]
        %v9353 = vld [vmem:[#allocation11 + $0xcf8] sm:$0xff]
        %v9354 = vld [vmem:[#allocation11 + $0xd00] sm:$0xff]
        %v9355 = vld [vmem:[#allocation11 + $0xd08] sm:$0xff]
        %v9356 = vld [vmem:[#allocation11 + $0xd10] sm:$0xff]
        %v9357 = vld [vmem:[#allocation11 + $0xd18] sm:$0xff]
        %v9358 = vld [vmem:[#allocation11 + $0xd20] sm:$0xff]
        %v9359 = vld [vmem:[#allocation11 + $0xd28] sm:$0xff]
        %v9360 = vld [vmem:[#allocation11 + $0xd30] sm:$0xff]
        %v9361 = vld [vmem:[#allocation11 + $0xd38] sm:$0xff]
        %v9362 = vld [vmem:[#allocation11 + $0xd40] sm:$0xff]
        %v9363 = vld [vmem:[#allocation11 + $0xd48] sm:$0xff]
        %v9364 = vld [vmem:[#allocation11 + $0xd50] sm:$0xff]
        %v9365 = vld [vmem:[#allocation11 + $0xd58] sm:$0xff]
        %v9366 = vld [vmem:[#allocation11 + $0xd60] sm:$0xff]
        %v9367 = vld [vmem:[#allocation11 + $0xd68] sm:$0xff]
        %v9368 = vld [vmem:[#allocation11 + $0xd70] sm:$0xff]
        %v9369 = vld [vmem:[#allocation11 + $0xd78] sm:$0xff]
        %v9370 = vld [vmem:[#allocation11 + $0xd80] sm:$0xff]
        %v9371 = vld [vmem:[#allocation11 + $0xd88] sm:$0xff]
        %v9372 = vld [vmem:[#allocation11 + $0xd90] sm:$0xff]
        %v9373 = vld [vmem:[#allocation11 + $0xd98] sm:$0xff]
        %v9374 = vld [vmem:[#allocation11 + $0xda0] sm:$0xff]
        %v9375 = vld [vmem:[#allocation11 + $0xda8] sm:$0xff]
        %v9376 = vld [vmem:[#allocation11 + $0xdb0] sm:$0xff]
        %v9377 = vld [vmem:[#allocation11 + $0xdb8] sm:$0xff]
        %v9378 = vld [vmem:[#allocation11 + $0xdc0] sm:$0xff]
        %v9379 = vld [vmem:[#allocation11 + $0xdc8] sm:$0xff]
        %v9380 = vld [vmem:[#allocation11 + $0xdd0] sm:$0xff]
        %v9381 = vld [vmem:[#allocation11 + $0xdd8] sm:$0xff]
        %v9382 = vld [vmem:[#allocation11 + $0xde0] sm:$0xff]
        %v9383 = vld [vmem:[#allocation11 + $0xde8] sm:$0xff]
        %v9384 = vld [vmem:[#allocation11 + $0xdf0] sm:$0xff]
        %v9385 = vld [vmem:[#allocation11 + $0xdf8] sm:$0xff]
        %v9386 = vld [vmem:[#allocation11 + $0xe00] sm:$0xff]
        %v9387 = vld [vmem:[#allocation11 + $0xe08] sm:$0xff]
        %v9388 = vld [vmem:[#allocation11 + $0xe10] sm:$0xff]
        %v9389 = vld [vmem:[#allocation11 + $0xe18] sm:$0xff]
        %v9390 = vld [vmem:[#allocation11 + $0xe20] sm:$0xff]
        %v9391 = vld [vmem:[#allocation11 + $0xe28] sm:$0xff]
        %v9392 = vld [vmem:[#allocation11 + $0xe30] sm:$0xff]
        %v9393 = vld [vmem:[#allocation11 + $0xe38] sm:$0xff]
        %v9394 = vld [vmem:[#allocation11 + $0xe40] sm:$0xff]
        %v9395 = vld [vmem:[#allocation11 + $0xe48] sm:$0xff]
        %v9396 = vld [vmem:[#allocation11 + $0xe50] sm:$0xff]
        %v9397 = vld [vmem:[#allocation11 + $0xe58] sm:$0xff]
        %v9398 = vld [vmem:[#allocation11 + $0xe60] sm:$0xff]
        %v9399 = vld [vmem:[#allocation11 + $0xe68] sm:$0xff]
        %v9400 = vld [vmem:[#allocation11 + $0xe70] sm:$0xff]
        %v9401 = vld [vmem:[#allocation11 + $0xe78] sm:$0xff]
        %v9402 = vld [vmem:[#allocation11 + $0xe80] sm:$0xff]
        %v9403 = vld [vmem:[#allocation11 + $0xe88] sm:$0xff]
        %v9404 = vld [vmem:[#allocation11 + $0xe90] sm:$0xff]
        %v9405 = vld [vmem:[#allocation11 + $0xe98] sm:$0xff]
        %v9406 = vld [vmem:[#allocation11 + $0xea0] sm:$0xff]
        %v9407 = vld [vmem:[#allocation11 + $0xea8] sm:$0xff]
        %v9408 = vld [vmem:[#allocation11 + $0xeb0] sm:$0xff]
        %v9409 = vld [vmem:[#allocation11 + $0xeb8] sm:$0xff]
        %v9410 = vld [vmem:[#allocation11 + $0xec0] sm:$0xff]
        %v9411 = vld [vmem:[#allocation11 + $0xec8] sm:$0xff]
        %v9412 = vld [vmem:[#allocation11 + $0xed0] sm:$0xff]
        %v9413 = vld [vmem:[#allocation11 + $0xed8] sm:$0xff]
        %v9414 = vld [vmem:[#allocation11 + $0xee0] sm:$0xff]
        %v9415 = vld [vmem:[#allocation11 + $0xee8] sm:$0xff]
        %v9416 = vld [vmem:[#allocation11 + $0xef0] sm:$0xff]
        %v9417 = vld [vmem:[#allocation11 + $0xef8] sm:$0xff]
        %v9418 = vld [vmem:[#allocation11 + $0xf00] sm:$0xff]
        %v9419 = vld [vmem:[#allocation11 + $0xf08] sm:$0xff]
        %v9420 = vld [vmem:[#allocation11 + $0xf10] sm:$0xff]
        %v9421 = vld [vmem:[#allocation11 + $0xf18] sm:$0xff]
        %v9422 = vld [vmem:[#allocation11 + $0xf20] sm:$0xff]
        %v9423 = vld [vmem:[#allocation11 + $0xf28] sm:$0xff]
        %v9424 = vld [vmem:[#allocation11 + $0xf30] sm:$0xff]
        %v9425 = vld [vmem:[#allocation11 + $0xf38] sm:$0xff]
        %v9426 = vld [vmem:[#allocation11 + $0xf40] sm:$0xff]
        %v9427 = vld [vmem:[#allocation11 + $0xf48] sm:$0xff]
        %v9428 = vld [vmem:[#allocation11 + $0xf50] sm:$0xff]
        %v9429 = vld [vmem:[#allocation11 + $0xf58] sm:$0xff]
        %v9430 = vld [vmem:[#allocation11 + $0xf60] sm:$0xff]
        %v9431 = vld [vmem:[#allocation11 + $0xf68] sm:$0xff]
        %v9432 = vld [vmem:[#allocation11 + $0xf70] sm:$0xff]
        %v9433 = vld [vmem:[#allocation11 + $0xf78] sm:$0xff]
        %v9434 = vld [vmem:[#allocation11 + $0xf80] sm:$0xff]
        %v9435 = vld [vmem:[#allocation11 + $0xf88] sm:$0xff]
        %v9436 = vld [vmem:[#allocation11 + $0xf90] sm:$0xff]
        %v9437 = vld [vmem:[#allocation11 + $0xf98] sm:$0xff]
        %v9438 = vld [vmem:[#allocation11 + $0xfa0] sm:$0xff]
        %v9439 = vld [vmem:[#allocation11 + $0xfa8] sm:$0xff]
        %v9440 = vld [vmem:[#allocation11 + $0xfb0] sm:$0xff]
        %v9441 = vld [vmem:[#allocation11 + $0xfb8] sm:$0xff]
        %v9442 = vld [vmem:[#allocation11 + $0xfc0] sm:$0xff]
        %v9443 = vld [vmem:[#allocation11 + $0xfc8] sm:$0xff]
        %v9444 = vld [vmem:[#allocation11 + $0xfd0] sm:$0xff]
        %v9445 = vld [vmem:[#allocation11 + $0xfd8] sm:$0xff]
        %v9446 = vld [vmem:[#allocation11 + $0xfe0] sm:$0xff]
        %v9447 = vld [vmem:[#allocation11 + $0xfe8] sm:$0xff]
        %v9448 = vld [vmem:[#allocation11 + $0xff0] sm:$0xff]
        %v9449 = vld [vmem:[#allocation11 + $0xff8] sm:$0xff]
        %v9450 = vld [vmem:[#allocation11 + $0x1000] sm:$0xff]
        %v9451 = vld [vmem:[#allocation11 + $0x1008] sm:$0xff]
        %v9452 = vld [vmem:[#allocation11 + $0x1010] sm:$0xff]
        %v9453 = vld [vmem:[#allocation11 + $0x1018] sm:$0xff]
        %v9454 = vld [vmem:[#allocation11 + $0x1020] sm:$0xff]
        %v9455 = vld [vmem:[#allocation11 + $0x1028] sm:$0xff]
        %v9456 = vld [vmem:[#allocation11 + $0x1030] sm:$0xff]
        %v9457 = vld [vmem:[#allocation11 + $0x1038] sm:$0xff]
        %v9458 = vld [vmem:[#allocation11 + $0x1040] sm:$0xff]
        %v9459 = vld [vmem:[#allocation11 + $0x1048] sm:$0xff]
        %v9460 = vld [vmem:[#allocation11 + $0x1050] sm:$0xff]
        %v9461 = vld [vmem:[#allocation11 + $0x1058] sm:$0xff]
        %v9462 = vld [vmem:[#allocation11 + $0x1060] sm:$0xff]
        %v9463 = vld [vmem:[#allocation11 + $0x1068] sm:$0xff]
        %v9464 = vld [vmem:[#allocation11 + $0x1070] sm:$0xff]
        %v9465 = vld [vmem:[#allocation11 + $0x1078] sm:$0xff]
        %v9466 = vld [vmem:[#allocation11 + $0x1080] sm:$0xff]
        %v9467 = vld [vmem:[#allocation11 + $0x1088] sm:$0xff]
        %v9468 = vld [vmem:[#allocation11 + $0x1090] sm:$0xff]
        %v9469 = vld [vmem:[#allocation11 + $0x1098] sm:$0xff]
        %v9470 = vld [vmem:[#allocation11 + $0x10a0] sm:$0xff]
        %v9471 = vld [vmem:[#allocation11 + $0x10a8] sm:$0xff]
        %v9472 = vld [vmem:[#allocation11 + $0x10b0] sm:$0xff]
        %v9473 = vld [vmem:[#allocation11 + $0x10b8] sm:$0xff]
        %v9474 = vld [vmem:[#allocation11 + $0x10c0] sm:$0xff]
        %v9475 = vld [vmem:[#allocation11 + $0x10c8] sm:$0xff]
        %v9476 = vld [vmem:[#allocation11 + $0x10d0] sm:$0xff]
        %v9477 = vld [vmem:[#allocation11 + $0x10d8] sm:$0xff]
        %v9478 = vld [vmem:[#allocation11 + $0x10e0] sm:$0xff]
        %v9479 = vld [vmem:[#allocation11 + $0x10e8] sm:$0xff]
        %v9480 = vld [vmem:[#allocation11 + $0x10f0] sm:$0xff]
        %v9481 = vld [vmem:[#allocation11 + $0x10f8] sm:$0xff]
        %v9482 = vld [vmem:[#allocation11 + $0x1100] sm:$0xff]
        %v9483 = vld [vmem:[#allocation11 + $0x1108] sm:$0xff]
        %v9484 = vld [vmem:[#allocation11 + $0x1110] sm:$0xff]
        %v9485 = vld [vmem:[#allocation11 + $0x1118] sm:$0xff]
        %v9486 = vld [vmem:[#allocation11 + $0x1120] sm:$0xff]
        %v9487 = vld [vmem:[#allocation11 + $0x1128] sm:$0xff]
        %v9488 = vld [vmem:[#allocation11 + $0x1130] sm:$0xff]
        %v9489 = vld [vmem:[#allocation11 + $0x1138] sm:$0xff]
        %v9490 = vld [vmem:[#allocation11 + $0x1140] sm:$0xff]
        %v9491 = vld [vmem:[#allocation11 + $0x1148] sm:$0xff]
        %v9492 = vld [vmem:[#allocation11 + $0x1150] sm:$0xff]
        %v9493 = vld [vmem:[#allocation11 + $0x1158] sm:$0xff]
        %v9494 = vld [vmem:[#allocation11 + $0x1160] sm:$0xff]
        %v9495 = vld [vmem:[#allocation11 + $0x1168] sm:$0xff]
        %v9496 = vld [vmem:[#allocation11 + $0x1170] sm:$0xff]
        %v9497 = vld [vmem:[#allocation11 + $0x1178] sm:$0xff]
        %v9498 = vld [vmem:[#allocation11 + $0x1180] sm:$0xff]
        %v9499 = vld [vmem:[#allocation11 + $0x1188] sm:$0xff]
        %v9500 = vld [vmem:[#allocation11 + $0x1190] sm:$0xff]
        %v9501 = vld [vmem:[#allocation11 + $0x1198] sm:$0xff]
        %v9502 = vld [vmem:[#allocation11 + $0x11a0] sm:$0xff]
        %v9503 = vld [vmem:[#allocation11 + $0x11a8] sm:$0xff]
        %v9504 = vld [vmem:[#allocation11 + $0x11b0] sm:$0xff]
        %v9505 = vld [vmem:[#allocation11 + $0x11b8] sm:$0xff]
        %v9506 = vld [vmem:[#allocation11 + $0x11c0] sm:$0xff]
        %v9507 = vld [vmem:[#allocation11 + $0x11c8] sm:$0xff]
        %v9508 = vld [vmem:[#allocation11 + $0x11d0] sm:$0xff]
        %v9509 = vld [vmem:[#allocation11 + $0x11d8] sm:$0xff]
        %v9510 = vld [vmem:[#allocation11 + $0x11e0] sm:$0xff]
        %v9511 = vld [vmem:[#allocation11 + $0x11e8] sm:$0xff]
        %v9512 = vld [vmem:[#allocation11 + $0x11f0] sm:$0xff]
        %v9513 = vld [vmem:[#allocation11 + $0x11f8] sm:$0xff]
        %v9514 = vld [vmem:[#allocation11 + $0x1200] sm:$0xff]
        %v9515 = vld [vmem:[#allocation11 + $0x1208] sm:$0xff]
        %v9516 = vld [vmem:[#allocation11 + $0x1210] sm:$0xff]
        %v9517 = vld [vmem:[#allocation11 + $0x1218] sm:$0xff]
        %v9518 = vld [vmem:[#allocation11 + $0x1220] sm:$0xff]
        %v9519 = vld [vmem:[#allocation11 + $0x1228] sm:$0xff]
        %v9520 = vld [vmem:[#allocation11 + $0x1230] sm:$0xff]
        %v9521 = vld [vmem:[#allocation11 + $0x1238] sm:$0xff]
        %v9522 = vld [vmem:[#allocation11 + $0x1240] sm:$0xff]
        %v9523 = vld [vmem:[#allocation11 + $0x1248] sm:$0xff]
        %v9524 = vld [vmem:[#allocation11 + $0x1250] sm:$0xff]
        %v9525 = vld [vmem:[#allocation11 + $0x1258] sm:$0xff]
        %v9526 = vld [vmem:[#allocation11 + $0x1260] sm:$0xff]
        %v9527 = vld [vmem:[#allocation11 + $0x1268] sm:$0xff]
        %v9528 = vld [vmem:[#allocation11 + $0x1270] sm:$0xff]
        %v9529 = vld [vmem:[#allocation11 + $0x1278] sm:$0xff]
        %v9530 = vld [vmem:[#allocation11 + $0x1280] sm:$0xff]
        %v9531 = vld [vmem:[#allocation11 + $0x1288] sm:$0xff]
        %v9532 = vld [vmem:[#allocation11 + $0x1290] sm:$0xff]
        %v9533 = vld [vmem:[#allocation11 + $0x1298] sm:$0xff]
        %v9534 = vld [vmem:[#allocation11 + $0x12a0] sm:$0xff]
        %v9535 = vld [vmem:[#allocation11 + $0x12a8] sm:$0xff]
        %v9536 = vld [vmem:[#allocation11 + $0x12b0] sm:$0xff]
        %v9537 = vld [vmem:[#allocation11 + $0x12b8] sm:$0xff]
        %v9538 = vld [vmem:[#allocation11 + $0x12c0] sm:$0xff]
        %v9539 = vld [vmem:[#allocation11 + $0x12c8] sm:$0xff]
        %v9540 = vld [vmem:[#allocation11 + $0x12d0] sm:$0xff]
        %v9541 = vld [vmem:[#allocation11 + $0x12d8] sm:$0xff]
        %v9542 = vld [vmem:[#allocation11 + $0x12e0] sm:$0xff]
        %v9543 = vld [vmem:[#allocation11 + $0x12e8] sm:$0xff]
        %v9544 = vld [vmem:[#allocation11 + $0x12f0] sm:$0xff]
        %v9545 = vld [vmem:[#allocation11 + $0x12f8] sm:$0xff]
        %v9546 = vld [vmem:[#allocation11 + $0x1300] sm:$0xff]
        %v9547 = vld [vmem:[#allocation11 + $0x1308] sm:$0xff]
        %v9548 = vld [vmem:[#allocation11 + $0x1310] sm:$0xff]
        %v9549 = vld [vmem:[#allocation11 + $0x1318] sm:$0xff]
        %v9550 = vld [vmem:[#allocation11 + $0x1320] sm:$0xff]
        %v9551 = vld [vmem:[#allocation11 + $0x1328] sm:$0xff]
        %v9552 = vld [vmem:[#allocation11 + $0x1330] sm:$0xff]
        %v9553 = vld [vmem:[#allocation11 + $0x1338] sm:$0xff]
        %v9554 = vld [vmem:[#allocation11 + $0x1340] sm:$0xff]
        %v9555 = vld [vmem:[#allocation11 + $0x1348] sm:$0xff]
        %v9556 = vld [vmem:[#allocation11 + $0x1350] sm:$0xff]
        %v9557 = vld [vmem:[#allocation11 + $0x1358] sm:$0xff]
        %v9558 = vld [vmem:[#allocation11 + $0x1360] sm:$0xff]
        %v9559 = vld [vmem:[#allocation11 + $0x1368] sm:$0xff]
        %v9560 = vld [vmem:[#allocation11 + $0x1370] sm:$0xff]
        %v9561 = vld [vmem:[#allocation11 + $0x1378] sm:$0xff]
        %v9562 = vld [vmem:[#allocation11 + $0x1380] sm:$0xff]
        %v9563 = vld [vmem:[#allocation11 + $0x1388] sm:$0xff]
        %v9564 = vld [vmem:[#allocation11 + $0x1390] sm:$0xff]
        %v9565 = vld [vmem:[#allocation11 + $0x1398] sm:$0xff]
        %v9566 = vld [vmem:[#allocation11 + $0x13a0] sm:$0xff]
        %v9567 = vld [vmem:[#allocation11 + $0x13a8] sm:$0xff]
        %v9568 = vld [vmem:[#allocation11 + $0x13b0] sm:$0xff]
        %v9569 = vld [vmem:[#allocation11 + $0x13b8] sm:$0xff]
        %v9570 = vld [vmem:[#allocation11 + $0x13c0] sm:$0xff]
        %v9571 = vld [vmem:[#allocation11 + $0x13c8] sm:$0xff]
        %v9572 = vld [vmem:[#allocation11 + $0x13d0] sm:$0xff]
        %v9573 = vld [vmem:[#allocation11 + $0x13d8] sm:$0xff]
        %v9574 = vld [vmem:[#allocation11 + $0x13e0] sm:$0xff]
        %v9575 = vld [vmem:[#allocation11 + $0x13e8] sm:$0xff]
        %v9576 = vld [vmem:[#allocation11 + $0x13f0] sm:$0xff]
        %v9577 = vld [vmem:[#allocation11 + $0x13f8] sm:$0xff]
        %v9578 = vld [vmem:[#allocation11 + $0x1400] sm:$0xff]
        %v9579 = vld [vmem:[#allocation11 + $0x1408] sm:$0xff]
        %v9580 = vld [vmem:[#allocation11 + $0x1410] sm:$0xff]
        %v9581 = vld [vmem:[#allocation11 + $0x1418] sm:$0xff]
        %v9582 = vld [vmem:[#allocation11 + $0x1420] sm:$0xff]
        %v9583 = vld [vmem:[#allocation11 + $0x1428] sm:$0xff]
        %v9584 = vld [vmem:[#allocation11 + $0x1430] sm:$0xff]
        %v9585 = vld [vmem:[#allocation11 + $0x1438] sm:$0xff]
        %v9586 = vld [vmem:[#allocation11 + $0x1440] sm:$0xff]
        %v9587 = vld [vmem:[#allocation11 + $0x1448] sm:$0xff]
        %v9588 = vld [vmem:[#allocation11 + $0x1450] sm:$0xff]
        %v9589 = vld [vmem:[#allocation11 + $0x1458] sm:$0xff]
        %v9590 = vld [vmem:[#allocation11 + $0x1460] sm:$0xff]
        %v9591 = vld [vmem:[#allocation11 + $0x1468] sm:$0xff]
        %v9592 = vld [vmem:[#allocation11 + $0x1470] sm:$0xff]
        %v9593 = vld [vmem:[#allocation11 + $0x1478] sm:$0xff]
        %v9594 = vld [vmem:[#allocation11 + $0x1480] sm:$0xff]
        %v9595 = vld [vmem:[#allocation11 + $0x1488] sm:$0xff]
        %v9596 = vld [vmem:[#allocation11 + $0x1490] sm:$0xff]
        %v9597 = vld [vmem:[#allocation11 + $0x1498] sm:$0xff]
        %v9598 = vld [vmem:[#allocation11 + $0x14a0] sm:$0xff]
        %v9599 = vld [vmem:[#allocation11 + $0x14a8] sm:$0xff]
        %v9600 = vld [vmem:[#allocation11 + $0x14b0] sm:$0xff]
        %v9601 = vld [vmem:[#allocation11 + $0x14b8] sm:$0xff]
        %v9602 = vld [vmem:[#allocation11 + $0x14c0] sm:$0xff]
        %v9603 = vld [vmem:[#allocation11 + $0x14c8] sm:$0xff]
        %v9604 = vld [vmem:[#allocation11 + $0x14d0] sm:$0xff]
        %v9605 = vld [vmem:[#allocation11 + $0x14d8] sm:$0xff]
        %v9606 = vld [vmem:[#allocation11 + $0x14e0] sm:$0xff]
        %v9607 = vld [vmem:[#allocation11 + $0x14e8] sm:$0xff]
        %v9608 = vld [vmem:[#allocation11 + $0x14f0] sm:$0xff]
        %v9609 = vld [vmem:[#allocation11 + $0x14f8] sm:$0xff]
        %v9610 = vld [vmem:[#allocation11 + $0x1500] sm:$0xff]
        %v9611 = vld [vmem:[#allocation11 + $0x1508] sm:$0xff]
        %v9612 = vld [vmem:[#allocation11 + $0x1510] sm:$0xff]
        %v9613 = vld [vmem:[#allocation11 + $0x1518] sm:$0xff]
        %v9614 = vld [vmem:[#allocation11 + $0x1520] sm:$0xff]
        %v9615 = vld [vmem:[#allocation11 + $0x1528] sm:$0xff]
        %v9616 = vld [vmem:[#allocation11 + $0x1530] sm:$0xff]
        %v9617 = vld [vmem:[#allocation11 + $0x1538] sm:$0xff]
        %v9618 = vld [vmem:[#allocation11 + $0x1540] sm:$0xff]
        %v9619 = vld [vmem:[#allocation11 + $0x1548] sm:$0xff]
        %v9620 = vld [vmem:[#allocation11 + $0x1550] sm:$0xff]
        %v9621 = vld [vmem:[#allocation11 + $0x1558] sm:$0xff]
        %v9622 = vld [vmem:[#allocation11 + $0x1560] sm:$0xff]
        %v9623 = vld [vmem:[#allocation11 + $0x1568] sm:$0xff]
        %v9624 = vld [vmem:[#allocation11 + $0x1570] sm:$0xff]
        %v9625 = vld [vmem:[#allocation11 + $0x1578] sm:$0xff]
        %v9626 = vld [vmem:[#allocation11 + $0x1580] sm:$0xff]
        %v9627 = vld [vmem:[#allocation11 + $0x1588] sm:$0xff]
        %v9628 = vld [vmem:[#allocation11 + $0x1590] sm:$0xff]
        %v9629 = vld [vmem:[#allocation11 + $0x1598] sm:$0xff]
        %v9630 = vld [vmem:[#allocation11 + $0x15a0] sm:$0xff]
        %v9631 = vld [vmem:[#allocation11 + $0x15a8] sm:$0xff]
        %v9632 = vld [vmem:[#allocation11 + $0x15b0] sm:$0xff]
        %v9633 = vld [vmem:[#allocation11 + $0x15b8] sm:$0xff]
        %v9634 = vld [vmem:[#allocation11 + $0x15c0] sm:$0xff]
        %v9635 = vld [vmem:[#allocation11 + $0x15c8] sm:$0xff]
        %v9636 = vld [vmem:[#allocation11 + $0x15d0] sm:$0xff]
        %v9637 = vld [vmem:[#allocation11 + $0x15d8] sm:$0xff]
        %v9638 = vld [vmem:[#allocation11 + $0x15e0] sm:$0xff]
        %v9639 = vld [vmem:[#allocation11 + $0x15e8] sm:$0xff]
        %v9640 = vld [vmem:[#allocation11 + $0x15f0] sm:$0xff]
        %v9641 = vld [vmem:[#allocation11 + $0x15f8] sm:$0xff]
        %v9642 = vld [vmem:[#allocation11 + $0x1600] sm:$0xff]
        %v9643 = vld [vmem:[#allocation11 + $0x1608] sm:$0xff]
        %v9644 = vld [vmem:[#allocation11 + $0x1610] sm:$0xff]
        %v9645 = vld [vmem:[#allocation11 + $0x1618] sm:$0xff]
        %v9646 = vld [vmem:[#allocation11 + $0x1620] sm:$0xff]
        %v9647 = vld [vmem:[#allocation11 + $0x1628] sm:$0xff]
        %v9648 = vld [vmem:[#allocation11 + $0x1630] sm:$0xff]
        %v9649 = vld [vmem:[#allocation11 + $0x1638] sm:$0xff]
        %v9650 = vld [vmem:[#allocation11 + $0x1640] sm:$0xff]
        %v9651 = vld [vmem:[#allocation11 + $0x1648] sm:$0xff]
        %v9652 = vld [vmem:[#allocation11 + $0x1650] sm:$0xff]
        %v9653 = vld [vmem:[#allocation11 + $0x1658] sm:$0xff]
        %v9654 = vld [vmem:[#allocation11 + $0x1660] sm:$0xff]
        %v9655 = vld [vmem:[#allocation11 + $0x1668] sm:$0xff]
        %v9656 = vld [vmem:[#allocation11 + $0x1670] sm:$0xff]
        %v9657 = vld [vmem:[#allocation11 + $0x1678] sm:$0xff]
        %v9658 = vld [vmem:[#allocation11 + $0x1680] sm:$0xff]
        %v9659 = vld [vmem:[#allocation11 + $0x1688] sm:$0xff]
        %v9660 = vld [vmem:[#allocation11 + $0x1690] sm:$0xff]
        %v9661 = vld [vmem:[#allocation11 + $0x1698] sm:$0xff]
        %v9662 = vld [vmem:[#allocation11 + $0x16a0] sm:$0xff]
        %v9663 = vld [vmem:[#allocation11 + $0x16a8] sm:$0xff]
        %v9664 = vld [vmem:[#allocation11 + $0x16b0] sm:$0xff]
        %v9665 = vld [vmem:[#allocation11 + $0x16b8] sm:$0xff]
        %v9666 = vld [vmem:[#allocation11 + $0x16c0] sm:$0xff]
        %v9667 = vld [vmem:[#allocation11 + $0x16c8] sm:$0xff]
        %v9668 = vld [vmem:[#allocation11 + $0x16d0] sm:$0xff]
        %v9669 = vld [vmem:[#allocation11 + $0x16d8] sm:$0xff]
        %v9670 = vld [vmem:[#allocation11 + $0x16e0] sm:$0xff]
        %v9671 = vld [vmem:[#allocation11 + $0x16e8] sm:$0xff]
        %v9672 = vld [vmem:[#allocation11 + $0x16f0] sm:$0xff]
        %v9673 = vld [vmem:[#allocation11 + $0x16f8] sm:$0xff]
        %v9674 = vld [vmem:[#allocation11 + $0x1700] sm:$0xff]
        %v9675 = vld [vmem:[#allocation11 + $0x1708] sm:$0xff]
        %v9676 = vld [vmem:[#allocation11 + $0x1710] sm:$0xff]
        %v9677 = vld [vmem:[#allocation11 + $0x1718] sm:$0xff]
        %v9678 = vld [vmem:[#allocation11 + $0x1720] sm:$0xff]
        %v9679 = vld [vmem:[#allocation11 + $0x1728] sm:$0xff]
        %v9680 = vld [vmem:[#allocation11 + $0x1730] sm:$0xff]
        %v9681 = vld [vmem:[#allocation11 + $0x1738] sm:$0xff]
        %v9682 = vld [vmem:[#allocation11 + $0x1740] sm:$0xff]
        %v9683 = vld [vmem:[#allocation11 + $0x1748] sm:$0xff]
        %v9684 = vld [vmem:[#allocation11 + $0x1750] sm:$0xff]
        %v9685 = vld [vmem:[#allocation11 + $0x1758] sm:$0xff]
        %v9686 = vld [vmem:[#allocation11 + $0x1760] sm:$0xff]
        %v9687 = vld [vmem:[#allocation11 + $0x1768] sm:$0xff]
        %v9688 = vld [vmem:[#allocation11 + $0x1770] sm:$0xff]
        %v9689 = vld [vmem:[#allocation11 + $0x1778] sm:$0xff]
        %v9690 = vld [vmem:[#allocation11 + $0x1780] sm:$0xff]
        %v9691 = vld [vmem:[#allocation11 + $0x1788] sm:$0xff]
        %v9692 = vld [vmem:[#allocation11 + $0x1790] sm:$0xff]
        %v9693 = vld [vmem:[#allocation11 + $0x1798] sm:$0xff]
        %v9694 = vld [vmem:[#allocation11 + $0x17a0] sm:$0xff]
        %v9695 = vld [vmem:[#allocation11 + $0x17a8] sm:$0xff]
        %v9696 = vld [vmem:[#allocation11 + $0x17b0] sm:$0xff]
        %v9697 = vld [vmem:[#allocation11 + $0x17b8] sm:$0xff]
        %v9698 = vld [vmem:[#allocation11 + $0x17c0] sm:$0xff]
        %v9699 = vld [vmem:[#allocation11 + $0x17c8] sm:$0xff]
        %v9700 = vld [vmem:[#allocation11 + $0x17d0] sm:$0xff]
        %v9701 = vld [vmem:[#allocation11 + $0x17d8] sm:$0xff]
        %v9702 = vld [vmem:[#allocation11 + $0x17e0] sm:$0xff]
        %v9703 = vld [vmem:[#allocation11 + $0x17e8] sm:$0xff]
        %v9704 = vld [vmem:[#allocation11 + $0x17f0] sm:$0xff]
        %v9705 = vld [vmem:[#allocation11 + $0x17f8] sm:$0xff]
        %v9706 = vld [vmem:[#allocation13] sm:$0xf]
        %v9708 = vlaneseq
        %v9709 = vshrl.u32 %v9708, 7
        %v9710 = vsub.s32 0, %v9709
        %v9711 = vrot.slane %v9706, %v9710
        %v9712 = vlaneseq
        %v9713 = vshrl.u32 %v9712, 7
        %v9714 = vsub.s32 1, %v9713
        %v9715 = vrot.slane %v9706, %v9714
        %v9716 = vlaneseq
        %v9717 = vshrl.u32 %v9716, 7
        %v9718 = vsub.s32 2, %v9717
        %v9719 = vrot.slane %v9706, %v9718
        %v9720 = vlaneseq
        %v9721 = vshrl.u32 %v9720, 7
        %v9722 = vsub.s32 3, %v9721
        %v9723 = vrot.slane %v9706, %v9722
        %9728 = vmatprep.subr.mxu0 %v8939
        %9729 = vmatpush1.msra.mxu0 %v8938
        %9730 = vmatprep.subr.mxu0 %v8943
        %9731 = vmatpush1.msra.mxu0 %v8942
        %9732 = vmatprep.subr.mxu0 %v8947
        %9733 = vmatpush1.msra.mxu0 %v8946
        %9734 = vmatprep.subr.mxu0 %v8951
        %9735 = vmatpush1.msra.mxu0 %v8950
        %9736 = vmatprep.subr.mxu0 %v8955
        %9737 = vmatpush1.msra.mxu0 %v8954
        %9738 = vmatprep.subr.mxu0 %v8959
        %9739 = vmatpush1.msra.mxu0 %v8958
        %9740 = vmatprep.subr.mxu0 %v8963
        %9741 = vmatpush1.msra.mxu0 %v8962
        %9742 = vmatprep.subr.mxu0 %v8967
        %9743 = vmatpush1.msra.mxu0 %v8966
        %9744 = vmatprep.subr.mxu0 %v8971
        %9745 = vmatpush1.msra.mxu0 %v8970
        %9746 = vmatprep.subr.mxu0 %v8975
        %9747 = vmatpush1.msra.mxu0 %v8974
        %9748 = vmatprep.subr.mxu0 %v8979
        %9749 = vmatpush1.msra.mxu0 %v8978
        %9750 = vmatprep.subr.mxu0 %v8983
        %9751 = vmatpush1.msra.mxu0 %v8982
        %9752 = vmatprep.subr.mxu0 %v8987
        %9753 = vmatpush1.msra.mxu0 %v8986
        %9754 = vmatprep.subr.mxu0 %v8991
        %9755 = vmatpush1.msra.mxu0 %v8990
        %9756 = vmatprep.subr.mxu0 %v8995
        %9757 = vmatpush1.msra.mxu0 %v8994
        %9758 = vmatprep.subr.mxu0 %v8999
        %9759 = vmatpush1.msra.mxu0 %v8998
        %9760 = vmatprep.subr.mxu0 %v9003
        %9761 = vmatpush1.msra.mxu0 %v9002
        %9762 = vmatprep.subr.mxu0 %v9007
        %9763 = vmatpush1.msra.mxu0 %v9006
        %9764 = vmatprep.subr.mxu0 %v9011
        %9765 = vmatpush1.msra.mxu0 %v9010
        %9766 = vmatprep.subr.mxu0 %v9015
        %9767 = vmatpush1.msra.mxu0 %v9014
        %9768 = vmatprep.subr.mxu0 %v9019
        %9769 = vmatpush1.msra.mxu0 %v9018
        %9770 = vmatprep.subr.mxu0 %v9023
        %9771 = vmatpush1.msra.mxu0 %v9022
        %9772 = vmatprep.subr.mxu0 %v9027
        %9773 = vmatpush1.msra.mxu0 %v9026
        %9774 = vmatprep.subr.mxu0 %v9031
        %9775 = vmatpush1.msra.mxu0 %v9030
        %9776 = vmatprep.subr.mxu0 %v9035
        %9777 = vmatpush1.msra.mxu0 %v9034
        %9778 = vmatprep.subr.mxu0 %v9039
        %9779 = vmatpush1.msra.mxu0 %v9038
        %9780 = vmatprep.subr.mxu0 %v9043
        %9781 = vmatpush1.msra.mxu0 %v9042
        %9782 = vmatprep.subr.mxu0 %v9047
        %9783 = vmatpush1.msra.mxu0 %v9046
        %9784 = vmatprep.subr.mxu0 %v9051
        %9785 = vmatpush1.msra.mxu0 %v9050
        %9786 = vmatprep.subr.mxu0 %v9055
        %9787 = vmatpush1.msra.mxu0 %v9054
        %9788 = vmatprep.subr.mxu0 %v9059
        %9789 = vmatpush1.msra.mxu0 %v9058
        %9790 = vmatprep.subr.mxu0 %v9063
        %9791 = vmatpush1.msra.mxu0 %v9062
        %9792 = vmatprep.mubr.f32.mxu0 %v8917
        %9793 = vmatmul.mubr.f32.gmra.mrb[0].mxu0 %v8908
        %v9794 = vpop.f32.mrb[0].mxu0
        %v9795 = vadd.f32 %v9711, %v9794
        %v9796 = vpop.f32.mrb[0].mxu0
        %v9797 = vadd.f32 %v9715, %v9796
        %9798 = vdwg.mxu0
        %9799 = vmatprep.subr.mxu0 %v9067
        %9800 = vmatpush1.msra.mxu0 %v9066
        %9801 = vmatprep.subr.mxu0 %v9071
        %9802 = vmatpush1.msra.mxu0 %v9070
        %9803 = vmatprep.subr.mxu0 %v9075
        %9804 = vmatpush1.msra.mxu0 %v9074
        %9805 = vmatprep.subr.mxu0 %v9079
        %9806 = vmatpush1.msra.mxu0 %v9078
        %9807 = vmatprep.subr.mxu0 %v9083
        %9808 = vmatpush1.msra.mxu0 %v9082
        %9809 = vmatprep.subr.mxu0 %v9087
        %9810 = vmatpush1.msra.mxu0 %v9086
        %9811 = vmatprep.subr.mxu0 %v9091
        %9812 = vmatpush1.msra.mxu0 %v9090
        %9813 = vmatprep.subr.mxu0 %v9095
        %9814 = vmatpush1.msra.mxu0 %v9094
        %9815 = vmatprep.subr.mxu0 %v9099
        %9816 = vmatpush1.msra.mxu0 %v9098
        %9817 = vmatprep.subr.mxu0 %v9103
        %9818 = vmatpush1.msra.mxu0 %v9102
        %9819 = vmatprep.subr.mxu0 %v9107
        %9820 = vmatpush1.msra.mxu0 %v9106
        %9821 = vmatprep.subr.mxu0 %v9111
        %9822 = vmatpush1.msra.mxu0 %v9110
        %9823 = vmatprep.subr.mxu0 %v9115
        %9824 = vmatpush1.msra.mxu0 %v9114
        %9825 = vmatprep.subr.mxu0 %v9119
        %9826 = vmatpush1.msra.mxu0 %v9118
        %9827 = vmatprep.subr.mxu0 %v9123
        %9828 = vmatpush1.msra.mxu0 %v9122
        %9829 = vmatprep.subr.mxu0 %v9127
        %9830 = vmatpush1.msra.mxu0 %v9126
        %9831 = vmatprep.subr.mxu0 %v9131
        %9832 = vmatpush1.msra.mxu0 %v9130
        %9833 = vmatprep.subr.mxu0 %v9135
        %9834 = vmatpush1.msra.mxu0 %v9134
        %9835 = vmatprep.subr.mxu0 %v9139
        %9836 = vmatpush1.msra.mxu0 %v9138
        %9837 = vmatprep.subr.mxu0 %v9143
        %9838 = vmatpush1.msra.mxu0 %v9142
        %9839 = vmatprep.subr.mxu0 %v9147
        %9840 = vmatpush1.msra.mxu0 %v9146
        %9841 = vmatprep.subr.mxu0 %v9151
        %9842 = vmatpush1.msra.mxu0 %v9150
        %9843 = vmatprep.subr.mxu0 %v9155
        %9844 = vmatpush1.msra.mxu0 %v9154
        %9845 = vmatprep.subr.mxu0 %v9159
        %9846 = vmatpush1.msra.mxu0 %v9158
        %9847 = vmatprep.subr.mxu0 %v9163
        %9848 = vmatpush1.msra.mxu0 %v9162
        %9849 = vmatprep.subr.mxu0 %v9167
        %9850 = vmatpush1.msra.mxu0 %v9166
        %9851 = vmatprep.subr.mxu0 %v9171
        %9852 = vmatpush1.msra.mxu0 %v9170
        %9853 = vmatprep.subr.mxu0 %v9175
        %9854 = vmatpush1.msra.mxu0 %v9174
        %9855 = vmatprep.subr.mxu0 %v9179
        %9856 = vmatpush1.msra.mxu0 %v9178
        %9857 = vmatprep.subr.mxu0 %v9183
        %9858 = vmatpush1.msra.mxu0 %v9182
        %9859 = vmatprep.subr.mxu0 %v9187
        %9860 = vmatpush1.msra.mxu0 %v9186
        %9861 = vmatprep.subr.mxu0 %v9191
        %9862 = vmatpush1.msra.mxu0 %v9190
        %9863 = vmatprep.mubr.f32.mxu0 %v8921
        %9864 = vmatmul.mubr.f32.gmra.mrb[0].mxu0 %v8919
        %v9865 = vpop.f32.mrb[0].mxu0
        %v9866 = vadd.f32 %v9795, %v9865
        %v9867 = vpop.f32.mrb[0].mxu0
        %v9868 = vadd.f32 %v9797, %v9867
        %9869 = vdwg.mxu0
        %9870 = vmatprep.subr.mxu0 %v9195
        %9871 = vmatpush1.msra.mxu0 %v9194
        %9872 = vmatprep.subr.mxu0 %v9199
        %9873 = vmatpush1.msra.mxu0 %v9198
        %9874 = vmatprep.subr.mxu0 %v9203
        %9875 = vmatpush1.msra.mxu0 %v9202
        %9876 = vmatprep.subr.mxu0 %v9207
        %9877 = vmatpush1.msra.mxu0 %v9206
        %9878 = vmatprep.subr.mxu0 %v9211
        %9879 = vmatpush1.msra.mxu0 %v9210
        %9880 = vmatprep.subr.mxu0 %v9215
        %9881 = vmatpush1.msra.mxu0 %v9214
        %9882 = vmatprep.subr.mxu0 %v9219
        %9883 = vmatpush1.msra.mxu0 %v9218
        %9884 = vmatprep.subr.mxu0 %v9223
        %9885 = vmatpush1.msra.mxu0 %v9222
        %9886 = vmatprep.subr.mxu0 %v9227
        %9887 = vmatpush1.msra.mxu0 %v9226
        %9888 = vmatprep.subr.mxu0 %v9231
        %9889 = vmatpush1.msra.mxu0 %v9230
        %9890 = vmatprep.subr.mxu0 %v9235
        %9891 = vmatpush1.msra.mxu0 %v9234
        %9892 = vmatprep.subr.mxu0 %v9239
        %9893 = vmatpush1.msra.mxu0 %v9238
        %9894 = vmatprep.subr.mxu0 %v9243
        %9895 = vmatpush1.msra.mxu0 %v9242
        %9896 = vmatprep.subr.mxu0 %v9247
        %9897 = vmatpush1.msra.mxu0 %v9246
        %9898 = vmatprep.subr.mxu0 %v9251
        %9899 = vmatpush1.msra.mxu0 %v9250
        %9900 = vmatprep.subr.mxu0 %v9255
        %9901 = vmatpush1.msra.mxu0 %v9254
        %9902 = vmatprep.subr.mxu0 %v9259
        %9903 = vmatpush1.msra.mxu0 %v9258
        %9904 = vmatprep.subr.mxu0 %v9263
        %9905 = vmatpush1.msra.mxu0 %v9262
        %9906 = vmatprep.subr.mxu0 %v9267
        %9907 = vmatpush1.msra.mxu0 %v9266
        %9908 = vmatprep.subr.mxu0 %v9271
        %9909 = vmatpush1.msra.mxu0 %v9270
        %9910 = vmatprep.subr.mxu0 %v9275
        %9911 = vmatpush1.msra.mxu0 %v9274
        %9912 = vmatprep.subr.mxu0 %v9279
        %9913 = vmatpush1.msra.mxu0 %v9278
        %9914 = vmatprep.subr.mxu0 %v9283
        %9915 = vmatpush1.msra.mxu0 %v9282
        %9916 = vmatprep.subr.mxu0 %v9287
        %9917 = vmatpush1.msra.mxu0 %v9286
        %9918 = vmatprep.subr.mxu0 %v9291
        %9919 = vmatpush1.msra.mxu0 %v9290
        %9920 = vmatprep.subr.mxu0 %v9295
        %9921 = vmatpush1.msra.mxu0 %v9294
        %9922 = vmatprep.subr.mxu0 %v9299
        %9923 = vmatpush1.msra.mxu0 %v9298
        %9924 = vmatprep.subr.mxu0 %v9303
        %9925 = vmatpush1.msra.mxu0 %v9302
        %9926 = vmatprep.subr.mxu0 %v9307
        %9927 = vmatpush1.msra.mxu0 %v9306
        %9928 = vmatprep.subr.mxu0 %v9311
        %9929 = vmatpush1.msra.mxu0 %v9310
        %9930 = vmatprep.subr.mxu0 %v9315
        %9931 = vmatpush1.msra.mxu0 %v9314
        %9932 = vmatprep.subr.mxu0 %v9319
        %9933 = vmatpush1.msra.mxu0 %v9318
        %9934 = vmatprep.mubr.f32.mxu0 %v8925
        %9935 = vmatmul.mubr.f32.gmra.mrb[0].mxu0 %v8923
        %v9936 = vpop.f32.mrb[0].mxu0
        %v9937 = vadd.f32 %v9866, %v9936
        %v9938 = vpop.f32.mrb[0].mxu0
        %v9939 = vadd.f32 %v9868, %v9938
        %9940 = vdwg.mxu0
        %9941 = vmatprep.subr.mxu0 %v9323
        %9942 = vmatpush1.msra.mxu0 %v9322
        %9943 = vmatprep.subr.mxu0 %v9327
        %9944 = vmatpush1.msra.mxu0 %v9326
        %9945 = vmatprep.subr.mxu0 %v9331
        %9946 = vmatpush1.msra.mxu0 %v9330
        %9947 = vmatprep.subr.mxu0 %v9335
        %9948 = vmatpush1.msra.mxu0 %v9334
        %9949 = vmatprep.subr.mxu0 %v9339
        %9950 = vmatpush1.msra.mxu0 %v9338
        %9951 = vmatprep.subr.mxu0 %v9343
        %9952 = vmatpush1.msra.mxu0 %v9342
        %9953 = vmatprep.subr.mxu0 %v9347
        %9954 = vmatpush1.msra.mxu0 %v9346
        %9955 = vmatprep.subr.mxu0 %v9351
        %9956 = vmatpush1.msra.mxu0 %v9350
        %9957 = vmatprep.subr.mxu0 %v9355
        %9958 = vmatpush1.msra.mxu0 %v9354
        %9959 = vmatprep.subr.mxu0 %v9359
        %9960 = vmatpush1.msra.mxu0 %v9358
        %9961 = vmatprep.subr.mxu0 %v9363
        %9962 = vmatpush1.msra.mxu0 %v9362
        %9963 = vmatprep.subr.mxu0 %v9367
        %9964 = vmatpush1.msra.mxu0 %v9366
        %9965 = vmatprep.subr.mxu0 %v9371
        %9966 = vmatpush1.msra.mxu0 %v9370
        %9967 = vmatprep.subr.mxu0 %v9375
        %9968 = vmatpush1.msra.mxu0 %v9374
        %9969 = vmatprep.subr.mxu0 %v9379
        %9970 = vmatpush1.msra.mxu0 %v9378
        %9971 = vmatprep.subr.mxu0 %v9383
        %9972 = vmatpush1.msra.mxu0 %v9382
        %9973 = vmatprep.subr.mxu0 %v9387
        %9974 = vmatpush1.msra.mxu0 %v9386
        %9975 = vmatprep.subr.mxu0 %v9391
        %9976 = vmatpush1.msra.mxu0 %v9390
        %9977 = vmatprep.subr.mxu0 %v9395
        %9978 = vmatpush1.msra.mxu0 %v9394
        %9979 = vmatprep.subr.mxu0 %v9399
        %9980 = vmatpush1.msra.mxu0 %v9398
        %9981 = vmatprep.subr.mxu0 %v9403
        %9982 = vmatpush1.msra.mxu0 %v9402
        %9983 = vmatprep.subr.mxu0 %v9407
        %9984 = vmatpush1.msra.mxu0 %v9406
        %9985 = vmatprep.subr.mxu0 %v9411
        %9986 = vmatpush1.msra.mxu0 %v9410
        %9987 = vmatprep.subr.mxu0 %v9415
        %9988 = vmatpush1.msra.mxu0 %v9414
        %9989 = vmatprep.subr.mxu0 %v9419
        %9990 = vmatpush1.msra.mxu0 %v9418
        %9991 = vmatprep.subr.mxu0 %v9423
        %9992 = vmatpush1.msra.mxu0 %v9422
        %9993 = vmatprep.subr.mxu0 %v9427
        %9994 = vmatpush1.msra.mxu0 %v9426
        %9995 = vmatprep.subr.mxu0 %v9431
        %9996 = vmatpush1.msra.mxu0 %v9430
        %9997 = vmatprep.subr.mxu0 %v9435
        %9998 = vmatpush1.msra.mxu0 %v9434
        %9999 = vmatprep.subr.mxu0 %v9439
        %10000 = vmatpush1.msra.mxu0 %v9438
        %10001 = vmatprep.subr.mxu0 %v9443
        %10002 = vmatpush1.msra.mxu0 %v9442
        %10003 = vmatprep.subr.mxu0 %v9447
        %10004 = vmatpush1.msra.mxu0 %v9446
        %10005 = vmatprep.mubr.f32.mxu0 %v8929
        %10006 = vmatmul.mubr.f32.gmra.mrb[0].mxu0 %v8927
        %v10007 = vpop.f32.mrb[0].mxu0
        %v10008 = vadd.f32 %v9937, %v10007
        %v10009 = vpop.f32.mrb[0].mxu0
        %v10010 = vadd.f32 %v9939, %v10009
        %10011 = vdwg.mxu0
        %10012 = vmatprep.subr.mxu0 %v9451
        %10013 = vmatpush1.msra.mxu0 %v9450
        %10014 = vmatprep.subr.mxu0 %v9455
        %10015 = vmatpush1.msra.mxu0 %v9454
        %10016 = vmatprep.subr.mxu0 %v9459
        %10017 = vmatpush1.msra.mxu0 %v9458
        %10018 = vmatprep.subr.mxu0 %v9463
        %10019 = vmatpush1.msra.mxu0 %v9462
        %10020 = vmatprep.subr.mxu0 %v9467
        %10021 = vmatpush1.msra.mxu0 %v9466
        %10022 = vmatprep.subr.mxu0 %v9471
        %10023 = vmatpush1.msra.mxu0 %v9470
        %10024 = vmatprep.subr.mxu0 %v9475
        %10025 = vmatpush1.msra.mxu0 %v9474
        %10026 = vmatprep.subr.mxu0 %v9479
        %10027 = vmatpush1.msra.mxu0 %v9478
        %10028 = vmatprep.subr.mxu0 %v9483
        %10029 = vmatpush1.msra.mxu0 %v9482
        %10030 = vmatprep.subr.mxu0 %v9487
        %10031 = vmatpush1.msra.mxu0 %v9486
        %10032 = vmatprep.subr.mxu0 %v9491
        %10033 = vmatpush1.msra.mxu0 %v9490
        %10034 = vmatprep.subr.mxu0 %v9495
        %10035 = vmatpush1.msra.mxu0 %v9494
        %10036 = vmatprep.subr.mxu0 %v9499
        %10037 = vmatpush1.msra.mxu0 %v9498
        %10038 = vmatprep.subr.mxu0 %v9503
        %10039 = vmatpush1.msra.mxu0 %v9502
        %10040 = vmatprep.subr.mxu0 %v9507
        %10041 = vmatpush1.msra.mxu0 %v9506
        %10042 = vmatprep.subr.mxu0 %v9511
        %10043 = vmatpush1.msra.mxu0 %v9510
        %10044 = vmatprep.subr.mxu0 %v9515
        %10045 = vmatpush1.msra.mxu0 %v9514
        %10046 = vmatprep.subr.mxu0 %v9519
        %10047 = vmatpush1.msra.mxu0 %v9518
        %10048 = vmatprep.subr.mxu0 %v9523
        %10049 = vmatpush1.msra.mxu0 %v9522
        %10050 = vmatprep.subr.mxu0 %v9527
        %10051 = vmatpush1.msra.mxu0 %v9526
        %10052 = vmatprep.subr.mxu0 %v9531
        %10053 = vmatpush1.msra.mxu0 %v9530
        %10054 = vmatprep.subr.mxu0 %v9535
        %10055 = vmatpush1.msra.mxu0 %v9534
        %10056 = vmatprep.subr.mxu0 %v9539
        %10057 = vmatpush1.msra.mxu0 %v9538
        %10058 = vmatprep.subr.mxu0 %v9543
        %10059 = vmatpush1.msra.mxu0 %v9542
        %10060 = vmatprep.subr.mxu0 %v9547
        %10061 = vmatpush1.msra.mxu0 %v9546
        %10062 = vmatprep.subr.mxu0 %v9551
        %10063 = vmatpush1.msra.mxu0 %v9550
        %10064 = vmatprep.subr.mxu0 %v9555
        %10065 = vmatpush1.msra.mxu0 %v9554
        %10066 = vmatprep.subr.mxu0 %v9559
        %10067 = vmatpush1.msra.mxu0 %v9558
        %10068 = vmatprep.subr.mxu0 %v9563
        %10069 = vmatpush1.msra.mxu0 %v9562
        %10070 = vmatprep.subr.mxu0 %v9567
        %10071 = vmatpush1.msra.mxu0 %v9566
        %10072 = vmatprep.subr.mxu0 %v9571
        %10073 = vmatpush1.msra.mxu0 %v9570
        %10074 = vmatprep.subr.mxu0 %v9575
        %10075 = vmatpush1.msra.mxu0 %v9574
        %10076 = vmatprep.mubr.f32.mxu0 %v8932
        %10077 = vmatmul.mubr.f32.gmra.mrb[0].mxu0 %v8913
        %v10078 = vpop.f32.mrb[0].mxu0
        %v10079 = vadd.f32 %v10008, %v10078
        %v10080 = vpop.f32.mrb[0].mxu0
        %v10081 = vadd.f32 %v10010, %v10080
        %10082 = vdwg.mxu0
        %10083 = vmatprep.subr.mxu0 %v9579
        %10084 = vmatpush1.msra.mxu0 %v9578
        %10085 = vmatprep.subr.mxu0 %v9583
        %10086 = vmatpush1.msra.mxu0 %v9582
        %10087 = vmatprep.subr.mxu0 %v9587
        %10088 = vmatpush1.msra.mxu0 %v9586
        %10089 = vmatprep.subr.mxu0 %v9591
        %10090 = vmatpush1.msra.mxu0 %v9590
        %10091 = vmatprep.subr.mxu0 %v9595
        %10092 = vmatpush1.msra.mxu0 %v9594
        %10093 = vmatprep.subr.mxu0 %v9599
        %10094 = vmatpush1.msra.mxu0 %v9598
        %10095 = vmatprep.subr.mxu0 %v9603
        %10096 = vmatpush1.msra.mxu0 %v9602
        %10097 = vmatprep.subr.mxu0 %v9607
        %10098 = vmatpush1.msra.mxu0 %v9606
        %10099 = vmatprep.subr.mxu0 %v9611
        %10100 = vmatpush1.msra.mxu0 %v9610
        %10101 = vmatprep.subr.mxu0 %v9615
        %10102 = vmatpush1.msra.mxu0 %v9614
        %10103 = vmatprep.subr.mxu0 %v9619
        %10104 = vmatpush1.msra.mxu0 %v9618
        %10105 = vmatprep.subr.mxu0 %v9623
        %10106 = vmatpush1.msra.mxu0 %v9622
        %10107 = vmatprep.subr.mxu0 %v9627
        %10108 = vmatpush1.msra.mxu0 %v9626
        %10109 = vmatprep.subr.mxu0 %v9631
        %10110 = vmatpush1.msra.mxu0 %v9630
        %10111 = vmatprep.subr.mxu0 %v9635
        %10112 = vmatpush1.msra.mxu0 %v9634
        %10113 = vmatprep.subr.mxu0 %v9639
        %10114 = vmatpush1.msra.mxu0 %v9638
        %10115 = vmatprep.subr.mxu0 %v9643
        %10116 = vmatpush1.msra.mxu0 %v9642
        %10117 = vmatprep.subr.mxu0 %v9647
        %10118 = vmatpush1.msra.mxu0 %v9646
        %10119 = vmatprep.subr.mxu0 %v9651
        %10120 = vmatpush1.msra.mxu0 %v9650
        %10121 = vmatprep.subr.mxu0 %v9655
        %10122 = vmatpush1.msra.mxu0 %v9654
        %10123 = vmatprep.subr.mxu0 %v9659
        %10124 = vmatpush1.msra.mxu0 %v9658
        %10125 = vmatprep.subr.mxu0 %v9663
        %10126 = vmatpush1.msra.mxu0 %v9662
        %10127 = vmatprep.subr.mxu0 %v9667
        %10128 = vmatpush1.msra.mxu0 %v9666
        %10129 = vmatprep.subr.mxu0 %v9671
        %10130 = vmatpush1.msra.mxu0 %v9670
        %10131 = vmatprep.subr.mxu0 %v9675
        %10132 = vmatpush1.msra.mxu0 %v9674
        %10133 = vmatprep.subr.mxu0 %v9679
        %10134 = vmatpush1.msra.mxu0 %v9678
        %10135 = vmatprep.subr.mxu0 %v9683
        %10136 = vmatpush1.msra.mxu0 %v9682
        %10137 = vmatprep.subr.mxu0 %v9687
        %10138 = vmatpush1.msra.mxu0 %v9686
        %10139 = vmatprep.subr.mxu0 %v9691
        %10140 = vmatpush1.msra.mxu0 %v9690
        %10141 = vmatprep.subr.mxu0 %v9695
        %10142 = vmatpush1.msra.mxu0 %v9694
        %10143 = vmatprep.subr.mxu0 %v9699
        %10144 = vmatpush1.msra.mxu0 %v9698
        %10145 = vmatprep.subr.mxu0 %v9703
        %10146 = vmatpush1.msra.mxu0 %v9702
        %10147 = vmatprep.mubr.f32.mxu0 %v8936
        %10148 = vmatmul.mubr.f32.gmra.mrb[0].mxu0 %v8934
        %v10149 = vpop.f32.mrb[0].mxu0
        %v10150 = vadd.f32 %v10079, %v10149
        %v10151 = vpop.f32.mrb[0].mxu0
        %v10152 = vadd.f32 %v10081, %v10151
        %10153 = vdwg.mxu0
        %10154 = vmatprep.subr.mxu0 %v8941
        %10155 = vmatpush1.msra.mxu0 %v8940
        %10156 = vmatprep.subr.mxu0 %v8945
        %10157 = vmatpush1.msra.mxu0 %v8944
        %10158 = vmatprep.subr.mxu0 %v8949
        %10159 = vmatpush1.msra.mxu0 %v8948
        %10160 = vmatprep.subr.mxu0 %v8953
        %10161 = vmatpush1.msra.mxu0 %v8952
        %10162 = vmatprep.subr.mxu0 %v8957
        %10163 = vmatpush1.msra.mxu0 %v8956
        %10164 = vmatprep.subr.mxu0 %v8961
        %10165 = vmatpush1.msra.mxu0 %v8960
        %10166 = vmatprep.subr.mxu0 %v8965
        %10167 = vmatpush1.msra.mxu0 %v8964
        %10168 = vmatprep.subr.mxu0 %v8969
        %10169 = vmatpush1.msra.mxu0 %v8968
        %10170 = vmatprep.subr.mxu0 %v8973
        %10171 = vmatpush1.msra.mxu0 %v8972
        %10172 = vmatprep.subr.mxu0 %v8977
        %10173 = vmatpush1.msra.mxu0 %v8976
        %10174 = vmatprep.subr.mxu0 %v8981
        %10175 = vmatpush1.msra.mxu0 %v8980
        %10176 = vmatprep.subr.mxu0 %v8985
        %10177 = vmatpush1.msra.mxu0 %v8984
        %10178 = vmatprep.subr.mxu0 %v8989
        %10179 = vmatpush1.msra.mxu0 %v8988
        %10180 = vmatprep.subr.mxu0 %v8993
        %10181 = vmatpush1.msra.mxu0 %v8992
        %10182 = vmatprep.subr.mxu0 %v8997
        %10183 = vmatpush1.msra.mxu0 %v8996
        %10184 = vmatprep.subr.mxu0 %v9001
        %10185 = vmatpush1.msra.mxu0 %v9000
        %10186 = vmatprep.subr.mxu0 %v9005
        %10187 = vmatpush1.msra.mxu0 %v9004
        %10188 = vmatprep.subr.mxu0 %v9009
        %10189 = vmatpush1.msra.mxu0 %v9008
        %10190 = vmatprep.subr.mxu0 %v9013
        %10191 = vmatpush1.msra.mxu0 %v9012
        %10192 = vmatprep.subr.mxu0 %v9017
        %10193 = vmatpush1.msra.mxu0 %v9016
        %10194 = vmatprep.subr.mxu0 %v9021
        %10195 = vmatpush1.msra.mxu0 %v9020
        %10196 = vmatprep.subr.mxu0 %v9025
        %10197 = vmatpush1.msra.mxu0 %v9024
        %10198 = vmatprep.subr.mxu0 %v9029
        %10199 = vmatpush1.msra.mxu0 %v9028
        %10200 = vmatprep.subr.mxu0 %v9033
        %10201 = vmatpush1.msra.mxu0 %v9032
        %10202 = vmatprep.subr.mxu0 %v9037
        %10203 = vmatpush1.msra.mxu0 %v9036
        %10204 = vmatprep.subr.mxu0 %v9041
        %10205 = vmatpush1.msra.mxu0 %v9040
        %10206 = vmatprep.subr.mxu0 %v9045
        %10207 = vmatpush1.msra.mxu0 %v9044
        %10208 = vmatprep.subr.mxu0 %v9049
        %10209 = vmatpush1.msra.mxu0 %v9048
        %10210 = vmatprep.subr.mxu0 %v9053
        %10211 = vmatpush1.msra.mxu0 %v9052
        %10212 = vmatprep.subr.mxu0 %v9057
        %10213 = vmatpush1.msra.mxu0 %v9056
        %10214 = vmatprep.subr.mxu0 %v9061
        %10215 = vmatpush1.msra.mxu0 %v9060
        %10216 = vmatprep.subr.mxu0 %v9065
        %10217 = vmatpush1.msra.mxu0 %v9064
        %10218 = vmatprep.mubr.f32.mxu0 %v8917
        %10219 = vmatmul.mubr.f32.gmra.mrb[0].mxu0 %v8908
        %v10220 = vpop.f32.mrb[0].mxu0
        %v10221 = vadd.f32 %v9719, %v10220
        %v10222 = vpop.f32.mrb[0].mxu0
        %v10223 = vadd.f32 %v9723, %v10222
        %10224 = vdwg.mxu0
        %10225 = vmatprep.subr.mxu0 %v9069
        %10226 = vmatpush1.msra.mxu0 %v9068
        %10227 = vmatprep.subr.mxu0 %v9073
        %10228 = vmatpush1.msra.mxu0 %v9072
        %10229 = vmatprep.subr.mxu0 %v9077
        %10230 = vmatpush1.msra.mxu0 %v9076
        %10231 = vmatprep.subr.mxu0 %v9081
        %10232 = vmatpush1.msra.mxu0 %v9080
        %10233 = vmatprep.subr.mxu0 %v9085
        %10234 = vmatpush1.msra.mxu0 %v9084
        %10235 = vmatprep.subr.mxu0 %v9089
        %10236 = vmatpush1.msra.mxu0 %v9088
        %10237 = vmatprep.subr.mxu0 %v9093
        %10238 = vmatpush1.msra.mxu0 %v9092
        %10239 = vmatprep.subr.mxu0 %v9097
        %10240 = vmatpush1.msra.mxu0 %v9096
        %10241 = vmatprep.subr.mxu0 %v9101
        %10242 = vmatpush1.msra.mxu0 %v9100
        %10243 = vmatprep.subr.mxu0 %v9105
        %10244 = vmatpush1.msra.mxu0 %v9104
        %10245 = vmatprep.subr.mxu0 %v9109
        %10246 = vmatpush1.msra.mxu0 %v9108
        %10247 = vmatprep.subr.mxu0 %v9113
        %10248 = vmatpush1.msra.mxu0 %v9112
        %10249 = vmatprep.subr.mxu0 %v9117
        %10250 = vmatpush1.msra.mxu0 %v9116
        %10251 = vmatprep.subr.mxu0 %v9121
        %10252 = vmatpush1.msra.mxu0 %v9120
        %10253 = vmatprep.subr.mxu0 %v9125
        %10254 = vmatpush1.msra.mxu0 %v9124
        %10255 = vmatprep.subr.mxu0 %v9129
        %10256 = vmatpush1.msra.mxu0 %v9128
        %10257 = vmatprep.subr.mxu0 %v9133
        %10258 = vmatpush1.msra.mxu0 %v9132
        %10259 = vmatprep.subr.mxu0 %v9137
        %10260 = vmatpush1.msra.mxu0 %v9136
        %10261 = vmatprep.subr.mxu0 %v9141
        %10262 = vmatpush1.msra.mxu0 %v9140
        %10263 = vmatprep.subr.mxu0 %v9145
        %10264 = vmatpush1.msra.mxu0 %v9144
        %10265 = vmatprep.subr.mxu0 %v9149
        %10266 = vmatpush1.msra.mxu0 %v9148
        %10267 = vmatprep.subr.mxu0 %v9153
        %10268 = vmatpush1.msra.mxu0 %v9152
        %10269 = vmatprep.subr.mxu0 %v9157
        %10270 = vmatpush1.msra.mxu0 %v9156
        %10271 = vmatprep.subr.mxu0 %v9161
        %10272 = vmatpush1.msra.mxu0 %v9160
        %10273 = vmatprep.subr.mxu0 %v9165
        %10274 = vmatpush1.msra.mxu0 %v9164
        %10275 = vmatprep.subr.mxu0 %v9169
        %10276 = vmatpush1.msra.mxu0 %v9168
        %10277 = vmatprep.subr.mxu0 %v9173
        %10278 = vmatpush1.msra.mxu0 %v9172
        %10279 = vmatprep.subr.mxu0 %v9177
        %10280 = vmatpush1.msra.mxu0 %v9176
        %10281 = vmatprep.subr.mxu0 %v9181
        %10282 = vmatpush1.msra.mxu0 %v9180
        %10283 = vmatprep.subr.mxu0 %v9185
        %10284 = vmatpush1.msra.mxu0 %v9184
        %10285 = vmatprep.subr.mxu0 %v9189
        %10286 = vmatpush1.msra.mxu0 %v9188
        %10287 = vmatprep.subr.mxu0 %v9193
        %10288 = vmatpush1.msra.mxu0 %v9192
        %10289 = vmatprep.mubr.f32.mxu0 %v8921
        %10290 = vmatmul.mubr.f32.gmra.mrb[0].mxu0 %v8919
        %v10291 = vpop.f32.mrb[0].mxu0
        %v10292 = vadd.f32 %v10221, %v10291
        %v10293 = vpop.f32.mrb[0].mxu0
        %v10294 = vadd.f32 %v10223, %v10293
        %10295 = vdwg.mxu0
        %10296 = vmatprep.subr.mxu0 %v9197
        %10297 = vmatpush1.msra.mxu0 %v9196
        %10298 = vmatprep.subr.mxu0 %v9201
        %10299 = vmatpush1.msra.mxu0 %v9200
        %10300 = vmatprep.subr.mxu0 %v9205
        %10301 = vmatpush1.msra.mxu0 %v9204
        %10302 = vmatprep.subr.mxu0 %v9209
        %10303 = vmatpush1.msra.mxu0 %v9208
        %10304 = vmatprep.subr.mxu0 %v9213
        %10305 = vmatpush1.msra.mxu0 %v9212
        %10306 = vmatprep.subr.mxu0 %v9217
        %10307 = vmatpush1.msra.mxu0 %v9216
        %10308 = vmatprep.subr.mxu0 %v9221
        %10309 = vmatpush1.msra.mxu0 %v9220
        %10310 = vmatprep.subr.mxu0 %v9225
        %10311 = vmatpush1.msra.mxu0 %v9224
        %10312 = vmatprep.subr.mxu0 %v9229
        %10313 = vmatpush1.msra.mxu0 %v9228
        %10314 = vmatprep.subr.mxu0 %v9233
        %10315 = vmatpush1.msra.mxu0 %v9232
        %10316 = vmatprep.subr.mxu0 %v9237
        %10317 = vmatpush1.msra.mxu0 %v9236
        %10318 = vmatprep.subr.mxu0 %v9241
        %10319 = vmatpush1.msra.mxu0 %v9240
        %10320 = vmatprep.subr.mxu0 %v9245
        %10321 = vmatpush1.msra.mxu0 %v9244
        %10322 = vmatprep.subr.mxu0 %v9249
        %10323 = vmatpush1.msra.mxu0 %v9248
        %10324 = vmatprep.subr.mxu0 %v9253
        %10325 = vmatpush1.msra.mxu0 %v9252
        %10326 = vmatprep.subr.mxu0 %v9257
        %10327 = vmatpush1.msra.mxu0 %v9256
        %10328 = vmatprep.subr.mxu0 %v9261
        %10329 = vmatpush1.msra.mxu0 %v9260
        %10330 = vmatprep.subr.mxu0 %v9265
        %10331 = vmatpush1.msra.mxu0 %v9264
        %10332 = vmatprep.subr.mxu0 %v9269
        %10333 = vmatpush1.msra.mxu0 %v9268
        %10334 = vmatprep.subr.mxu0 %v9273
        %10335 = vmatpush1.msra.mxu0 %v9272
        %10336 = vmatprep.subr.mxu0 %v9277
        %10337 = vmatpush1.msra.mxu0 %v9276
        %10338 = vmatprep.subr.mxu0 %v9281
        %10339 = vmatpush1.msra.mxu0 %v9280
        %10340 = vmatprep.subr.mxu0 %v9285
        %10341 = vmatpush1.msra.mxu0 %v9284
        %10342 = vmatprep.subr.mxu0 %v9289
        %10343 = vmatpush1.msra.mxu0 %v9288
        %10344 = vmatprep.subr.mxu0 %v9293
        %10345 = vmatpush1.msra.mxu0 %v9292
        %10346 = vmatprep.subr.mxu0 %v9297
        %10347 = vmatpush1.msra.mxu0 %v9296
        %10348 = vmatprep.subr.mxu0 %v9301
        %10349 = vmatpush1.msra.mxu0 %v9300
        %10350 = vmatprep.subr.mxu0 %v9305
        %10351 = vmatpush1.msra.mxu0 %v9304
        %10352 = vmatprep.subr.mxu0 %v9309
        %10353 = vmatpush1.msra.mxu0 %v9308
        %10354 = vmatprep.subr.mxu0 %v9313
        %10355 = vmatpush1.msra.mxu0 %v9312
        %10356 = vmatprep.subr.mxu0 %v9317
        %10357 = vmatpush1.msra.mxu0 %v9316
        %10358 = vmatprep.subr.mxu0 %v9321
        %10359 = vmatpush1.msra.mxu0 %v9320
        %10360 = vmatprep.mubr.f32.mxu0 %v8925
        %10361 = vmatmul.mubr.f32.gmra.mrb[0].mxu0 %v8923
        %v10362 = vpop.f32.mrb[0].mxu0
        %v10363 = vadd.f32 %v10292, %v10362
        %v10364 = vpop.f32.mrb[0].mxu0
        %v10365 = vadd.f32 %v10294, %v10364
        %10366 = vdwg.mxu0
        %10367 = vmatprep.subr.mxu0 %v9325
        %10368 = vmatpush1.msra.mxu0 %v9324
        %10369 = vmatprep.subr.mxu0 %v9329
        %10370 = vmatpush1.msra.mxu0 %v9328
        %10371 = vmatprep.subr.mxu0 %v9333
        %10372 = vmatpush1.msra.mxu0 %v9332
        %10373 = vmatprep.subr.mxu0 %v9337
        %10374 = vmatpush1.msra.mxu0 %v9336
        %10375 = vmatprep.subr.mxu0 %v9341
        %10376 = vmatpush1.msra.mxu0 %v9340
        %10377 = vmatprep.subr.mxu0 %v9345
        %10378 = vmatpush1.msra.mxu0 %v9344
        %10379 = vmatprep.subr.mxu0 %v9349
        %10380 = vmatpush1.msra.mxu0 %v9348
        %10381 = vmatprep.subr.mxu0 %v9353
        %10382 = vmatpush1.msra.mxu0 %v9352
        %10383 = vmatprep.subr.mxu0 %v9357
        %10384 = vmatpush1.msra.mxu0 %v9356
        %10385 = vmatprep.subr.mxu0 %v9361
        %10386 = vmatpush1.msra.mxu0 %v9360
        %10387 = vmatprep.subr.mxu0 %v9365
        %10388 = vmatpush1.msra.mxu0 %v9364
        %10389 = vmatprep.subr.mxu0 %v9369
        %10390 = vmatpush1.msra.mxu0 %v9368
        %10391 = vmatprep.subr.mxu0 %v9373
        %10392 = vmatpush1.msra.mxu0 %v9372
        %10393 = vmatprep.subr.mxu0 %v9377
        %10394 = vmatpush1.msra.mxu0 %v9376
        %10395 = vmatprep.subr.mxu0 %v9381
        %10396 = vmatpush1.msra.mxu0 %v9380
        %10397 = vmatprep.subr.mxu0 %v9385
        %10398 = vmatpush1.msra.mxu0 %v9384
        %10399 = vmatprep.subr.mxu0 %v9389
        %10400 = vmatpush1.msra.mxu0 %v9388
        %10401 = vmatprep.subr.mxu0 %v9393
        %10402 = vmatpush1.msra.mxu0 %v9392
        %10403 = vmatprep.subr.mxu0 %v9397
        %10404 = vmatpush1.msra.mxu0 %v9396
        %10405 = vmatprep.subr.mxu0 %v9401
        %10406 = vmatpush1.msra.mxu0 %v9400
        %10407 = vmatprep.subr.mxu0 %v9405
        %10408 = vmatpush1.msra.mxu0 %v9404
        %10409 = vmatprep.subr.mxu0 %v9409
        %10410 = vmatpush1.msra.mxu0 %v9408
        %10411 = vmatprep.subr.mxu0 %v9413
        %10412 = vmatpush1.msra.mxu0 %v9412
        %10413 = vmatprep.subr.mxu0 %v9417
        %10414 = vmatpush1.msra.mxu0 %v9416
        %10415 = vmatprep.subr.mxu0 %v9421
        %10416 = vmatpush1.msra.mxu0 %v9420
        %10417 = vmatprep.subr.mxu0 %v9425
        %10418 = vmatpush1.msra.mxu0 %v9424
        %10419 = vmatprep.subr.mxu0 %v9429
        %10420 = vmatpush1.msra.mxu0 %v9428
        %10421 = vmatprep.subr.mxu0 %v9433
        %10422 = vmatpush1.msra.mxu0 %v9432
        %10423 = vmatprep.subr.mxu0 %v9437
        %10424 = vmatpush1.msra.mxu0 %v9436
        %10425 = vmatprep.subr.mxu0 %v9441
        %10426 = vmatpush1.msra.mxu0 %v9440
        %10427 = vmatprep.subr.mxu0 %v9445
        %10428 = vmatpush1.msra.mxu0 %v9444
        %10429 = vmatprep.subr.mxu0 %v9449
        %10430 = vmatpush1.msra.mxu0 %v9448
        %10431 = vmatprep.mubr.f32.mxu0 %v8929
        %10432 = vmatmul.mubr.f32.gmra.mrb[0].mxu0 %v8927
        %v10433 = vpop.f32.mrb[0].mxu0
        %v10434 = vadd.f32 %v10363, %v10433
        %v10435 = vpop.f32.mrb[0].mxu0
        %v10436 = vadd.f32 %v10365, %v10435
        %10437 = vdwg.mxu0
        %10438 = vmatprep.subr.mxu0 %v9453
        %10439 = vmatpush1.msra.mxu0 %v9452
        %10440 = vmatprep.subr.mxu0 %v9457
        %10441 = vmatpush1.msra.mxu0 %v9456
        %10442 = vmatprep.subr.mxu0 %v9461
        %10443 = vmatpush1.msra.mxu0 %v9460
        %10444 = vmatprep.subr.mxu0 %v9465
        %10445 = vmatpush1.msra.mxu0 %v9464
        %10446 = vmatprep.subr.mxu0 %v9469
        %10447 = vmatpush1.msra.mxu0 %v9468
        %10448 = vmatprep.subr.mxu0 %v9473
        %10449 = vmatpush1.msra.mxu0 %v9472
        %10450 = vmatprep.subr.mxu0 %v9477
        %10451 = vmatpush1.msra.mxu0 %v9476
        %10452 = vmatprep.subr.mxu0 %v9481
        %10453 = vmatpush1.msra.mxu0 %v9480
        %10454 = vmatprep.subr.mxu0 %v9485
        %10455 = vmatpush1.msra.mxu0 %v9484
        %10456 = vmatprep.subr.mxu0 %v9489
        %10457 = vmatpush1.msra.mxu0 %v9488
        %10458 = vmatprep.subr.mxu0 %v9493
        %10459 = vmatpush1.msra.mxu0 %v9492
        %10460 = vmatprep.subr.mxu0 %v9497
        %10461 = vmatpush1.msra.mxu0 %v9496
        %10462 = vmatprep.subr.mxu0 %v9501
        %10463 = vmatpush1.msra.mxu0 %v9500
        %10464 = vmatprep.subr.mxu0 %v9505
        %10465 = vmatpush1.msra.mxu0 %v9504
        %10466 = vmatprep.subr.mxu0 %v9509
        %10467 = vmatpush1.msra.mxu0 %v9508
        %10468 = vmatprep.subr.mxu0 %v9513
        %10469 = vmatpush1.msra.mxu0 %v9512
        %10470 = vmatprep.subr.mxu0 %v9517
        %10471 = vmatpush1.msra.mxu0 %v9516
        %10472 = vmatprep.subr.mxu0 %v9521
        %10473 = vmatpush1.msra.mxu0 %v9520
        %10474 = vmatprep.subr.mxu0 %v9525
        %10475 = vmatpush1.msra.mxu0 %v9524
        %10476 = vmatprep.subr.mxu0 %v9529
        %10477 = vmatpush1.msra.mxu0 %v9528
        %10478 = vmatprep.subr.mxu0 %v9533
        %10479 = vmatpush1.msra.mxu0 %v9532
        %10480 = vmatprep.subr.mxu0 %v9537
        %10481 = vmatpush1.msra.mxu0 %v9536
        %10482 = vmatprep.subr.mxu0 %v9541
        %10483 = vmatpush1.msra.mxu0 %v9540
        %10484 = vmatprep.subr.mxu0 %v9545
        %10485 = vmatpush1.msra.mxu0 %v9544
        %10486 = vmatprep.subr.mxu0 %v9549
        %10487 = vmatpush1.msra.mxu0 %v9548
        %10488 = vmatprep.subr.mxu0 %v9553
        %10489 = vmatpush1.msra.mxu0 %v9552
        %10490 = vmatprep.subr.mxu0 %v9557
        %10491 = vmatpush1.msra.mxu0 %v9556
        %10492 = vmatprep.subr.mxu0 %v9561
        %10493 = vmatpush1.msra.mxu0 %v9560
        %10494 = vmatprep.subr.mxu0 %v9565
        %10495 = vmatpush1.msra.mxu0 %v9564
        %10496 = vmatprep.subr.mxu0 %v9569
        %10497 = vmatpush1.msra.mxu0 %v9568
        %10498 = vmatprep.subr.mxu0 %v9573
        %10499 = vmatpush1.msra.mxu0 %v9572
        %10500 = vmatprep.subr.mxu0 %v9577
        %10501 = vmatpush1.msra.mxu0 %v9576
        %10502 = vmatprep.mubr.f32.mxu0 %v8932
        %10503 = vmatmul.mubr.f32.gmra.mrb[0].mxu0 %v8913
        %v10504 = vpop.f32.mrb[0].mxu0
        %v10505 = vadd.f32 %v10434, %v10504
        %v10506 = vpop.f32.mrb[0].mxu0
        %v10507 = vadd.f32 %v10436, %v10506
        %10508 = vdwg.mxu0
        %10509 = vmatprep.subr.mxu0 %v9581
        %10510 = vmatpush1.msra.mxu0 %v9580
        %10511 = vmatprep.subr.mxu0 %v9585
        %10512 = vmatpush1.msra.mxu0 %v9584
        %10513 = vmatprep.subr.mxu0 %v9589
        %10514 = vmatpush1.msra.mxu0 %v9588
        %10515 = vmatprep.subr.mxu0 %v9593
        %10516 = vmatpush1.msra.mxu0 %v9592
        %10517 = vmatprep.subr.mxu0 %v9597
        %10518 = vmatpush1.msra.mxu0 %v9596
        %10519 = vmatprep.subr.mxu0 %v9601
        %10520 = vmatpush1.msra.mxu0 %v9600
        %10521 = vmatprep.subr.mxu0 %v9605
        %10522 = vmatpush1.msra.mxu0 %v9604
        %10523 = vmatprep.subr.mxu0 %v9609
        %10524 = vmatpush1.msra.mxu0 %v9608
        %10525 = vmatprep.subr.mxu0 %v9613
        %10526 = vmatpush1.msra.mxu0 %v9612
        %10527 = vmatprep.subr.mxu0 %v9617
        %10528 = vmatpush1.msra.mxu0 %v9616
        %10529 = vmatprep.subr.mxu0 %v9621
        %10530 = vmatpush1.msra.mxu0 %v9620
        %10531 = vmatprep.subr.mxu0 %v9625
        %10532 = vmatpush1.msra.mxu0 %v9624
        %10533 = vmatprep.subr.mxu0 %v9629
        %10534 = vmatpush1.msra.mxu0 %v9628
        %10535 = vmatprep.subr.mxu0 %v9633
        %10536 = vmatpush1.msra.mxu0 %v9632
        %10537 = vmatprep.subr.mxu0 %v9637
        %10538 = vmatpush1.msra.mxu0 %v9636
        %10539 = vmatprep.subr.mxu0 %v9641
        %10540 = vmatpush1.msra.mxu0 %v9640
        %10541 = vmatprep.subr.mxu0 %v9645
        %10542 = vmatpush1.msra.mxu0 %v9644
        %10543 = vmatprep.subr.mxu0 %v9649
        %10544 = vmatpush1.msra.mxu0 %v9648
        %10545 = vmatprep.subr.mxu0 %v9653
        %10546 = vmatpush1.msra.mxu0 %v9652
        %10547 = vmatprep.subr.mxu0 %v9657
        %10548 = vmatpush1.msra.mxu0 %v9656
        %10549 = vmatprep.subr.mxu0 %v9661
        %10550 = vmatpush1.msra.mxu0 %v9660
        %10551 = vmatprep.subr.mxu0 %v9665
        %10552 = vmatpush1.msra.mxu0 %v9664
        %10553 = vmatprep.subr.mxu0 %v9669
        %10554 = vmatpush1.msra.mxu0 %v9668
        %10555 = vmatprep.subr.mxu0 %v9673
        %10556 = vmatpush1.msra.mxu0 %v9672
        %10557 = vmatprep.subr.mxu0 %v9677
        %10558 = vmatpush1.msra.mxu0 %v9676
        %10559 = vmatprep.subr.mxu0 %v9681
        %10560 = vmatpush1.msra.mxu0 %v9680
        %10561 = vmatprep.subr.mxu0 %v9685
        %10562 = vmatpush1.msra.mxu0 %v9684
        %10563 = vmatprep.subr.mxu0 %v9689
        %10564 = vmatpush1.msra.mxu0 %v9688
        %10565 = vmatprep.subr.mxu0 %v9693
        %10566 = vmatpush1.msra.mxu0 %v9692
        %10567 = vmatprep.subr.mxu0 %v9697
        %10568 = vmatpush1.msra.mxu0 %v9696
        %10569 = vmatprep.subr.mxu0 %v9701
        %10570 = vmatpush1.msra.mxu0 %v9700
        %10571 = vmatprep.subr.mxu0 %v9705
        %10572 = vmatpush1.msra.mxu0 %v9704
        %10573 = vmatprep.mubr.f32.mxu0 %v8936
        %10574 = vmatmul.mubr.f32.gmra.mrb[0].mxu0 %v8934
        %v10575 = vpop.f32.mrb[0].mxu0
        %v10576 = vadd.f32 %v10505, %v10575
        %v10577 = vpop.f32.mrb[0].mxu0
        %v10578 = vadd.f32 %v10507, %v10577
        %10579 = vdwg.mxu0
        %v10580 = vmax.f32 %v10150, 0.0
        %v10581 = vmax.f32 %v10152, 0.0
        %v10582 = vmax.f32 %v10576, 0.0
        %v10583 = vmax.f32 %v10578, 0.0
        %v10584 = vld [vmem:[#allocation14] sm:$0xf]
        %v10586 = vlaneseq
        %v10587 = vshrl.u32 %v10586, 7
        %v10588 = vsub.s32 0, %v10587
        %v10589 = vrot.slane %v10584, %v10588
        %v10590 = vlaneseq
        %v10591 = vshrl.u32 %v10590, 7
        %v10592 = vsub.s32 1, %v10591
        %v10593 = vrot.slane %v10584, %v10592
        %v10594 = vlaneseq
        %v10595 = vshrl.u32 %v10594, 7
        %v10596 = vsub.s32 2, %v10595
        %v10597 = vrot.slane %v10584, %v10596
        %v10598 = vlaneseq
        %v10599 = vshrl.u32 %v10598, 7
        %v10600 = vsub.s32 3, %v10599
        %v10601 = vrot.slane %v10584, %v10600
        %v10606 = vmul.f32 %v10580, %v10589
        %v10607 = vmul.f32 %v10581, %v10593
        %v10608 = vmul.f32 %v10582, %v10597
        %v10609 = vmul.f32 %v10583, %v10601
        %v10610 = vsel %vm684, %v10606, 0.0
        %v10611 = vsel %vm684, %v10607, 0.0
        %v10612 = vadd.f32 %v10610, %v10611
        %v10613 = vsel %vm684, %v10608, 0.0
        %v10614 = vadd.f32 %v10612, %v10613
        %v10615 = vsel %vm684, %v10609, 0.0
        %v10616 = vadd.f32 %v10614, %v10615
        %10617 = vadd.xlane.f32.xlu0 %v10616
        %v10618 = vpop.xlane.xlu0 %10617
        %v10619 = vld [vmem:[#allocation2] sm:$0x1]
        %v10620 = vadd.f32 %v10618, %v10619
        %vm10621 = vcmask 0
        %10622 = vst.msk [vmem:[%s491] sm:$0x1] %vm10621, %v10620
        %p10623 = scmp.lt.s32.totalorder %s29, 1
        %s10624 = scalar_select %p10623, %s29, 1
        %s10625 = scalar_lea.vmem %s11, %s10624
        // Predicated region
        $region97: #{net_forward.1} parent=63 // pred_check
          %p10626 = pneg %p283
        $region98: #{net_forward.1} parent=63 // pred_check_branch
          %10628 = sbr.rel (%p10626) target = $region100
        $region99: #{net_forward.1} parent=63 // pred_region
          _
        $region100: #{net_forward.1} parent=63 // pred_fallthru
          _
      $region64: #{net_forward.1} parent=5 // pred_fallthru
        _
      %p10629 = scmp.le.s32.totalorder 2, %s24
      // Predicated region
      $region101: #{net_forward.1} parent=5 // pred_check
        %p10630 = pneg %p10629
      $region102: #{net_forward.1} parent=5 // pred_check_branch
        %10632 = sbr.rel (%p10630) target = $region104
      $region103: #{net_forward.1} parent=5 // pred_region
        %s10633 = ssub.s32 %s24, 2
        // Predicated region
        $region105: #{net_forward.1} parent=103 // pred_check
          %p10634 = pneg %p289
        $region106: #{net_forward.1} parent=103 // pred_check_branch
          %10636 = sbr.rel (%p10634) target = $region108
        $region107: #{net_forward.1} parent=103 // pred_region
          %p10637 = scmp.lt.s32.totalorder %s30, 1
          %s10638 = scalar_select %p10637, %s30, 1
          %s10639 = scalar_lea.vmem %s11, %s10638
        $region108: #{net_forward.1} parent=103 // pred_fallthru
          _
      $region104: #{net_forward.1} parent=5 // pred_fallthru
        _
    $region6: #{net_forward.1} parent=1 // loop_footer
      %s28 = sadd.s32 1, %s24
    $region7: #{net_forward.1} parent=1 // loop_footer_branch
      %23 = sbr.rel target = $region3
    $region8: #{net_forward.1} parent=1 // loop_exit
      _
    %10640 = vsyncpa [#allocation4], 1
    %s10641 = scalar_lea.sflag [#allocation4], 1
    %10642 = vsyncpa %s10641, 1
    %10643 = vsyncpa [#allocation6], 1
    %10644 = vsyncpa [#allocation9], 1
    %10645 = vsyncpa [#allocation12], 1
    %10646 = vsyncpa [#allocation15], 1

</llo_original>
